<compile_context>
chip_gen: v7x
topology: tpu7x:2x2x1
jax: 0.10.0
libtpu: 0.0.40
codegen_flags: <defaults>
</compile_context>

<pallas_src>
import functools
import math

import jax
import jax.numpy as jnp
from jax import lax
from jax.experimental import pallas as pl
from jax.experimental.pallas import tpu as pltpu


# ---------------------------------------------------------------------------
# helpers / constants
# ---------------------------------------------------------------------------
def _round_up(x, m):
    return (x + m - 1) // m * m


FC1_TK = 16384                       # fc1 K tile
FC1_KSPLIT = 2                       # leading parallel K-split (v7x megacore)
FC1_K = 16 * 125 * 125               # 250000
FC1_KP = _round_up(FC1_K, FC1_TK * FC1_KSPLIT)   # 262144


# ---------------------------------------------------------------------------
# Pallas kernels
# ---------------------------------------------------------------------------
def _conv_relu_pool_kernel(g_ref, w_ref, b_ref, o_ref, *,
                           ku, cout, coutp, owp, half, ohp):
    """Fused 5x5 valid conv + bias + ReLU + 2x2/2 max-pool for one image.

    g_ref : (1, H*ku, 2*half) bf16  width-unfolded input: per input row h the
            ku consecutive rows are taps u = dj*C + ci (zero padded to ku);
            lane layout = [even output cols | pad | odd output cols | pad].
    w_ref : (2*coutp, 6*ku) bf16    banded weights -> one MXU dot produces the
            two adjacent conv rows of a vertical pool pair.
    b_ref : (coutp, 1) f32 bias.
    o_ref : (1, ohp, cout, owp)     pooled output (bf16), one row per step.
    """
    w = w_ref[...]
    bias = b_ref[...]

    def body(p, carry):
        r0 = pl.multiple_of(p * (2 * ku), 2 * ku)
        rhs = g_ref[0, pl.ds(r0, 6 * ku), :]                        # (6ku, 2*half)
        acc = jnp.dot(w, rhs, preferred_element_type=jnp.float32)   # (2*coutp, 2*half)
        v = jnp.maximum(acc[:coutp, :], acc[coutp:, :])             # vertical 2:1 max
        h = jnp.maximum(v[:, :owp], v[:, half:half + owp])          # horizontal 2:1 max
        res = jnp.maximum(h + bias, 0.0)                            # bias + ReLU
        o_ref[0, p] = res[:cout, :].astype(o_ref.dtype)
        return carry

    lax.fori_loop(0, ohp, body, 0)


def _fc_partial_kernel(a_ref, b_ref, o_ref, acc_ref):
    """K-tiled matmul partials: out[s] = sum_k A[:, k-tile] @ B[k-tile, :]."""
    k = pl.program_id(1)

    @pl.when(k == 0)
    def _():
        acc_ref[...] = jnp.zeros_like(acc_ref)

    acc_ref[...] += jnp.dot(a_ref[...], b_ref[...],
                            preferred_element_type=jnp.float32)

    @pl.when(k == pl.num_programs(1) - 1)
    def _():
        o_ref[0] = acc_ref[...]


def _head_kernel(h_ref, w2_ref, b2_ref, w3_ref, b3_ref, o_ref):
    """Fused fc2 (ReLU) + fc3."""
    h2 = jnp.dot(h_ref[...], w2_ref[...],
                 preferred_element_type=jnp.float32) + b2_ref[...]
    h2 = jnp.maximum(h2, 0.0).astype(jnp.bfloat16)
    o_ref[...] = jnp.dot(h2, w3_ref[...],
                         preferred_element_type=jnp.float32) + b3_ref[...]


# ---------------------------------------------------------------------------
# Conv stage wrapper: cheap JAX width-unfold glue + fused Pallas kernel
# ---------------------------------------------------------------------------
def _build_unfold(act, kw, ku, owp, half):
    """act (n, H, C, W) -> (n, H*ku, 2*half) bf16 width-unfolded taps.

    Lane layout per row: [taps over even output cols | pad | odd cols | pad]
    so the kernel's horizontal pool is an aligned block max (lane-dense).
    """
    n, H, C, W = act.shape
    act = act.astype(jnp.bfloat16)
    zpad = jnp.zeros((n, H, C, half - owp), jnp.bfloat16)
    taps = []
    for dj in range(kw):
        ev = act[:, :, :, dj: dj + 2 * owp: 2]             # even output columns
        od = act[:, :, :, dj + 1: dj + 1 + 2 * owp: 2]     # odd output columns
        taps.append(jnp.concatenate([ev, zpad, od, zpad], axis=-1))
    g = jnp.stack(taps, axis=2).reshape(n, H, kw * C, 2 * half)
    if ku > kw * C:
        g = jnp.pad(g, ((0, 0), (0, 0), (0, ku - kw * C), (0, 0)))
    return g.reshape(n, H * ku, 2 * half)


def _conv_relu_pool(act, wb, bias, cout):
    """act (n,H,C,W) -> pooled activations (n, (H-4)//2, cout, (W-4)//2) bf16."""
    n, H, C, W = act.shape
    kh = kw = 5
    oh, ow = H - kh + 1, W - kw + 1
    ohp, owp = oh // 2, ow // 2
    half = _round_up(owp, 128)
    coutp = wb.shape[0] // 2
    ku = wb.shape[1] // (kh + 1)

    g = _build_unfold(act, kw, ku, owp, half)

    kernel = functools.partial(_conv_relu_pool_kernel, ku=ku, cout=cout,
                               coutp=coutp, owp=owp, half=half, ohp=ohp)
    return pl.pallas_call(
        kernel,
        out_shape=jax.ShapeDtypeStruct((n, ohp, cout, owp), jnp.bfloat16),
        grid_spec=pltpu.PrefetchScalarGridSpec(
            num_scalar_prefetch=0,
            grid=(n,),
            in_specs=[pl.BlockSpec((1, H * ku, 2 * half), lambda b: (b, 0, 0)),
                      pl.BlockSpec(wb.shape, lambda b: (0, 0)),
                      pl.BlockSpec(bias.shape, lambda b: (0, 0))],
            out_specs=pl.BlockSpec((1, ohp, cout, owp), lambda b: (b, 0, 0, 0)),
        ),
        compiler_params=pltpu.CompilerParams(
            dimension_semantics=("parallel",),
            vmem_limit_bytes=32 * 1024 * 1024),
    )(g, wb, bias)


# ---------------------------------------------------------------------------
# FC wrappers
# ---------------------------------------------------------------------------
def _fc1(flat, w_kn, bias):
    """flat (M, FC1_KP) bf16, w_kn (FC1_KP, N) bf16 -> ReLU(flat @ w_kn + b) f32."""
    M, Kp = flat.shape
    _, N = w_kn.shape
    nk = Kp // FC1_TK
    ks = nk // FC1_KSPLIT

    partial = pl.pallas_call(
        _fc_partial_kernel,
        out_shape=jax.ShapeDtypeStruct((FC1_KSPLIT, M, N), jnp.float32),
        grid_spec=pltpu.PrefetchScalarGridSpec(
            num_scalar_prefetch=0,
            grid=(FC1_KSPLIT, ks),
            in_specs=[pl.BlockSpec((M, FC1_TK), lambda s, k: (0, s * ks + k)),
                      pl.BlockSpec((FC1_TK, N), lambda s, k: (s * ks + k, 0))],
            out_specs=pl.BlockSpec((1, M, N), lambda s, k: (s, 0, 0)),
            scratch_shapes=[pltpu.VMEM((M, N), jnp.float32)],
        ),
        compiler_params=pltpu.CompilerParams(
            dimension_semantics=("parallel", "arbitrary"),
            vmem_limit_bytes=32 * 1024 * 1024),
    )(flat, w_kn)
    return jnp.maximum(partial.sum(axis=0) + bias[None, :], 0.0)


def _head(h1, w2, b2, w3, b3):
    M, N = h1.shape[0], w3.shape[1]
    return pl.pallas_call(
        _head_kernel,
        out_shape=jax.ShapeDtypeStruct((M, N), jnp.float32),
        grid_spec=pltpu.PrefetchScalarGridSpec(
            num_scalar_prefetch=0,
            grid=(1,),
            in_specs=[pl.BlockSpec(h1.shape, lambda i: (0, 0)),
                      pl.BlockSpec(w2.shape, lambda i: (0, 0)),
                      pl.BlockSpec(b2.shape, lambda i: (0, 0)),
                      pl.BlockSpec(w3.shape, lambda i: (0, 0)),
                      pl.BlockSpec(b3.shape, lambda i: (0, 0))],
            out_specs=pl.BlockSpec((M, N), lambda i: (0, 0)),
        ),
        compiler_params=pltpu.CompilerParams(
            dimension_semantics=("arbitrary",)),
    )(h1, w2, b2, w3, b3)


# ---------------------------------------------------------------------------
# Model forward (kernel-ready params from prepare_params)
# ---------------------------------------------------------------------------
def model_forward(x_nchw, kp):
    n = x_nchw.shape[0]
    a = jnp.transpose(x_nchw.astype(jnp.bfloat16), (0, 2, 1, 3))      # (n,H,C,W)
    z1 = _conv_relu_pool(a, kp["conv1_wb"], kp["conv1_b"], cout=6)    # (n,254,6,254)
    z2 = _conv_relu_pool(z1, kp["conv2_wb"], kp["conv2_b"], cout=16)  # (n,125,16,125)
    flat = z2.reshape(n, -1)                                          # (n,250000) bf16
    flat = jnp.pad(flat, ((0, 0), (0, FC1_KP - flat.shape[1])))
    h1 = _fc1(flat, kp["fc1_w"], kp["fc1_b"])                         # (n,120) f32
    return _head(h1.astype(jnp.bfloat16), kp["fc2_w"], kp["fc2_b"],
                 kp["fc3_w"], kp["fc3_b"])                            # (n,3)


# ---------------------------------------------------------------------------
# One-time parameter relayout (outside the per-call path)
# ---------------------------------------------------------------------------
def _prep_conv(w, b, ku, coutp):
    cout, cin, kh, kw = w.shape
    wu = jnp.transpose(w, (0, 2, 3, 1)).reshape(cout, kh, kw * cin)   # u = dj*C+ci
    wu = jnp.pad(wu, ((0, coutp - cout), (0, 0), (0, ku - kw * cin)))
    wu = wu.reshape(coutp, kh * ku)
    z = jnp.zeros((coutp, ku), wu.dtype)
    wb = jnp.concatenate([jnp.concatenate([wu, z], axis=1),
                          jnp.concatenate([z, wu], axis=1)], axis=0)  # (2*coutp, 6*ku)
    bias = jnp.pad(b, (0, coutp - cout)).reshape(coutp, 1)
    return wb.astype(jnp.bfloat16), bias.astype(jnp.float32)


def prepare_params(p):
    conv1_wb, conv1_b = _prep_conv(p["conv1_w"], p["conv1_b"], ku=16, coutp=8)
    conv2_wb, conv2_b = _prep_conv(p["conv2_w"], p["conv2_b"], ku=32, coutp=16)

    # fc1: fold the NCHW flatten order (c,h,w) into column order (h,c,w) used
    # by the conv2 kernel output, pre-transpose to (K,N), pre-pad K, cast bf16.
    w1 = p["fc1_w"].reshape(120, 16, 125, 125).transpose(0, 2, 1, 3)
    w1 = w1.reshape(120, FC1_K).T
    w1 = jnp.pad(w1, ((0, FC1_KP - FC1_K), (0, 0))).astype(jnp.bfloat16)

    return {
        "conv1_wb": conv1_wb, "conv1_b": conv1_b,
        "conv2_wb": conv2_wb, "conv2_b": conv2_b,
        "fc1_w": w1, "fc1_b": p["fc1_b"].astype(jnp.float32),
        "fc2_w": p["fc2_w"].T.astype(jnp.bfloat16),
        "fc2_b": p["fc2_b"].reshape(1, -1).astype(jnp.float32),
        "fc3_w": p["fc3_w"].T.astype(jnp.bfloat16),
        "fc3_b": p["fc3_b"].reshape(1, -1).astype(jnp.float32),
    }


# ---------------------------------------------------------------------------
# Deterministic parameter init (PyTorch-style U(-1/sqrt(fan_in), 1/sqrt(fan_in)))
# ---------------------------------------------------------------------------
def init_params(key):
    def u(k, shape, fan_in):
        b = 1.0 / math.sqrt(fan_in)
        return jax.random.uniform(k, shape, jnp.float32, -b, b)

    ks = jax.random.split(key, 10)
    return {
        "conv1_w": u(ks[0], (6, 3, 5, 5), 3 * 25),
        "conv1_b": u(ks[1], (6,), 3 * 25),
        "conv2_w": u(ks[2], (16, 6, 5, 5), 6 * 25),
        "conv2_b": u(ks[3], (16,), 6 * 25),
        "fc1_w": u(ks[4], (120, 16 * 125 * 125), 16 * 125 * 125),
        "fc1_b": u(ks[5], (120,), 16 * 125 * 125),
        "fc2_w": u(ks[6], (84, 120), 120),
        "fc2_b": u(ks[7], (84,), 120),
        "fc3_w": u(ks[8], (3, 84), 84),
        "fc3_b": u(ks[9], (3,), 84),
    }


# ---------------------------------------------------------------------------
# References: matched-precision (bf16 inputs / f32 accum) and pure f32
# ---------------------------------------------------------------------------
def reference_forward_matched(x, p):
    bf16, f32 = jnp.bfloat16, jnp.float32

    def conv(a, w, b):
        y = lax.conv_general_dilated(
            a.astype(bf16), w.astype(bf16), (1, 1), "VALID",
            dimension_numbers=("NCHW", "OIHW", "NCHW"),
            preferred_element_type=f32)
        return y + b[None, :, None, None]

    def pool(a):
        return lax.reduce_window(a, -jnp.inf, lax.max,
                                 (1, 1, 2, 2), (1, 1, 2, 2), "VALID")

    y = pool(jax.nn.relu(conv(x, p["conv1_w"], p["conv1_b"]))).astype(bf16)
    y = pool(jax.nn.relu(conv(y, p["conv2_w"], p["conv2_b"]))).astype(bf16)
    flat = y.reshape(y.shape[0], -1)
    h1 = jnp.maximum(jnp.dot(flat, p["fc1_w"].T.astype(bf16),
                             preferred_element_type=f32) + p["fc1_b"], 0.0)
    h1 = h1.astype(bf16)
    h2 = jnp.maximum(jnp.dot(h1, p["fc2_w"].T.astype(bf16),
                             preferred_element_type=f32) + p["fc2_b"], 0.0)
    h2 = h2.astype(bf16)
    return jnp.dot(h2, p["fc3_w"].T.astype(bf16),
                   preferred_element_type=f32) + p["fc3_b"]


def reference_forward_f32(x, p):
    hp = lax.Precision.HIGHEST

    def conv(a, w, b):
        y = lax.conv_general_dilated(
            a, w, (1, 1), "VALID",
            dimension_numbers=("NCHW", "OIHW", "NCHW"), precision=hp)
        return y + b[None, :, None, None]

    def pool(a):
        return lax.reduce_window(a, -jnp.inf, lax.max,
                                 (1, 1, 2, 2), (1, 1, 2, 2), "VALID")

    y = pool(jax.nn.relu(conv(x, p["conv1_w"], p["conv1_b"])))
    y = pool(jax.nn.relu(conv(y, p["conv2_w"], p["conv2_b"])))
    flat = y.reshape(y.shape[0], -1)
    h1 = jax.nn.relu(jnp.dot(flat, p["fc1_w"].T, precision=hp) + p["fc1_b"])
    h2 = jax.nn.relu(jnp.dot(h1, p["fc2_w"].T, precision=hp) + p["fc2_b"])
    return jnp.dot(h2, p["fc3_w"].T, precision=hp) + p["fc3_b"]


if __name__ == "__main__":
    key = jax.random.PRNGKey(0)
    k_x, k_p = jax.random.split(key)
    params = init_params(k_p)
    kparams = prepare_params(params)      # one-time weight relayout (not per call)

    # fc1 (= 16*125*125) implies a 512x512 input; batch kept small.
    x = jax.random.normal(k_x, (2, 3, 512, 512), jnp.float32)

    fwd = jax.jit(model_forward)
    out = jax.block_until_ready(fwd(x, kparams))
    assert out.shape == (2, 3), out.shape
    assert jnp.all(jnp.isfinite(out))

    # Strict check against a reference with matching bf16-input / f32-accum numerics.
    ref_m = jax.block_until_ready(jax.jit(reference_forward_matched)(x, params))
    assert jnp.allclose(out, ref_m, rtol=5e-3, atol=5e-3), (out, ref_m)

    # Loose sanity check against the pure-f32 PyTorch-equivalent forward
    # (difference is only bf16 weight/activation quantization).
    ref_f = jax.block_until_ready(jax.jit(reference_forward_f32)(x, params))
    assert float(jnp.max(jnp.abs(out - ref_f))) < 0.15, (out, ref_f)

    print("KERNEL_OK")
</pallas_src>

<mosaic_0001>
module attributes {stable_mosaic.version = 11 : i64} {
  func.func @_conv_relu_pool_kernel(%arg0: i32, %arg1: memref<1x8192x512xbf16, #tpu.memory_space<vmem>>, %arg2: memref<16x96xbf16, #tpu.memory_space<vmem>>, %arg3: memref<8x1xf32, #tpu.memory_space<vmem>>, %arg4: memref<1x254x6x254xbf16, #tpu.memory_space<vmem>>) attributes {dimension_semantics = [#tpu.dimension_semantics<parallel>], iteration_bounds = array<i64: 2>, scalar_prefetch = 0 : i64, scratch_operands = 0 : i64, tpu.core_type = #tpu.core_type<tc>, window_params = [{transform_indices = @transform_0, window_bounds = array<i64: 1, 8192, 512>}, {pipeline_mode = #tpu.pipeline_mode<synchronous>, transform_indices = @transform_1, window_bounds = array<i64: 16, 96>}, {pipeline_mode = #tpu.pipeline_mode<synchronous>, transform_indices = @transform_2, window_bounds = array<i64: 8, 1>}, {transform_indices = @transform_3, window_bounds = array<i64: 1, 254, 6, 254>}]} {
    %c0 = arith.constant 0 : index
    %c0_0 = arith.constant 0 : index
    %0 = vector.load %arg2[%c0, %c0_0] : memref<16x96xbf16, #tpu.memory_space<vmem>>, vector<16x96xbf16>
    %c0_1 = arith.constant 0 : index
    %c0_2 = arith.constant 0 : index
    %1 = vector.load %arg3[%c0_1, %c0_2] : memref<8x1xf32, #tpu.memory_space<vmem>>, vector<8x1xf32>
    %c0_i32 = arith.constant 0 : i32
    %c254_i32 = arith.constant 254 : i32
    %2 = arith.addi %c0_i32, %c254_i32 : i32
    %c1_i32 = arith.constant 1 : i32
    scf.for %arg5 = %c0_i32 to %2 step %c1_i32  : i32 {
      %c32_i32 = arith.constant 32 : i32
      %3 = arith.muli %arg5, %c32_i32 : i32
      %4 = tpu.assume_multiple %3, 32 : i32
      %c0_4 = arith.constant 0 : index
      %5 = arith.index_cast %4 : i32 to index
      %c0_5 = arith.constant 0 : index
      %6 = vector.load %arg1[%c0_4, %5, %c0_5] : memref<1x8192x512xbf16, #tpu.memory_space<vmem>>, vector<1x96x512xbf16>
      %7 = vector.shape_cast %6 : vector<1x96x512xbf16> to vector<96x512xbf16>
      %cst = arith.constant dense<0.000000e+00> : vector<16x512xf32>
      %8 = tpu.matmul %0, %7, %cst {dimension_numbers = #tpu.dot_dimension_numbers<[1], [0], [0], [1], [0, 0, 1, 1], [], []>} : vector<16x96xbf16>, vector<96x512xbf16>, vector<16x512xf32> -> vector<16x512xf32>
      %9 = vector.extract_strided_slice %8 {offsets = [0, 0], sizes = [8, 512], strides = [1, 1]} : vector<16x512xf32> to vector<8x512xf32>
      %10 = vector.extract_strided_slice %8 {offsets = [8, 0], sizes = [8, 512], strides = [1, 1]} : vector<16x512xf32> to vector<8x512xf32>
      %11 = arith.maximumf %9, %10 : vector<8x512xf32>
      %12 = vector.extract_strided_slice %11 {offsets = [0, 0], sizes = [8, 254], strides = [1, 1]} : vector<8x512xf32> to vector<8x254xf32>
      %13 = vector.extract_strided_slice %11 {offsets = [0, 256], sizes = [8, 254], strides = [1, 1]} : vector<8x512xf32> to vector<8x254xf32>
      %14 = arith.maximumf %12, %13 : vector<8x254xf32>
      %15 = vector.broadcast %1 : vector<8x1xf32> to vector<8x254xf32>
      %16 = arith.addf %14, %15 : vector<8x254xf32>
      %cst_6 = arith.constant 0.000000e+00 : f32
      %17 = vector.broadcast %cst_6 : f32 to vector<8x254xf32>
      %18 = arith.maximumf %16, %17 : vector<8x254xf32>
      %19 = vector.extract_strided_slice %18 {offsets = [0, 0], sizes = [6, 254], strides = [1, 1]} : vector<8x254xf32> to vector<6x254xf32>
      %20 = arith.truncf %19 : vector<6x254xf32> to vector<6x254xbf16>
      %c0_7 = arith.constant 0 : index
      %21 = arith.index_cast %arg5 : i32 to index
      %c0_8 = arith.constant 0 : index
      %c0_9 = arith.constant 0 : index
      %22 = vector.load %arg4[%c0_7, %21, %c0_8, %c0_9] : memref<1x254x6x254xbf16, #tpu.memory_space<vmem>>, vector<1x1x6x254xbf16>
      %23 = vector.shape_cast %22 : vector<1x1x6x254xbf16> to vector<6x254xbf16>
      %24 = vector.shape_cast %20 : vector<6x254xbf16> to vector<1x1x6x254xbf16>
      tpu.vector_store %arg4[%c0_7, %21, %c0_8, %c0_9], %24 {strides = array<i32>} : memref<1x254x6x254xbf16, #tpu.memory_space<vmem>>, vector<1x1x6x254xbf16>,
    }
    %c254_i32_3 = arith.constant 254 : i32
    return
  }
  func.func @transform_0(%arg0: i32) -> (i32, i32, i32) {
    %c0_i32 = arith.constant 0 : i32
    %c0_i32_0 = arith.constant 0 : i32
    %c0_i32_1 = arith.constant 0 : i32
    return %arg0, %c0_i32, %c0_i32_0 : i32, i32, i32
  }
  func.func @transform_1(%arg0: i32) -> (i32, i32) {
    %c0_i32 = arith.constant 0 : i32
    %c0_i32_0 = arith.constant 0 : i32
    %c0_i32_1 = arith.constant 0 : i32
    return %c0_i32, %c0_i32_0 : i32, i32
  }
  func.func @transform_2(%arg0: i32) -> (i32, i32) {
    %c0_i32 = arith.constant 0 : i32
    %c0_i32_0 = arith.constant 0 : i32
    %c0_i32_1 = arith.constant 0 : i32
    return %c0_i32, %c0_i32_0 : i32, i32
  }
  func.func @transform_3(%arg0: i32) -> (i32, i32, i32, i32) {
    %c0_i32 = arith.constant 0 : i32
    %c0_i32_0 = arith.constant 0 : i32
    %c0_i32_1 = arith.constant 0 : i32
    %c0_i32_2 = arith.constant 0 : i32
    return %arg0, %c0_i32, %c0_i32_0, %c0_i32_1 : i32, i32, i32, i32
  }
}

module attributes {stable_mosaic.version = 11 : i64} {
  func.func @_conv_relu_pool_kernel(%arg0: i32, %arg1: memref<1x8128x256xbf16, #tpu.memory_space<vmem>>, %arg2: memref<32x192xbf16, #tpu.memory_space<vmem>>, %arg3: memref<16x1xf32, #tpu.memory_space<vmem>>, %arg4: memref<1x125x16x125xbf16, #tpu.memory_space<vmem>>) attributes {dimension_semantics = [#tpu.dimension_semantics<parallel>], iteration_bounds = array<i64: 2>, scalar_prefetch = 0 : i64, scratch_operands = 0 : i64, tpu.core_type = #tpu.core_type<tc>, window_params = [{transform_indices = @transform_0, window_bounds = array<i64: 1, 8128, 256>}, {pipeline_mode = #tpu.pipeline_mode<synchronous>, transform_indices = @transform_1, window_bounds = array<i64: 32, 192>}, {pipeline_mode = #tpu.pipeline_mode<synchronous>, transform_indices = @transform_2, window_bounds = array<i64: 16, 1>}, {transform_indices = @transform_3, window_bounds = array<i64: 1, 125, 16, 125>}]} {
    %c0 = arith.constant 0 : index
    %c0_0 = arith.constant 0 : index
    %0 = vector.load %arg2[%c0, %c0_0] : memref<32x192xbf16, #tpu.memory_space<vmem>>, vector<32x192xbf16>
    %c0_1 = arith.constant 0 : index
    %c0_2 = arith.constant 0 : index
    %1 = vector.load %arg3[%c0_1, %c0_2] : memref<16x1xf32, #tpu.memory_space<vmem>>, vector<16x1xf32>
    %c0_i32 = arith.constant 0 : i32
    %c125_i32 = arith.constant 125 : i32
    %2 = arith.addi %c0_i32, %c125_i32 : i32
    %c1_i32 = arith.constant 1 : i32
    scf.for %arg5 = %c0_i32 to %2 step %c1_i32  : i32 {
      %c64_i32 = arith.constant 64 : i32
      %3 = arith.muli %arg5, %c64_i32 : i32
      %4 = tpu.assume_multiple %3, 64 : i32
      %c0_4 = arith.constant 0 : index
      %5 = arith.index_cast %4 : i32 to index
      %c0_5 = arith.constant 0 : index
      %6 = vector.load %arg1[%c0_4, %5, %c0_5] : memref<1x8128x256xbf16, #tpu.memory_space<vmem>>, vector<1x192x256xbf16>
      %7 = vector.shape_cast %6 : vector<1x192x256xbf16> to vector<192x256xbf16>
      %cst = arith.constant dense<0.000000e+00> : vector<32x256xf32>
      %8 = tpu.matmul %0, %7, %cst {dimension_numbers = #tpu.dot_dimension_numbers<[1], [0], [0], [1], [0, 0, 1, 1], [], []>} : vector<32x192xbf16>, vector<192x256xbf16>, vector<32x256xf32> -> vector<32x256xf32>
      %9 = vector.extract_strided_slice %8 {offsets = [0, 0], sizes = [16, 256], strides = [1, 1]} : vector<32x256xf32> to vector<16x256xf32>
      %10 = vector.extract_strided_slice %8 {offsets = [16, 0], sizes = [16, 256], strides = [1, 1]} : vector<32x256xf32> to vector<16x256xf32>
      %11 = arith.maximumf %9, %10 : vector<16x256xf32>
      %12 = vector.extract_strided_slice %11 {offsets = [0, 0], sizes = [16, 125], strides = [1, 1]} : vector<16x256xf32> to vector<16x125xf32>
      %13 = vector.extract_strided_slice %11 {offsets = [0, 128], sizes = [16, 125], strides = [1, 1]} : vector<16x256xf32> to vector<16x125xf32>
      %14 = arith.maximumf %12, %13 : vector<16x125xf32>
      %15 = vector.broadcast %1 : vector<16x1xf32> to vector<16x125xf32>
      %16 = arith.addf %14, %15 : vector<16x125xf32>
      %cst_6 = arith.constant 0.000000e+00 : f32
      %17 = vector.broadcast %cst_6 : f32 to vector<16x125xf32>
      %18 = arith.maximumf %16, %17 : vector<16x125xf32>
      %19 = arith.truncf %18 : vector<16x125xf32> to vector<16x125xbf16>
      %c0_7 = arith.constant 0 : index
      %20 = arith.index_cast %arg5 : i32 to index
      %c0_8 = arith.constant 0 : index
      %c0_9 = arith.constant 0 : index
      %21 = vector.load %arg4[%c0_7, %20, %c0_8, %c0_9] : memref<1x125x16x125xbf16, #tpu.memory_space<vmem>>, vector<1x1x16x125xbf16>
      %22 = vector.shape_cast %21 : vector<1x1x16x125xbf16> to vector<16x125xbf16>
      %23 = vector.shape_cast %19 : vector<16x125xbf16> to vector<1x1x16x125xbf16>
      tpu.vector_store %arg4[%c0_7, %20, %c0_8, %c0_9], %23 {strides = array<i32>} : memref<1x125x16x125xbf16, #tpu.memory_space<vmem>>, vector<1x1x16x125xbf16>,
    }
    %c125_i32_3 = arith.constant 125 : i32
    return
  }
  func.func @transform_0(%arg0: i32) -> (i32, i32, i32) {
    %c0_i32 = arith.constant 0 : i32
    %c0_i32_0 = arith.constant 0 : i32
    %c0_i32_1 = arith.constant 0 : i32
    return %arg0, %c0_i32, %c0_i32_0 : i32, i32, i32
  }
  func.func @transform_1(%arg0: i32) -> (i32, i32) {
    %c0_i32 = arith.constant 0 : i32
    %c0_i32_0 = arith.constant 0 : i32
    %c0_i32_1 = arith.constant 0 : i32
    return %c0_i32, %c0_i32_0 : i32, i32
  }
  func.func @transform_2(%arg0: i32) -> (i32, i32) {
    %c0_i32 = arith.constant 0 : i32
    %c0_i32_0 = arith.constant 0 : i32
    %c0_i32_1 = arith.constant 0 : i32
    return %c0_i32, %c0_i32_0 : i32, i32
  }
  func.func @transform_3(%arg0: i32) -> (i32, i32, i32, i32) {
    %c0_i32 = arith.constant 0 : i32
    %c0_i32_0 = arith.constant 0 : i32
    %c0_i32_1 = arith.constant 0 : i32
    %c0_i32_2 = arith.constant 0 : i32
    return %arg0, %c0_i32, %c0_i32_0, %c0_i32_1 : i32, i32, i32, i32
  }
}

module attributes {stable_mosaic.version = 11 : i64} {
  func.func @_fc_partial_kernel(%arg0: i32, %arg1: i32, %arg2: memref<2x16384xbf16, #tpu.memory_space<vmem>>, %arg3: memref<16384x120xbf16, #tpu.memory_space<vmem>>, %arg4: memref<1x2x120xf32, #tpu.memory_space<vmem>>, %arg5: memref<2x120xf32, #tpu.memory_space<vmem>>) attributes {dimension_semantics = [#tpu.dimension_semantics<parallel>, #tpu.dimension_semantics<arbitrary>], iteration_bounds = array<i64: 2, 8>, scalar_prefetch = 0 : i64, scratch_operands = 1 : i64, tpu.core_type = #tpu.core_type<tc>, window_params = [{transform_indices = @transform_0, window_bounds = array<i64: 2, 16384>}, {transform_indices = @transform_1, window_bounds = array<i64: 16384, 120>}, {transform_indices = @transform_2, window_bounds = array<i64: 1, 2, 120>}]} {
    %c0_i32 = arith.constant 0 : i32
    %0 = arith.cmpi eq, %arg1, %c0_i32 : i32
    %1 = arith.extui %0 : i1 to i32
    %c0_i32_0 = arith.constant 0 : i32
    %2 = arith.cmpi ne, %1, %c0_i32_0 : i32
    scf.if %2 {
      %cst_9 = arith.constant 0.000000e+00 : f32
      %12 = vector.broadcast %cst_9 : f32 to vector<2x120xf32>
      %c0_10 = arith.constant 0 : index
      %c0_11 = arith.constant 0 : index
      %13 = vector.load %arg5[%c0_10, %c0_11] : memref<2x120xf32, #tpu.memory_space<vmem>>, vector<2x120xf32>
      tpu.vector_store %arg5[%c0_10, %c0_11], %12 {strides = array<i32>} : memref<2x120xf32, #tpu.memory_space<vmem>>, vector<2x120xf32>,
    } else {
    }
    %c0 = arith.constant 0 : index
    %c0_1 = arith.constant 0 : index
    %3 = vector.load %arg5[%c0, %c0_1] : memref<2x120xf32, #tpu.memory_space<vmem>>, vector<2x120xf32>
    %c0_2 = arith.constant 0 : index
    %c0_3 = arith.constant 0 : index
    %4 = vector.load %arg2[%c0_2, %c0_3] : memref<2x16384xbf16, #tpu.memory_space<vmem>>, vector<2x16384xbf16>
    %c0_4 = arith.constant 0 : index
    %c0_5 = arith.constant 0 : index
    %5 = vector.load %arg3[%c0_4, %c0_5] : memref<16384x120xbf16, #tpu.memory_space<vmem>>, vector<16384x120xbf16>
    %cst = arith.constant dense<0.000000e+00> : vector<2x120xf32>
    %6 = tpu.matmul %4, %5, %cst {dimension_numbers = #tpu.dot_dimension_numbers<[1], [0], [0], [1], [0, 0, 1, 1], [], []>} : vector<2x16384xbf16>, vector<16384x120xbf16>, vector<2x120xf32> -> vector<2x120xf32>
    %7 = arith.addf %3, %6 : vector<2x120xf32>
    %c0_6 = arith.constant 0 : index
    %c0_7 = arith.constant 0 : index
    %8 = vector.load %arg5[%c0_6, %c0_7] : memref<2x120xf32, #tpu.memory_space<vmem>>, vector<2x120xf32>
    tpu.vector_store %arg5[%c0_6, %c0_7], %7 {strides = array<i32>} : memref<2x120xf32, #tpu.memory_space<vmem>>, vector<2x120xf32>,
    %c7_i32 = arith.constant 7 : i32
    %9 = arith.cmpi eq, %arg1, %c7_i32 : i32
    %10 = arith.extui %9 : i1 to i32
    %c0_i32_8 = arith.constant 0 : i32
    %11 = arith.cmpi ne, %10, %c0_i32_8 : i32
    scf.if %11 {
      %c0_9 = arith.constant 0 : index
      %c0_10 = arith.constant 0 : index
      %12 = vector.load %arg5[%c0_9, %c0_10] : memref<2x120xf32, #tpu.memory_space<vmem>>, vector<2x120xf32>
      %c0_11 = arith.constant 0 : index
      %c0_12 = arith.constant 0 : index
      %c0_13 = arith.constant 0 : index
      %13 = vector.load %arg4[%c0_11, %c0_12, %c0_13] : memref<1x2x120xf32, #tpu.memory_space<vmem>>, vector<1x2x120xf32>
      %14 = vector.shape_cast %13 : vector<1x2x120xf32> to vector<2x120xf32>
      %15 = vector.shape_cast %12 : vector<2x120xf32> to vector<1x2x120xf32>
      tpu.vector_store %arg4[%c0_11, %c0_12, %c0_13], %15 {strides = array<i32>} : memref<1x2x120xf32, #tpu.memory_space<vmem>>, vector<1x2x120xf32>,
    } else {
    }
    return
  }
  func.func @transform_0(%arg0: i32, %arg1: i32) -> (i32, i32) {
    %c8_i32 = arith.constant 8 : i32
    %0 = arith.muli %arg0, %c8_i32 : i32
    %1 = arith.addi %0, %arg1 : i32
    %c0_i32 = arith.constant 0 : i32
    %c0_i32_0 = arith.constant 0 : i32
    return %c0_i32, %1 : i32, i32
  }
  func.func @transform_1(%arg0: i32, %arg1: i32) -> (i32, i32) {
    %c8_i32 = arith.constant 8 : i32
    %0 = arith.muli %arg0, %c8_i32 : i32
    %1 = arith.addi %0, %arg1 : i32
    %c0_i32 = arith.constant 0 : i32
    %c0_i32_0 = arith.constant 0 : i32
    return %1, %c0_i32 : i32, i32
  }
  func.func @transform_2(%arg0: i32, %arg1: i32) -> (i32, i32, i32) {
    %c0_i32 = arith.constant 0 : i32
    %c0_i32_0 = arith.constant 0 : i32
    %c0_i32_1 = arith.constant 0 : i32
    return %arg0, %c0_i32, %c0_i32_0 : i32, i32, i32
  }
}

module attributes {stable_mosaic.version = 11 : i64} {
  func.func @_head_kernel(%arg0: i32, %arg1: memref<2x120xbf16, #tpu.memory_space<vmem>>, %arg2: memref<120x84xbf16, #tpu.memory_space<vmem>>, %arg3: memref<1x84xf32, #tpu.memory_space<vmem>>, %arg4: memref<84x3xbf16, #tpu.memory_space<vmem>>, %arg5: memref<1x3xf32, #tpu.memory_space<vmem>>, %arg6: memref<2x3xf32, #tpu.memory_space<vmem>>) attributes {dimension_semantics = [#tpu.dimension_semantics<arbitrary>], iteration_bounds = array<i64: 1>, scalar_prefetch = 0 : i64, scratch_operands = 0 : i64, tpu.core_type = #tpu.core_type<tc>, window_params = [{pipeline_mode = #tpu.pipeline_mode<synchronous>, transform_indices = @transform_0, window_bounds = array<i64: 2, 120>}, {pipeline_mode = #tpu.pipeline_mode<synchronous>, transform_indices = @transform_1, window_bounds = array<i64: 120, 84>}, {pipeline_mode = #tpu.pipeline_mode<synchronous>, transform_indices = @transform_2, window_bounds = array<i64: 1, 84>}, {pipeline_mode = #tpu.pipeline_mode<synchronous>, transform_indices = @transform_3, window_bounds = array<i64: 84, 3>}, {pipeline_mode = #tpu.pipeline_mode<synchronous>, transform_indices = @transform_4, window_bounds = array<i64: 1, 3>}, {pipeline_mode = #tpu.pipeline_mode<synchronous>, transform_indices = @transform_5, window_bounds = array<i64: 2, 3>}]} {
    %c0 = arith.constant 0 : index
    %c0_0 = arith.constant 0 : index
    %0 = vector.load %arg1[%c0, %c0_0] : memref<2x120xbf16, #tpu.memory_space<vmem>>, vector<2x120xbf16>
    %c0_1 = arith.constant 0 : index
    %c0_2 = arith.constant 0 : index
    %1 = vector.load %arg2[%c0_1, %c0_2] : memref<120x84xbf16, #tpu.memory_space<vmem>>, vector<120x84xbf16>
    %cst = arith.constant dense<0.000000e+00> : vector<2x84xf32>
    %2 = tpu.matmul %0, %1, %cst {dimension_numbers = #tpu.dot_dimension_numbers<[1], [0], [0], [1], [0, 0, 1, 1], [], []>} : vector<2x120xbf16>, vector<120x84xbf16>, vector<2x84xf32> -> vector<2x84xf32>
    %c0_3 = arith.constant 0 : index
    %c0_4 = arith.constant 0 : index
    %3 = vector.load %arg3[%c0_3, %c0_4] : memref<1x84xf32, #tpu.memory_space<vmem>>, vector<1x84xf32>
    %4 = vector.broadcast %3 : vector<1x84xf32> to vector<2x84xf32>
    %5 = arith.addf %2, %4 : vector<2x84xf32>
    %cst_5 = arith.constant 0.000000e+00 : f32
    %6 = vector.broadcast %cst_5 : f32 to vector<2x84xf32>
    %7 = arith.maximumf %5, %6 : vector<2x84xf32>
    %8 = arith.truncf %7 : vector<2x84xf32> to vector<2x84xbf16>
    %c0_6 = arith.constant 0 : index
    %c0_7 = arith.constant 0 : index
    %9 = vector.load %arg4[%c0_6, %c0_7] : memref<84x3xbf16, #tpu.memory_space<vmem>>, vector<84x3xbf16>
    %cst_8 = arith.constant dense<0.000000e+00> : vector<2x3xf32>
    %10 = tpu.matmul %8, %9, %cst_8 {dimension_numbers = #tpu.dot_dimension_numbers<[1], [0], [0], [1], [0, 0, 1, 1], [], []>} : vector<2x84xbf16>, vector<84x3xbf16>, vector<2x3xf32> -> vector<2x3xf32>
    %c0_9 = arith.constant 0 : index
    %c0_10 = arith.constant 0 : index
    %11 = vector.load %arg5[%c0_9, %c0_10] : memref<1x3xf32, #tpu.memory_space<vmem>>, vector<1x3xf32>
    %12 = vector.broadcast %11 : vector<1x3xf32> to vector<2x3xf32>
    %13 = arith.addf %10, %12 : vector<2x3xf32>
    %c0_11 = arith.constant 0 : index
    %c0_12 = arith.constant 0 : index
    %14 = vector.load %arg6[%c0_11, %c0_12] : memref<2x3xf32, #tpu.memory_space<vmem>>, vector<2x3xf32>
    tpu.vector_store %arg6[%c0_11, %c0_12], %13 {strides = array<i32>} : memref<2x3xf32, #tpu.memory_space<vmem>>, vector<2x3xf32>,
    return
  }
  func.func @transform_0(%arg0: i32) -> (i32, i32) {
    %c0_i32 = arith.constant 0 : i32
    %c0_i32_0 = arith.constant 0 : i32
    %c0_i32_1 = arith.constant 0 : i32
    return %c0_i32, %c0_i32_0 : i32, i32
  }
  func.func @transform_1(%arg0: i32) -> (i32, i32) {
    %c0_i32 = arith.constant 0 : i32
    %c0_i32_0 = arith.constant 0 : i32
    %c0_i32_1 = arith.constant 0 : i32
    return %c0_i32, %c0_i32_0 : i32, i32
  }
  func.func @transform_2(%arg0: i32) -> (i32, i32) {
    %c0_i32 = arith.constant 0 : i32
    %c0_i32_0 = arith.constant 0 : i32
    %c0_i32_1 = arith.constant 0 : i32
    return %c0_i32, %c0_i32_0 : i32, i32
  }
  func.func @transform_3(%arg0: i32) -> (i32, i32) {
    %c0_i32 = arith.constant 0 : i32
    %c0_i32_0 = arith.constant 0 : i32
    %c0_i32_1 = arith.constant 0 : i32
    return %c0_i32, %c0_i32_0 : i32, i32
  }
  func.func @transform_4(%arg0: i32) -> (i32, i32) {
    %c0_i32 = arith.constant 0 : i32
    %c0_i32_0 = arith.constant 0 : i32
    %c0_i32_1 = arith.constant 0 : i32
    return %c0_i32, %c0_i32_0 : i32, i32
  }
  func.func @transform_5(%arg0: i32) -> (i32, i32) {
    %c0_i32 = arith.constant 0 : i32
    %c0_i32_0 = arith.constant 0 : i32
    %c0_i32_1 = arith.constant 0 : i32
    return %c0_i32, %c0_i32_0 : i32, i32
  }
}

</mosaic_0001>

<llo_original>
// kernel: model_forward.4
$region0: #{model_forward.4}
  #allocation0 [shape = 'u32[]', space=smem, size = 0x4, offset = 0x4, fixed_abs, tag = 'smem constant byte address 0x4 - core index']
  #allocation1 [shape = 'u32[144,128]{1,0:T(1,128)}', space=vmem, size = 0x12000, scoped, tag = 'internal scratch']
  %s0 = inlined_call_operand.vmem [shape: bf16[2,8192,512], index: 0, kind: input, shape index: {}]
  %s1 = inlined_call_operand.hbm [shape: bf16[16,96], index: 1, kind: input, shape index: {}]
  %s2 = inlined_call_operand.vmem [shape: f32[8,1], index: 2, kind: input, shape index: {}]
  %s3 = inlined_call_operand.vmem [shape: bf16[2,254,6,254], index: 3, kind: output, shape index: {}]
  %s4 = sld [smem:[#allocation0]]
  $region56: #{model_forward.4} parent=0
    _
  %s6 = ssub.s32 1, %s4
  %s7 = scalar_select 0, %s6, %s4
  $region1: #{model_forward.4} parent=0
    #allocation2 [shape = 'u8[4096]{0}', space=vmem, size = 0x1000, scoped, tag = 'input window, operand 1, single buffered']
    #allocation3 [shape = 's32[2]{0}', space=sflag, size = 0x8, scoped, tag = 'scoped memory for model_forward.4']
    %8 = vsyncpa [#allocation3], 0
    loop: start=0, step=1, limit=4
    $region2: #{model_forward.4} parent=1 // loop_pre_header
      _
    $region3: #{model_forward.4} parent=1 // loop_header
      %s10 = sphi 0, %s14
      %p11 = scmp.ge.s32.totalorder %s10, 4
      %s20 = sphi 0, %s22
      %s23 = sphi 0, %s20
      %s24 = sphi 0, %s23
      %s40 = sphi 0, %s24
      %s44 = sphi 0, %s44
      %s46 = sphi 0, %s44
      %s47 = sphi 0, %s46
      %s61 = sphi 0, %s47
      %s65 = sphi 0, %s65
      %s67 = sphi 0, %s65
      %s68 = sphi 0, %s67
      %s82 = sphi 0, %s68
      %s88 = sphi 0, %s90
      %s91 = sphi 0, %s88
      %s92 = sphi 0, %s91
      %s108 = sphi 0, %s92
    $region4: #{model_forward.4} parent=1 // loop_header_branch
      %13 = sbr.rel (%p11) target = $region8
    $region5: #{model_forward.4} parent=1 // loop_body
      %s15 = ssub.s32 %s10, 1
      %s16 = ssub.s32 %s10, 2
      %s17 = sadd.s32 %s10, 1
      %s18 = ssub.s32 %s10, %s17
      %p19 = scmp.eq.s32.totalorder %s18, 0
      %s21 = sadd.s32 %s20, 1
      %s22 = scalar_select %p19, %s20, %s21
      %p25 = pneg %p19
      %p26 = scmp.eq.s32.totalorder %s10, 1
      %p27 = por %p25, %p26
      %p28 = scmp.ne.s32.totalorder %s20, %s23
      %p29 = scmp.eq.s32.totalorder %s10, 0
      %p30 = por %p28, %p29
      %p31 = scmp.ne.s32.totalorder %s20, %s23
      %p32 = scmp.eq.s32.totalorder %s15, 1
      %p33 = por %p31, %p32
      %p34 = scmp.ne.s32.totalorder %s23, %s24
      %p35 = scmp.eq.s32.totalorder %s15, 0
      %p36 = por %p34, %p35
      %p37 = scmp.ne.s32.totalorder %s23, %s24
      %p38 = scmp.eq.s32.totalorder %s16, 1
      %p39 = por %p37, %p38
      %p41 = scmp.ne.s32.totalorder %s24, %s40
      %p42 = scmp.eq.s32.totalorder %s16, 0
      %p43 = por %p41, %p42
      %s45 = sadd.s32 %s44, 1
      %p48 = scmp.eq.s32.totalorder %s10, 1
      %p49 = scmp.ne.s32.totalorder %s44, %s46
      %p50 = scmp.eq.s32.totalorder %s10, 0
      %p51 = por %p49, %p50
      %p52 = scmp.ne.s32.totalorder %s44, %s46
      %p53 = scmp.eq.s32.totalorder %s15, 1
      %p54 = por %p52, %p53
      %p55 = scmp.ne.s32.totalorder %s46, %s47
      %p56 = scmp.eq.s32.totalorder %s15, 0
      %p57 = por %p55, %p56
      %p58 = scmp.ne.s32.totalorder %s46, %s47
      %p59 = scmp.eq.s32.totalorder %s16, 1
      %p60 = por %p58, %p59
      %p62 = scmp.ne.s32.totalorder %s47, %s61
      %p63 = scmp.eq.s32.totalorder %s16, 0
      %p64 = por %p62, %p63
      %s66 = sadd.s32 %s65, 1
      %p69 = scmp.eq.s32.totalorder %s10, 1
      %p70 = scmp.ne.s32.totalorder %s65, %s67
      %p71 = scmp.eq.s32.totalorder %s10, 0
      %p72 = por %p70, %p71
      %p73 = scmp.ne.s32.totalorder %s65, %s67
      %p74 = scmp.eq.s32.totalorder %s15, 1
      %p75 = por %p73, %p74
      %p76 = scmp.ne.s32.totalorder %s67, %s68
      %p77 = scmp.eq.s32.totalorder %s15, 0
      %p78 = por %p76, %p77
      %p79 = scmp.ne.s32.totalorder %s67, %s68
      %p80 = scmp.eq.s32.totalorder %s16, 1
      %p81 = por %p79, %p80
      %p83 = scmp.ne.s32.totalorder %s68, %s82
      %p84 = scmp.eq.s32.totalorder %s16, 0
      %p85 = por %p83, %p84
      %s86 = ssub.s32 %s10, %s17
      %p87 = scmp.eq.s32.totalorder %s86, 0
      %s89 = sadd.s32 %s88, 1
      %s90 = scalar_select %p87, %s88, %s89
      %p93 = pneg %p87
      %p94 = scmp.eq.s32.totalorder %s10, 1
      %p95 = por %p93, %p94
      %p96 = scmp.ne.s32.totalorder %s88, %s91
      %p97 = scmp.eq.s32.totalorder %s10, 0
      %p98 = por %p96, %p97
      %p99 = scmp.ne.s32.totalorder %s88, %s91
      %p100 = scmp.eq.s32.totalorder %s15, 1
      %p101 = por %p99, %p100
      %p102 = scmp.ne.s32.totalorder %s91, %s92
      %p103 = scmp.eq.s32.totalorder %s15, 0
      %p104 = por %p102, %p103
      %p105 = scmp.ne.s32.totalorder %s91, %s92
      %p106 = scmp.eq.s32.totalorder %s16, 1
      %p107 = por %p105, %p106
      %p109 = scmp.ne.s32.totalorder %s92, %s108
      %p110 = scmp.eq.s32.totalorder %s16, 0
      %p111 = por %p109, %p110
      %p112 = scmp.le.s32.totalorder 1, %s10
      %p113 = scmp.lt.s32.totalorder %s10, 3
      %p114 = pnand %p112, %p113
      %p115 = pneg %p114
      // Predicated region
      $region9: #{model_forward.4} parent=5 // pred_check
        _
      $region10: #{model_forward.4} parent=5 // pred_check_branch
        %117 = sbr.rel (%p114) target = $region12
      $region11: #{model_forward.4} parent=5 // pred_region
        %s118 = ssub.s32 %s10, 1
        // Predicated region
        $region13: #{model_forward.4} parent=11 // pred_check
          %p119 = pneg %p57
        $region14: #{model_forward.4} parent=11 // pred_check_branch
          %121 = sbr.rel (%p119) target = $region16
        $region15: #{model_forward.4} parent=11 // pred_region
          %s123 = ssub.s32 128, 128
          %124 = vsyncadd [#allocation3], %s123
          %s125 = sshll.u32 [#allocation2], 4
          %s126 = int_to_ptr.vmem [resolvable:$true] %s125
          %131 = dma.hbm_to_vmem [thread:$0]  %s1, 128, %s126, [#allocation3], 64, 64, 4
        $region16: #{model_forward.4} parent=11 // pred_fallthru
          _
        // Predicated region
        $region17: #{model_forward.4} parent=11 // pred_check
          %p132 = pneg %p78
        $region18: #{model_forward.4} parent=11 // pred_check_branch
          %134 = sbr.rel (%p132) target = $region20
        $region19: #{model_forward.4} parent=11 // pred_region
          _
        $region20: #{model_forward.4} parent=11 // pred_fallthru
          _
      $region12: #{model_forward.4} parent=5 // pred_fallthru
        _
      %p135 = scmp.lt.s32.totalorder %s10, 2
      // Predicated region
      $region21: #{model_forward.4} parent=5 // pred_check
        %p136 = pneg %p135
      $region22: #{model_forward.4} parent=5 // pred_check_branch
        %138 = sbr.rel (%p136) target = $region24
      $region23: #{model_forward.4} parent=5 // pred_region
        // Predicated region
        $region25: #{model_forward.4} parent=23 // pred_check
          %p139 = pneg %p30
        $region26: #{model_forward.4} parent=23 // pred_check_branch
          %141 = sbr.rel (%p139) target = $region28
        $region27: #{model_forward.4} parent=23 // pred_region
          %p142 = scmp.lt.s32.totalorder %s10, 1
          %s143 = scalar_select %p142, %s10, 1
          %s144 = smul.addr %s143, 4096
          %s145 = smul.addr %s144, 4
          %s146 = scalar_lea.vmem %s0, %s145
        $region28: #{model_forward.4} parent=23 // pred_fallthru
          _
      $region24: #{model_forward.4} parent=5 // pred_fallthru
        _
      %p147 = scmp.le.s32.totalorder 1, %s10
      %p148 = scmp.lt.s32.totalorder %s10, 3
      %p149 = pnand %p147, %p148
      %p150 = pneg %p149
      // Predicated region
      $region29: #{model_forward.4} parent=5 // pred_check
        _
      $region30: #{model_forward.4} parent=5 // pred_check_branch
        %152 = sbr.rel (%p149) target = $region32
      $region31: #{model_forward.4} parent=5 // pred_region
        %s153 = ssub.s32 %s10, 1
        // Predicated region
        $region33: #{model_forward.4} parent=31 // pred_check
          %p154 = pneg %p57
        $region34: #{model_forward.4} parent=31 // pred_check_branch
          %156 = sbr.rel (%p154) target = $region36
        $region35: #{model_forward.4} parent=31 // pred_region
          %157 = dma.done [#allocation3], 128
        $region36: #{model_forward.4} parent=31 // pred_fallthru
          _
        %p158 = scmp.lt.s32.totalorder %s15, 1
        %s159 = scalar_select %p158, %s15, 1
        %s160 = smul.addr %s159, 4096
        %s161 = smul.addr %s160, 4
        %s162 = scalar_lea.vmem %s0, %s161
        %p163 = pneg %p36
        %p164 = pneg %p33
        %p165 = pneg %p57
        %p166 = pneg %p54
        %p167 = pneg %p78
        %p168 = pneg %p75
        %p169 = pneg %p104
        %p170 = pneg %p101
        %p171 = scmp.lt.s32.totalorder %s15, 1
        %s172 = scalar_select %p171, %s15, 1
        %s173 = smul.addr %s172, 508
        %s174 = smul.addr %s173, 4
        %s175 = scalar_lea.vmem %s3, %s174
        %p176 = scmp.lt.s32.totalorder %s15, 1
        %s177 = scalar_select %p176, %s15, 1
        %s178 = smul.addr %s177, 4096
        %s179 = smul.addr %s178, 4
        %s180 = scalar_lea.vmem %s0, %s179
        %p181 = scmp.lt.s32.totalorder %s15, 1
        %s182 = scalar_select %p181, %s15, 1
        %s183 = smul.addr %s182, 508
        %s184 = smul.addr %s183, 4
        %s185 = scalar_lea.vmem %s3, %s184
        %v187 = vld [vmem:[#allocation2] sm:$0xf]
        %v188 = vld [vmem:[#allocation2 + $0x4] sm:$0xf]
        %v189 = vld [vmem:[%s2] sm:$0xff]
        loop: start=0, step=1, limit=254
        $region37: #{model_forward.4} parent=31 // loop_pre_header
          _
        $region38: #{model_forward.4} parent=31 // loop_header
          %s191 = sphi 0, %s195
          %p192 = scmp.ge.s32.totalorder %s191, 254
        $region39: #{model_forward.4} parent=31 // loop_header_branch
          %194 = sbr.rel (%p192) target = $region43
        $region40: #{model_forward.4} parent=31 // loop_body
          %s196 = smul.u32 %s191, 32
          %s197 = sshra.s32 %s196, 3
          %s198 = sand.u32 %s196, 7
          %s199 = smul.u32 %s197, 4
          %s200 = smul.addr %s199, 4
          %s201 = scalar_lea.vmem %s180, %s200
          %v202 = vld [vmem:[%s201] sm:$0xff]
          %v203 = vld [vmem:[%s201 + $0x8] sm:$0xff]
          %v204 = vld [vmem:[%s201 + $0x10] sm:$0xff]
          %v205 = vld [vmem:[%s201 + $0x18] sm:$0xff]
          %v206 = vld [vmem:[%s201 + $0x20] sm:$0xff]
          %v207 = vld [vmem:[%s201 + $0x28] sm:$0xff]
          %v208 = vld [vmem:[%s201 + $0x30] sm:$0xff]
          %v209 = vld [vmem:[%s201 + $0x38] sm:$0xff]
          %v210 = vld [vmem:[%s201 + $0x40] sm:$0xff]
          %v211 = vld [vmem:[%s201 + $0x48] sm:$0xff]
          %v212 = vld [vmem:[%s201 + $0x50] sm:$0xff]
          %v213 = vld [vmem:[%s201 + $0x58] sm:$0xff]
          %v214 = vld [vmem:[%s201 + $0x60] sm:$0xff]
          %v215 = vld [vmem:[%s201 + $0x68] sm:$0xff]
          %v216 = vld [vmem:[%s201 + $0x70] sm:$0xff]
          %v217 = vld [vmem:[%s201 + $0x78] sm:$0xff]
          %v218 = vld [vmem:[%s201 + $0x80] sm:$0xff]
          %v219 = vld [vmem:[%s201 + $0x88] sm:$0xff]
          %v220 = vld [vmem:[%s201 + $0x90] sm:$0xff]
          %v221 = vld [vmem:[%s201 + $0x98] sm:$0xff]
          %v222 = vld [vmem:[%s201 + $0xa0] sm:$0xff]
          %v223 = vld [vmem:[%s201 + $0xa8] sm:$0xff]
          %v224 = vld [vmem:[%s201 + $0xb0] sm:$0xff]
          %v225 = vld [vmem:[%s201 + $0xb8] sm:$0xff]
          %v228 = vunpack.c.l.b16 %v187
          %v229 = vunpack.c.l.b16 %v188
          %v230 = vpack.c.b16 %v229, %v228
          %v255 = vunpack.c.l.b16 %v202
          %v256 = vunpack.c.h.b16 %v202
          %v257 = vunpack.c.l.b16 %v203
          %v258 = vunpack.c.h.b16 %v203
          %v259 = vunpack.c.l.b16 %v204
          %v260 = vunpack.c.h.b16 %v204
          %v261 = vunpack.c.l.b16 %v205
          %v262 = vunpack.c.h.b16 %v205
          %v263 = vunpack.c.l.b16 %v206
          %v264 = vunpack.c.h.b16 %v206
          %v265 = vunpack.c.l.b16 %v207
          %v266 = vunpack.c.h.b16 %v207
          %v267 = vunpack.c.l.b16 %v208
          %v268 = vunpack.c.h.b16 %v208
          %v269 = vunpack.c.l.b16 %v209
          %v270 = vunpack.c.h.b16 %v209
          %v271 = vunpack.c.l.b16 %v210
          %v272 = vunpack.c.h.b16 %v210
          %v273 = vunpack.c.l.b16 %v211
          %v274 = vunpack.c.h.b16 %v211
          %v275 = vunpack.c.l.b16 %v212
          %v276 = vunpack.c.h.b16 %v212
          %v277 = vunpack.c.l.b16 %v213
          %v278 = vunpack.c.h.b16 %v213
          %v279 = vunpack.c.l.b16 %v214
          %v280 = vunpack.c.h.b16 %v214
          %v281 = vunpack.c.l.b16 %v215
          %v282 = vunpack.c.h.b16 %v215
          %v283 = vunpack.c.l.b16 %v216
          %v284 = vunpack.c.h.b16 %v216
          %v285 = vunpack.c.l.b16 %v217
          %v286 = vunpack.c.h.b16 %v217
          %v287 = vunpack.c.l.b16 %v218
          %v288 = vunpack.c.h.b16 %v218
          %v289 = vunpack.c.l.b16 %v219
          %v290 = vunpack.c.h.b16 %v219
          %v291 = vunpack.c.l.b16 %v220
          %v292 = vunpack.c.h.b16 %v220
          %v293 = vunpack.c.l.b16 %v221
          %v294 = vunpack.c.h.b16 %v221
          %v295 = vunpack.c.l.b16 %v222
          %v296 = vunpack.c.h.b16 %v222
          %v297 = vunpack.c.l.b16 %v223
          %v298 = vunpack.c.h.b16 %v223
          %v299 = vunpack.c.l.b16 %v224
          %v300 = vunpack.c.h.b16 %v224
          %v301 = vunpack.c.l.b16 %v225
          %v302 = vunpack.c.h.b16 %v225
          %v303 = vpack.c.b16 %v259, %v255
          %v304 = vpack.c.b16 %v260, %v256
          %v305 = vpack.c.b16 %v261, %v257
          %v306 = vpack.c.b16 %v262, %v258
          %v307 = vpack.c.b16 %v267, %v263
          %v308 = vpack.c.b16 %v268, %v264
          %v309 = vpack.c.b16 %v269, %v265
          %v310 = vpack.c.b16 %v270, %v266
          %v311 = vpack.c.b16 %v275, %v271
          %v312 = vpack.c.b16 %v276, %v272
          %v313 = vpack.c.b16 %v277, %v273
          %v314 = vpack.c.b16 %v278, %v274
          %v315 = vpack.c.b16 %v283, %v279
          %v316 = vpack.c.b16 %v284, %v280
          %v317 = vpack.c.b16 %v285, %v281
          %v318 = vpack.c.b16 %v286, %v282
          %v319 = vpack.c.b16 %v291, %v287
          %v320 = vpack.c.b16 %v292, %v288
          %v321 = vpack.c.b16 %v293, %v289
          %v322 = vpack.c.b16 %v294, %v290
          %v323 = vpack.c.b16 %v299, %v295
          %v324 = vpack.c.b16 %v300, %v296
          %v325 = vpack.c.b16 %v301, %v297
          %v326 = vpack.c.b16 %v302, %v298
          %vm351 = vcmask 785408
          %v353 = vsel %vm351, %v230, 0
          %355 = vmatprep.subr.bf16.mxu0 %v304
          %356 = vmatpush1.bf16.msra.mxu0 %v303
          %357 = vmatprep.subr.bf16.mxu0 %v308
          %358 = vmatpush1.bf16.msra.mxu0 %v307
          %359 = vmatprep.subr.bf16.mxu0 %v312
          %360 = vmatpush1.bf16.msra.mxu0 %v311
          %361 = vmatprep.subr.bf16.mxu0 %v316
          %362 = vmatpush1.bf16.msra.mxu0 %v315
          %363 = vmatprep.subr.bf16.mxu0 %v320
          %364 = vmatpush1.bf16.msra.mxu0 %v319
          %365 = vmatprep.subr.bf16.mxu0 %v324
          %366 = vmatpush1.bf16.msra.mxu0 %v323
          %367 = vmatprep.subr.bf16.mxu0 0
          %368 = vmatpush1.bf16.msra.mxu0 0
          %369 = vmatprep.subr.bf16.mxu0 0
          %370 = vmatpush1.bf16.msra.mxu0 0
          %371 = vmatprep.subr.bf16.mxu0 0
          %372 = vmatpush1.bf16.msra.mxu0 0
          %373 = vmatprep.subr.bf16.mxu0 0
          %374 = vmatpush1.bf16.msra.mxu0 0
          %375 = vmatprep.subr.bf16.mxu0 0
          %376 = vmatpush1.bf16.msra.mxu0 0
          %377 = vmatprep.subr.bf16.mxu0 0
          %378 = vmatpush1.bf16.msra.mxu0 0
          %379 = vmatprep.subr.bf16.mxu0 0
          %380 = vmatpush1.bf16.msra.mxu0 0
          %381 = vmatprep.subr.bf16.mxu0 0
          %382 = vmatpush1.bf16.msra.mxu0 0
          %383 = vmatprep.subr.bf16.mxu0 0
          %384 = vmatpush1.bf16.msra.mxu0 0
          %385 = vmatprep.subr.bf16.mxu0 0
          %386 = vmatpush1.bf16.msra.mxu0 0
          %387 = vmatprep.mubr.bf16.mxu0 0
          %388 = vmatmul.mubr.bf16.gmra.mrb[0].mxu0 %v353
          %v389 = vpop.f32.mrb[0].mxu0
          %v390 = vadd.f32 0.0, %v389
          %v391 = vpop.f32.mrb[0].mxu0
          %v392 = vadd.f32 0.0, %v391
          %v393 = vpop.f32.mrb[0].mxu0
          %v394 = vadd.f32 0.0, %v393
          %v395 = vpop.f32.mrb[0].mxu0
          %v396 = vadd.f32 0.0, %v395
          %397 = vdwg.mxu0
          %398 = vmatprep.subr.bf16.mxu0 %v306
          %399 = vmatpush1.bf16.msra.mxu0 %v305
          %400 = vmatprep.subr.bf16.mxu0 %v310
          %401 = vmatpush1.bf16.msra.mxu0 %v309
          %402 = vmatprep.subr.bf16.mxu0 %v314
          %403 = vmatpush1.bf16.msra.mxu0 %v313
          %404 = vmatprep.subr.bf16.mxu0 %v318
          %405 = vmatpush1.bf16.msra.mxu0 %v317
          %406 = vmatprep.subr.bf16.mxu0 %v322
          %407 = vmatpush1.bf16.msra.mxu0 %v321
          %408 = vmatprep.subr.bf16.mxu0 %v326
          %409 = vmatpush1.bf16.msra.mxu0 %v325
          %410 = vmatprep.subr.bf16.mxu0 0
          %411 = vmatpush1.bf16.msra.mxu0 0
          %412 = vmatprep.subr.bf16.mxu0 0
          %413 = vmatpush1.bf16.msra.mxu0 0
          %414 = vmatprep.subr.bf16.mxu0 0
          %415 = vmatpush1.bf16.msra.mxu0 0
          %416 = vmatprep.subr.bf16.mxu0 0
          %417 = vmatpush1.bf16.msra.mxu0 0
          %418 = vmatprep.subr.bf16.mxu0 0
          %419 = vmatpush1.bf16.msra.mxu0 0
          %420 = vmatprep.subr.bf16.mxu0 0
          %421 = vmatpush1.bf16.msra.mxu0 0
          %422 = vmatprep.subr.bf16.mxu0 0
          %423 = vmatpush1.bf16.msra.mxu0 0
          %424 = vmatprep.subr.bf16.mxu0 0
          %425 = vmatpush1.bf16.msra.mxu0 0
          %426 = vmatprep.subr.bf16.mxu0 0
          %427 = vmatpush1.bf16.msra.mxu0 0
          %428 = vmatprep.subr.bf16.mxu0 0
          %429 = vmatpush1.bf16.msra.mxu0 0
          %430 = vmatprep.mubr.bf16.mxu0 0
          %431 = vmatmul.mubr.bf16.gmra.mrb[0].mxu0 %v353
          %v432 = vpop.f32.mrb[0].mxu0
          %v433 = vadd.f32 0.0, %v432
          %v434 = vpop.f32.mrb[0].mxu0
          %v435 = vadd.f32 0.0, %v434
          %v436 = vpop.f32.mrb[0].mxu0
          %v437 = vadd.f32 0.0, %v436
          %v438 = vpop.f32.mrb[0].mxu0
          %v439 = vadd.f32 0.0, %v438
          %440 = vdwg.mxu0
          %v441 = vmax.f32 %v390, %v394
          %v442 = vmax.f32 %v392, %v396
          %v443 = vmax.f32 %v433, %v437
          %v444 = vmax.f32 %v435, %v439
          %v445 = vmax.f32 %v441, %v443
          %v446 = vmax.f32 %v442, %v444
          %448 = vset.pattern.permute.xlu0 0
          %449 = vperm.xlu0 %448, %v189
          %v450 = vpop.permute.xlu0 %449
          %v452 = vadd.f32 %v445, %v450
          %v453 = vadd.f32 %v446, %v450
          %v454 = vmax.f32 %v452, 0.0
          %v455 = vmax.f32 %v453, 0.0
          %v456 = vpack.c.bf16 %v454, %v454
          %v457 = vpack.c.bf16 %v455, %v455
          %v460 = vunpack.c.l.b16 %v456
          %v461 = vunpack.c.l.b16 %v457
          %v462 = vpack.c.b16 %v461, %v460
          %s464 = smul.u32 %s191, 2
          %s465 = smul.addr %s464, 4
          %s466 = scalar_lea.vmem %s185, %s465
          %vm467 = vcmask 1042432
          %vm468 = vcmask 1030148
          %vm469 = vmor %vm468, %vm467
          %470 = vst.msk [vmem:[%s466] sm:$0x77] %vm469, %v462
        $region41: #{model_forward.4} parent=31 // loop_footer
          %s195 = sadd.s32 1, %s191
        $region42: #{model_forward.4} parent=31 // loop_footer_branch
          %190 = sbr.rel target = $region38
        $region43: #{model_forward.4} parent=31 // loop_exit
          _
        %p471 = scmp.lt.s32.totalorder %s15, 1
        %s472 = scalar_select %p471, %s15, 1
        %s473 = smul.addr %s472, 508
        %s474 = smul.addr %s473, 4
        %s475 = scalar_lea.vmem %s3, %s474
        // Predicated region
        $region44: #{model_forward.4} parent=31 // pred_check
          %p476 = pneg %p101
        $region45: #{model_forward.4} parent=31 // pred_check_branch
          %478 = sbr.rel (%p476) target = $region47
        $region46: #{model_forward.4} parent=31 // pred_region
          _
        $region47: #{model_forward.4} parent=31 // pred_fallthru
          _
      $region32: #{model_forward.4} parent=5 // pred_fallthru
        _
      %p479 = scmp.le.s32.totalorder 2, %s10
      // Predicated region
      $region48: #{model_forward.4} parent=5 // pred_check
        %p480 = pneg %p479
      $region49: #{model_forward.4} parent=5 // pred_check_branch
        %482 = sbr.rel (%p480) target = $region51
      $region50: #{model_forward.4} parent=5 // pred_region
        %s483 = ssub.s32 %s10, 2
        // Predicated region
        $region52: #{model_forward.4} parent=50 // pred_check
          %p484 = pneg %p107
        $region53: #{model_forward.4} parent=50 // pred_check_branch
          %486 = sbr.rel (%p484) target = $region55
        $region54: #{model_forward.4} parent=50 // pred_region
          %p487 = scmp.lt.s32.totalorder %s16, 1
          %s488 = scalar_select %p487, %s16, 1
          %s489 = smul.addr %s488, 508
          %s490 = smul.addr %s489, 4
          %s491 = scalar_lea.vmem %s3, %s490
        $region55: #{model_forward.4} parent=50 // pred_fallthru
          _
      $region51: #{model_forward.4} parent=5 // pred_fallthru
        _
    $region6: #{model_forward.4} parent=1 // loop_footer
      %s14 = sadd.s32 1, %s10
    $region7: #{model_forward.4} parent=1 // loop_footer_branch
      %9 = sbr.rel target = $region3
    $region8: #{model_forward.4} parent=1 // loop_exit
      _
    %492 = vsyncpa [#allocation3], 1
    %s493 = scalar_lea.sflag [#allocation3], 1
    %494 = vsyncpa %s493, 1

// kernel: model_forward.5
$region0: #{model_forward.5}
  #allocation0 [shape = 'u32[]', space=smem, size = 0x4, offset = 0x4, fixed_abs, tag = 'smem constant byte address 0x4 - core index']
  #allocation1 [shape = 'u32[144,128]{1,0:T(1,128)}', space=vmem, size = 0x12000, scoped, tag = 'internal scratch']
  %s0 = inlined_call_operand.vmem [shape: bf16[2,8128,256], index: 0, kind: input, shape index: {}]
  %s1 = inlined_call_operand.vmem [shape: bf16[32,192], index: 1, kind: input, shape index: {}]
  %s2 = inlined_call_operand.vmem [shape: f32[16,1], index: 2, kind: input, shape index: {}]
  %s3 = inlined_call_operand.vmem [shape: bf16[2,125,16,125], index: 3, kind: output, shape index: {}]
  %s4 = sld [smem:[#allocation0]]
  $region52: #{model_forward.5} parent=0
    _
  %s6 = ssub.s32 1, %s4
  %s7 = scalar_select 0, %s6, %s4
  loop: start=0, step=1, limit=4
  $region2: #{model_forward.5} parent=0 // loop_pre_header
    _
  $region3: #{model_forward.5} parent=0 // loop_header
    %s9 = sphi 0, %s13
    %p10 = scmp.ge.s32.totalorder %s9, 4
    %s19 = sphi 0, %s21
    %s22 = sphi 0, %s19
    %s23 = sphi 0, %s22
    %s39 = sphi 0, %s23
    %s43 = sphi 0, %s43
    %s45 = sphi 0, %s43
    %s46 = sphi 0, %s45
    %s60 = sphi 0, %s46
    %s64 = sphi 0, %s64
    %s66 = sphi 0, %s64
    %s67 = sphi 0, %s66
    %s81 = sphi 0, %s67
    %s87 = sphi 0, %s89
    %s90 = sphi 0, %s87
    %s91 = sphi 0, %s90
    %s107 = sphi 0, %s91
  $region4: #{model_forward.5} parent=0 // loop_header_branch
    %12 = sbr.rel (%p10) target = $region8
  $region5: #{model_forward.5} parent=0 // loop_body
    %s14 = ssub.s32 %s9, 1
    %s15 = ssub.s32 %s9, 2
    %s16 = sadd.s32 %s9, 1
    %s17 = ssub.s32 %s9, %s16
    %p18 = scmp.eq.s32.totalorder %s17, 0
    %s20 = sadd.s32 %s19, 1
    %s21 = scalar_select %p18, %s19, %s20
    %p24 = pneg %p18
    %p25 = scmp.eq.s32.totalorder %s9, 1
    %p26 = por %p24, %p25
    %p27 = scmp.ne.s32.totalorder %s19, %s22
    %p28 = scmp.eq.s32.totalorder %s9, 0
    %p29 = por %p27, %p28
    %p30 = scmp.ne.s32.totalorder %s19, %s22
    %p31 = scmp.eq.s32.totalorder %s14, 1
    %p32 = por %p30, %p31
    %p33 = scmp.ne.s32.totalorder %s22, %s23
    %p34 = scmp.eq.s32.totalorder %s14, 0
    %p35 = por %p33, %p34
    %p36 = scmp.ne.s32.totalorder %s22, %s23
    %p37 = scmp.eq.s32.totalorder %s15, 1
    %p38 = por %p36, %p37
    %p40 = scmp.ne.s32.totalorder %s23, %s39
    %p41 = scmp.eq.s32.totalorder %s15, 0
    %p42 = por %p40, %p41
    %s44 = sadd.s32 %s43, 1
    %p47 = scmp.eq.s32.totalorder %s9, 1
    %p48 = scmp.ne.s32.totalorder %s43, %s45
    %p49 = scmp.eq.s32.totalorder %s9, 0
    %p50 = por %p48, %p49
    %p51 = scmp.ne.s32.totalorder %s43, %s45
    %p52 = scmp.eq.s32.totalorder %s14, 1
    %p53 = por %p51, %p52
    %p54 = scmp.ne.s32.totalorder %s45, %s46
    %p55 = scmp.eq.s32.totalorder %s14, 0
    %p56 = por %p54, %p55
    %p57 = scmp.ne.s32.totalorder %s45, %s46
    %p58 = scmp.eq.s32.totalorder %s15, 1
    %p59 = por %p57, %p58
    %p61 = scmp.ne.s32.totalorder %s46, %s60
    %p62 = scmp.eq.s32.totalorder %s15, 0
    %p63 = por %p61, %p62
    %s65 = sadd.s32 %s64, 1
    %p68 = scmp.eq.s32.totalorder %s9, 1
    %p69 = scmp.ne.s32.totalorder %s64, %s66
    %p70 = scmp.eq.s32.totalorder %s9, 0
    %p71 = por %p69, %p70
    %p72 = scmp.ne.s32.totalorder %s64, %s66
    %p73 = scmp.eq.s32.totalorder %s14, 1
    %p74 = por %p72, %p73
    %p75 = scmp.ne.s32.totalorder %s66, %s67
    %p76 = scmp.eq.s32.totalorder %s14, 0
    %p77 = por %p75, %p76
    %p78 = scmp.ne.s32.totalorder %s66, %s67
    %p79 = scmp.eq.s32.totalorder %s15, 1
    %p80 = por %p78, %p79
    %p82 = scmp.ne.s32.totalorder %s67, %s81
    %p83 = scmp.eq.s32.totalorder %s15, 0
    %p84 = por %p82, %p83
    %s85 = ssub.s32 %s9, %s16
    %p86 = scmp.eq.s32.totalorder %s85, 0
    %s88 = sadd.s32 %s87, 1
    %s89 = scalar_select %p86, %s87, %s88
    %p92 = pneg %p86
    %p93 = scmp.eq.s32.totalorder %s9, 1
    %p94 = por %p92, %p93
    %p95 = scmp.ne.s32.totalorder %s87, %s90
    %p96 = scmp.eq.s32.totalorder %s9, 0
    %p97 = por %p95, %p96
    %p98 = scmp.ne.s32.totalorder %s87, %s90
    %p99 = scmp.eq.s32.totalorder %s14, 1
    %p100 = por %p98, %p99
    %p101 = scmp.ne.s32.totalorder %s90, %s91
    %p102 = scmp.eq.s32.totalorder %s14, 0
    %p103 = por %p101, %p102
    %p104 = scmp.ne.s32.totalorder %s90, %s91
    %p105 = scmp.eq.s32.totalorder %s15, 1
    %p106 = por %p104, %p105
    %p108 = scmp.ne.s32.totalorder %s91, %s107
    %p109 = scmp.eq.s32.totalorder %s15, 0
    %p110 = por %p108, %p109
    %p111 = scmp.le.s32.totalorder 1, %s9
    %p112 = scmp.lt.s32.totalorder %s9, 3
    %p113 = pnand %p111, %p112
    %p114 = pneg %p113
    // Predicated region
    $region9: #{model_forward.5} parent=5 // pred_check
      _
    $region10: #{model_forward.5} parent=5 // pred_check_branch
      %116 = sbr.rel (%p113) target = $region12
    $region11: #{model_forward.5} parent=5 // pred_region
      %s117 = ssub.s32 %s9, 1
      // Predicated region
      $region13: #{model_forward.5} parent=11 // pred_check
        %p118 = pneg %p56
      $region14: #{model_forward.5} parent=11 // pred_check_branch
        %120 = sbr.rel (%p118) target = $region16
      $region15: #{model_forward.5} parent=11 // pred_region
        _
      $region16: #{model_forward.5} parent=11 // pred_fallthru
        _
      // Predicated region
      $region17: #{model_forward.5} parent=11 // pred_check
        %p121 = pneg %p77
      $region18: #{model_forward.5} parent=11 // pred_check_branch
        %123 = sbr.rel (%p121) target = $region20
      $region19: #{model_forward.5} parent=11 // pred_region
        _
      $region20: #{model_forward.5} parent=11 // pred_fallthru
        _
    $region12: #{model_forward.5} parent=5 // pred_fallthru
      _
    %p124 = scmp.lt.s32.totalorder %s9, 2
    // Predicated region
    $region21: #{model_forward.5} parent=5 // pred_check
      %p125 = pneg %p124
    $region22: #{model_forward.5} parent=5 // pred_check_branch
      %127 = sbr.rel (%p125) target = $region24
    $region23: #{model_forward.5} parent=5 // pred_region
      // Predicated region
      $region25: #{model_forward.5} parent=23 // pred_check
        %p128 = pneg %p29
      $region26: #{model_forward.5} parent=23 // pred_check_branch
        %130 = sbr.rel (%p128) target = $region28
      $region27: #{model_forward.5} parent=23 // pred_region
        %p131 = scmp.lt.s32.totalorder %s9, 1
        %s132 = scalar_select %p131, %s9, 1
        %s133 = smul.addr %s132, 2032
        %s134 = smul.addr %s133, 4
        %s135 = scalar_lea.vmem %s0, %s134
      $region28: #{model_forward.5} parent=23 // pred_fallthru
        _
    $region24: #{model_forward.5} parent=5 // pred_fallthru
      _
    %p136 = scmp.le.s32.totalorder 1, %s9
    %p137 = scmp.lt.s32.totalorder %s9, 3
    %p138 = pnand %p136, %p137
    %p139 = pneg %p138
    // Predicated region
    $region29: #{model_forward.5} parent=5 // pred_check
      _
    $region30: #{model_forward.5} parent=5 // pred_check_branch
      %141 = sbr.rel (%p138) target = $region32
    $region31: #{model_forward.5} parent=5 // pred_region
      %s142 = ssub.s32 %s9, 1
      %p143 = scmp.lt.s32.totalorder %s14, 1
      %s144 = scalar_select %p143, %s14, 1
      %s145 = smul.addr %s144, 2032
      %s146 = smul.addr %s145, 4
      %s147 = scalar_lea.vmem %s0, %s146
      %p148 = pneg %p35
      %p149 = pneg %p32
      %p150 = pneg %p56
      %p151 = pneg %p53
      %p152 = pneg %p77
      %p153 = pneg %p74
      %p154 = pneg %p103
      %p155 = pneg %p100
      %p156 = scmp.lt.s32.totalorder %s14, 1
      %s157 = scalar_select %p156, %s14, 1
      %s158 = smul.addr %s157, 250
      %s159 = smul.addr %s158, 4
      %s160 = scalar_lea.vmem %s3, %s159
      %p161 = scmp.lt.s32.totalorder %s14, 1
      %s162 = scalar_select %p161, %s14, 1
      %s163 = smul.addr %s162, 2032
      %s164 = smul.addr %s163, 4
      %s165 = scalar_lea.vmem %s0, %s164
      %p166 = scmp.lt.s32.totalorder %s14, 1
      %s167 = scalar_select %p166, %s14, 1
      %s168 = smul.addr %s167, 250
      %s169 = smul.addr %s168, 4
      %s170 = scalar_lea.vmem %s3, %s169
      %v172 = vld [vmem:[%s1] sm:$0xff]
      %v173 = vld [vmem:[%s1 + $0x8] sm:$0xff]
      %v174 = vld [vmem:[%s1 + $0x10] sm:$0xff]
      %v175 = vld [vmem:[%s1 + $0x18] sm:$0xff]
      %v176 = vld [vmem:[%s2] sm:$0xff]
      %v177 = vld [vmem:[%s2 + $0x8] sm:$0xff]
      loop: start=0, step=1, limit=125
      $region33: #{model_forward.5} parent=31 // loop_pre_header
        _
      $region34: #{model_forward.5} parent=31 // loop_header
        %s179 = sphi 0, %s183
        %p180 = scmp.ge.s32.totalorder %s179, 125
      $region35: #{model_forward.5} parent=31 // loop_header_branch
        %182 = sbr.rel (%p180) target = $region39
      $region36: #{model_forward.5} parent=31 // loop_body
        %s184 = smul.u32 %s179, 64
        %s185 = sshra.s32 %s184, 3
        %s186 = sand.u32 %s184, 7
        %s187 = smul.u32 %s185, 2
        %s188 = smul.addr %s187, 4
        %s189 = scalar_lea.vmem %s165, %s188
        %v190 = vld [vmem:[%s189] sm:$0xff]
        %v191 = vld [vmem:[%s189 + $0x8] sm:$0xff]
        %v192 = vld [vmem:[%s189 + $0x10] sm:$0xff]
        %v193 = vld [vmem:[%s189 + $0x18] sm:$0xff]
        %v194 = vld [vmem:[%s189 + $0x20] sm:$0xff]
        %v195 = vld [vmem:[%s189 + $0x28] sm:$0xff]
        %v196 = vld [vmem:[%s189 + $0x30] sm:$0xff]
        %v197 = vld [vmem:[%s189 + $0x38] sm:$0xff]
        %v198 = vld [vmem:[%s189 + $0x40] sm:$0xff]
        %v199 = vld [vmem:[%s189 + $0x48] sm:$0xff]
        %v200 = vld [vmem:[%s189 + $0x50] sm:$0xff]
        %v201 = vld [vmem:[%s189 + $0x58] sm:$0xff]
        %v202 = vld [vmem:[%s189 + $0x60] sm:$0xff]
        %v203 = vld [vmem:[%s189 + $0x68] sm:$0xff]
        %v204 = vld [vmem:[%s189 + $0x70] sm:$0xff]
        %v205 = vld [vmem:[%s189 + $0x78] sm:$0xff]
        %v206 = vld [vmem:[%s189 + $0x80] sm:$0xff]
        %v207 = vld [vmem:[%s189 + $0x88] sm:$0xff]
        %v208 = vld [vmem:[%s189 + $0x90] sm:$0xff]
        %v209 = vld [vmem:[%s189 + $0x98] sm:$0xff]
        %v210 = vld [vmem:[%s189 + $0xa0] sm:$0xff]
        %v211 = vld [vmem:[%s189 + $0xa8] sm:$0xff]
        %v212 = vld [vmem:[%s189 + $0xb0] sm:$0xff]
        %v213 = vld [vmem:[%s189 + $0xb8] sm:$0xff]
        %v218 = vunpack.c.l.b16 %v172
        %v219 = vunpack.c.h.b16 %v172
        %v220 = vunpack.c.l.b16 %v173
        %v221 = vunpack.c.h.b16 %v173
        %v222 = vunpack.c.l.b16 %v174
        %v223 = vunpack.c.h.b16 %v174
        %v224 = vunpack.c.l.b16 %v175
        %v225 = vunpack.c.h.b16 %v175
        %v226 = vpack.c.b16 %v220, %v218
        %v227 = vpack.c.b16 %v221, %v219
        %v228 = vpack.c.b16 %v224, %v222
        %v229 = vpack.c.b16 %v225, %v223
        %v256 = vunpack.c.l.b16 %v190
        %v257 = vunpack.c.h.b16 %v190
        %v258 = vunpack.c.l.b16 %v191
        %v259 = vunpack.c.h.b16 %v191
        %v260 = vunpack.c.l.b16 %v192
        %v261 = vunpack.c.h.b16 %v192
        %v262 = vunpack.c.l.b16 %v193
        %v263 = vunpack.c.h.b16 %v193
        %v264 = vunpack.c.l.b16 %v194
        %v265 = vunpack.c.h.b16 %v194
        %v266 = vunpack.c.l.b16 %v195
        %v267 = vunpack.c.h.b16 %v195
        %v268 = vunpack.c.l.b16 %v196
        %v269 = vunpack.c.h.b16 %v196
        %v270 = vunpack.c.l.b16 %v197
        %v271 = vunpack.c.h.b16 %v197
        %v272 = vunpack.c.l.b16 %v198
        %v273 = vunpack.c.h.b16 %v198
        %v274 = vunpack.c.l.b16 %v199
        %v275 = vunpack.c.h.b16 %v199
        %v276 = vunpack.c.l.b16 %v200
        %v277 = vunpack.c.h.b16 %v200
        %v278 = vunpack.c.l.b16 %v201
        %v279 = vunpack.c.h.b16 %v201
        %v280 = vunpack.c.l.b16 %v202
        %v281 = vunpack.c.h.b16 %v202
        %v282 = vunpack.c.l.b16 %v203
        %v283 = vunpack.c.h.b16 %v203
        %v284 = vunpack.c.l.b16 %v204
        %v285 = vunpack.c.h.b16 %v204
        %v286 = vunpack.c.l.b16 %v205
        %v287 = vunpack.c.h.b16 %v205
        %v288 = vunpack.c.l.b16 %v206
        %v289 = vunpack.c.h.b16 %v206
        %v290 = vunpack.c.l.b16 %v207
        %v291 = vunpack.c.h.b16 %v207
        %v292 = vunpack.c.l.b16 %v208
        %v293 = vunpack.c.h.b16 %v208
        %v294 = vunpack.c.l.b16 %v209
        %v295 = vunpack.c.h.b16 %v209
        %v296 = vunpack.c.l.b16 %v210
        %v297 = vunpack.c.h.b16 %v210
        %v298 = vunpack.c.l.b16 %v211
        %v299 = vunpack.c.h.b16 %v211
        %v300 = vunpack.c.l.b16 %v212
        %v301 = vunpack.c.h.b16 %v212
        %v302 = vunpack.c.l.b16 %v213
        %v303 = vunpack.c.h.b16 %v213
        %v304 = vpack.c.b16 %v258, %v256
        %v305 = vpack.c.b16 %v259, %v257
        %v306 = vpack.c.b16 %v262, %v260
        %v307 = vpack.c.b16 %v263, %v261
        %v308 = vpack.c.b16 %v266, %v264
        %v309 = vpack.c.b16 %v267, %v265
        %v310 = vpack.c.b16 %v270, %v268
        %v311 = vpack.c.b16 %v271, %v269
        %v312 = vpack.c.b16 %v274, %v272
        %v313 = vpack.c.b16 %v275, %v273
        %v314 = vpack.c.b16 %v278, %v276
        %v315 = vpack.c.b16 %v279, %v277
        %v316 = vpack.c.b16 %v282, %v280
        %v317 = vpack.c.b16 %v283, %v281
        %v318 = vpack.c.b16 %v286, %v284
        %v319 = vpack.c.b16 %v287, %v285
        %v320 = vpack.c.b16 %v290, %v288
        %v321 = vpack.c.b16 %v291, %v289
        %v322 = vpack.c.b16 %v294, %v292
        %v323 = vpack.c.b16 %v295, %v293
        %v324 = vpack.c.b16 %v298, %v296
        %v325 = vpack.c.b16 %v299, %v297
        %v326 = vpack.c.b16 %v302, %v300
        %v327 = vpack.c.b16 %v303, %v301
        %vm352 = vcmask 523264
        %v354 = vsel %vm352, %v227, 0
        %v357 = vsel %vm352, %v229, 0
        %359 = vmatprep.subr.bf16.mxu0 %v305
        %360 = vmatpush1.bf16.msra.mxu0 %v304
        %361 = vmatprep.subr.bf16.mxu0 %v307
        %362 = vmatpush1.bf16.msra.mxu0 %v306
        %363 = vmatprep.subr.bf16.mxu0 %v309
        %364 = vmatpush1.bf16.msra.mxu0 %v308
        %365 = vmatprep.subr.bf16.mxu0 %v311
        %366 = vmatpush1.bf16.msra.mxu0 %v310
        %367 = vmatprep.subr.bf16.mxu0 %v313
        %368 = vmatpush1.bf16.msra.mxu0 %v312
        %369 = vmatprep.subr.bf16.mxu0 %v315
        %370 = vmatpush1.bf16.msra.mxu0 %v314
        %371 = vmatprep.subr.bf16.mxu0 %v317
        %372 = vmatpush1.bf16.msra.mxu0 %v316
        %373 = vmatprep.subr.bf16.mxu0 %v319
        %374 = vmatpush1.bf16.msra.mxu0 %v318
        %375 = vmatprep.subr.bf16.mxu0 %v321
        %376 = vmatpush1.bf16.msra.mxu0 %v320
        %377 = vmatprep.subr.bf16.mxu0 %v323
        %378 = vmatpush1.bf16.msra.mxu0 %v322
        %379 = vmatprep.subr.bf16.mxu0 %v325
        %380 = vmatpush1.bf16.msra.mxu0 %v324
        %381 = vmatprep.subr.bf16.mxu0 %v327
        %382 = vmatpush1.bf16.msra.mxu0 %v326
        %383 = vmatprep.subr.bf16.mxu0 0
        %384 = vmatpush1.bf16.msra.mxu0 0
        %385 = vmatprep.subr.bf16.mxu0 0
        %386 = vmatpush1.bf16.msra.mxu0 0
        %387 = vmatprep.subr.bf16.mxu0 0
        %388 = vmatpush1.bf16.msra.mxu0 0
        %389 = vmatprep.subr.bf16.mxu0 0
        %390 = vmatpush1.bf16.msra.mxu0 0
        %391 = vmatprep.mubr.bf16.mxu0 %v354
        %392 = vmatmul.mubr.bf16.gmra.mrb[0].mxu0 %v226
        %v393 = vpop.f32.mrb[0].mxu0
        %v394 = vadd.f32 0.0, %v393
        %v395 = vpop.f32.mrb[0].mxu0
        %v396 = vadd.f32 0.0, %v395
        %v397 = vpop.f32.mrb[0].mxu0
        %v398 = vadd.f32 0.0, %v397
        %v399 = vpop.f32.mrb[0].mxu0
        %v400 = vadd.f32 0.0, %v399
        %401 = vmatprep.mubr.bf16.mxu0 %v357
        %402 = vmatmul.mubr.bf16.gmra.mrb[0].mxu0 %v228
        %v403 = vpop.f32.mrb[0].mxu0
        %v404 = vadd.f32 0.0, %v403
        %v405 = vpop.f32.mrb[0].mxu0
        %v406 = vadd.f32 0.0, %v405
        %v407 = vpop.f32.mrb[0].mxu0
        %v408 = vadd.f32 0.0, %v407
        %v409 = vpop.f32.mrb[0].mxu0
        %v410 = vadd.f32 0.0, %v409
        %411 = vdwg.mxu0
        %v412 = vmax.f32 %v394, %v404
        %v413 = vmax.f32 %v396, %v406
        %v414 = vmax.f32 %v398, %v408
        %v415 = vmax.f32 %v400, %v410
        %v416 = vmax.f32 %v412, %v413
        %v417 = vmax.f32 %v414, %v415
        %419 = vset.pattern.permute.xlu0 0
        %420 = vperm.xlu0 %419, %v176
        %v421 = vpop.permute.xlu0 %420
        %424 = vset.pattern.permute.xlu0 0
        %425 = vperm.xlu0 %424, %v177
        %v426 = vpop.permute.xlu0 %425
        %v428 = vadd.f32 %v416, %v421
        %v429 = vadd.f32 %v417, %v426
        %v430 = vmax.f32 %v428, 0.0
        %v431 = vmax.f32 %v429, 0.0
        %v432 = vpack.c.bf16 %v431, %v430
        %v434 = vunpack.c.l.b16 %v432
        %v435 = vunpack.c.h.b16 %v432
        %v436 = vpack.c.b16 %v434, %v434
        %v437 = vpack.c.b16 %v435, %v435
        %s440 = smul.u32 %s179, 2
        %s441 = smul.addr %s440, 4
        %s442 = scalar_lea.vmem %s170, %s441
        %vm443 = vcmask 1018880
        %444 = vst.msk [vmem:[%s442] sm:$0xf] %vm443, %v436
        %445 = vst.msk [vmem:[%s442 + $0x4] sm:$0xf] %vm443, %v437
      $region37: #{model_forward.5} parent=31 // loop_footer
        %s183 = sadd.s32 1, %s179
      $region38: #{model_forward.5} parent=31 // loop_footer_branch
        %178 = sbr.rel target = $region34
      $region39: #{model_forward.5} parent=31 // loop_exit
        _
      %p446 = scmp.lt.s32.totalorder %s14, 1
      %s447 = scalar_select %p446, %s14, 1
      %s448 = smul.addr %s447, 250
      %s449 = smul.addr %s448, 4
      %s450 = scalar_lea.vmem %s3, %s449
      // Predicated region
      $region40: #{model_forward.5} parent=31 // pred_check
        %p451 = pneg %p100
      $region41: #{model_forward.5} parent=31 // pred_check_branch
        %453 = sbr.rel (%p451) target = $region43
      $region42: #{model_forward.5} parent=31 // pred_region
        _
      $region43: #{model_forward.5} parent=31 // pred_fallthru
        _
    $region32: #{model_forward.5} parent=5 // pred_fallthru
      _
    %p454 = scmp.le.s32.totalorder 2, %s9
    // Predicated region
    $region44: #{model_forward.5} parent=5 // pred_check
      %p455 = pneg %p454
    $region45: #{model_forward.5} parent=5 // pred_check_branch
      %457 = sbr.rel (%p455) target = $region47
    $region46: #{model_forward.5} parent=5 // pred_region
      %s458 = ssub.s32 %s9, 2
      // Predicated region
      $region48: #{model_forward.5} parent=46 // pred_check
        %p459 = pneg %p106
      $region49: #{model_forward.5} parent=46 // pred_check_branch
        %461 = sbr.rel (%p459) target = $region51
      $region50: #{model_forward.5} parent=46 // pred_region
        %p462 = scmp.lt.s32.totalorder %s15, 1
        %s463 = scalar_select %p462, %s15, 1
        %s464 = smul.addr %s463, 250
        %s465 = smul.addr %s464, 4
        %s466 = scalar_lea.vmem %s3, %s465
      $region51: #{model_forward.5} parent=46 // pred_fallthru
        _
    $region47: #{model_forward.5} parent=5 // pred_fallthru
      _
  $region6: #{model_forward.5} parent=0 // loop_footer
    %s13 = sadd.s32 1, %s9
  $region7: #{model_forward.5} parent=0 // loop_footer_branch
    %8 = sbr.rel target = $region3
  $region8: #{model_forward.5} parent=0 // loop_exit
    _

// kernel: model_forward.7
$region0: #{model_forward.7}
  #allocation0 [shape = 'u32[]', space=smem, size = 0x4, offset = 0x4, fixed_abs, tag = 'smem constant byte address 0x4 - core index']
  #allocation1 [shape = 'u32[144,128]{1,0:T(1,128)}', space=vmem, size = 0x12000, scoped, tag = 'internal scratch']
  %s0 = inlined_call_operand.vmem [shape: bf16[2,120], index: 0, kind: input, shape index: {}]
  %s1 = inlined_call_operand.vmem [shape: bf16[120,84], index: 1, kind: input, shape index: {}]
  %s2 = inlined_call_operand.vmem [shape: f32[1,84], index: 2, kind: input, shape index: {}]
  %s3 = inlined_call_operand.vmem [shape: bf16[84,3], index: 3, kind: input, shape index: {}]
  %s4 = inlined_call_operand.vmem [shape: f32[1,3], index: 4, kind: input, shape index: {}]
  %s5 = inlined_call_operand.hbm [shape: f32[2,3], index: 5, kind: output, shape index: {}]
  %s6 = sld [smem:[#allocation0]]
  $region30: #{model_forward.7} parent=0
    _
  %s8 = ssub.s32 1, %s6
  %s9 = scalar_select 0, %s8, %s6
  $region1: #{model_forward.7} parent=0
    #allocation2 [shape = 'u8[1024]{0}', space=vmem, size = 0x400, scoped, tag = 'output window, operand 0, single buffered']
    #allocation3 [shape = 's32[1]{0}', space=sflag, size = 0x4, scoped, tag = 'scoped memory for model_forward.7']
    %10 = vsyncpa [#allocation3], 0
    // Predicated region
    $region2: #{model_forward.7} parent=1 // pred_check
      _
    $region3: #{model_forward.7} parent=1 // pred_check_branch
      %12 = sbr.rel (0) target = $region5
    $region4: #{model_forward.7} parent=1 // pred_region
      _
    $region5: #{model_forward.7} parent=1 // pred_fallthru
      _
    // Predicated region
    $region6: #{model_forward.7} parent=1 // pred_check
      _
    $region7: #{model_forward.7} parent=1 // pred_check_branch
      %14 = sbr.rel (0) target = $region9
    $region8: #{model_forward.7} parent=1 // pred_region
      _
    $region9: #{model_forward.7} parent=1 // pred_fallthru
      _
    // Predicated region
    $region10: #{model_forward.7} parent=1 // pred_check
      _
    $region11: #{model_forward.7} parent=1 // pred_check_branch
      %16 = sbr.rel (0) target = $region13
    $region12: #{model_forward.7} parent=1 // pred_region
      _
    $region13: #{model_forward.7} parent=1 // pred_fallthru
      _
    // Predicated region
    $region14: #{model_forward.7} parent=1 // pred_check
      _
    $region15: #{model_forward.7} parent=1 // pred_check_branch
      %18 = sbr.rel (0) target = $region17
    $region16: #{model_forward.7} parent=1 // pred_region
      _
    $region17: #{model_forward.7} parent=1 // pred_fallthru
      _
    // Predicated region
    $region18: #{model_forward.7} parent=1 // pred_check
      _
    $region19: #{model_forward.7} parent=1 // pred_check_branch
      %20 = sbr.rel (0) target = $region21
    $region20: #{model_forward.7} parent=1 // pred_region
      _
    $region21: #{model_forward.7} parent=1 // pred_fallthru
      _
    %v22 = vld [vmem:[%s0] sm:$0x1]
    %v23 = vld [vmem:[%s1] sm:$0xf]
    %v24 = vld [vmem:[%s1 + $0x4] sm:$0xf]
    %v25 = vld [vmem:[%s1 + $0x8] sm:$0xf]
    %v26 = vld [vmem:[%s1 + $0xc] sm:$0xf]
    %v27 = vld [vmem:[%s1 + $0x10] sm:$0xf]
    %v28 = vld [vmem:[%s1 + $0x14] sm:$0xf]
    %v29 = vld [vmem:[%s1 + $0x18] sm:$0xf]
    %v30 = vld [vmem:[%s1 + $0x1c] sm:$0xf]
    %v31 = vld [vmem:[%s1 + $0x20] sm:$0xf]
    %v32 = vld [vmem:[%s1 + $0x24] sm:$0xf]
    %v33 = vld [vmem:[%s1 + $0x28] sm:$0xf]
    %v34 = vld [vmem:[%s1 + $0x2c] sm:$0xf]
    %v35 = vld [vmem:[%s1 + $0x30] sm:$0xf]
    %v36 = vld [vmem:[%s1 + $0x34] sm:$0xf]
    %v37 = vld [vmem:[%s1 + $0x38] sm:$0xf]
    %v38 = vld [vmem:[%s2] sm:$0x1]
    %v40 = vlaneseq
    %v41 = vshrl.u32 %v40, 7
    %v42 = vsub.s32 0, %v41
    %v43 = vrot.slane %v38, %v42
    %v60 = vunpack.c.l.b16 %v23
    %v61 = vunpack.c.l.b16 %v24
    %v62 = vunpack.c.l.b16 %v25
    %v63 = vunpack.c.l.b16 %v26
    %v64 = vunpack.c.l.b16 %v27
    %v65 = vunpack.c.l.b16 %v28
    %v66 = vunpack.c.l.b16 %v29
    %v67 = vunpack.c.l.b16 %v30
    %v68 = vunpack.c.l.b16 %v31
    %v69 = vunpack.c.l.b16 %v32
    %v70 = vunpack.c.l.b16 %v33
    %v71 = vunpack.c.l.b16 %v34
    %v72 = vunpack.c.l.b16 %v35
    %v73 = vunpack.c.l.b16 %v36
    %v74 = vunpack.c.l.b16 %v37
    %v75 = vpack.c.b16 %v61, %v60
    %v76 = vpack.c.b16 %v63, %v62
    %v77 = vpack.c.b16 %v65, %v64
    %v78 = vpack.c.b16 %v67, %v66
    %v79 = vpack.c.b16 %v69, %v68
    %v80 = vpack.c.b16 %v71, %v70
    %v81 = vpack.c.b16 %v73, %v72
    %v82 = vpack.c.b16 %v74, %v74
    %vm90 = vcmask 982016
    %v92 = vsel %vm90, %v22, 0
    %vm94 = vcmask 1043456
    %v96 = vsel %vm94, %v82, 0
    %98 = vmatprep.subr.bf16.mxu0 0
    %99 = vmatpush1.bf16.msra.mxu0 %v75
    %100 = vmatprep.subr.bf16.mxu0 0
    %101 = vmatpush1.bf16.msra.mxu0 %v76
    %102 = vmatprep.subr.bf16.mxu0 0
    %103 = vmatpush1.bf16.msra.mxu0 %v77
    %104 = vmatprep.subr.bf16.mxu0 0
    %105 = vmatpush1.bf16.msra.mxu0 %v78
    %106 = vmatprep.subr.bf16.mxu0 0
    %107 = vmatpush1.bf16.msra.mxu0 %v79
    %108 = vmatprep.subr.bf16.mxu0 0
    %109 = vmatpush1.bf16.msra.mxu0 %v80
    %110 = vmatprep.subr.bf16.mxu0 0
    %111 = vmatpush1.bf16.msra.mxu0 %v81
    %112 = vmatprep.subr.bf16.mxu0 0
    %113 = vmatpush1.bf16.msra.mxu0 %v96
    %114 = vmatprep.subr.bf16.mxu0 0
    %115 = vmatpush1.bf16.msra.mxu0 0
    %116 = vmatprep.subr.bf16.mxu0 0
    %117 = vmatpush1.bf16.msra.mxu0 0
    %118 = vmatprep.subr.bf16.mxu0 0
    %119 = vmatpush1.bf16.msra.mxu0 0
    %120 = vmatprep.subr.bf16.mxu0 0
    %121 = vmatpush1.bf16.msra.mxu0 0
    %122 = vmatprep.subr.bf16.mxu0 0
    %123 = vmatpush1.bf16.msra.mxu0 0
    %124 = vmatprep.subr.bf16.mxu0 0
    %125 = vmatpush1.bf16.msra.mxu0 0
    %126 = vmatprep.subr.bf16.mxu0 0
    %127 = vmatpush1.bf16.msra.mxu0 0
    %128 = vmatprep.subr.bf16.mxu0 0
    %129 = vmatpush1.bf16.msra.mxu0 0
    %130 = vmatprep.mubr.bf16.mxu0 0
    %131 = vmatmul.mubr.bf16.gmra.mrb[0].mxu0 %v92
    %v132 = vpop.f32.mrb[0].mxu0
    %v133 = vadd.f32 %v43, %v132
    %v134 = vpop.f32.mrb[0].mxu0
    %v135 = vpop.f32.mrb[0].mxu0
    %v136 = vpop.f32.mrb[0].mxu0
    %137 = vdwg.mxu0
    %v138 = vmax.f32 %v133, 0.0
    %v139 = vpack.c.bf16 %v138, %v138
    %v140 = vld [vmem:[%s3] sm:$0xf]
    %v141 = vld [vmem:[%s3 + $0x4] sm:$0xf]
    %v142 = vld [vmem:[%s3 + $0x8] sm:$0xf]
    %v143 = vld [vmem:[%s3 + $0xc] sm:$0xf]
    %v144 = vld [vmem:[%s3 + $0x10] sm:$0xf]
    %v145 = vld [vmem:[%s3 + $0x14] sm:$0xf]
    %v146 = vld [vmem:[%s3 + $0x18] sm:$0xf]
    %v147 = vld [vmem:[%s3 + $0x1c] sm:$0xf]
    %v148 = vld [vmem:[%s3 + $0x20] sm:$0xf]
    %v149 = vld [vmem:[%s3 + $0x24] sm:$0xf]
    %v150 = vld [vmem:[%s3 + $0x28] sm:$0x3]
    %v151 = vld [vmem:[%s4] sm:$0x1]
    %v153 = vlaneseq
    %v154 = vshrl.u32 %v153, 7
    %v155 = vsub.s32 0, %v154
    %v156 = vrot.slane %v151, %v155
    %v169 = vunpack.c.l.b16 %v140
    %v170 = vunpack.c.l.b16 %v141
    %v171 = vunpack.c.l.b16 %v142
    %v172 = vunpack.c.l.b16 %v143
    %v173 = vunpack.c.l.b16 %v144
    %v174 = vunpack.c.l.b16 %v145
    %v175 = vunpack.c.l.b16 %v146
    %v176 = vunpack.c.l.b16 %v147
    %v177 = vunpack.c.l.b16 %v148
    %v178 = vunpack.c.l.b16 %v149
    %v179 = vunpack.c.l.b16 %v150
    %v180 = vpack.c.b16 %v170, %v169
    %v181 = vpack.c.b16 %v172, %v171
    %v182 = vpack.c.b16 %v174, %v173
    %v183 = vpack.c.b16 %v176, %v175
    %v184 = vpack.c.b16 %v178, %v177
    %v185 = vpack.c.b16 %v179, %v179
    %vm191 = vcmask 687104
    %v193 = vsel %vm191, %v139, 0
    %vm195 = vcmask 1041408
    %v197 = vsel %vm195, %v185, 0
    %199 = vmatprep.subr.bf16.mxu0 0
    %200 = vmatpush1.bf16.msra.mxu0 %v180
    %201 = vmatprep.subr.bf16.mxu0 0
    %202 = vmatpush1.bf16.msra.mxu0 %v181
    %203 = vmatprep.subr.bf16.mxu0 0
    %204 = vmatpush1.bf16.msra.mxu0 %v182
    %205 = vmatprep.subr.bf16.mxu0 0
    %206 = vmatpush1.bf16.msra.mxu0 %v183
    %207 = vmatprep.subr.bf16.mxu0 0
    %208 = vmatpush1.bf16.msra.mxu0 %v184
    %209 = vmatprep.subr.bf16.mxu0 0
    %210 = vmatpush1.bf16.msra.mxu0 %v197
    %211 = vmatprep.subr.bf16.mxu0 0
    %212 = vmatpush1.bf16.msra.mxu0 0
    %213 = vmatprep.subr.bf16.mxu0 0
    %214 = vmatpush1.bf16.msra.mxu0 0
    %215 = vmatprep.subr.bf16.mxu0 0
    %216 = vmatpush1.bf16.msra.mxu0 0
    %217 = vmatprep.subr.bf16.mxu0 0
    %218 = vmatpush1.bf16.msra.mxu0 0
    %219 = vmatprep.subr.bf16.mxu0 0
    %220 = vmatpush1.bf16.msra.mxu0 0
    %221 = vmatprep.subr.bf16.mxu0 0
    %222 = vmatpush1.bf16.msra.mxu0 0
    %223 = vmatprep.subr.bf16.mxu0 0
    %224 = vmatpush1.bf16.msra.mxu0 0
    %225 = vmatprep.subr.bf16.mxu0 0
    %226 = vmatpush1.bf16.msra.mxu0 0
    %227 = vmatprep.subr.bf16.mxu0 0
    %228 = vmatpush1.bf16.msra.mxu0 0
    %229 = vmatprep.subr.bf16.mxu0 0
    %230 = vmatpush1.bf16.msra.mxu0 0
    %231 = vmatprep.mubr.bf16.mxu0 0
    %232 = vmatmul.mubr.bf16.gmra.mrb[0].mxu0 %v193
    %v233 = vpop.f32.mrb[0].mxu0
    %v234 = vadd.f32 %v156, %v233
    %v235 = vpop.f32.mrb[0].mxu0
    %v236 = vpop.f32.mrb[0].mxu0
    %v237 = vpop.f32.mrb[0].mxu0
    %238 = vdwg.mxu0
    %vm239 = vcmask 17408
    %240 = vst.msk [vmem:[#allocation2] sm:$0x3] %vm239, %v234
    // Predicated region
    $region22: #{model_forward.7} parent=1 // pred_check
      _
    $region23: #{model_forward.7} parent=1 // pred_check_branch
      %242 = sbr.rel (0) target = $region25
    $region24: #{model_forward.7} parent=1 // pred_region
      %s244 = ssub.s32 32, 32
      %245 = vsyncadd [#allocation3], %s244
      %s247 = sshll.u32 [#allocation2], 4
      %s248 = int_to_ptr.vmem [resolvable:$true] %s247
      %250 = dma.vmem_to_hbm [thread:$0]  %s248, 32, %s5, [#allocation3]
    $region25: #{model_forward.7} parent=1 // pred_fallthru
      _
    // Predicated region
    $region26: #{model_forward.7} parent=1 // pred_check
      _
    $region27: #{model_forward.7} parent=1 // pred_check_branch
      %252 = sbr.rel (0) target = $region29
    $region28: #{model_forward.7} parent=1 // pred_region
      %253 = dma.done [#allocation3], 32
    $region29: #{model_forward.7} parent=1 // pred_fallthru
      _
    %254 = vsyncpa [#allocation3], 1

// kernel: model_forward.6
$region0: #{model_forward.6}
  #allocation0 [shape = 'u32[]', space=smem, size = 0x4, offset = 0x4, fixed_abs, tag = 'smem constant byte address 0x4 - core index']
  #allocation1 [shape = 'u32[144,128]{1,0:T(1,128)}', space=vmem, size = 0x12000, scoped, tag = 'internal scratch']
  #allocation2 [shape = 'f32[2,120]{1,0:T(2,128)}', space=vmem, size = 0x400, scoped, tag = 'scratch operand']
  %s0 = inlined_call_operand.vmem [shape: bf16[2,262144], index: 0, kind: input, shape index: {}]
  %s1 = inlined_call_operand.hbm [shape: bf16[262144,120], index: 1, kind: input, shape index: {}]
  %s2 = inlined_call_operand.vmem [shape: f32[2,2,120], index: 2, kind: output, shape index: {}]
  %s3 = sld [smem:[#allocation0]]
  $region53: #{model_forward.6} parent=0
    _
  %s5 = ssub.s32 1, %s3
  %s6 = scalar_select 0, %s5, %s3
  $region1: #{model_forward.6} parent=0
    #allocation3 [shape = 'u8[8388608]{0}', space=vmem, size = 0x800000, scoped, tag = 'input window, operand 1']
    #allocation4 [shape = 's32[2]{0}', space=sflag, size = 0x8, scoped, tag = 'scoped memory for model_forward.6']
    %7 = vsyncpa [#allocation4], 0
    %s8 = scalar_lea.sflag [#allocation4], 1
    %9 = vsyncpa %s8, 0
    loop: start=0, step=1, limit=18
    $region2: #{model_forward.6} parent=1 // loop_pre_header
      _
    $region3: #{model_forward.6} parent=1 // loop_header
      %s11 = sphi 0, %s15
      %p12 = scmp.ge.s32.totalorder %s11, 18
      %s18 = sphi 0, %s30
      %s19 = sphi 0, %s26
      %s20 = sphi 0, %s18
      %s21 = sphi 0, %s19
      %s22 = sphi 0, %s20
      %s23 = sphi 0, %s21
      %s37 = sphi 0, %s39
      %s40 = sphi 0, %s37
      %s41 = sphi 0, %s40
      %s57 = sphi 0, %s41
      %s67 = sphi 0, %s69
      %s70 = sphi 0, %s67
      %s71 = sphi 0, %s70
      %s87 = sphi 0, %s71
      %s93 = sphi 0, %s95
      %s96 = sphi 0, %s93
      %s97 = sphi 0, %s96
      %s113 = sphi 0, %s97
    $region4: #{model_forward.6} parent=1 // loop_header_branch
      %14 = sbr.rel (%p12) target = $region8
    $region5: #{model_forward.6} parent=1 // loop_body
      %s16 = ssub.s32 %s11, 1
      %s17 = ssub.s32 %s11, 2
      %s24 = sadd.s32 1, %s19
      %p25 = scmp.ge.s32.totalorder %s24, 8
      %s26 = scalar_select %p25, 0, %s24
      %s27 = sadd.s32 1, %s18
      %s28 = scalar_select %p25, %s27, %s18
      %p29 = scmp.ge.s32.totalorder %s28, 2
      %s30 = scalar_select %p29, 0, %s28
      %s31 = smul.u32 %s18, 8
      %s32 = sadd.s32 %s31, %s19
      %s33 = smul.u32 %s30, 8
      %s34 = sadd.s32 %s33, %s26
      %s35 = ssub.s32 %s32, %s34
      %p36 = scmp.eq.s32.totalorder %s35, 0
      %s38 = sadd.s32 %s37, 1
      %s39 = scalar_select %p36, %s37, %s38
      %p42 = pneg %p36
      %p43 = scmp.eq.s32.totalorder %s11, 15
      %p44 = por %p42, %p43
      %p45 = scmp.ne.s32.totalorder %s37, %s40
      %p46 = scmp.eq.s32.totalorder %s11, 0
      %p47 = por %p45, %p46
      %p48 = scmp.ne.s32.totalorder %s37, %s40
      %p49 = scmp.eq.s32.totalorder %s16, 15
      %p50 = por %p48, %p49
      %p51 = scmp.ne.s32.totalorder %s40, %s41
      %p52 = scmp.eq.s32.totalorder %s16, 0
      %p53 = por %p51, %p52
      %p54 = scmp.ne.s32.totalorder %s40, %s41
      %p55 = scmp.eq.s32.totalorder %s17, 15
      %p56 = por %p54, %p55
      %p58 = scmp.ne.s32.totalorder %s41, %s57
      %p59 = scmp.eq.s32.totalorder %s17, 0
      %p60 = por %p58, %p59
      %s61 = smul.u32 %s18, 8
      %s62 = sadd.s32 %s61, %s19
      %s63 = smul.u32 %s30, 8
      %s64 = sadd.s32 %s63, %s26
      %s65 = ssub.s32 %s62, %s64
      %p66 = scmp.eq.s32.totalorder %s65, 0
      %s68 = sadd.s32 %s67, 1
      %s69 = scalar_select %p66, %s67, %s68
      %p72 = pneg %p66
      %p73 = scmp.eq.s32.totalorder %s11, 15
      %p74 = por %p72, %p73
      %p75 = scmp.ne.s32.totalorder %s67, %s70
      %p76 = scmp.eq.s32.totalorder %s11, 0
      %p77 = por %p75, %p76
      %p78 = scmp.ne.s32.totalorder %s67, %s70
      %p79 = scmp.eq.s32.totalorder %s16, 15
      %p80 = por %p78, %p79
      %p81 = scmp.ne.s32.totalorder %s70, %s71
      %p82 = scmp.eq.s32.totalorder %s16, 0
      %p83 = por %p81, %p82
      %p84 = scmp.ne.s32.totalorder %s70, %s71
      %p85 = scmp.eq.s32.totalorder %s17, 15
      %p86 = por %p84, %p85
      %p88 = scmp.ne.s32.totalorder %s71, %s87
      %p89 = scmp.eq.s32.totalorder %s17, 0
      %p90 = por %p88, %p89
      %s91 = ssub.s32 %s18, %s30
      %p92 = scmp.eq.s32.totalorder %s91, 0
      %s94 = sadd.s32 %s93, 1
      %s95 = scalar_select %p92, %s93, %s94
      %p98 = pneg %p92
      %p99 = scmp.eq.s32.totalorder %s11, 15
      %p100 = por %p98, %p99
      %p101 = scmp.ne.s32.totalorder %s93, %s96
      %p102 = scmp.eq.s32.totalorder %s11, 0
      %p103 = por %p101, %p102
      %p104 = scmp.ne.s32.totalorder %s93, %s96
      %p105 = scmp.eq.s32.totalorder %s16, 15
      %p106 = por %p104, %p105
      %p107 = scmp.ne.s32.totalorder %s96, %s97
      %p108 = scmp.eq.s32.totalorder %s16, 0
      %p109 = por %p107, %p108
      %p110 = scmp.ne.s32.totalorder %s96, %s97
      %p111 = scmp.eq.s32.totalorder %s17, 15
      %p112 = por %p110, %p111
      %p114 = scmp.ne.s32.totalorder %s97, %s113
      %p115 = scmp.eq.s32.totalorder %s17, 0
      %p116 = por %p114, %p115
      %p117 = scmp.le.s32.totalorder 1, %s11
      %p118 = scmp.lt.s32.totalorder %s11, 17
      %p119 = pnand %p117, %p118
      %p120 = pneg %p119
      // Predicated region
      $region9: #{model_forward.6} parent=5 // pred_check
        _
      $region10: #{model_forward.6} parent=5 // pred_check_branch
        %122 = sbr.rel (%p119) target = $region12
      $region11: #{model_forward.6} parent=5 // pred_region
        %s123 = ssub.s32 %s11, 1
      $region12: #{model_forward.6} parent=5 // pred_fallthru
        _
      %p124 = scmp.lt.s32.totalorder %s11, 16
      // Predicated region
      $region13: #{model_forward.6} parent=5 // pred_check
        %p125 = pneg %p124
      $region14: #{model_forward.6} parent=5 // pred_check_branch
        %127 = sbr.rel (%p125) target = $region16
      $region15: #{model_forward.6} parent=5 // pred_region
        // Predicated region
        $region17: #{model_forward.6} parent=15 // pred_check
          %p128 = pneg %p47
        $region18: #{model_forward.6} parent=15 // pred_check_branch
          %130 = sbr.rel (%p128) target = $region20
        $region19: #{model_forward.6} parent=15 // pred_region
          %s131 = smul.u32 %s18, 8
          %s132 = sadd.s32 %s131, %s19
          %s133 = smul.u32 128, %s132
          %p134 = scmp.lt.s32.totalorder %s133, 2047
          %s135 = scalar_select %p134, %s133, 2047
          %s136 = scalar_lea.vmem %s0, %s135
          %s137 = smul.u32 %s18, 8
          %s138 = sadd.s32 %s137, %s19
          %s139 = smul.u32 128, %s138
        $region20: #{model_forward.6} parent=15 // pred_fallthru
          _
        // Predicated region
        $region21: #{model_forward.6} parent=15 // pred_check
          %p140 = pneg %p77
        $region22: #{model_forward.6} parent=15 // pred_check_branch
          %142 = sbr.rel (%p140) target = $region24
        $region23: #{model_forward.6} parent=15 // pred_region
          %s143 = sand.u32 %s67, 1
          %s144 = scalar_lea.sflag [#allocation4], %s143
          %s145 = sand.u32 %s67, 1
          %s146 = smul.addr %s145, 8192
          %s147 = scalar_lea.vmem [#allocation3], %s146
          %s148 = smul.u32 %s18, 8
          %s149 = sadd.s32 %s148, %s19
          %s150 = smul.u32 2048, %s149
          %s152 = ssub.s32 131072, 131072
          %153 = vsyncadd %s144, %s152
          %s154 = smul.addr %s150, 64
          %s155 = scalar_lea.hbm %s1, %s154
          %s156 = sshll.u32 %s147, 4
          %s157 = int_to_ptr.vmem [resolvable:$true] %s156
          %162 = dma.hbm_to_vmem [thread:$0]  %s155, 131072, %s157, %s144, 64, 64, 4
        $region24: #{model_forward.6} parent=15 // pred_fallthru
          _
      $region16: #{model_forward.6} parent=5 // pred_fallthru
        _
      %p163 = scmp.le.s32.totalorder 1, %s11
      %p164 = scmp.lt.s32.totalorder %s11, 17
      %p165 = pnand %p163, %p164
      %p166 = pneg %p165
      // Predicated region
      $region25: #{model_forward.6} parent=5 // pred_check
        _
      $region26: #{model_forward.6} parent=5 // pred_check_branch
        %168 = sbr.rel (%p165) target = $region28
      $region27: #{model_forward.6} parent=5 // pred_region
        %s169 = ssub.s32 %s11, 1
        %s170 = sand.u32 %s70, 1
        %s171 = scalar_lea.sflag [#allocation4], %s170
        %s172 = sand.u32 %s70, 1
        %s173 = smul.addr %s172, 8192
        %s174 = scalar_lea.vmem [#allocation3], %s173
        // Predicated region
        $region29: #{model_forward.6} parent=27 // pred_check
          %p175 = pneg %p83
        $region30: #{model_forward.6} parent=27 // pred_check_branch
          %177 = sbr.rel (%p175) target = $region32
        $region31: #{model_forward.6} parent=27 // pred_region
          %178 = dma.done %s171, 131072
        $region32: #{model_forward.6} parent=27 // pred_fallthru
          _
        %s179 = smul.u32 %s20, 8
        %s180 = sadd.s32 %s179, %s21
        %s181 = smul.u32 128, %s180
        %p182 = scmp.lt.s32.totalorder %s181, 2047
        %s183 = scalar_select %p182, %s181, 2047
        %s184 = scalar_lea.vmem %s0, %s183
        %p185 = pneg %p53
        %p186 = pneg %p50
        %s187 = sand.u32 %s70, 1
        %s188 = scalar_lea.sflag [#allocation4], %s187
        %s189 = sand.u32 %s70, 1
        %s190 = smul.addr %s189, 8192
        %s191 = scalar_lea.vmem [#allocation3], %s190
        %p192 = pneg %p83
        %p193 = pneg %p80
        %p194 = pneg %p109
        %p195 = pneg %p106
        %p196 = scmp.lt.s32.totalorder %s20, 1
        %s197 = scalar_select %p196, %s20, 1
        %s198 = smul.addr %s197, 2
        %s199 = scalar_lea.vmem %s2, %s198
        %s200 = smul.u32 %s20, 8
        %s201 = sadd.s32 %s200, %s21
        %s202 = smul.u32 128, %s201
        %p203 = scmp.lt.s32.totalorder %s202, 2047
        %s204 = scalar_select %p203, %s202, 2047
        %s205 = scalar_lea.vmem %s0, %s204
        %s206 = smul.u32 %s20, 8
        %s207 = sadd.s32 %s206, %s21
        %s208 = smul.u32 128, %s207
        %s209 = smul.u32 %s20, 8
        %s210 = sadd.s32 %s209, %s21
        %s211 = smul.u32 2048, %s210
        %p212 = scmp.lt.s32.totalorder %s20, 1
        %s213 = scalar_select %p212, %s20, 1
        %s214 = smul.addr %s213, 2
        %s215 = scalar_lea.vmem %s2, %s214
        %p217 = scmp.eq.s32.totalorder %s21, 0
        // Predicated region
        $region33: #{model_forward.6} parent=27 // pred_check
          %p218 = pneg %p217
        $region34: #{model_forward.6} parent=27 // pred_check_branch
          %220 = sbr.rel (%p218) target = $region36
        $region35: #{model_forward.6} parent=27 // pred_region
          %vm221 = vcmask 975872
          %222 = vst.msk [vmem:[#allocation2] sm:$0x3] %vm221, 0.0
        $region36: #{model_forward.6} parent=27 // pred_fallthru
          _
        %v223 = vld [vmem:[#allocation2] sm:$0x3]
        %v224 = vld [vmem:[%s205] sm:$0xff]
        %v225 = vld [vmem:[%s205 + $0x8] sm:$0xff]
        %v226 = vld [vmem:[%s205 + $0x10] sm:$0xff]
        %v227 = vld [vmem:[%s205 + $0x18] sm:$0xff]
        %v228 = vld [vmem:[%s205 + $0x20] sm:$0xff]
        %v229 = vld [vmem:[%s205 + $0x28] sm:$0xff]
        %v230 = vld [vmem:[%s205 + $0x30] sm:$0xff]
        %v231 = vld [vmem:[%s205 + $0x38] sm:$0xff]
        %v232 = vld [vmem:[%s205 + $0x40] sm:$0xff]
        %v233 = vld [vmem:[%s205 + $0x48] sm:$0xff]
        %v234 = vld [vmem:[%s205 + $0x50] sm:$0xff]
        %v235 = vld [vmem:[%s205 + $0x58] sm:$0xff]
        %v236 = vld [vmem:[%s205 + $0x60] sm:$0xff]
        %v237 = vld [vmem:[%s205 + $0x68] sm:$0xff]
        %v238 = vld [vmem:[%s205 + $0x70] sm:$0xff]
        %v239 = vld [vmem:[%s205 + $0x78] sm:$0xff]
        %v240 = vld [vmem:[%s174] sm:$0xf]
        %v241 = vld [vmem:[%s174 + $0x4] sm:$0xf]
        %v242 = vld [vmem:[%s174 + $0x8] sm:$0xf]
        %v243 = vld [vmem:[%s174 + $0xc] sm:$0xf]
        %v244 = vld [vmem:[%s174 + $0x10] sm:$0xf]
        %v245 = vld [vmem:[%s174 + $0x14] sm:$0xf]
        %v246 = vld [vmem:[%s174 + $0x18] sm:$0xf]
        %v247 = vld [vmem:[%s174 + $0x1c] sm:$0xf]
        %v248 = vld [vmem:[%s174 + $0x20] sm:$0xf]
        %v249 = vld [vmem:[%s174 + $0x24] sm:$0xf]
        %v250 = vld [vmem:[%s174 + $0x28] sm:$0xf]
        %v251 = vld [vmem:[%s174 + $0x2c] sm:$0xf]
        %v252 = vld [vmem:[%s174 + $0x30] sm:$0xf]
        %v253 = vld [vmem:[%s174 + $0x34] sm:$0xf]
        %v254 = vld [vmem:[%s174 + $0x38] sm:$0xf]
        %v255 = vld [vmem:[%s174 + $0x3c] sm:$0xf]
        %v256 = vld [vmem:[%s174 + $0x40] sm:$0xf]
        %v257 = vld [vmem:[%s174 + $0x44] sm:$0xf]
        %v258 = vld [vmem:[%s174 + $0x48] sm:$0xf]
        %v259 = vld [vmem:[%s174 + $0x4c] sm:$0xf]
        %v260 = vld [vmem:[%s174 + $0x50] sm:$0xf]
        %v261 = vld [vmem:[%s174 + $0x54] sm:$0xf]
        %v262 = vld [vmem:[%s174 + $0x58] sm:$0xf]
        %v263 = vld [vmem:[%s174 + $0x5c] sm:$0xf]
        %v264 = vld [vmem:[%s174 + $0x60] sm:$0xf]
        %v265 = vld [vmem:[%s174 + $0x64] sm:$0xf]
        %v266 = vld [vmem:[%s174 + $0x68] sm:$0xf]
        %v267 = vld [vmem:[%s174 + $0x6c] sm:$0xf]
        %v268 = vld [vmem:[%s174 + $0x70] sm:$0xf]
        %v269 = vld [vmem:[%s174 + $0x74] sm:$0xf]
        %v270 = vld [vmem:[%s174 + $0x78] sm:$0xf]
        %v271 = vld [vmem:[%s174 + $0x7c] sm:$0xf]
        %v272 = vld [vmem:[%s174 + $0x80] sm:$0xf]
        %v273 = vld [vmem:[%s174 + $0x84] sm:$0xf]
        %v274 = vld [vmem:[%s174 + $0x88] sm:$0xf]
        %v275 = vld [vmem:[%s174 + $0x8c] sm:$0xf]
        %v276 = vld [vmem:[%s174 + $0x90] sm:$0xf]
        %v277 = vld [vmem:[%s174 + $0x94] sm:$0xf]
        %v278 = vld [vmem:[%s174 + $0x98] sm:$0xf]
        %v279 = vld [vmem:[%s174 + $0x9c] sm:$0xf]
        %v280 = vld [vmem:[%s174 + $0xa0] sm:$0xf]
        %v281 = vld [vmem:[%s174 + $0xa4] sm:$0xf]
        %v282 = vld [vmem:[%s174 + $0xa8] sm:$0xf]
        %v283 = vld [vmem:[%s174 + $0xac] sm:$0xf]
        %v284 = vld [vmem:[%s174 + $0xb0] sm:$0xf]
        %v285 = vld [vmem:[%s174 + $0xb4] sm:$0xf]
        %v286 = vld [vmem:[%s174 + $0xb8] sm:$0xf]
        %v287 = vld [vmem:[%s174 + $0xbc] sm:$0xf]
        %v288 = vld [vmem:[%s174 + $0xc0] sm:$0xf]
        %v289 = vld [vmem:[%s174 + $0xc4] sm:$0xf]
        %v290 = vld [vmem:[%s174 + $0xc8] sm:$0xf]
        %v291 = vld [vmem:[%s174 + $0xcc] sm:$0xf]
        %v292 = vld [vmem:[%s174 + $0xd0] sm:$0xf]
        %v293 = vld [vmem:[%s174 + $0xd4] sm:$0xf]
        %v294 = vld [vmem:[%s174 + $0xd8] sm:$0xf]
        %v295 = vld [vmem:[%s174 + $0xdc] sm:$0xf]
        %v296 = vld [vmem:[%s174 + $0xe0] sm:$0xf]
        %v297 = vld [vmem:[%s174 + $0xe4] sm:$0xf]
        %v298 = vld [vmem:[%s174 + $0xe8] sm:$0xf]
        %v299 = vld [vmem:[%s174 + $0xec] sm:$0xf]
        %v300 = vld [vmem:[%s174 + $0xf0] sm:$0xf]
        %v301 = vld [vmem:[%s174 + $0xf4] sm:$0xf]
        %v302 = vld [vmem:[%s174 + $0xf8] sm:$0xf]
        %v303 = vld [vmem:[%s174 + $0xfc] sm:$0xf]
        %v304 = vld [vmem:[%s174 + $0x100] sm:$0xf]
        %v305 = vld [vmem:[%s174 + $0x104] sm:$0xf]
        %v306 = vld [vmem:[%s174 + $0x108] sm:$0xf]
        %v307 = vld [vmem:[%s174 + $0x10c] sm:$0xf]
        %v308 = vld [vmem:[%s174 + $0x110] sm:$0xf]
        %v309 = vld [vmem:[%s174 + $0x114] sm:$0xf]
        %v310 = vld [vmem:[%s174 + $0x118] sm:$0xf]
        %v311 = vld [vmem:[%s174 + $0x11c] sm:$0xf]
        %v312 = vld [vmem:[%s174 + $0x120] sm:$0xf]
        %v313 = vld [vmem:[%s174 + $0x124] sm:$0xf]
        %v314 = vld [vmem:[%s174 + $0x128] sm:$0xf]
        %v315 = vld [vmem:[%s174 + $0x12c] sm:$0xf]
        %v316 = vld [vmem:[%s174 + $0x130] sm:$0xf]
        %v317 = vld [vmem:[%s174 + $0x134] sm:$0xf]
        %v318 = vld [vmem:[%s174 + $0x138] sm:$0xf]
        %v319 = vld [vmem:[%s174 + $0x13c] sm:$0xf]
        %v320 = vld [vmem:[%s174 + $0x140] sm:$0xf]
        %v321 = vld [vmem:[%s174 + $0x144] sm:$0xf]
        %v322 = vld [vmem:[%s174 + $0x148] sm:$0xf]
        %v323 = vld [vmem:[%s174 + $0x14c] sm:$0xf]
        %v324 = vld [vmem:[%s174 + $0x150] sm:$0xf]
        %v325 = vld [vmem:[%s174 + $0x154] sm:$0xf]
        %v326 = vld [vmem:[%s174 + $0x158] sm:$0xf]
        %v327 = vld [vmem:[%s174 + $0x15c] sm:$0xf]
        %v328 = vld [vmem:[%s174 + $0x160] sm:$0xf]
        %v329 = vld [vmem:[%s174 + $0x164] sm:$0xf]
        %v330 = vld [vmem:[%s174 + $0x168] sm:$0xf]
        %v331 = vld [vmem:[%s174 + $0x16c] sm:$0xf]
        %v332 = vld [vmem:[%s174 + $0x170] sm:$0xf]
        %v333 = vld [vmem:[%s174 + $0x174] sm:$0xf]
        %v334 = vld [vmem:[%s174 + $0x178] sm:$0xf]
        %v335 = vld [vmem:[%s174 + $0x17c] sm:$0xf]
        %v336 = vld [vmem:[%s174 + $0x180] sm:$0xf]
        %v337 = vld [vmem:[%s174 + $0x184] sm:$0xf]
        %v338 = vld [vmem:[%s174 + $0x188] sm:$0xf]
        %v339 = vld [vmem:[%s174 + $0x18c] sm:$0xf]
        %v340 = vld [vmem:[%s174 + $0x190] sm:$0xf]
        %v341 = vld [vmem:[%s174 + $0x194] sm:$0xf]
        %v342 = vld [vmem:[%s174 + $0x198] sm:$0xf]
        %v343 = vld [vmem:[%s174 + $0x19c] sm:$0xf]
        %v344 = vld [vmem:[%s174 + $0x1a0] sm:$0xf]
        %v345 = vld [vmem:[%s174 + $0x1a4] sm:$0xf]
        %v346 = vld [vmem:[%s174 + $0x1a8] sm:$0xf]
        %v347 = vld [vmem:[%s174 + $0x1ac] sm:$0xf]
        %v348 = vld [vmem:[%s174 + $0x1b0] sm:$0xf]
        %v349 = vld [vmem:[%s174 + $0x1b4] sm:$0xf]
        %v350 = vld [vmem:[%s174 + $0x1b8] sm:$0xf]
        %v351 = vld [vmem:[%s174 + $0x1bc] sm:$0xf]
        %v352 = vld [vmem:[%s174 + $0x1c0] sm:$0xf]
        %v353 = vld [vmem:[%s174 + $0x1c4] sm:$0xf]
        %v354 = vld [vmem:[%s174 + $0x1c8] sm:$0xf]
        %v355 = vld [vmem:[%s174 + $0x1cc] sm:$0xf]
        %v356 = vld [vmem:[%s174 + $0x1d0] sm:$0xf]
        %v357 = vld [vmem:[%s174 + $0x1d4] sm:$0xf]
        %v358 = vld [vmem:[%s174 + $0x1d8] sm:$0xf]
        %v359 = vld [vmem:[%s174 + $0x1dc] sm:$0xf]
        %v360 = vld [vmem:[%s174 + $0x1e0] sm:$0xf]
        %v361 = vld [vmem:[%s174 + $0x1e4] sm:$0xf]
        %v362 = vld [vmem:[%s174 + $0x1e8] sm:$0xf]
        %v363 = vld [vmem:[%s174 + $0x1ec] sm:$0xf]
        %v364 = vld [vmem:[%s174 + $0x1f0] sm:$0xf]
        %v365 = vld [vmem:[%s174 + $0x1f4] sm:$0xf]
        %v366 = vld [vmem:[%s174 + $0x1f8] sm:$0xf]
        %v367 = vld [vmem:[%s174 + $0x1fc] sm:$0xf]
        %v368 = vld [vmem:[%s174 + $0x200] sm:$0xf]
        %v369 = vld [vmem:[%s174 + $0x204] sm:$0xf]
        %v370 = vld [vmem:[%s174 + $0x208] sm:$0xf]
        %v371 = vld [vmem:[%s174 + $0x20c] sm:$0xf]
        %v372 = vld [vmem:[%s174 + $0x210] sm:$0xf]
        %v373 = vld [vmem:[%s174 + $0x214] sm:$0xf]
        %v374 = vld [vmem:[%s174 + $0x218] sm:$0xf]
        %v375 = vld [vmem:[%s174 + $0x21c] sm:$0xf]
        %v376 = vld [vmem:[%s174 + $0x220] sm:$0xf]
        %v377 = vld [vmem:[%s174 + $0x224] sm:$0xf]
        %v378 = vld [vmem:[%s174 + $0x228] sm:$0xf]
        %v379 = vld [vmem:[%s174 + $0x22c] sm:$0xf]
        %v380 = vld [vmem:[%s174 + $0x230] sm:$0xf]
        %v381 = vld [vmem:[%s174 + $0x234] sm:$0xf]
        %v382 = vld [vmem:[%s174 + $0x238] sm:$0xf]
        %v383 = vld [vmem:[%s174 + $0x23c] sm:$0xf]
        %v384 = vld [vmem:[%s174 + $0x240] sm:$0xf]
        %v385 = vld [vmem:[%s174 + $0x244] sm:$0xf]
        %v386 = vld [vmem:[%s174 + $0x248] sm:$0xf]
        %v387 = vld [vmem:[%s174 + $0x24c] sm:$0xf]
        %v388 = vld [vmem:[%s174 + $0x250] sm:$0xf]
        %v389 = vld [vmem:[%s174 + $0x254] sm:$0xf]
        %v390 = vld [vmem:[%s174 + $0x258] sm:$0xf]
        %v391 = vld [vmem:[%s174 + $0x25c] sm:$0xf]
        %v392 = vld [vmem:[%s174 + $0x260] sm:$0xf]
        %v393 = vld [vmem:[%s174 + $0x264] sm:$0xf]
        %v394 = vld [vmem:[%s174 + $0x268] sm:$0xf]
        %v395 = vld [vmem:[%s174 + $0x26c] sm:$0xf]
        %v396 = vld [vmem:[%s174 + $0x270] sm:$0xf]
        %v397 = vld [vmem:[%s174 + $0x274] sm:$0xf]
        %v398 = vld [vmem:[%s174 + $0x278] sm:$0xf]
        %v399 = vld [vmem:[%s174 + $0x27c] sm:$0xf]
        %v400 = vld [vmem:[%s174 + $0x280] sm:$0xf]
        %v401 = vld [vmem:[%s174 + $0x284] sm:$0xf]
        %v402 = vld [vmem:[%s174 + $0x288] sm:$0xf]
        %v403 = vld [vmem:[%s174 + $0x28c] sm:$0xf]
        %v404 = vld [vmem:[%s174 + $0x290] sm:$0xf]
        %v405 = vld [vmem:[%s174 + $0x294] sm:$0xf]
        %v406 = vld [vmem:[%s174 + $0x298] sm:$0xf]
        %v407 = vld [vmem:[%s174 + $0x29c] sm:$0xf]
        %v408 = vld [vmem:[%s174 + $0x2a0] sm:$0xf]
        %v409 = vld [vmem:[%s174 + $0x2a4] sm:$0xf]
        %v410 = vld [vmem:[%s174 + $0x2a8] sm:$0xf]
        %v411 = vld [vmem:[%s174 + $0x2ac] sm:$0xf]
        %v412 = vld [vmem:[%s174 + $0x2b0] sm:$0xf]
        %v413 = vld [vmem:[%s174 + $0x2b4] sm:$0xf]
        %v414 = vld [vmem:[%s174 + $0x2b8] sm:$0xf]
        %v415 = vld [vmem:[%s174 + $0x2bc] sm:$0xf]
        %v416 = vld [vmem:[%s174 + $0x2c0] sm:$0xf]
        %v417 = vld [vmem:[%s174 + $0x2c4] sm:$0xf]
        %v418 = vld [vmem:[%s174 + $0x2c8] sm:$0xf]
        %v419 = vld [vmem:[%s174 + $0x2cc] sm:$0xf]
        %v420 = vld [vmem:[%s174 + $0x2d0] sm:$0xf]
        %v421 = vld [vmem:[%s174 + $0x2d4] sm:$0xf]
        %v422 = vld [vmem:[%s174 + $0x2d8] sm:$0xf]
        %v423 = vld [vmem:[%s174 + $0x2dc] sm:$0xf]
        %v424 = vld [vmem:[%s174 + $0x2e0] sm:$0xf]
        %v425 = vld [vmem:[%s174 + $0x2e4] sm:$0xf]
        %v426 = vld [vmem:[%s174 + $0x2e8] sm:$0xf]
        %v427 = vld [vmem:[%s174 + $0x2ec] sm:$0xf]
        %v428 = vld [vmem:[%s174 + $0x2f0] sm:$0xf]
        %v429 = vld [vmem:[%s174 + $0x2f4] sm:$0xf]
        %v430 = vld [vmem:[%s174 + $0x2f8] sm:$0xf]
        %v431 = vld [vmem:[%s174 + $0x2fc] sm:$0xf]
        %v432 = vld [vmem:[%s174 + $0x300] sm:$0xf]
        %v433 = vld [vmem:[%s174 + $0x304] sm:$0xf]
        %v434 = vld [vmem:[%s174 + $0x308] sm:$0xf]
        %v435 = vld [vmem:[%s174 + $0x30c] sm:$0xf]
        %v436 = vld [vmem:[%s174 + $0x310] sm:$0xf]
        %v437 = vld [vmem:[%s174 + $0x314] sm:$0xf]
        %v438 = vld [vmem:[%s174 + $0x318] sm:$0xf]
        %v439 = vld [vmem:[%s174 + $0x31c] sm:$0xf]
        %v440 = vld [vmem:[%s174 + $0x320] sm:$0xf]
        %v441 = vld [vmem:[%s174 + $0x324] sm:$0xf]
        %v442 = vld [vmem:[%s174 + $0x328] sm:$0xf]
        %v443 = vld [vmem:[%s174 + $0x32c] sm:$0xf]
        %v444 = vld [vmem:[%s174 + $0x330] sm:$0xf]
        %v445 = vld [vmem:[%s174 + $0x334] sm:$0xf]
        %v446 = vld [vmem:[%s174 + $0x338] sm:$0xf]
        %v447 = vld [vmem:[%s174 + $0x33c] sm:$0xf]
        %v448 = vld [vmem:[%s174 + $0x340] sm:$0xf]
        %v449 = vld [vmem:[%s174 + $0x344] sm:$0xf]
        %v450 = vld [vmem:[%s174 + $0x348] sm:$0xf]
        %v451 = vld [vmem:[%s174 + $0x34c] sm:$0xf]
        %v452 = vld [vmem:[%s174 + $0x350] sm:$0xf]
        %v453 = vld [vmem:[%s174 + $0x354] sm:$0xf]
        %v454 = vld [vmem:[%s174 + $0x358] sm:$0xf]
        %v455 = vld [vmem:[%s174 + $0x35c] sm:$0xf]
        %v456 = vld [vmem:[%s174 + $0x360] sm:$0xf]
        %v457 = vld [vmem:[%s174 + $0x364] sm:$0xf]
        %v458 = vld [vmem:[%s174 + $0x368] sm:$0xf]
        %v459 = vld [vmem:[%s174 + $0x36c] sm:$0xf]
        %v460 = vld [vmem:[%s174 + $0x370] sm:$0xf]
        %v461 = vld [vmem:[%s174 + $0x374] sm:$0xf]
        %v462 = vld [vmem:[%s174 + $0x378] sm:$0xf]
        %v463 = vld [vmem:[%s174 + $0x37c] sm:$0xf]
        %v464 = vld [vmem:[%s174 + $0x380] sm:$0xf]
        %v465 = vld [vmem:[%s174 + $0x384] sm:$0xf]
        %v466 = vld [vmem:[%s174 + $0x388] sm:$0xf]
        %v467 = vld [vmem:[%s174 + $0x38c] sm:$0xf]
        %v468 = vld [vmem:[%s174 + $0x390] sm:$0xf]
        %v469 = vld [vmem:[%s174 + $0x394] sm:$0xf]
        %v470 = vld [vmem:[%s174 + $0x398] sm:$0xf]
        %v471 = vld [vmem:[%s174 + $0x39c] sm:$0xf]
        %v472 = vld [vmem:[%s174 + $0x3a0] sm:$0xf]
        %v473 = vld [vmem:[%s174 + $0x3a4] sm:$0xf]
        %v474 = vld [vmem:[%s174 + $0x3a8] sm:$0xf]
        %v475 = vld [vmem:[%s174 + $0x3ac] sm:$0xf]
        %v476 = vld [vmem:[%s174 + $0x3b0] sm:$0xf]
        %v477 = vld [vmem:[%s174 + $0x3b4] sm:$0xf]
        %v478 = vld [vmem:[%s174 + $0x3b8] sm:$0xf]
        %v479 = vld [vmem:[%s174 + $0x3bc] sm:$0xf]
        %v480 = vld [vmem:[%s174 + $0x3c0] sm:$0xf]
        %v481 = vld [vmem:[%s174 + $0x3c4] sm:$0xf]
        %v482 = vld [vmem:[%s174 + $0x3c8] sm:$0xf]
        %v483 = vld [vmem:[%s174 + $0x3cc] sm:$0xf]
        %v484 = vld [vmem:[%s174 + $0x3d0] sm:$0xf]
        %v485 = vld [vmem:[%s174 + $0x3d4] sm:$0xf]
        %v486 = vld [vmem:[%s174 + $0x3d8] sm:$0xf]
        %v487 = vld [vmem:[%s174 + $0x3dc] sm:$0xf]
        %v488 = vld [vmem:[%s174 + $0x3e0] sm:$0xf]
        %v489 = vld [vmem:[%s174 + $0x3e4] sm:$0xf]
        %v490 = vld [vmem:[%s174 + $0x3e8] sm:$0xf]
        %v491 = vld [vmem:[%s174 + $0x3ec] sm:$0xf]
        %v492 = vld [vmem:[%s174 + $0x3f0] sm:$0xf]
        %v493 = vld [vmem:[%s174 + $0x3f4] sm:$0xf]
        %v494 = vld [vmem:[%s174 + $0x3f8] sm:$0xf]
        %v495 = vld [vmem:[%s174 + $0x3fc] sm:$0xf]
        %v496 = vld [vmem:[%s174 + $0x400] sm:$0xf]
        %v497 = vld [vmem:[%s174 + $0x404] sm:$0xf]
        %v498 = vld [vmem:[%s174 + $0x408] sm:$0xf]
        %v499 = vld [vmem:[%s174 + $0x40c] sm:$0xf]
        %v500 = vld [vmem:[%s174 + $0x410] sm:$0xf]
        %v501 = vld [vmem:[%s174 + $0x414] sm:$0xf]
        %v502 = vld [vmem:[%s174 + $0x418] sm:$0xf]
        %v503 = vld [vmem:[%s174 + $0x41c] sm:$0xf]
        %v504 = vld [vmem:[%s174 + $0x420] sm:$0xf]
        %v505 = vld [vmem:[%s174 + $0x424] sm:$0xf]
        %v506 = vld [vmem:[%s174 + $0x428] sm:$0xf]
        %v507 = vld [vmem:[%s174 + $0x42c] sm:$0xf]
        %v508 = vld [vmem:[%s174 + $0x430] sm:$0xf]
        %v509 = vld [vmem:[%s174 + $0x434] sm:$0xf]
        %v510 = vld [vmem:[%s174 + $0x438] sm:$0xf]
        %v511 = vld [vmem:[%s174 + $0x43c] sm:$0xf]
        %v512 = vld [vmem:[%s174 + $0x440] sm:$0xf]
        %v513 = vld [vmem:[%s174 + $0x444] sm:$0xf]
        %v514 = vld [vmem:[%s174 + $0x448] sm:$0xf]
        %v515 = vld [vmem:[%s174 + $0x44c] sm:$0xf]
        %v516 = vld [vmem:[%s174 + $0x450] sm:$0xf]
        %v517 = vld [vmem:[%s174 + $0x454] sm:$0xf]
        %v518 = vld [vmem:[%s174 + $0x458] sm:$0xf]
        %v519 = vld [vmem:[%s174 + $0x45c] sm:$0xf]
        %v520 = vld [vmem:[%s174 + $0x460] sm:$0xf]
        %v521 = vld [vmem:[%s174 + $0x464] sm:$0xf]
        %v522 = vld [vmem:[%s174 + $0x468] sm:$0xf]
        %v523 = vld [vmem:[%s174 + $0x46c] sm:$0xf]
        %v524 = vld [vmem:[%s174 + $0x470] sm:$0xf]
        %v525 = vld [vmem:[%s174 + $0x474] sm:$0xf]
        %v526 = vld [vmem:[%s174 + $0x478] sm:$0xf]
        %v527 = vld [vmem:[%s174 + $0x47c] sm:$0xf]
        %v528 = vld [vmem:[%s174 + $0x480] sm:$0xf]
        %v529 = vld [vmem:[%s174 + $0x484] sm:$0xf]
        %v530 = vld [vmem:[%s174 + $0x488] sm:$0xf]
        %v531 = vld [vmem:[%s174 + $0x48c] sm:$0xf]
        %v532 = vld [vmem:[%s174 + $0x490] sm:$0xf]
        %v533 = vld [vmem:[%s174 + $0x494] sm:$0xf]
        %v534 = vld [vmem:[%s174 + $0x498] sm:$0xf]
        %v535 = vld [vmem:[%s174 + $0x49c] sm:$0xf]
        %v536 = vld [vmem:[%s174 + $0x4a0] sm:$0xf]
        %v537 = vld [vmem:[%s174 + $0x4a4] sm:$0xf]
        %v538 = vld [vmem:[%s174 + $0x4a8] sm:$0xf]
        %v539 = vld [vmem:[%s174 + $0x4ac] sm:$0xf]
        %v540 = vld [vmem:[%s174 + $0x4b0] sm:$0xf]
        %v541 = vld [vmem:[%s174 + $0x4b4] sm:$0xf]
        %v542 = vld [vmem:[%s174 + $0x4b8] sm:$0xf]
        %v543 = vld [vmem:[%s174 + $0x4bc] sm:$0xf]
        %v544 = vld [vmem:[%s174 + $0x4c0] sm:$0xf]
        %v545 = vld [vmem:[%s174 + $0x4c4] sm:$0xf]
        %v546 = vld [vmem:[%s174 + $0x4c8] sm:$0xf]
        %v547 = vld [vmem:[%s174 + $0x4cc] sm:$0xf]
        %v548 = vld [vmem:[%s174 + $0x4d0] sm:$0xf]
        %v549 = vld [vmem:[%s174 + $0x4d4] sm:$0xf]
        %v550 = vld [vmem:[%s174 + $0x4d8] sm:$0xf]
        %v551 = vld [vmem:[%s174 + $0x4dc] sm:$0xf]
        %v552 = vld [vmem:[%s174 + $0x4e0] sm:$0xf]
        %v553 = vld [vmem:[%s174 + $0x4e4] sm:$0xf]
        %v554 = vld [vmem:[%s174 + $0x4e8] sm:$0xf]
        %v555 = vld [vmem:[%s174 + $0x4ec] sm:$0xf]
        %v556 = vld [vmem:[%s174 + $0x4f0] sm:$0xf]
        %v557 = vld [vmem:[%s174 + $0x4f4] sm:$0xf]
        %v558 = vld [vmem:[%s174 + $0x4f8] sm:$0xf]
        %v559 = vld [vmem:[%s174 + $0x4fc] sm:$0xf]
        %v560 = vld [vmem:[%s174 + $0x500] sm:$0xf]
        %v561 = vld [vmem:[%s174 + $0x504] sm:$0xf]
        %v562 = vld [vmem:[%s174 + $0x508] sm:$0xf]
        %v563 = vld [vmem:[%s174 + $0x50c] sm:$0xf]
        %v564 = vld [vmem:[%s174 + $0x510] sm:$0xf]
        %v565 = vld [vmem:[%s174 + $0x514] sm:$0xf]
        %v566 = vld [vmem:[%s174 + $0x518] sm:$0xf]
        %v567 = vld [vmem:[%s174 + $0x51c] sm:$0xf]
        %v568 = vld [vmem:[%s174 + $0x520] sm:$0xf]
        %v569 = vld [vmem:[%s174 + $0x524] sm:$0xf]
        %v570 = vld [vmem:[%s174 + $0x528] sm:$0xf]
        %v571 = vld [vmem:[%s174 + $0x52c] sm:$0xf]
        %v572 = vld [vmem:[%s174 + $0x530] sm:$0xf]
        %v573 = vld [vmem:[%s174 + $0x534] sm:$0xf]
        %v574 = vld [vmem:[%s174 + $0x538] sm:$0xf]
        %v575 = vld [vmem:[%s174 + $0x53c] sm:$0xf]
        %v576 = vld [vmem:[%s174 + $0x540] sm:$0xf]
        %v577 = vld [vmem:[%s174 + $0x544] sm:$0xf]
        %v578 = vld [vmem:[%s174 + $0x548] sm:$0xf]
        %v579 = vld [vmem:[%s174 + $0x54c] sm:$0xf]
        %v580 = vld [vmem:[%s174 + $0x550] sm:$0xf]
        %v581 = vld [vmem:[%s174 + $0x554] sm:$0xf]
        %v582 = vld [vmem:[%s174 + $0x558] sm:$0xf]
        %v583 = vld [vmem:[%s174 + $0x55c] sm:$0xf]
        %v584 = vld [vmem:[%s174 + $0x560] sm:$0xf]
        %v585 = vld [vmem:[%s174 + $0x564] sm:$0xf]
        %v586 = vld [vmem:[%s174 + $0x568] sm:$0xf]
        %v587 = vld [vmem:[%s174 + $0x56c] sm:$0xf]
        %v588 = vld [vmem:[%s174 + $0x570] sm:$0xf]
        %v589 = vld [vmem:[%s174 + $0x574] sm:$0xf]
        %v590 = vld [vmem:[%s174 + $0x578] sm:$0xf]
        %v591 = vld [vmem:[%s174 + $0x57c] sm:$0xf]
        %v592 = vld [vmem:[%s174 + $0x580] sm:$0xf]
        %v593 = vld [vmem:[%s174 + $0x584] sm:$0xf]
        %v594 = vld [vmem:[%s174 + $0x588] sm:$0xf]
        %v595 = vld [vmem:[%s174 + $0x58c] sm:$0xf]
        %v596 = vld [vmem:[%s174 + $0x590] sm:$0xf]
        %v597 = vld [vmem:[%s174 + $0x594] sm:$0xf]
        %v598 = vld [vmem:[%s174 + $0x598] sm:$0xf]
        %v599 = vld [vmem:[%s174 + $0x59c] sm:$0xf]
        %v600 = vld [vmem:[%s174 + $0x5a0] sm:$0xf]
        %v601 = vld [vmem:[%s174 + $0x5a4] sm:$0xf]
        %v602 = vld [vmem:[%s174 + $0x5a8] sm:$0xf]
        %v603 = vld [vmem:[%s174 + $0x5ac] sm:$0xf]
        %v604 = vld [vmem:[%s174 + $0x5b0] sm:$0xf]
        %v605 = vld [vmem:[%s174 + $0x5b4] sm:$0xf]
        %v606 = vld [vmem:[%s174 + $0x5b8] sm:$0xf]
        %v607 = vld [vmem:[%s174 + $0x5bc] sm:$0xf]
        %v608 = vld [vmem:[%s174 + $0x5c0] sm:$0xf]
        %v609 = vld [vmem:[%s174 + $0x5c4] sm:$0xf]
        %v610 = vld [vmem:[%s174 + $0x5c8] sm:$0xf]
        %v611 = vld [vmem:[%s174 + $0x5cc] sm:$0xf]
        %v612 = vld [vmem:[%s174 + $0x5d0] sm:$0xf]
        %v613 = vld [vmem:[%s174 + $0x5d4] sm:$0xf]
        %v614 = vld [vmem:[%s174 + $0x5d8] sm:$0xf]
        %v615 = vld [vmem:[%s174 + $0x5dc] sm:$0xf]
        %v616 = vld [vmem:[%s174 + $0x5e0] sm:$0xf]
        %v617 = vld [vmem:[%s174 + $0x5e4] sm:$0xf]
        %v618 = vld [vmem:[%s174 + $0x5e8] sm:$0xf]
        %v619 = vld [vmem:[%s174 + $0x5ec] sm:$0xf]
        %v620 = vld [vmem:[%s174 + $0x5f0] sm:$0xf]
        %v621 = vld [vmem:[%s174 + $0x5f4] sm:$0xf]
        %v622 = vld [vmem:[%s174 + $0x5f8] sm:$0xf]
        %v623 = vld [vmem:[%s174 + $0x5fc] sm:$0xf]
        %v624 = vld [vmem:[%s174 + $0x600] sm:$0xf]
        %v625 = vld [vmem:[%s174 + $0x604] sm:$0xf]
        %v626 = vld [vmem:[%s174 + $0x608] sm:$0xf]
        %v627 = vld [vmem:[%s174 + $0x60c] sm:$0xf]
        %v628 = vld [vmem:[%s174 + $0x610] sm:$0xf]
        %v629 = vld [vmem:[%s174 + $0x614] sm:$0xf]
        %v630 = vld [vmem:[%s174 + $0x618] sm:$0xf]
        %v631 = vld [vmem:[%s174 + $0x61c] sm:$0xf]
        %v632 = vld [vmem:[%s174 + $0x620] sm:$0xf]
        %v633 = vld [vmem:[%s174 + $0x624] sm:$0xf]
        %v634 = vld [vmem:[%s174 + $0x628] sm:$0xf]
        %v635 = vld [vmem:[%s174 + $0x62c] sm:$0xf]
        %v636 = vld [vmem:[%s174 + $0x630] sm:$0xf]
        %v637 = vld [vmem:[%s174 + $0x634] sm:$0xf]
        %v638 = vld [vmem:[%s174 + $0x638] sm:$0xf]
        %v639 = vld [vmem:[%s174 + $0x63c] sm:$0xf]
        %v640 = vld [vmem:[%s174 + $0x640] sm:$0xf]
        %v641 = vld [vmem:[%s174 + $0x644] sm:$0xf]
        %v642 = vld [vmem:[%s174 + $0x648] sm:$0xf]
        %v643 = vld [vmem:[%s174 + $0x64c] sm:$0xf]
        %v644 = vld [vmem:[%s174 + $0x650] sm:$0xf]
        %v645 = vld [vmem:[%s174 + $0x654] sm:$0xf]
        %v646 = vld [vmem:[%s174 + $0x658] sm:$0xf]
        %v647 = vld [vmem:[%s174 + $0x65c] sm:$0xf]
        %v648 = vld [vmem:[%s174 + $0x660] sm:$0xf]
        %v649 = vld [vmem:[%s174 + $0x664] sm:$0xf]
        %v650 = vld [vmem:[%s174 + $0x668] sm:$0xf]
        %v651 = vld [vmem:[%s174 + $0x66c] sm:$0xf]
        %v652 = vld [vmem:[%s174 + $0x670] sm:$0xf]
        %v653 = vld [vmem:[%s174 + $0x674] sm:$0xf]
        %v654 = vld [vmem:[%s174 + $0x678] sm:$0xf]
        %v655 = vld [vmem:[%s174 + $0x67c] sm:$0xf]
        %v656 = vld [vmem:[%s174 + $0x680] sm:$0xf]
        %v657 = vld [vmem:[%s174 + $0x684] sm:$0xf]
        %v658 = vld [vmem:[%s174 + $0x688] sm:$0xf]
        %v659 = vld [vmem:[%s174 + $0x68c] sm:$0xf]
        %v660 = vld [vmem:[%s174 + $0x690] sm:$0xf]
        %v661 = vld [vmem:[%s174 + $0x694] sm:$0xf]
        %v662 = vld [vmem:[%s174 + $0x698] sm:$0xf]
        %v663 = vld [vmem:[%s174 + $0x69c] sm:$0xf]
        %v664 = vld [vmem:[%s174 + $0x6a0] sm:$0xf]
        %v665 = vld [vmem:[%s174 + $0x6a4] sm:$0xf]
        %v666 = vld [vmem:[%s174 + $0x6a8] sm:$0xf]
        %v667 = vld [vmem:[%s174 + $0x6ac] sm:$0xf]
        %v668 = vld [vmem:[%s174 + $0x6b0] sm:$0xf]
        %v669 = vld [vmem:[%s174 + $0x6b4] sm:$0xf]
        %v670 = vld [vmem:[%s174 + $0x6b8] sm:$0xf]
        %v671 = vld [vmem:[%s174 + $0x6bc] sm:$0xf]
        %v672 = vld [vmem:[%s174 + $0x6c0] sm:$0xf]
        %v673 = vld [vmem:[%s174 + $0x6c4] sm:$0xf]
        %v674 = vld [vmem:[%s174 + $0x6c8] sm:$0xf]
        %v675 = vld [vmem:[%s174 + $0x6cc] sm:$0xf]
        %v676 = vld [vmem:[%s174 + $0x6d0] sm:$0xf]
        %v677 = vld [vmem:[%s174 + $0x6d4] sm:$0xf]
        %v678 = vld [vmem:[%s174 + $0x6d8] sm:$0xf]
        %v679 = vld [vmem:[%s174 + $0x6dc] sm:$0xf]
        %v680 = vld [vmem:[%s174 + $0x6e0] sm:$0xf]
        %v681 = vld [vmem:[%s174 + $0x6e4] sm:$0xf]
        %v682 = vld [vmem:[%s174 + $0x6e8] sm:$0xf]
        %v683 = vld [vmem:[%s174 + $0x6ec] sm:$0xf]
        %v684 = vld [vmem:[%s174 + $0x6f0] sm:$0xf]
        %v685 = vld [vmem:[%s174 + $0x6f4] sm:$0xf]
        %v686 = vld [vmem:[%s174 + $0x6f8] sm:$0xf]
        %v687 = vld [vmem:[%s174 + $0x6fc] sm:$0xf]
        %v688 = vld [vmem:[%s174 + $0x700] sm:$0xf]
        %v689 = vld [vmem:[%s174 + $0x704] sm:$0xf]
        %v690 = vld [vmem:[%s174 + $0x708] sm:$0xf]
        %v691 = vld [vmem:[%s174 + $0x70c] sm:$0xf]
        %v692 = vld [vmem:[%s174 + $0x710] sm:$0xf]
        %v693 = vld [vmem:[%s174 + $0x714] sm:$0xf]
        %v694 = vld [vmem:[%s174 + $0x718] sm:$0xf]
        %v695 = vld [vmem:[%s174 + $0x71c] sm:$0xf]
        %v696 = vld [vmem:[%s174 + $0x720] sm:$0xf]
        %v697 = vld [vmem:[%s174 + $0x724] sm:$0xf]
        %v698 = vld [vmem:[%s174 + $0x728] sm:$0xf]
        %v699 = vld [vmem:[%s174 + $0x72c] sm:$0xf]
        %v700 = vld [vmem:[%s174 + $0x730] sm:$0xf]
        %v701 = vld [vmem:[%s174 + $0x734] sm:$0xf]
        %v702 = vld [vmem:[%s174 + $0x738] sm:$0xf]
        %v703 = vld [vmem:[%s174 + $0x73c] sm:$0xf]
        %v704 = vld [vmem:[%s174 + $0x740] sm:$0xf]
        %v705 = vld [vmem:[%s174 + $0x744] sm:$0xf]
        %v706 = vld [vmem:[%s174 + $0x748] sm:$0xf]
        %v707 = vld [vmem:[%s174 + $0x74c] sm:$0xf]
        %v708 = vld [vmem:[%s174 + $0x750] sm:$0xf]
        %v709 = vld [vmem:[%s174 + $0x754] sm:$0xf]
        %v710 = vld [vmem:[%s174 + $0x758] sm:$0xf]
        %v711 = vld [vmem:[%s174 + $0x75c] sm:$0xf]
        %v712 = vld [vmem:[%s174 + $0x760] sm:$0xf]
        %v713 = vld [vmem:[%s174 + $0x764] sm:$0xf]
        %v714 = vld [vmem:[%s174 + $0x768] sm:$0xf]
        %v715 = vld [vmem:[%s174 + $0x76c] sm:$0xf]
        %v716 = vld [vmem:[%s174 + $0x770] sm:$0xf]
        %v717 = vld [vmem:[%s174 + $0x774] sm:$0xf]
        %v718 = vld [vmem:[%s174 + $0x778] sm:$0xf]
        %v719 = vld [vmem:[%s174 + $0x77c] sm:$0xf]
        %v720 = vld [vmem:[%s174 + $0x780] sm:$0xf]
        %v721 = vld [vmem:[%s174 + $0x784] sm:$0xf]
        %v722 = vld [vmem:[%s174 + $0x788] sm:$0xf]
        %v723 = vld [vmem:[%s174 + $0x78c] sm:$0xf]
        %v724 = vld [vmem:[%s174 + $0x790] sm:$0xf]
        %v725 = vld [vmem:[%s174 + $0x794] sm:$0xf]
        %v726 = vld [vmem:[%s174 + $0x798] sm:$0xf]
        %v727 = vld [vmem:[%s174 + $0x79c] sm:$0xf]
        %v728 = vld [vmem:[%s174 + $0x7a0] sm:$0xf]
        %v729 = vld [vmem:[%s174 + $0x7a4] sm:$0xf]
        %v730 = vld [vmem:[%s174 + $0x7a8] sm:$0xf]
        %v731 = vld [vmem:[%s174 + $0x7ac] sm:$0xf]
        %v732 = vld [vmem:[%s174 + $0x7b0] sm:$0xf]
        %v733 = vld [vmem:[%s174 + $0x7b4] sm:$0xf]
        %v734 = vld [vmem:[%s174 + $0x7b8] sm:$0xf]
        %v735 = vld [vmem:[%s174 + $0x7bc] sm:$0xf]
        %v736 = vld [vmem:[%s174 + $0x7c0] sm:$0xf]
        %v737 = vld [vmem:[%s174 + $0x7c4] sm:$0xf]
        %v738 = vld [vmem:[%s174 + $0x7c8] sm:$0xf]
        %v739 = vld [vmem:[%s174 + $0x7cc] sm:$0xf]
        %v740 = vld [vmem:[%s174 + $0x7d0] sm:$0xf]
        %v741 = vld [vmem:[%s174 + $0x7d4] sm:$0xf]
        %v742 = vld [vmem:[%s174 + $0x7d8] sm:$0xf]
        %v743 = vld [vmem:[%s174 + $0x7dc] sm:$0xf]
        %v744 = vld [vmem:[%s174 + $0x7e0] sm:$0xf]
        %v745 = vld [vmem:[%s174 + $0x7e4] sm:$0xf]
        %v746 = vld [vmem:[%s174 + $0x7e8] sm:$0xf]
        %v747 = vld [vmem:[%s174 + $0x7ec] sm:$0xf]
        %v748 = vld [vmem:[%s174 + $0x7f0] sm:$0xf]
        %v749 = vld [vmem:[%s174 + $0x7f4] sm:$0xf]
        %v750 = vld [vmem:[%s174 + $0x7f8] sm:$0xf]
        %v751 = vld [vmem:[%s174 + $0x7fc] sm:$0xf]
        %v752 = vld [vmem:[%s174 + $0x800] sm:$0xf]
        %v753 = vld [vmem:[%s174 + $0x804] sm:$0xf]
        %v754 = vld [vmem:[%s174 + $0x808] sm:$0xf]
        %v755 = vld [vmem:[%s174 + $0x80c] sm:$0xf]
        %v756 = vld [vmem:[%s174 + $0x810] sm:$0xf]
        %v757 = vld [vmem:[%s174 + $0x814] sm:$0xf]
        %v758 = vld [vmem:[%s174 + $0x818] sm:$0xf]
        %v759 = vld [vmem:[%s174 + $0x81c] sm:$0xf]
        %v760 = vld [vmem:[%s174 + $0x820] sm:$0xf]
        %v761 = vld [vmem:[%s174 + $0x824] sm:$0xf]
        %v762 = vld [vmem:[%s174 + $0x828] sm:$0xf]
        %v763 = vld [vmem:[%s174 + $0x82c] sm:$0xf]
        %v764 = vld [vmem:[%s174 + $0x830] sm:$0xf]
        %v765 = vld [vmem:[%s174 + $0x834] sm:$0xf]
        %v766 = vld [vmem:[%s174 + $0x838] sm:$0xf]
        %v767 = vld [vmem:[%s174 + $0x83c] sm:$0xf]
        %v768 = vld [vmem:[%s174 + $0x840] sm:$0xf]
        %v769 = vld [vmem:[%s174 + $0x844] sm:$0xf]
        %v770 = vld [vmem:[%s174 + $0x848] sm:$0xf]
        %v771 = vld [vmem:[%s174 + $0x84c] sm:$0xf]
        %v772 = vld [vmem:[%s174 + $0x850] sm:$0xf]
        %v773 = vld [vmem:[%s174 + $0x854] sm:$0xf]
        %v774 = vld [vmem:[%s174 + $0x858] sm:$0xf]
        %v775 = vld [vmem:[%s174 + $0x85c] sm:$0xf]
        %v776 = vld [vmem:[%s174 + $0x860] sm:$0xf]
        %v777 = vld [vmem:[%s174 + $0x864] sm:$0xf]
        %v778 = vld [vmem:[%s174 + $0x868] sm:$0xf]
        %v779 = vld [vmem:[%s174 + $0x86c] sm:$0xf]
        %v780 = vld [vmem:[%s174 + $0x870] sm:$0xf]
        %v781 = vld [vmem:[%s174 + $0x874] sm:$0xf]
        %v782 = vld [vmem:[%s174 + $0x878] sm:$0xf]
        %v783 = vld [vmem:[%s174 + $0x87c] sm:$0xf]
        %v784 = vld [vmem:[%s174 + $0x880] sm:$0xf]
        %v785 = vld [vmem:[%s174 + $0x884] sm:$0xf]
        %v786 = vld [vmem:[%s174 + $0x888] sm:$0xf]
        %v787 = vld [vmem:[%s174 + $0x88c] sm:$0xf]
        %v788 = vld [vmem:[%s174 + $0x890] sm:$0xf]
        %v789 = vld [vmem:[%s174 + $0x894] sm:$0xf]
        %v790 = vld [vmem:[%s174 + $0x898] sm:$0xf]
        %v791 = vld [vmem:[%s174 + $0x89c] sm:$0xf]
        %v792 = vld [vmem:[%s174 + $0x8a0] sm:$0xf]
        %v793 = vld [vmem:[%s174 + $0x8a4] sm:$0xf]
        %v794 = vld [vmem:[%s174 + $0x8a8] sm:$0xf]
        %v795 = vld [vmem:[%s174 + $0x8ac] sm:$0xf]
        %v796 = vld [vmem:[%s174 + $0x8b0] sm:$0xf]
        %v797 = vld [vmem:[%s174 + $0x8b4] sm:$0xf]
        %v798 = vld [vmem:[%s174 + $0x8b8] sm:$0xf]
        %v799 = vld [vmem:[%s174 + $0x8bc] sm:$0xf]
        %v800 = vld [vmem:[%s174 + $0x8c0] sm:$0xf]
        %v801 = vld [vmem:[%s174 + $0x8c4] sm:$0xf]
        %v802 = vld [vmem:[%s174 + $0x8c8] sm:$0xf]
        %v803 = vld [vmem:[%s174 + $0x8cc] sm:$0xf]
        %v804 = vld [vmem:[%s174 + $0x8d0] sm:$0xf]
        %v805 = vld [vmem:[%s174 + $0x8d4] sm:$0xf]
        %v806 = vld [vmem:[%s174 + $0x8d8] sm:$0xf]
        %v807 = vld [vmem:[%s174 + $0x8dc] sm:$0xf]
        %v808 = vld [vmem:[%s174 + $0x8e0] sm:$0xf]
        %v809 = vld [vmem:[%s174 + $0x8e4] sm:$0xf]
        %v810 = vld [vmem:[%s174 + $0x8e8] sm:$0xf]
        %v811 = vld [vmem:[%s174 + $0x8ec] sm:$0xf]
        %v812 = vld [vmem:[%s174 + $0x8f0] sm:$0xf]
        %v813 = vld [vmem:[%s174 + $0x8f4] sm:$0xf]
        %v814 = vld [vmem:[%s174 + $0x8f8] sm:$0xf]
        %v815 = vld [vmem:[%s174 + $0x8fc] sm:$0xf]
        %v816 = vld [vmem:[%s174 + $0x900] sm:$0xf]
        %v817 = vld [vmem:[%s174 + $0x904] sm:$0xf]
        %v818 = vld [vmem:[%s174 + $0x908] sm:$0xf]
        %v819 = vld [vmem:[%s174 + $0x90c] sm:$0xf]
        %v820 = vld [vmem:[%s174 + $0x910] sm:$0xf]
        %v821 = vld [vmem:[%s174 + $0x914] sm:$0xf]
        %v822 = vld [vmem:[%s174 + $0x918] sm:$0xf]
        %v823 = vld [vmem:[%s174 + $0x91c] sm:$0xf]
        %v824 = vld [vmem:[%s174 + $0x920] sm:$0xf]
        %v825 = vld [vmem:[%s174 + $0x924] sm:$0xf]
        %v826 = vld [vmem:[%s174 + $0x928] sm:$0xf]
        %v827 = vld [vmem:[%s174 + $0x92c] sm:$0xf]
        %v828 = vld [vmem:[%s174 + $0x930] sm:$0xf]
        %v829 = vld [vmem:[%s174 + $0x934] sm:$0xf]
        %v830 = vld [vmem:[%s174 + $0x938] sm:$0xf]
        %v831 = vld [vmem:[%s174 + $0x93c] sm:$0xf]
        %v832 = vld [vmem:[%s174 + $0x940] sm:$0xf]
        %v833 = vld [vmem:[%s174 + $0x944] sm:$0xf]
        %v834 = vld [vmem:[%s174 + $0x948] sm:$0xf]
        %v835 = vld [vmem:[%s174 + $0x94c] sm:$0xf]
        %v836 = vld [vmem:[%s174 + $0x950] sm:$0xf]
        %v837 = vld [vmem:[%s174 + $0x954] sm:$0xf]
        %v838 = vld [vmem:[%s174 + $0x958] sm:$0xf]
        %v839 = vld [vmem:[%s174 + $0x95c] sm:$0xf]
        %v840 = vld [vmem:[%s174 + $0x960] sm:$0xf]
        %v841 = vld [vmem:[%s174 + $0x964] sm:$0xf]
        %v842 = vld [vmem:[%s174 + $0x968] sm:$0xf]
        %v843 = vld [vmem:[%s174 + $0x96c] sm:$0xf]
        %v844 = vld [vmem:[%s174 + $0x970] sm:$0xf]
        %v845 = vld [vmem:[%s174 + $0x974] sm:$0xf]
        %v846 = vld [vmem:[%s174 + $0x978] sm:$0xf]
        %v847 = vld [vmem:[%s174 + $0x97c] sm:$0xf]
        %v848 = vld [vmem:[%s174 + $0x980] sm:$0xf]
        %v849 = vld [vmem:[%s174 + $0x984] sm:$0xf]
        %v850 = vld [vmem:[%s174 + $0x988] sm:$0xf]
        %v851 = vld [vmem:[%s174 + $0x98c] sm:$0xf]
        %v852 = vld [vmem:[%s174 + $0x990] sm:$0xf]
        %v853 = vld [vmem:[%s174 + $0x994] sm:$0xf]
        %v854 = vld [vmem:[%s174 + $0x998] sm:$0xf]
        %v855 = vld [vmem:[%s174 + $0x99c] sm:$0xf]
        %v856 = vld [vmem:[%s174 + $0x9a0] sm:$0xf]
        %v857 = vld [vmem:[%s174 + $0x9a4] sm:$0xf]
        %v858 = vld [vmem:[%s174 + $0x9a8] sm:$0xf]
        %v859 = vld [vmem:[%s174 + $0x9ac] sm:$0xf]
        %v860 = vld [vmem:[%s174 + $0x9b0] sm:$0xf]
        %v861 = vld [vmem:[%s174 + $0x9b4] sm:$0xf]
        %v862 = vld [vmem:[%s174 + $0x9b8] sm:$0xf]
        %v863 = vld [vmem:[%s174 + $0x9bc] sm:$0xf]
        %v864 = vld [vmem:[%s174 + $0x9c0] sm:$0xf]
        %v865 = vld [vmem:[%s174 + $0x9c4] sm:$0xf]
        %v866 = vld [vmem:[%s174 + $0x9c8] sm:$0xf]
        %v867 = vld [vmem:[%s174 + $0x9cc] sm:$0xf]
        %v868 = vld [vmem:[%s174 + $0x9d0] sm:$0xf]
        %v869 = vld [vmem:[%s174 + $0x9d4] sm:$0xf]
        %v870 = vld [vmem:[%s174 + $0x9d8] sm:$0xf]
        %v871 = vld [vmem:[%s174 + $0x9dc] sm:$0xf]
        %v872 = vld [vmem:[%s174 + $0x9e0] sm:$0xf]
        %v873 = vld [vmem:[%s174 + $0x9e4] sm:$0xf]
        %v874 = vld [vmem:[%s174 + $0x9e8] sm:$0xf]
        %v875 = vld [vmem:[%s174 + $0x9ec] sm:$0xf]
        %v876 = vld [vmem:[%s174 + $0x9f0] sm:$0xf]
        %v877 = vld [vmem:[%s174 + $0x9f4] sm:$0xf]
        %v878 = vld [vmem:[%s174 + $0x9f8] sm:$0xf]
        %v879 = vld [vmem:[%s174 + $0x9fc] sm:$0xf]
        %v880 = vld [vmem:[%s174 + $0xa00] sm:$0xf]
        %v881 = vld [vmem:[%s174 + $0xa04] sm:$0xf]
        %v882 = vld [vmem:[%s174 + $0xa08] sm:$0xf]
        %v883 = vld [vmem:[%s174 + $0xa0c] sm:$0xf]
        %v884 = vld [vmem:[%s174 + $0xa10] sm:$0xf]
        %v885 = vld [vmem:[%s174 + $0xa14] sm:$0xf]
        %v886 = vld [vmem:[%s174 + $0xa18] sm:$0xf]
        %v887 = vld [vmem:[%s174 + $0xa1c] sm:$0xf]
        %v888 = vld [vmem:[%s174 + $0xa20] sm:$0xf]
        %v889 = vld [vmem:[%s174 + $0xa24] sm:$0xf]
        %v890 = vld [vmem:[%s174 + $0xa28] sm:$0xf]
        %v891 = vld [vmem:[%s174 + $0xa2c] sm:$0xf]
        %v892 = vld [vmem:[%s174 + $0xa30] sm:$0xf]
        %v893 = vld [vmem:[%s174 + $0xa34] sm:$0xf]
        %v894 = vld [vmem:[%s174 + $0xa38] sm:$0xf]
        %v895 = vld [vmem:[%s174 + $0xa3c] sm:$0xf]
        %v896 = vld [vmem:[%s174 + $0xa40] sm:$0xf]
        %v897 = vld [vmem:[%s174 + $0xa44] sm:$0xf]
        %v898 = vld [vmem:[%s174 + $0xa48] sm:$0xf]
        %v899 = vld [vmem:[%s174 + $0xa4c] sm:$0xf]
        %v900 = vld [vmem:[%s174 + $0xa50] sm:$0xf]
        %v901 = vld [vmem:[%s174 + $0xa54] sm:$0xf]
        %v902 = vld [vmem:[%s174 + $0xa58] sm:$0xf]
        %v903 = vld [vmem:[%s174 + $0xa5c] sm:$0xf]
        %v904 = vld [vmem:[%s174 + $0xa60] sm:$0xf]
        %v905 = vld [vmem:[%s174 + $0xa64] sm:$0xf]
        %v906 = vld [vmem:[%s174 + $0xa68] sm:$0xf]
        %v907 = vld [vmem:[%s174 + $0xa6c] sm:$0xf]
        %v908 = vld [vmem:[%s174 + $0xa70] sm:$0xf]
        %v909 = vld [vmem:[%s174 + $0xa74] sm:$0xf]
        %v910 = vld [vmem:[%s174 + $0xa78] sm:$0xf]
        %v911 = vld [vmem:[%s174 + $0xa7c] sm:$0xf]
        %v912 = vld [vmem:[%s174 + $0xa80] sm:$0xf]
        %v913 = vld [vmem:[%s174 + $0xa84] sm:$0xf]
        %v914 = vld [vmem:[%s174 + $0xa88] sm:$0xf]
        %v915 = vld [vmem:[%s174 + $0xa8c] sm:$0xf]
        %v916 = vld [vmem:[%s174 + $0xa90] sm:$0xf]
        %v917 = vld [vmem:[%s174 + $0xa94] sm:$0xf]
        %v918 = vld [vmem:[%s174 + $0xa98] sm:$0xf]
        %v919 = vld [vmem:[%s174 + $0xa9c] sm:$0xf]
        %v920 = vld [vmem:[%s174 + $0xaa0] sm:$0xf]
        %v921 = vld [vmem:[%s174 + $0xaa4] sm:$0xf]
        %v922 = vld [vmem:[%s174 + $0xaa8] sm:$0xf]
        %v923 = vld [vmem:[%s174 + $0xaac] sm:$0xf]
        %v924 = vld [vmem:[%s174 + $0xab0] sm:$0xf]
        %v925 = vld [vmem:[%s174 + $0xab4] sm:$0xf]
        %v926 = vld [vmem:[%s174 + $0xab8] sm:$0xf]
        %v927 = vld [vmem:[%s174 + $0xabc] sm:$0xf]
        %v928 = vld [vmem:[%s174 + $0xac0] sm:$0xf]
        %v929 = vld [vmem:[%s174 + $0xac4] sm:$0xf]
        %v930 = vld [vmem:[%s174 + $0xac8] sm:$0xf]
        %v931 = vld [vmem:[%s174 + $0xacc] sm:$0xf]
        %v932 = vld [vmem:[%s174 + $0xad0] sm:$0xf]
        %v933 = vld [vmem:[%s174 + $0xad4] sm:$0xf]
        %v934 = vld [vmem:[%s174 + $0xad8] sm:$0xf]
        %v935 = vld [vmem:[%s174 + $0xadc] sm:$0xf]
        %v936 = vld [vmem:[%s174 + $0xae0] sm:$0xf]
        %v937 = vld [vmem:[%s174 + $0xae4] sm:$0xf]
        %v938 = vld [vmem:[%s174 + $0xae8] sm:$0xf]
        %v939 = vld [vmem:[%s174 + $0xaec] sm:$0xf]
        %v940 = vld [vmem:[%s174 + $0xaf0] sm:$0xf]
        %v941 = vld [vmem:[%s174 + $0xaf4] sm:$0xf]
        %v942 = vld [vmem:[%s174 + $0xaf8] sm:$0xf]
        %v943 = vld [vmem:[%s174 + $0xafc] sm:$0xf]
        %v944 = vld [vmem:[%s174 + $0xb00] sm:$0xf]
        %v945 = vld [vmem:[%s174 + $0xb04] sm:$0xf]
        %v946 = vld [vmem:[%s174 + $0xb08] sm:$0xf]
        %v947 = vld [vmem:[%s174 + $0xb0c] sm:$0xf]
        %v948 = vld [vmem:[%s174 + $0xb10] sm:$0xf]
        %v949 = vld [vmem:[%s174 + $0xb14] sm:$0xf]
        %v950 = vld [vmem:[%s174 + $0xb18] sm:$0xf]
        %v951 = vld [vmem:[%s174 + $0xb1c] sm:$0xf]
        %v952 = vld [vmem:[%s174 + $0xb20] sm:$0xf]
        %v953 = vld [vmem:[%s174 + $0xb24] sm:$0xf]
        %v954 = vld [vmem:[%s174 + $0xb28] sm:$0xf]
        %v955 = vld [vmem:[%s174 + $0xb2c] sm:$0xf]
        %v956 = vld [vmem:[%s174 + $0xb30] sm:$0xf]
        %v957 = vld [vmem:[%s174 + $0xb34] sm:$0xf]
        %v958 = vld [vmem:[%s174 + $0xb38] sm:$0xf]
        %v959 = vld [vmem:[%s174 + $0xb3c] sm:$0xf]
        %v960 = vld [vmem:[%s174 + $0xb40] sm:$0xf]
        %v961 = vld [vmem:[%s174 + $0xb44] sm:$0xf]
        %v962 = vld [vmem:[%s174 + $0xb48] sm:$0xf]
        %v963 = vld [vmem:[%s174 + $0xb4c] sm:$0xf]
        %v964 = vld [vmem:[%s174 + $0xb50] sm:$0xf]
        %v965 = vld [vmem:[%s174 + $0xb54] sm:$0xf]
        %v966 = vld [vmem:[%s174 + $0xb58] sm:$0xf]
        %v967 = vld [vmem:[%s174 + $0xb5c] sm:$0xf]
        %v968 = vld [vmem:[%s174 + $0xb60] sm:$0xf]
        %v969 = vld [vmem:[%s174 + $0xb64] sm:$0xf]
        %v970 = vld [vmem:[%s174 + $0xb68] sm:$0xf]
        %v971 = vld [vmem:[%s174 + $0xb6c] sm:$0xf]
        %v972 = vld [vmem:[%s174 + $0xb70] sm:$0xf]
        %v973 = vld [vmem:[%s174 + $0xb74] sm:$0xf]
        %v974 = vld [vmem:[%s174 + $0xb78] sm:$0xf]
        %v975 = vld [vmem:[%s174 + $0xb7c] sm:$0xf]
        %v976 = vld [vmem:[%s174 + $0xb80] sm:$0xf]
        %v977 = vld [vmem:[%s174 + $0xb84] sm:$0xf]
        %v978 = vld [vmem:[%s174 + $0xb88] sm:$0xf]
        %v979 = vld [vmem:[%s174 + $0xb8c] sm:$0xf]
        %v980 = vld [vmem:[%s174 + $0xb90] sm:$0xf]
        %v981 = vld [vmem:[%s174 + $0xb94] sm:$0xf]
        %v982 = vld [vmem:[%s174 + $0xb98] sm:$0xf]
        %v983 = vld [vmem:[%s174 + $0xb9c] sm:$0xf]
        %v984 = vld [vmem:[%s174 + $0xba0] sm:$0xf]
        %v985 = vld [vmem:[%s174 + $0xba4] sm:$0xf]
        %v986 = vld [vmem:[%s174 + $0xba8] sm:$0xf]
        %v987 = vld [vmem:[%s174 + $0xbac] sm:$0xf]
        %v988 = vld [vmem:[%s174 + $0xbb0] sm:$0xf]
        %v989 = vld [vmem:[%s174 + $0xbb4] sm:$0xf]
        %v990 = vld [vmem:[%s174 + $0xbb8] sm:$0xf]
        %v991 = vld [vmem:[%s174 + $0xbbc] sm:$0xf]
        %v992 = vld [vmem:[%s174 + $0xbc0] sm:$0xf]
        %v993 = vld [vmem:[%s174 + $0xbc4] sm:$0xf]
        %v994 = vld [vmem:[%s174 + $0xbc8] sm:$0xf]
        %v995 = vld [vmem:[%s174 + $0xbcc] sm:$0xf]
        %v996 = vld [vmem:[%s174 + $0xbd0] sm:$0xf]
        %v997 = vld [vmem:[%s174 + $0xbd4] sm:$0xf]
        %v998 = vld [vmem:[%s174 + $0xbd8] sm:$0xf]
        %v999 = vld [vmem:[%s174 + $0xbdc] sm:$0xf]
        %v1000 = vld [vmem:[%s174 + $0xbe0] sm:$0xf]
        %v1001 = vld [vmem:[%s174 + $0xbe4] sm:$0xf]
        %v1002 = vld [vmem:[%s174 + $0xbe8] sm:$0xf]
        %v1003 = vld [vmem:[%s174 + $0xbec] sm:$0xf]
        %v1004 = vld [vmem:[%s174 + $0xbf0] sm:$0xf]
        %v1005 = vld [vmem:[%s174 + $0xbf4] sm:$0xf]
        %v1006 = vld [vmem:[%s174 + $0xbf8] sm:$0xf]
        %v1007 = vld [vmem:[%s174 + $0xbfc] sm:$0xf]
        %v1008 = vld [vmem:[%s174 + $0xc00] sm:$0xf]
        %v1009 = vld [vmem:[%s174 + $0xc04] sm:$0xf]
        %v1010 = vld [vmem:[%s174 + $0xc08] sm:$0xf]
        %v1011 = vld [vmem:[%s174 + $0xc0c] sm:$0xf]
        %v1012 = vld [vmem:[%s174 + $0xc10] sm:$0xf]
        %v1013 = vld [vmem:[%s174 + $0xc14] sm:$0xf]
        %v1014 = vld [vmem:[%s174 + $0xc18] sm:$0xf]
        %v1015 = vld [vmem:[%s174 + $0xc1c] sm:$0xf]
        %v1016 = vld [vmem:[%s174 + $0xc20] sm:$0xf]
        %v1017 = vld [vmem:[%s174 + $0xc24] sm:$0xf]
        %v1018 = vld [vmem:[%s174 + $0xc28] sm:$0xf]
        %v1019 = vld [vmem:[%s174 + $0xc2c] sm:$0xf]
        %v1020 = vld [vmem:[%s174 + $0xc30] sm:$0xf]
        %v1021 = vld [vmem:[%s174 + $0xc34] sm:$0xf]
        %v1022 = vld [vmem:[%s174 + $0xc38] sm:$0xf]
        %v1023 = vld [vmem:[%s174 + $0xc3c] sm:$0xf]
        %v1024 = vld [vmem:[%s174 + $0xc40] sm:$0xf]
        %v1025 = vld [vmem:[%s174 + $0xc44] sm:$0xf]
        %v1026 = vld [vmem:[%s174 + $0xc48] sm:$0xf]
        %v1027 = vld [vmem:[%s174 + $0xc4c] sm:$0xf]
        %v1028 = vld [vmem:[%s174 + $0xc50] sm:$0xf]
        %v1029 = vld [vmem:[%s174 + $0xc54] sm:$0xf]
        %v1030 = vld [vmem:[%s174 + $0xc58] sm:$0xf]
        %v1031 = vld [vmem:[%s174 + $0xc5c] sm:$0xf]
        %v1032 = vld [vmem:[%s174 + $0xc60] sm:$0xf]
        %v1033 = vld [vmem:[%s174 + $0xc64] sm:$0xf]
        %v1034 = vld [vmem:[%s174 + $0xc68] sm:$0xf]
        %v1035 = vld [vmem:[%s174 + $0xc6c] sm:$0xf]
        %v1036 = vld [vmem:[%s174 + $0xc70] sm:$0xf]
        %v1037 = vld [vmem:[%s174 + $0xc74] sm:$0xf]
        %v1038 = vld [vmem:[%s174 + $0xc78] sm:$0xf]
        %v1039 = vld [vmem:[%s174 + $0xc7c] sm:$0xf]
        %v1040 = vld [vmem:[%s174 + $0xc80] sm:$0xf]
        %v1041 = vld [vmem:[%s174 + $0xc84] sm:$0xf]
        %v1042 = vld [vmem:[%s174 + $0xc88] sm:$0xf]
        %v1043 = vld [vmem:[%s174 + $0xc8c] sm:$0xf]
        %v1044 = vld [vmem:[%s174 + $0xc90] sm:$0xf]
        %v1045 = vld [vmem:[%s174 + $0xc94] sm:$0xf]
        %v1046 = vld [vmem:[%s174 + $0xc98] sm:$0xf]
        %v1047 = vld [vmem:[%s174 + $0xc9c] sm:$0xf]
        %v1048 = vld [vmem:[%s174 + $0xca0] sm:$0xf]
        %v1049 = vld [vmem:[%s174 + $0xca4] sm:$0xf]
        %v1050 = vld [vmem:[%s174 + $0xca8] sm:$0xf]
        %v1051 = vld [vmem:[%s174 + $0xcac] sm:$0xf]
        %v1052 = vld [vmem:[%s174 + $0xcb0] sm:$0xf]
        %v1053 = vld [vmem:[%s174 + $0xcb4] sm:$0xf]
        %v1054 = vld [vmem:[%s174 + $0xcb8] sm:$0xf]
        %v1055 = vld [vmem:[%s174 + $0xcbc] sm:$0xf]
        %v1056 = vld [vmem:[%s174 + $0xcc0] sm:$0xf]
        %v1057 = vld [vmem:[%s174 + $0xcc4] sm:$0xf]
        %v1058 = vld [vmem:[%s174 + $0xcc8] sm:$0xf]
        %v1059 = vld [vmem:[%s174 + $0xccc] sm:$0xf]
        %v1060 = vld [vmem:[%s174 + $0xcd0] sm:$0xf]
        %v1061 = vld [vmem:[%s174 + $0xcd4] sm:$0xf]
        %v1062 = vld [vmem:[%s174 + $0xcd8] sm:$0xf]
        %v1063 = vld [vmem:[%s174 + $0xcdc] sm:$0xf]
        %v1064 = vld [vmem:[%s174 + $0xce0] sm:$0xf]
        %v1065 = vld [vmem:[%s174 + $0xce4] sm:$0xf]
        %v1066 = vld [vmem:[%s174 + $0xce8] sm:$0xf]
        %v1067 = vld [vmem:[%s174 + $0xcec] sm:$0xf]
        %v1068 = vld [vmem:[%s174 + $0xcf0] sm:$0xf]
        %v1069 = vld [vmem:[%s174 + $0xcf4] sm:$0xf]
        %v1070 = vld [vmem:[%s174 + $0xcf8] sm:$0xf]
        %v1071 = vld [vmem:[%s174 + $0xcfc] sm:$0xf]
        %v1072 = vld [vmem:[%s174 + $0xd00] sm:$0xf]
        %v1073 = vld [vmem:[%s174 + $0xd04] sm:$0xf]
        %v1074 = vld [vmem:[%s174 + $0xd08] sm:$0xf]
        %v1075 = vld [vmem:[%s174 + $0xd0c] sm:$0xf]
        %v1076 = vld [vmem:[%s174 + $0xd10] sm:$0xf]
        %v1077 = vld [vmem:[%s174 + $0xd14] sm:$0xf]
        %v1078 = vld [vmem:[%s174 + $0xd18] sm:$0xf]
        %v1079 = vld [vmem:[%s174 + $0xd1c] sm:$0xf]
        %v1080 = vld [vmem:[%s174 + $0xd20] sm:$0xf]
        %v1081 = vld [vmem:[%s174 + $0xd24] sm:$0xf]
        %v1082 = vld [vmem:[%s174 + $0xd28] sm:$0xf]
        %v1083 = vld [vmem:[%s174 + $0xd2c] sm:$0xf]
        %v1084 = vld [vmem:[%s174 + $0xd30] sm:$0xf]
        %v1085 = vld [vmem:[%s174 + $0xd34] sm:$0xf]
        %v1086 = vld [vmem:[%s174 + $0xd38] sm:$0xf]
        %v1087 = vld [vmem:[%s174 + $0xd3c] sm:$0xf]
        %v1088 = vld [vmem:[%s174 + $0xd40] sm:$0xf]
        %v1089 = vld [vmem:[%s174 + $0xd44] sm:$0xf]
        %v1090 = vld [vmem:[%s174 + $0xd48] sm:$0xf]
        %v1091 = vld [vmem:[%s174 + $0xd4c] sm:$0xf]
        %v1092 = vld [vmem:[%s174 + $0xd50] sm:$0xf]
        %v1093 = vld [vmem:[%s174 + $0xd54] sm:$0xf]
        %v1094 = vld [vmem:[%s174 + $0xd58] sm:$0xf]
        %v1095 = vld [vmem:[%s174 + $0xd5c] sm:$0xf]
        %v1096 = vld [vmem:[%s174 + $0xd60] sm:$0xf]
        %v1097 = vld [vmem:[%s174 + $0xd64] sm:$0xf]
        %v1098 = vld [vmem:[%s174 + $0xd68] sm:$0xf]
        %v1099 = vld [vmem:[%s174 + $0xd6c] sm:$0xf]
        %v1100 = vld [vmem:[%s174 + $0xd70] sm:$0xf]
        %v1101 = vld [vmem:[%s174 + $0xd74] sm:$0xf]
        %v1102 = vld [vmem:[%s174 + $0xd78] sm:$0xf]
        %v1103 = vld [vmem:[%s174 + $0xd7c] sm:$0xf]
        %v1104 = vld [vmem:[%s174 + $0xd80] sm:$0xf]
        %v1105 = vld [vmem:[%s174 + $0xd84] sm:$0xf]
        %v1106 = vld [vmem:[%s174 + $0xd88] sm:$0xf]
        %v1107 = vld [vmem:[%s174 + $0xd8c] sm:$0xf]
        %v1108 = vld [vmem:[%s174 + $0xd90] sm:$0xf]
        %v1109 = vld [vmem:[%s174 + $0xd94] sm:$0xf]
        %v1110 = vld [vmem:[%s174 + $0xd98] sm:$0xf]
        %v1111 = vld [vmem:[%s174 + $0xd9c] sm:$0xf]
        %v1112 = vld [vmem:[%s174 + $0xda0] sm:$0xf]
        %v1113 = vld [vmem:[%s174 + $0xda4] sm:$0xf]
        %v1114 = vld [vmem:[%s174 + $0xda8] sm:$0xf]
        %v1115 = vld [vmem:[%s174 + $0xdac] sm:$0xf]
        %v1116 = vld [vmem:[%s174 + $0xdb0] sm:$0xf]
        %v1117 = vld [vmem:[%s174 + $0xdb4] sm:$0xf]
        %v1118 = vld [vmem:[%s174 + $0xdb8] sm:$0xf]
        %v1119 = vld [vmem:[%s174 + $0xdbc] sm:$0xf]
        %v1120 = vld [vmem:[%s174 + $0xdc0] sm:$0xf]
        %v1121 = vld [vmem:[%s174 + $0xdc4] sm:$0xf]
        %v1122 = vld [vmem:[%s174 + $0xdc8] sm:$0xf]
        %v1123 = vld [vmem:[%s174 + $0xdcc] sm:$0xf]
        %v1124 = vld [vmem:[%s174 + $0xdd0] sm:$0xf]
        %v1125 = vld [vmem:[%s174 + $0xdd4] sm:$0xf]
        %v1126 = vld [vmem:[%s174 + $0xdd8] sm:$0xf]
        %v1127 = vld [vmem:[%s174 + $0xddc] sm:$0xf]
        %v1128 = vld [vmem:[%s174 + $0xde0] sm:$0xf]
        %v1129 = vld [vmem:[%s174 + $0xde4] sm:$0xf]
        %v1130 = vld [vmem:[%s174 + $0xde8] sm:$0xf]
        %v1131 = vld [vmem:[%s174 + $0xdec] sm:$0xf]
        %v1132 = vld [vmem:[%s174 + $0xdf0] sm:$0xf]
        %v1133 = vld [vmem:[%s174 + $0xdf4] sm:$0xf]
        %v1134 = vld [vmem:[%s174 + $0xdf8] sm:$0xf]
        %v1135 = vld [vmem:[%s174 + $0xdfc] sm:$0xf]
        %v1136 = vld [vmem:[%s174 + $0xe00] sm:$0xf]
        %v1137 = vld [vmem:[%s174 + $0xe04] sm:$0xf]
        %v1138 = vld [vmem:[%s174 + $0xe08] sm:$0xf]
        %v1139 = vld [vmem:[%s174 + $0xe0c] sm:$0xf]
        %v1140 = vld [vmem:[%s174 + $0xe10] sm:$0xf]
        %v1141 = vld [vmem:[%s174 + $0xe14] sm:$0xf]
        %v1142 = vld [vmem:[%s174 + $0xe18] sm:$0xf]
        %v1143 = vld [vmem:[%s174 + $0xe1c] sm:$0xf]
        %v1144 = vld [vmem:[%s174 + $0xe20] sm:$0xf]
        %v1145 = vld [vmem:[%s174 + $0xe24] sm:$0xf]
        %v1146 = vld [vmem:[%s174 + $0xe28] sm:$0xf]
        %v1147 = vld [vmem:[%s174 + $0xe2c] sm:$0xf]
        %v1148 = vld [vmem:[%s174 + $0xe30] sm:$0xf]
        %v1149 = vld [vmem:[%s174 + $0xe34] sm:$0xf]
        %v1150 = vld [vmem:[%s174 + $0xe38] sm:$0xf]
        %v1151 = vld [vmem:[%s174 + $0xe3c] sm:$0xf]
        %v1152 = vld [vmem:[%s174 + $0xe40] sm:$0xf]
        %v1153 = vld [vmem:[%s174 + $0xe44] sm:$0xf]
        %v1154 = vld [vmem:[%s174 + $0xe48] sm:$0xf]
        %v1155 = vld [vmem:[%s174 + $0xe4c] sm:$0xf]
        %v1156 = vld [vmem:[%s174 + $0xe50] sm:$0xf]
        %v1157 = vld [vmem:[%s174 + $0xe54] sm:$0xf]
        %v1158 = vld [vmem:[%s174 + $0xe58] sm:$0xf]
        %v1159 = vld [vmem:[%s174 + $0xe5c] sm:$0xf]
        %v1160 = vld [vmem:[%s174 + $0xe60] sm:$0xf]
        %v1161 = vld [vmem:[%s174 + $0xe64] sm:$0xf]
        %v1162 = vld [vmem:[%s174 + $0xe68] sm:$0xf]
        %v1163 = vld [vmem:[%s174 + $0xe6c] sm:$0xf]
        %v1164 = vld [vmem:[%s174 + $0xe70] sm:$0xf]
        %v1165 = vld [vmem:[%s174 + $0xe74] sm:$0xf]
        %v1166 = vld [vmem:[%s174 + $0xe78] sm:$0xf]
        %v1167 = vld [vmem:[%s174 + $0xe7c] sm:$0xf]
        %v1168 = vld [vmem:[%s174 + $0xe80] sm:$0xf]
        %v1169 = vld [vmem:[%s174 + $0xe84] sm:$0xf]
        %v1170 = vld [vmem:[%s174 + $0xe88] sm:$0xf]
        %v1171 = vld [vmem:[%s174 + $0xe8c] sm:$0xf]
        %v1172 = vld [vmem:[%s174 + $0xe90] sm:$0xf]
        %v1173 = vld [vmem:[%s174 + $0xe94] sm:$0xf]
        %v1174 = vld [vmem:[%s174 + $0xe98] sm:$0xf]
        %v1175 = vld [vmem:[%s174 + $0xe9c] sm:$0xf]
        %v1176 = vld [vmem:[%s174 + $0xea0] sm:$0xf]
        %v1177 = vld [vmem:[%s174 + $0xea4] sm:$0xf]
        %v1178 = vld [vmem:[%s174 + $0xea8] sm:$0xf]
        %v1179 = vld [vmem:[%s174 + $0xeac] sm:$0xf]
        %v1180 = vld [vmem:[%s174 + $0xeb0] sm:$0xf]
        %v1181 = vld [vmem:[%s174 + $0xeb4] sm:$0xf]
        %v1182 = vld [vmem:[%s174 + $0xeb8] sm:$0xf]
        %v1183 = vld [vmem:[%s174 + $0xebc] sm:$0xf]
        %v1184 = vld [vmem:[%s174 + $0xec0] sm:$0xf]
        %v1185 = vld [vmem:[%s174 + $0xec4] sm:$0xf]
        %v1186 = vld [vmem:[%s174 + $0xec8] sm:$0xf]
        %v1187 = vld [vmem:[%s174 + $0xecc] sm:$0xf]
        %v1188 = vld [vmem:[%s174 + $0xed0] sm:$0xf]
        %v1189 = vld [vmem:[%s174 + $0xed4] sm:$0xf]
        %v1190 = vld [vmem:[%s174 + $0xed8] sm:$0xf]
        %v1191 = vld [vmem:[%s174 + $0xedc] sm:$0xf]
        %v1192 = vld [vmem:[%s174 + $0xee0] sm:$0xf]
        %v1193 = vld [vmem:[%s174 + $0xee4] sm:$0xf]
        %v1194 = vld [vmem:[%s174 + $0xee8] sm:$0xf]
        %v1195 = vld [vmem:[%s174 + $0xeec] sm:$0xf]
        %v1196 = vld [vmem:[%s174 + $0xef0] sm:$0xf]
        %v1197 = vld [vmem:[%s174 + $0xef4] sm:$0xf]
        %v1198 = vld [vmem:[%s174 + $0xef8] sm:$0xf]
        %v1199 = vld [vmem:[%s174 + $0xefc] sm:$0xf]
        %v1200 = vld [vmem:[%s174 + $0xf00] sm:$0xf]
        %v1201 = vld [vmem:[%s174 + $0xf04] sm:$0xf]
        %v1202 = vld [vmem:[%s174 + $0xf08] sm:$0xf]
        %v1203 = vld [vmem:[%s174 + $0xf0c] sm:$0xf]
        %v1204 = vld [vmem:[%s174 + $0xf10] sm:$0xf]
        %v1205 = vld [vmem:[%s174 + $0xf14] sm:$0xf]
        %v1206 = vld [vmem:[%s174 + $0xf18] sm:$0xf]
        %v1207 = vld [vmem:[%s174 + $0xf1c] sm:$0xf]
        %v1208 = vld [vmem:[%s174 + $0xf20] sm:$0xf]
        %v1209 = vld [vmem:[%s174 + $0xf24] sm:$0xf]
        %v1210 = vld [vmem:[%s174 + $0xf28] sm:$0xf]
        %v1211 = vld [vmem:[%s174 + $0xf2c] sm:$0xf]
        %v1212 = vld [vmem:[%s174 + $0xf30] sm:$0xf]
        %v1213 = vld [vmem:[%s174 + $0xf34] sm:$0xf]
        %v1214 = vld [vmem:[%s174 + $0xf38] sm:$0xf]
        %v1215 = vld [vmem:[%s174 + $0xf3c] sm:$0xf]
        %v1216 = vld [vmem:[%s174 + $0xf40] sm:$0xf]
        %v1217 = vld [vmem:[%s174 + $0xf44] sm:$0xf]
        %v1218 = vld [vmem:[%s174 + $0xf48] sm:$0xf]
        %v1219 = vld [vmem:[%s174 + $0xf4c] sm:$0xf]
        %v1220 = vld [vmem:[%s174 + $0xf50] sm:$0xf]
        %v1221 = vld [vmem:[%s174 + $0xf54] sm:$0xf]
        %v1222 = vld [vmem:[%s174 + $0xf58] sm:$0xf]
        %v1223 = vld [vmem:[%s174 + $0xf5c] sm:$0xf]
        %v1224 = vld [vmem:[%s174 + $0xf60] sm:$0xf]
        %v1225 = vld [vmem:[%s174 + $0xf64] sm:$0xf]
        %v1226 = vld [vmem:[%s174 + $0xf68] sm:$0xf]
        %v1227 = vld [vmem:[%s174 + $0xf6c] sm:$0xf]
        %v1228 = vld [vmem:[%s174 + $0xf70] sm:$0xf]
        %v1229 = vld [vmem:[%s174 + $0xf74] sm:$0xf]
        %v1230 = vld [vmem:[%s174 + $0xf78] sm:$0xf]
        %v1231 = vld [vmem:[%s174 + $0xf7c] sm:$0xf]
        %v1232 = vld [vmem:[%s174 + $0xf80] sm:$0xf]
        %v1233 = vld [vmem:[%s174 + $0xf84] sm:$0xf]
        %v1234 = vld [vmem:[%s174 + $0xf88] sm:$0xf]
        %v1235 = vld [vmem:[%s174 + $0xf8c] sm:$0xf]
        %v1236 = vld [vmem:[%s174 + $0xf90] sm:$0xf]
        %v1237 = vld [vmem:[%s174 + $0xf94] sm:$0xf]
        %v1238 = vld [vmem:[%s174 + $0xf98] sm:$0xf]
        %v1239 = vld [vmem:[%s174 + $0xf9c] sm:$0xf]
        %v1240 = vld [vmem:[%s174 + $0xfa0] sm:$0xf]
        %v1241 = vld [vmem:[%s174 + $0xfa4] sm:$0xf]
        %v1242 = vld [vmem:[%s174 + $0xfa8] sm:$0xf]
        %v1243 = vld [vmem:[%s174 + $0xfac] sm:$0xf]
        %v1244 = vld [vmem:[%s174 + $0xfb0] sm:$0xf]
        %v1245 = vld [vmem:[%s174 + $0xfb4] sm:$0xf]
        %v1246 = vld [vmem:[%s174 + $0xfb8] sm:$0xf]
        %v1247 = vld [vmem:[%s174 + $0xfbc] sm:$0xf]
        %v1248 = vld [vmem:[%s174 + $0xfc0] sm:$0xf]
        %v1249 = vld [vmem:[%s174 + $0xfc4] sm:$0xf]
        %v1250 = vld [vmem:[%s174 + $0xfc8] sm:$0xf]
        %v1251 = vld [vmem:[%s174 + $0xfcc] sm:$0xf]
        %v1252 = vld [vmem:[%s174 + $0xfd0] sm:$0xf]
        %v1253 = vld [vmem:[%s174 + $0xfd4] sm:$0xf]
        %v1254 = vld [vmem:[%s174 + $0xfd8] sm:$0xf]
        %v1255 = vld [vmem:[%s174 + $0xfdc] sm:$0xf]
        %v1256 = vld [vmem:[%s174 + $0xfe0] sm:$0xf]
        %v1257 = vld [vmem:[%s174 + $0xfe4] sm:$0xf]
        %v1258 = vld [vmem:[%s174 + $0xfe8] sm:$0xf]
        %v1259 = vld [vmem:[%s174 + $0xfec] sm:$0xf]
        %v1260 = vld [vmem:[%s174 + $0xff0] sm:$0xf]
        %v1261 = vld [vmem:[%s174 + $0xff4] sm:$0xf]
        %v1262 = vld [vmem:[%s174 + $0xff8] sm:$0xf]
        %v1263 = vld [vmem:[%s174 + $0xffc] sm:$0xf]
        %v1264 = vld [vmem:[%s174 + $0x1000] sm:$0xf]
        %v1265 = vld [vmem:[%s174 + $0x1004] sm:$0xf]
        %v1266 = vld [vmem:[%s174 + $0x1008] sm:$0xf]
        %v1267 = vld [vmem:[%s174 + $0x100c] sm:$0xf]
        %v1268 = vld [vmem:[%s174 + $0x1010] sm:$0xf]
        %v1269 = vld [vmem:[%s174 + $0x1014] sm:$0xf]
        %v1270 = vld [vmem:[%s174 + $0x1018] sm:$0xf]
        %v1271 = vld [vmem:[%s174 + $0x101c] sm:$0xf]
        %v1272 = vld [vmem:[%s174 + $0x1020] sm:$0xf]
        %v1273 = vld [vmem:[%s174 + $0x1024] sm:$0xf]
        %v1274 = vld [vmem:[%s174 + $0x1028] sm:$0xf]
        %v1275 = vld [vmem:[%s174 + $0x102c] sm:$0xf]
        %v1276 = vld [vmem:[%s174 + $0x1030] sm:$0xf]
        %v1277 = vld [vmem:[%s174 + $0x1034] sm:$0xf]
        %v1278 = vld [vmem:[%s174 + $0x1038] sm:$0xf]
        %v1279 = vld [vmem:[%s174 + $0x103c] sm:$0xf]
        %v1280 = vld [vmem:[%s174 + $0x1040] sm:$0xf]
        %v1281 = vld [vmem:[%s174 + $0x1044] sm:$0xf]
        %v1282 = vld [vmem:[%s174 + $0x1048] sm:$0xf]
        %v1283 = vld [vmem:[%s174 + $0x104c] sm:$0xf]
        %v1284 = vld [vmem:[%s174 + $0x1050] sm:$0xf]
        %v1285 = vld [vmem:[%s174 + $0x1054] sm:$0xf]
        %v1286 = vld [vmem:[%s174 + $0x1058] sm:$0xf]
        %v1287 = vld [vmem:[%s174 + $0x105c] sm:$0xf]
        %v1288 = vld [vmem:[%s174 + $0x1060] sm:$0xf]
        %v1289 = vld [vmem:[%s174 + $0x1064] sm:$0xf]
        %v1290 = vld [vmem:[%s174 + $0x1068] sm:$0xf]
        %v1291 = vld [vmem:[%s174 + $0x106c] sm:$0xf]
        %v1292 = vld [vmem:[%s174 + $0x1070] sm:$0xf]
        %v1293 = vld [vmem:[%s174 + $0x1074] sm:$0xf]
        %v1294 = vld [vmem:[%s174 + $0x1078] sm:$0xf]
        %v1295 = vld [vmem:[%s174 + $0x107c] sm:$0xf]
        %v1296 = vld [vmem:[%s174 + $0x1080] sm:$0xf]
        %v1297 = vld [vmem:[%s174 + $0x1084] sm:$0xf]
        %v1298 = vld [vmem:[%s174 + $0x1088] sm:$0xf]
        %v1299 = vld [vmem:[%s174 + $0x108c] sm:$0xf]
        %v1300 = vld [vmem:[%s174 + $0x1090] sm:$0xf]
        %v1301 = vld [vmem:[%s174 + $0x1094] sm:$0xf]
        %v1302 = vld [vmem:[%s174 + $0x1098] sm:$0xf]
        %v1303 = vld [vmem:[%s174 + $0x109c] sm:$0xf]
        %v1304 = vld [vmem:[%s174 + $0x10a0] sm:$0xf]
        %v1305 = vld [vmem:[%s174 + $0x10a4] sm:$0xf]
        %v1306 = vld [vmem:[%s174 + $0x10a8] sm:$0xf]
        %v1307 = vld [vmem:[%s174 + $0x10ac] sm:$0xf]
        %v1308 = vld [vmem:[%s174 + $0x10b0] sm:$0xf]
        %v1309 = vld [vmem:[%s174 + $0x10b4] sm:$0xf]
        %v1310 = vld [vmem:[%s174 + $0x10b8] sm:$0xf]
        %v1311 = vld [vmem:[%s174 + $0x10bc] sm:$0xf]
        %v1312 = vld [vmem:[%s174 + $0x10c0] sm:$0xf]
        %v1313 = vld [vmem:[%s174 + $0x10c4] sm:$0xf]
        %v1314 = vld [vmem:[%s174 + $0x10c8] sm:$0xf]
        %v1315 = vld [vmem:[%s174 + $0x10cc] sm:$0xf]
        %v1316 = vld [vmem:[%s174 + $0x10d0] sm:$0xf]
        %v1317 = vld [vmem:[%s174 + $0x10d4] sm:$0xf]
        %v1318 = vld [vmem:[%s174 + $0x10d8] sm:$0xf]
        %v1319 = vld [vmem:[%s174 + $0x10dc] sm:$0xf]
        %v1320 = vld [vmem:[%s174 + $0x10e0] sm:$0xf]
        %v1321 = vld [vmem:[%s174 + $0x10e4] sm:$0xf]
        %v1322 = vld [vmem:[%s174 + $0x10e8] sm:$0xf]
        %v1323 = vld [vmem:[%s174 + $0x10ec] sm:$0xf]
        %v1324 = vld [vmem:[%s174 + $0x10f0] sm:$0xf]
        %v1325 = vld [vmem:[%s174 + $0x10f4] sm:$0xf]
        %v1326 = vld [vmem:[%s174 + $0x10f8] sm:$0xf]
        %v1327 = vld [vmem:[%s174 + $0x10fc] sm:$0xf]
        %v1328 = vld [vmem:[%s174 + $0x1100] sm:$0xf]
        %v1329 = vld [vmem:[%s174 + $0x1104] sm:$0xf]
        %v1330 = vld [vmem:[%s174 + $0x1108] sm:$0xf]
        %v1331 = vld [vmem:[%s174 + $0x110c] sm:$0xf]
        %v1332 = vld [vmem:[%s174 + $0x1110] sm:$0xf]
        %v1333 = vld [vmem:[%s174 + $0x1114] sm:$0xf]
        %v1334 = vld [vmem:[%s174 + $0x1118] sm:$0xf]
        %v1335 = vld [vmem:[%s174 + $0x111c] sm:$0xf]
        %v1336 = vld [vmem:[%s174 + $0x1120] sm:$0xf]
        %v1337 = vld [vmem:[%s174 + $0x1124] sm:$0xf]
        %v1338 = vld [vmem:[%s174 + $0x1128] sm:$0xf]
        %v1339 = vld [vmem:[%s174 + $0x112c] sm:$0xf]
        %v1340 = vld [vmem:[%s174 + $0x1130] sm:$0xf]
        %v1341 = vld [vmem:[%s174 + $0x1134] sm:$0xf]
        %v1342 = vld [vmem:[%s174 + $0x1138] sm:$0xf]
        %v1343 = vld [vmem:[%s174 + $0x113c] sm:$0xf]
        %v1344 = vld [vmem:[%s174 + $0x1140] sm:$0xf]
        %v1345 = vld [vmem:[%s174 + $0x1144] sm:$0xf]
        %v1346 = vld [vmem:[%s174 + $0x1148] sm:$0xf]
        %v1347 = vld [vmem:[%s174 + $0x114c] sm:$0xf]
        %v1348 = vld [vmem:[%s174 + $0x1150] sm:$0xf]
        %v1349 = vld [vmem:[%s174 + $0x1154] sm:$0xf]
        %v1350 = vld [vmem:[%s174 + $0x1158] sm:$0xf]
        %v1351 = vld [vmem:[%s174 + $0x115c] sm:$0xf]
        %v1352 = vld [vmem:[%s174 + $0x1160] sm:$0xf]
        %v1353 = vld [vmem:[%s174 + $0x1164] sm:$0xf]
        %v1354 = vld [vmem:[%s174 + $0x1168] sm:$0xf]
        %v1355 = vld [vmem:[%s174 + $0x116c] sm:$0xf]
        %v1356 = vld [vmem:[%s174 + $0x1170] sm:$0xf]
        %v1357 = vld [vmem:[%s174 + $0x1174] sm:$0xf]
        %v1358 = vld [vmem:[%s174 + $0x1178] sm:$0xf]
        %v1359 = vld [vmem:[%s174 + $0x117c] sm:$0xf]
        %v1360 = vld [vmem:[%s174 + $0x1180] sm:$0xf]
        %v1361 = vld [vmem:[%s174 + $0x1184] sm:$0xf]
        %v1362 = vld [vmem:[%s174 + $0x1188] sm:$0xf]
        %v1363 = vld [vmem:[%s174 + $0x118c] sm:$0xf]
        %v1364 = vld [vmem:[%s174 + $0x1190] sm:$0xf]
        %v1365 = vld [vmem:[%s174 + $0x1194] sm:$0xf]
        %v1366 = vld [vmem:[%s174 + $0x1198] sm:$0xf]
        %v1367 = vld [vmem:[%s174 + $0x119c] sm:$0xf]
        %v1368 = vld [vmem:[%s174 + $0x11a0] sm:$0xf]
        %v1369 = vld [vmem:[%s174 + $0x11a4] sm:$0xf]
        %v1370 = vld [vmem:[%s174 + $0x11a8] sm:$0xf]
        %v1371 = vld [vmem:[%s174 + $0x11ac] sm:$0xf]
        %v1372 = vld [vmem:[%s174 + $0x11b0] sm:$0xf]
        %v1373 = vld [vmem:[%s174 + $0x11b4] sm:$0xf]
        %v1374 = vld [vmem:[%s174 + $0x11b8] sm:$0xf]
        %v1375 = vld [vmem:[%s174 + $0x11bc] sm:$0xf]
        %v1376 = vld [vmem:[%s174 + $0x11c0] sm:$0xf]
        %v1377 = vld [vmem:[%s174 + $0x11c4] sm:$0xf]
        %v1378 = vld [vmem:[%s174 + $0x11c8] sm:$0xf]
        %v1379 = vld [vmem:[%s174 + $0x11cc] sm:$0xf]
        %v1380 = vld [vmem:[%s174 + $0x11d0] sm:$0xf]
        %v1381 = vld [vmem:[%s174 + $0x11d4] sm:$0xf]
        %v1382 = vld [vmem:[%s174 + $0x11d8] sm:$0xf]
        %v1383 = vld [vmem:[%s174 + $0x11dc] sm:$0xf]
        %v1384 = vld [vmem:[%s174 + $0x11e0] sm:$0xf]
        %v1385 = vld [vmem:[%s174 + $0x11e4] sm:$0xf]
        %v1386 = vld [vmem:[%s174 + $0x11e8] sm:$0xf]
        %v1387 = vld [vmem:[%s174 + $0x11ec] sm:$0xf]
        %v1388 = vld [vmem:[%s174 + $0x11f0] sm:$0xf]
        %v1389 = vld [vmem:[%s174 + $0x11f4] sm:$0xf]
        %v1390 = vld [vmem:[%s174 + $0x11f8] sm:$0xf]
        %v1391 = vld [vmem:[%s174 + $0x11fc] sm:$0xf]
        %v1392 = vld [vmem:[%s174 + $0x1200] sm:$0xf]
        %v1393 = vld [vmem:[%s174 + $0x1204] sm:$0xf]
        %v1394 = vld [vmem:[%s174 + $0x1208] sm:$0xf]
        %v1395 = vld [vmem:[%s174 + $0x120c] sm:$0xf]
        %v1396 = vld [vmem:[%s174 + $0x1210] sm:$0xf]
        %v1397 = vld [vmem:[%s174 + $0x1214] sm:$0xf]
        %v1398 = vld [vmem:[%s174 + $0x1218] sm:$0xf]
        %v1399 = vld [vmem:[%s174 + $0x121c] sm:$0xf]
        %v1400 = vld [vmem:[%s174 + $0x1220] sm:$0xf]
        %v1401 = vld [vmem:[%s174 + $0x1224] sm:$0xf]
        %v1402 = vld [vmem:[%s174 + $0x1228] sm:$0xf]
        %v1403 = vld [vmem:[%s174 + $0x122c] sm:$0xf]
        %v1404 = vld [vmem:[%s174 + $0x1230] sm:$0xf]
        %v1405 = vld [vmem:[%s174 + $0x1234] sm:$0xf]
        %v1406 = vld [vmem:[%s174 + $0x1238] sm:$0xf]
        %v1407 = vld [vmem:[%s174 + $0x123c] sm:$0xf]
        %v1408 = vld [vmem:[%s174 + $0x1240] sm:$0xf]
        %v1409 = vld [vmem:[%s174 + $0x1244] sm:$0xf]
        %v1410 = vld [vmem:[%s174 + $0x1248] sm:$0xf]
        %v1411 = vld [vmem:[%s174 + $0x124c] sm:$0xf]
        %v1412 = vld [vmem:[%s174 + $0x1250] sm:$0xf]
        %v1413 = vld [vmem:[%s174 + $0x1254] sm:$0xf]
        %v1414 = vld [vmem:[%s174 + $0x1258] sm:$0xf]
        %v1415 = vld [vmem:[%s174 + $0x125c] sm:$0xf]
        %v1416 = vld [vmem:[%s174 + $0x1260] sm:$0xf]
        %v1417 = vld [vmem:[%s174 + $0x1264] sm:$0xf]
        %v1418 = vld [vmem:[%s174 + $0x1268] sm:$0xf]
        %v1419 = vld [vmem:[%s174 + $0x126c] sm:$0xf]
        %v1420 = vld [vmem:[%s174 + $0x1270] sm:$0xf]
        %v1421 = vld [vmem:[%s174 + $0x1274] sm:$0xf]
        %v1422 = vld [vmem:[%s174 + $0x1278] sm:$0xf]
        %v1423 = vld [vmem:[%s174 + $0x127c] sm:$0xf]
        %v1424 = vld [vmem:[%s174 + $0x1280] sm:$0xf]
        %v1425 = vld [vmem:[%s174 + $0x1284] sm:$0xf]
        %v1426 = vld [vmem:[%s174 + $0x1288] sm:$0xf]
        %v1427 = vld [vmem:[%s174 + $0x128c] sm:$0xf]
        %v1428 = vld [vmem:[%s174 + $0x1290] sm:$0xf]
        %v1429 = vld [vmem:[%s174 + $0x1294] sm:$0xf]
        %v1430 = vld [vmem:[%s174 + $0x1298] sm:$0xf]
        %v1431 = vld [vmem:[%s174 + $0x129c] sm:$0xf]
        %v1432 = vld [vmem:[%s174 + $0x12a0] sm:$0xf]
        %v1433 = vld [vmem:[%s174 + $0x12a4] sm:$0xf]
        %v1434 = vld [vmem:[%s174 + $0x12a8] sm:$0xf]
        %v1435 = vld [vmem:[%s174 + $0x12ac] sm:$0xf]
        %v1436 = vld [vmem:[%s174 + $0x12b0] sm:$0xf]
        %v1437 = vld [vmem:[%s174 + $0x12b4] sm:$0xf]
        %v1438 = vld [vmem:[%s174 + $0x12b8] sm:$0xf]
        %v1439 = vld [vmem:[%s174 + $0x12bc] sm:$0xf]
        %v1440 = vld [vmem:[%s174 + $0x12c0] sm:$0xf]
        %v1441 = vld [vmem:[%s174 + $0x12c4] sm:$0xf]
        %v1442 = vld [vmem:[%s174 + $0x12c8] sm:$0xf]
        %v1443 = vld [vmem:[%s174 + $0x12cc] sm:$0xf]
        %v1444 = vld [vmem:[%s174 + $0x12d0] sm:$0xf]
        %v1445 = vld [vmem:[%s174 + $0x12d4] sm:$0xf]
        %v1446 = vld [vmem:[%s174 + $0x12d8] sm:$0xf]
        %v1447 = vld [vmem:[%s174 + $0x12dc] sm:$0xf]
        %v1448 = vld [vmem:[%s174 + $0x12e0] sm:$0xf]
        %v1449 = vld [vmem:[%s174 + $0x12e4] sm:$0xf]
        %v1450 = vld [vmem:[%s174 + $0x12e8] sm:$0xf]
        %v1451 = vld [vmem:[%s174 + $0x12ec] sm:$0xf]
        %v1452 = vld [vmem:[%s174 + $0x12f0] sm:$0xf]
        %v1453 = vld [vmem:[%s174 + $0x12f4] sm:$0xf]
        %v1454 = vld [vmem:[%s174 + $0x12f8] sm:$0xf]
        %v1455 = vld [vmem:[%s174 + $0x12fc] sm:$0xf]
        %v1456 = vld [vmem:[%s174 + $0x1300] sm:$0xf]
        %v1457 = vld [vmem:[%s174 + $0x1304] sm:$0xf]
        %v1458 = vld [vmem:[%s174 + $0x1308] sm:$0xf]
        %v1459 = vld [vmem:[%s174 + $0x130c] sm:$0xf]
        %v1460 = vld [vmem:[%s174 + $0x1310] sm:$0xf]
        %v1461 = vld [vmem:[%s174 + $0x1314] sm:$0xf]
        %v1462 = vld [vmem:[%s174 + $0x1318] sm:$0xf]
        %v1463 = vld [vmem:[%s174 + $0x131c] sm:$0xf]
        %v1464 = vld [vmem:[%s174 + $0x1320] sm:$0xf]
        %v1465 = vld [vmem:[%s174 + $0x1324] sm:$0xf]
        %v1466 = vld [vmem:[%s174 + $0x1328] sm:$0xf]
        %v1467 = vld [vmem:[%s174 + $0x132c] sm:$0xf]
        %v1468 = vld [vmem:[%s174 + $0x1330] sm:$0xf]
        %v1469 = vld [vmem:[%s174 + $0x1334] sm:$0xf]
        %v1470 = vld [vmem:[%s174 + $0x1338] sm:$0xf]
        %v1471 = vld [vmem:[%s174 + $0x133c] sm:$0xf]
        %v1472 = vld [vmem:[%s174 + $0x1340] sm:$0xf]
        %v1473 = vld [vmem:[%s174 + $0x1344] sm:$0xf]
        %v1474 = vld [vmem:[%s174 + $0x1348] sm:$0xf]
        %v1475 = vld [vmem:[%s174 + $0x134c] sm:$0xf]
        %v1476 = vld [vmem:[%s174 + $0x1350] sm:$0xf]
        %v1477 = vld [vmem:[%s174 + $0x1354] sm:$0xf]
        %v1478 = vld [vmem:[%s174 + $0x1358] sm:$0xf]
        %v1479 = vld [vmem:[%s174 + $0x135c] sm:$0xf]
        %v1480 = vld [vmem:[%s174 + $0x1360] sm:$0xf]
        %v1481 = vld [vmem:[%s174 + $0x1364] sm:$0xf]
        %v1482 = vld [vmem:[%s174 + $0x1368] sm:$0xf]
        %v1483 = vld [vmem:[%s174 + $0x136c] sm:$0xf]
        %v1484 = vld [vmem:[%s174 + $0x1370] sm:$0xf]
        %v1485 = vld [vmem:[%s174 + $0x1374] sm:$0xf]
        %v1486 = vld [vmem:[%s174 + $0x1378] sm:$0xf]
        %v1487 = vld [vmem:[%s174 + $0x137c] sm:$0xf]
        %v1488 = vld [vmem:[%s174 + $0x1380] sm:$0xf]
        %v1489 = vld [vmem:[%s174 + $0x1384] sm:$0xf]
        %v1490 = vld [vmem:[%s174 + $0x1388] sm:$0xf]
        %v1491 = vld [vmem:[%s174 + $0x138c] sm:$0xf]
        %v1492 = vld [vmem:[%s174 + $0x1390] sm:$0xf]
        %v1493 = vld [vmem:[%s174 + $0x1394] sm:$0xf]
        %v1494 = vld [vmem:[%s174 + $0x1398] sm:$0xf]
        %v1495 = vld [vmem:[%s174 + $0x139c] sm:$0xf]
        %v1496 = vld [vmem:[%s174 + $0x13a0] sm:$0xf]
        %v1497 = vld [vmem:[%s174 + $0x13a4] sm:$0xf]
        %v1498 = vld [vmem:[%s174 + $0x13a8] sm:$0xf]
        %v1499 = vld [vmem:[%s174 + $0x13ac] sm:$0xf]
        %v1500 = vld [vmem:[%s174 + $0x13b0] sm:$0xf]
        %v1501 = vld [vmem:[%s174 + $0x13b4] sm:$0xf]
        %v1502 = vld [vmem:[%s174 + $0x13b8] sm:$0xf]
        %v1503 = vld [vmem:[%s174 + $0x13bc] sm:$0xf]
        %v1504 = vld [vmem:[%s174 + $0x13c0] sm:$0xf]
        %v1505 = vld [vmem:[%s174 + $0x13c4] sm:$0xf]
        %v1506 = vld [vmem:[%s174 + $0x13c8] sm:$0xf]
        %v1507 = vld [vmem:[%s174 + $0x13cc] sm:$0xf]
        %v1508 = vld [vmem:[%s174 + $0x13d0] sm:$0xf]
        %v1509 = vld [vmem:[%s174 + $0x13d4] sm:$0xf]
        %v1510 = vld [vmem:[%s174 + $0x13d8] sm:$0xf]
        %v1511 = vld [vmem:[%s174 + $0x13dc] sm:$0xf]
        %v1512 = vld [vmem:[%s174 + $0x13e0] sm:$0xf]
        %v1513 = vld [vmem:[%s174 + $0x13e4] sm:$0xf]
        %v1514 = vld [vmem:[%s174 + $0x13e8] sm:$0xf]
        %v1515 = vld [vmem:[%s174 + $0x13ec] sm:$0xf]
        %v1516 = vld [vmem:[%s174 + $0x13f0] sm:$0xf]
        %v1517 = vld [vmem:[%s174 + $0x13f4] sm:$0xf]
        %v1518 = vld [vmem:[%s174 + $0x13f8] sm:$0xf]
        %v1519 = vld [vmem:[%s174 + $0x13fc] sm:$0xf]
        %v1520 = vld [vmem:[%s174 + $0x1400] sm:$0xf]
        %v1521 = vld [vmem:[%s174 + $0x1404] sm:$0xf]
        %v1522 = vld [vmem:[%s174 + $0x1408] sm:$0xf]
        %v1523 = vld [vmem:[%s174 + $0x140c] sm:$0xf]
        %v1524 = vld [vmem:[%s174 + $0x1410] sm:$0xf]
        %v1525 = vld [vmem:[%s174 + $0x1414] sm:$0xf]
        %v1526 = vld [vmem:[%s174 + $0x1418] sm:$0xf]
        %v1527 = vld [vmem:[%s174 + $0x141c] sm:$0xf]
        %v1528 = vld [vmem:[%s174 + $0x1420] sm:$0xf]
        %v1529 = vld [vmem:[%s174 + $0x1424] sm:$0xf]
        %v1530 = vld [vmem:[%s174 + $0x1428] sm:$0xf]
        %v1531 = vld [vmem:[%s174 + $0x142c] sm:$0xf]
        %v1532 = vld [vmem:[%s174 + $0x1430] sm:$0xf]
        %v1533 = vld [vmem:[%s174 + $0x1434] sm:$0xf]
        %v1534 = vld [vmem:[%s174 + $0x1438] sm:$0xf]
        %v1535 = vld [vmem:[%s174 + $0x143c] sm:$0xf]
        %v1536 = vld [vmem:[%s174 + $0x1440] sm:$0xf]
        %v1537 = vld [vmem:[%s174 + $0x1444] sm:$0xf]
        %v1538 = vld [vmem:[%s174 + $0x1448] sm:$0xf]
        %v1539 = vld [vmem:[%s174 + $0x144c] sm:$0xf]
        %v1540 = vld [vmem:[%s174 + $0x1450] sm:$0xf]
        %v1541 = vld [vmem:[%s174 + $0x1454] sm:$0xf]
        %v1542 = vld [vmem:[%s174 + $0x1458] sm:$0xf]
        %v1543 = vld [vmem:[%s174 + $0x145c] sm:$0xf]
        %v1544 = vld [vmem:[%s174 + $0x1460] sm:$0xf]
        %v1545 = vld [vmem:[%s174 + $0x1464] sm:$0xf]
        %v1546 = vld [vmem:[%s174 + $0x1468] sm:$0xf]
        %v1547 = vld [vmem:[%s174 + $0x146c] sm:$0xf]
        %v1548 = vld [vmem:[%s174 + $0x1470] sm:$0xf]
        %v1549 = vld [vmem:[%s174 + $0x1474] sm:$0xf]
        %v1550 = vld [vmem:[%s174 + $0x1478] sm:$0xf]
        %v1551 = vld [vmem:[%s174 + $0x147c] sm:$0xf]
        %v1552 = vld [vmem:[%s174 + $0x1480] sm:$0xf]
        %v1553 = vld [vmem:[%s174 + $0x1484] sm:$0xf]
        %v1554 = vld [vmem:[%s174 + $0x1488] sm:$0xf]
        %v1555 = vld [vmem:[%s174 + $0x148c] sm:$0xf]
        %v1556 = vld [vmem:[%s174 + $0x1490] sm:$0xf]
        %v1557 = vld [vmem:[%s174 + $0x1494] sm:$0xf]
        %v1558 = vld [vmem:[%s174 + $0x1498] sm:$0xf]
        %v1559 = vld [vmem:[%s174 + $0x149c] sm:$0xf]
        %v1560 = vld [vmem:[%s174 + $0x14a0] sm:$0xf]
        %v1561 = vld [vmem:[%s174 + $0x14a4] sm:$0xf]
        %v1562 = vld [vmem:[%s174 + $0x14a8] sm:$0xf]
        %v1563 = vld [vmem:[%s174 + $0x14ac] sm:$0xf]
        %v1564 = vld [vmem:[%s174 + $0x14b0] sm:$0xf]
        %v1565 = vld [vmem:[%s174 + $0x14b4] sm:$0xf]
        %v1566 = vld [vmem:[%s174 + $0x14b8] sm:$0xf]
        %v1567 = vld [vmem:[%s174 + $0x14bc] sm:$0xf]
        %v1568 = vld [vmem:[%s174 + $0x14c0] sm:$0xf]
        %v1569 = vld [vmem:[%s174 + $0x14c4] sm:$0xf]
        %v1570 = vld [vmem:[%s174 + $0x14c8] sm:$0xf]
        %v1571 = vld [vmem:[%s174 + $0x14cc] sm:$0xf]
        %v1572 = vld [vmem:[%s174 + $0x14d0] sm:$0xf]
        %v1573 = vld [vmem:[%s174 + $0x14d4] sm:$0xf]
        %v1574 = vld [vmem:[%s174 + $0x14d8] sm:$0xf]
        %v1575 = vld [vmem:[%s174 + $0x14dc] sm:$0xf]
        %v1576 = vld [vmem:[%s174 + $0x14e0] sm:$0xf]
        %v1577 = vld [vmem:[%s174 + $0x14e4] sm:$0xf]
        %v1578 = vld [vmem:[%s174 + $0x14e8] sm:$0xf]
        %v1579 = vld [vmem:[%s174 + $0x14ec] sm:$0xf]
        %v1580 = vld [vmem:[%s174 + $0x14f0] sm:$0xf]
        %v1581 = vld [vmem:[%s174 + $0x14f4] sm:$0xf]
        %v1582 = vld [vmem:[%s174 + $0x14f8] sm:$0xf]
        %v1583 = vld [vmem:[%s174 + $0x14fc] sm:$0xf]
        %v1584 = vld [vmem:[%s174 + $0x1500] sm:$0xf]
        %v1585 = vld [vmem:[%s174 + $0x1504] sm:$0xf]
        %v1586 = vld [vmem:[%s174 + $0x1508] sm:$0xf]
        %v1587 = vld [vmem:[%s174 + $0x150c] sm:$0xf]
        %v1588 = vld [vmem:[%s174 + $0x1510] sm:$0xf]
        %v1589 = vld [vmem:[%s174 + $0x1514] sm:$0xf]
        %v1590 = vld [vmem:[%s174 + $0x1518] sm:$0xf]
        %v1591 = vld [vmem:[%s174 + $0x151c] sm:$0xf]
        %v1592 = vld [vmem:[%s174 + $0x1520] sm:$0xf]
        %v1593 = vld [vmem:[%s174 + $0x1524] sm:$0xf]
        %v1594 = vld [vmem:[%s174 + $0x1528] sm:$0xf]
        %v1595 = vld [vmem:[%s174 + $0x152c] sm:$0xf]
        %v1596 = vld [vmem:[%s174 + $0x1530] sm:$0xf]
        %v1597 = vld [vmem:[%s174 + $0x1534] sm:$0xf]
        %v1598 = vld [vmem:[%s174 + $0x1538] sm:$0xf]
        %v1599 = vld [vmem:[%s174 + $0x153c] sm:$0xf]
        %v1600 = vld [vmem:[%s174 + $0x1540] sm:$0xf]
        %v1601 = vld [vmem:[%s174 + $0x1544] sm:$0xf]
        %v1602 = vld [vmem:[%s174 + $0x1548] sm:$0xf]
        %v1603 = vld [vmem:[%s174 + $0x154c] sm:$0xf]
        %v1604 = vld [vmem:[%s174 + $0x1550] sm:$0xf]
        %v1605 = vld [vmem:[%s174 + $0x1554] sm:$0xf]
        %v1606 = vld [vmem:[%s174 + $0x1558] sm:$0xf]
        %v1607 = vld [vmem:[%s174 + $0x155c] sm:$0xf]
        %v1608 = vld [vmem:[%s174 + $0x1560] sm:$0xf]
        %v1609 = vld [vmem:[%s174 + $0x1564] sm:$0xf]
        %v1610 = vld [vmem:[%s174 + $0x1568] sm:$0xf]
        %v1611 = vld [vmem:[%s174 + $0x156c] sm:$0xf]
        %v1612 = vld [vmem:[%s174 + $0x1570] sm:$0xf]
        %v1613 = vld [vmem:[%s174 + $0x1574] sm:$0xf]
        %v1614 = vld [vmem:[%s174 + $0x1578] sm:$0xf]
        %v1615 = vld [vmem:[%s174 + $0x157c] sm:$0xf]
        %v1616 = vld [vmem:[%s174 + $0x1580] sm:$0xf]
        %v1617 = vld [vmem:[%s174 + $0x1584] sm:$0xf]
        %v1618 = vld [vmem:[%s174 + $0x1588] sm:$0xf]
        %v1619 = vld [vmem:[%s174 + $0x158c] sm:$0xf]
        %v1620 = vld [vmem:[%s174 + $0x1590] sm:$0xf]
        %v1621 = vld [vmem:[%s174 + $0x1594] sm:$0xf]
        %v1622 = vld [vmem:[%s174 + $0x1598] sm:$0xf]
        %v1623 = vld [vmem:[%s174 + $0x159c] sm:$0xf]
        %v1624 = vld [vmem:[%s174 + $0x15a0] sm:$0xf]
        %v1625 = vld [vmem:[%s174 + $0x15a4] sm:$0xf]
        %v1626 = vld [vmem:[%s174 + $0x15a8] sm:$0xf]
        %v1627 = vld [vmem:[%s174 + $0x15ac] sm:$0xf]
        %v1628 = vld [vmem:[%s174 + $0x15b0] sm:$0xf]
        %v1629 = vld [vmem:[%s174 + $0x15b4] sm:$0xf]
        %v1630 = vld [vmem:[%s174 + $0x15b8] sm:$0xf]
        %v1631 = vld [vmem:[%s174 + $0x15bc] sm:$0xf]
        %v1632 = vld [vmem:[%s174 + $0x15c0] sm:$0xf]
        %v1633 = vld [vmem:[%s174 + $0x15c4] sm:$0xf]
        %v1634 = vld [vmem:[%s174 + $0x15c8] sm:$0xf]
        %v1635 = vld [vmem:[%s174 + $0x15cc] sm:$0xf]
        %v1636 = vld [vmem:[%s174 + $0x15d0] sm:$0xf]
        %v1637 = vld [vmem:[%s174 + $0x15d4] sm:$0xf]
        %v1638 = vld [vmem:[%s174 + $0x15d8] sm:$0xf]
        %v1639 = vld [vmem:[%s174 + $0x15dc] sm:$0xf]
        %v1640 = vld [vmem:[%s174 + $0x15e0] sm:$0xf]
        %v1641 = vld [vmem:[%s174 + $0x15e4] sm:$0xf]
        %v1642 = vld [vmem:[%s174 + $0x15e8] sm:$0xf]
        %v1643 = vld [vmem:[%s174 + $0x15ec] sm:$0xf]
        %v1644 = vld [vmem:[%s174 + $0x15f0] sm:$0xf]
        %v1645 = vld [vmem:[%s174 + $0x15f4] sm:$0xf]
        %v1646 = vld [vmem:[%s174 + $0x15f8] sm:$0xf]
        %v1647 = vld [vmem:[%s174 + $0x15fc] sm:$0xf]
        %v1648 = vld [vmem:[%s174 + $0x1600] sm:$0xf]
        %v1649 = vld [vmem:[%s174 + $0x1604] sm:$0xf]
        %v1650 = vld [vmem:[%s174 + $0x1608] sm:$0xf]
        %v1651 = vld [vmem:[%s174 + $0x160c] sm:$0xf]
        %v1652 = vld [vmem:[%s174 + $0x1610] sm:$0xf]
        %v1653 = vld [vmem:[%s174 + $0x1614] sm:$0xf]
        %v1654 = vld [vmem:[%s174 + $0x1618] sm:$0xf]
        %v1655 = vld [vmem:[%s174 + $0x161c] sm:$0xf]
        %v1656 = vld [vmem:[%s174 + $0x1620] sm:$0xf]
        %v1657 = vld [vmem:[%s174 + $0x1624] sm:$0xf]
        %v1658 = vld [vmem:[%s174 + $0x1628] sm:$0xf]
        %v1659 = vld [vmem:[%s174 + $0x162c] sm:$0xf]
        %v1660 = vld [vmem:[%s174 + $0x1630] sm:$0xf]
        %v1661 = vld [vmem:[%s174 + $0x1634] sm:$0xf]
        %v1662 = vld [vmem:[%s174 + $0x1638] sm:$0xf]
        %v1663 = vld [vmem:[%s174 + $0x163c] sm:$0xf]
        %v1664 = vld [vmem:[%s174 + $0x1640] sm:$0xf]
        %v1665 = vld [vmem:[%s174 + $0x1644] sm:$0xf]
        %v1666 = vld [vmem:[%s174 + $0x1648] sm:$0xf]
        %v1667 = vld [vmem:[%s174 + $0x164c] sm:$0xf]
        %v1668 = vld [vmem:[%s174 + $0x1650] sm:$0xf]
        %v1669 = vld [vmem:[%s174 + $0x1654] sm:$0xf]
        %v1670 = vld [vmem:[%s174 + $0x1658] sm:$0xf]
        %v1671 = vld [vmem:[%s174 + $0x165c] sm:$0xf]
        %v1672 = vld [vmem:[%s174 + $0x1660] sm:$0xf]
        %v1673 = vld [vmem:[%s174 + $0x1664] sm:$0xf]
        %v1674 = vld [vmem:[%s174 + $0x1668] sm:$0xf]
        %v1675 = vld [vmem:[%s174 + $0x166c] sm:$0xf]
        %v1676 = vld [vmem:[%s174 + $0x1670] sm:$0xf]
        %v1677 = vld [vmem:[%s174 + $0x1674] sm:$0xf]
        %v1678 = vld [vmem:[%s174 + $0x1678] sm:$0xf]
        %v1679 = vld [vmem:[%s174 + $0x167c] sm:$0xf]
        %v1680 = vld [vmem:[%s174 + $0x1680] sm:$0xf]
        %v1681 = vld [vmem:[%s174 + $0x1684] sm:$0xf]
        %v1682 = vld [vmem:[%s174 + $0x1688] sm:$0xf]
        %v1683 = vld [vmem:[%s174 + $0x168c] sm:$0xf]
        %v1684 = vld [vmem:[%s174 + $0x1690] sm:$0xf]
        %v1685 = vld [vmem:[%s174 + $0x1694] sm:$0xf]
        %v1686 = vld [vmem:[%s174 + $0x1698] sm:$0xf]
        %v1687 = vld [vmem:[%s174 + $0x169c] sm:$0xf]
        %v1688 = vld [vmem:[%s174 + $0x16a0] sm:$0xf]
        %v1689 = vld [vmem:[%s174 + $0x16a4] sm:$0xf]
        %v1690 = vld [vmem:[%s174 + $0x16a8] sm:$0xf]
        %v1691 = vld [vmem:[%s174 + $0x16ac] sm:$0xf]
        %v1692 = vld [vmem:[%s174 + $0x16b0] sm:$0xf]
        %v1693 = vld [vmem:[%s174 + $0x16b4] sm:$0xf]
        %v1694 = vld [vmem:[%s174 + $0x16b8] sm:$0xf]
        %v1695 = vld [vmem:[%s174 + $0x16bc] sm:$0xf]
        %v1696 = vld [vmem:[%s174 + $0x16c0] sm:$0xf]
        %v1697 = vld [vmem:[%s174 + $0x16c4] sm:$0xf]
        %v1698 = vld [vmem:[%s174 + $0x16c8] sm:$0xf]
        %v1699 = vld [vmem:[%s174 + $0x16cc] sm:$0xf]
        %v1700 = vld [vmem:[%s174 + $0x16d0] sm:$0xf]
        %v1701 = vld [vmem:[%s174 + $0x16d4] sm:$0xf]
        %v1702 = vld [vmem:[%s174 + $0x16d8] sm:$0xf]
        %v1703 = vld [vmem:[%s174 + $0x16dc] sm:$0xf]
        %v1704 = vld [vmem:[%s174 + $0x16e0] sm:$0xf]
        %v1705 = vld [vmem:[%s174 + $0x16e4] sm:$0xf]
        %v1706 = vld [vmem:[%s174 + $0x16e8] sm:$0xf]
        %v1707 = vld [vmem:[%s174 + $0x16ec] sm:$0xf]
        %v1708 = vld [vmem:[%s174 + $0x16f0] sm:$0xf]
        %v1709 = vld [vmem:[%s174 + $0x16f4] sm:$0xf]
        %v1710 = vld [vmem:[%s174 + $0x16f8] sm:$0xf]
        %v1711 = vld [vmem:[%s174 + $0x16fc] sm:$0xf]
        %v1712 = vld [vmem:[%s174 + $0x1700] sm:$0xf]
        %v1713 = vld [vmem:[%s174 + $0x1704] sm:$0xf]
        %v1714 = vld [vmem:[%s174 + $0x1708] sm:$0xf]
        %v1715 = vld [vmem:[%s174 + $0x170c] sm:$0xf]
        %v1716 = vld [vmem:[%s174 + $0x1710] sm:$0xf]
        %v1717 = vld [vmem:[%s174 + $0x1714] sm:$0xf]
        %v1718 = vld [vmem:[%s174 + $0x1718] sm:$0xf]
        %v1719 = vld [vmem:[%s174 + $0x171c] sm:$0xf]
        %v1720 = vld [vmem:[%s174 + $0x1720] sm:$0xf]
        %v1721 = vld [vmem:[%s174 + $0x1724] sm:$0xf]
        %v1722 = vld [vmem:[%s174 + $0x1728] sm:$0xf]
        %v1723 = vld [vmem:[%s174 + $0x172c] sm:$0xf]
        %v1724 = vld [vmem:[%s174 + $0x1730] sm:$0xf]
        %v1725 = vld [vmem:[%s174 + $0x1734] sm:$0xf]
        %v1726 = vld [vmem:[%s174 + $0x1738] sm:$0xf]
        %v1727 = vld [vmem:[%s174 + $0x173c] sm:$0xf]
        %v1728 = vld [vmem:[%s174 + $0x1740] sm:$0xf]
        %v1729 = vld [vmem:[%s174 + $0x1744] sm:$0xf]
        %v1730 = vld [vmem:[%s174 + $0x1748] sm:$0xf]
        %v1731 = vld [vmem:[%s174 + $0x174c] sm:$0xf]
        %v1732 = vld [vmem:[%s174 + $0x1750] sm:$0xf]
        %v1733 = vld [vmem:[%s174 + $0x1754] sm:$0xf]
        %v1734 = vld [vmem:[%s174 + $0x1758] sm:$0xf]
        %v1735 = vld [vmem:[%s174 + $0x175c] sm:$0xf]
        %v1736 = vld [vmem:[%s174 + $0x1760] sm:$0xf]
        %v1737 = vld [vmem:[%s174 + $0x1764] sm:$0xf]
        %v1738 = vld [vmem:[%s174 + $0x1768] sm:$0xf]
        %v1739 = vld [vmem:[%s174 + $0x176c] sm:$0xf]
        %v1740 = vld [vmem:[%s174 + $0x1770] sm:$0xf]
        %v1741 = vld [vmem:[%s174 + $0x1774] sm:$0xf]
        %v1742 = vld [vmem:[%s174 + $0x1778] sm:$0xf]
        %v1743 = vld [vmem:[%s174 + $0x177c] sm:$0xf]
        %v1744 = vld [vmem:[%s174 + $0x1780] sm:$0xf]
        %v1745 = vld [vmem:[%s174 + $0x1784] sm:$0xf]
        %v1746 = vld [vmem:[%s174 + $0x1788] sm:$0xf]
        %v1747 = vld [vmem:[%s174 + $0x178c] sm:$0xf]
        %v1748 = vld [vmem:[%s174 + $0x1790] sm:$0xf]
        %v1749 = vld [vmem:[%s174 + $0x1794] sm:$0xf]
        %v1750 = vld [vmem:[%s174 + $0x1798] sm:$0xf]
        %v1751 = vld [vmem:[%s174 + $0x179c] sm:$0xf]
        %v1752 = vld [vmem:[%s174 + $0x17a0] sm:$0xf]
        %v1753 = vld [vmem:[%s174 + $0x17a4] sm:$0xf]
        %v1754 = vld [vmem:[%s174 + $0x17a8] sm:$0xf]
        %v1755 = vld [vmem:[%s174 + $0x17ac] sm:$0xf]
        %v1756 = vld [vmem:[%s174 + $0x17b0] sm:$0xf]
        %v1757 = vld [vmem:[%s174 + $0x17b4] sm:$0xf]
        %v1758 = vld [vmem:[%s174 + $0x17b8] sm:$0xf]
        %v1759 = vld [vmem:[%s174 + $0x17bc] sm:$0xf]
        %v1760 = vld [vmem:[%s174 + $0x17c0] sm:$0xf]
        %v1761 = vld [vmem:[%s174 + $0x17c4] sm:$0xf]
        %v1762 = vld [vmem:[%s174 + $0x17c8] sm:$0xf]
        %v1763 = vld [vmem:[%s174 + $0x17cc] sm:$0xf]
        %v1764 = vld [vmem:[%s174 + $0x17d0] sm:$0xf]
        %v1765 = vld [vmem:[%s174 + $0x17d4] sm:$0xf]
        %v1766 = vld [vmem:[%s174 + $0x17d8] sm:$0xf]
        %v1767 = vld [vmem:[%s174 + $0x17dc] sm:$0xf]
        %v1768 = vld [vmem:[%s174 + $0x17e0] sm:$0xf]
        %v1769 = vld [vmem:[%s174 + $0x17e4] sm:$0xf]
        %v1770 = vld [vmem:[%s174 + $0x17e8] sm:$0xf]
        %v1771 = vld [vmem:[%s174 + $0x17ec] sm:$0xf]
        %v1772 = vld [vmem:[%s174 + $0x17f0] sm:$0xf]
        %v1773 = vld [vmem:[%s174 + $0x17f4] sm:$0xf]
        %v1774 = vld [vmem:[%s174 + $0x17f8] sm:$0xf]
        %v1775 = vld [vmem:[%s174 + $0x17fc] sm:$0xf]
        %v1776 = vld [vmem:[%s174 + $0x1800] sm:$0xf]
        %v1777 = vld [vmem:[%s174 + $0x1804] sm:$0xf]
        %v1778 = vld [vmem:[%s174 + $0x1808] sm:$0xf]
        %v1779 = vld [vmem:[%s174 + $0x180c] sm:$0xf]
        %v1780 = vld [vmem:[%s174 + $0x1810] sm:$0xf]
        %v1781 = vld [vmem:[%s174 + $0x1814] sm:$0xf]
        %v1782 = vld [vmem:[%s174 + $0x1818] sm:$0xf]
        %v1783 = vld [vmem:[%s174 + $0x181c] sm:$0xf]
        %v1784 = vld [vmem:[%s174 + $0x1820] sm:$0xf]
        %v1785 = vld [vmem:[%s174 + $0x1824] sm:$0xf]
        %v1786 = vld [vmem:[%s174 + $0x1828] sm:$0xf]
        %v1787 = vld [vmem:[%s174 + $0x182c] sm:$0xf]
        %v1788 = vld [vmem:[%s174 + $0x1830] sm:$0xf]
        %v1789 = vld [vmem:[%s174 + $0x1834] sm:$0xf]
        %v1790 = vld [vmem:[%s174 + $0x1838] sm:$0xf]
        %v1791 = vld [vmem:[%s174 + $0x183c] sm:$0xf]
        %v1792 = vld [vmem:[%s174 + $0x1840] sm:$0xf]
        %v1793 = vld [vmem:[%s174 + $0x1844] sm:$0xf]
        %v1794 = vld [vmem:[%s174 + $0x1848] sm:$0xf]
        %v1795 = vld [vmem:[%s174 + $0x184c] sm:$0xf]
        %v1796 = vld [vmem:[%s174 + $0x1850] sm:$0xf]
        %v1797 = vld [vmem:[%s174 + $0x1854] sm:$0xf]
        %v1798 = vld [vmem:[%s174 + $0x1858] sm:$0xf]
        %v1799 = vld [vmem:[%s174 + $0x185c] sm:$0xf]
        %v1800 = vld [vmem:[%s174 + $0x1860] sm:$0xf]
        %v1801 = vld [vmem:[%s174 + $0x1864] sm:$0xf]
        %v1802 = vld [vmem:[%s174 + $0x1868] sm:$0xf]
        %v1803 = vld [vmem:[%s174 + $0x186c] sm:$0xf]
        %v1804 = vld [vmem:[%s174 + $0x1870] sm:$0xf]
        %v1805 = vld [vmem:[%s174 + $0x1874] sm:$0xf]
        %v1806 = vld [vmem:[%s174 + $0x1878] sm:$0xf]
        %v1807 = vld [vmem:[%s174 + $0x187c] sm:$0xf]
        %v1808 = vld [vmem:[%s174 + $0x1880] sm:$0xf]
        %v1809 = vld [vmem:[%s174 + $0x1884] sm:$0xf]
        %v1810 = vld [vmem:[%s174 + $0x1888] sm:$0xf]
        %v1811 = vld [vmem:[%s174 + $0x188c] sm:$0xf]
        %v1812 = vld [vmem:[%s174 + $0x1890] sm:$0xf]
        %v1813 = vld [vmem:[%s174 + $0x1894] sm:$0xf]
        %v1814 = vld [vmem:[%s174 + $0x1898] sm:$0xf]
        %v1815 = vld [vmem:[%s174 + $0x189c] sm:$0xf]
        %v1816 = vld [vmem:[%s174 + $0x18a0] sm:$0xf]
        %v1817 = vld [vmem:[%s174 + $0x18a4] sm:$0xf]
        %v1818 = vld [vmem:[%s174 + $0x18a8] sm:$0xf]
        %v1819 = vld [vmem:[%s174 + $0x18ac] sm:$0xf]
        %v1820 = vld [vmem:[%s174 + $0x18b0] sm:$0xf]
        %v1821 = vld [vmem:[%s174 + $0x18b4] sm:$0xf]
        %v1822 = vld [vmem:[%s174 + $0x18b8] sm:$0xf]
        %v1823 = vld [vmem:[%s174 + $0x18bc] sm:$0xf]
        %v1824 = vld [vmem:[%s174 + $0x18c0] sm:$0xf]
        %v1825 = vld [vmem:[%s174 + $0x18c4] sm:$0xf]
        %v1826 = vld [vmem:[%s174 + $0x18c8] sm:$0xf]
        %v1827 = vld [vmem:[%s174 + $0x18cc] sm:$0xf]
        %v1828 = vld [vmem:[%s174 + $0x18d0] sm:$0xf]
        %v1829 = vld [vmem:[%s174 + $0x18d4] sm:$0xf]
        %v1830 = vld [vmem:[%s174 + $0x18d8] sm:$0xf]
        %v1831 = vld [vmem:[%s174 + $0x18dc] sm:$0xf]
        %v1832 = vld [vmem:[%s174 + $0x18e0] sm:$0xf]
        %v1833 = vld [vmem:[%s174 + $0x18e4] sm:$0xf]
        %v1834 = vld [vmem:[%s174 + $0x18e8] sm:$0xf]
        %v1835 = vld [vmem:[%s174 + $0x18ec] sm:$0xf]
        %v1836 = vld [vmem:[%s174 + $0x18f0] sm:$0xf]
        %v1837 = vld [vmem:[%s174 + $0x18f4] sm:$0xf]
        %v1838 = vld [vmem:[%s174 + $0x18f8] sm:$0xf]
        %v1839 = vld [vmem:[%s174 + $0x18fc] sm:$0xf]
        %v1840 = vld [vmem:[%s174 + $0x1900] sm:$0xf]
        %v1841 = vld [vmem:[%s174 + $0x1904] sm:$0xf]
        %v1842 = vld [vmem:[%s174 + $0x1908] sm:$0xf]
        %v1843 = vld [vmem:[%s174 + $0x190c] sm:$0xf]
        %v1844 = vld [vmem:[%s174 + $0x1910] sm:$0xf]
        %v1845 = vld [vmem:[%s174 + $0x1914] sm:$0xf]
        %v1846 = vld [vmem:[%s174 + $0x1918] sm:$0xf]
        %v1847 = vld [vmem:[%s174 + $0x191c] sm:$0xf]
        %v1848 = vld [vmem:[%s174 + $0x1920] sm:$0xf]
        %v1849 = vld [vmem:[%s174 + $0x1924] sm:$0xf]
        %v1850 = vld [vmem:[%s174 + $0x1928] sm:$0xf]
        %v1851 = vld [vmem:[%s174 + $0x192c] sm:$0xf]
        %v1852 = vld [vmem:[%s174 + $0x1930] sm:$0xf]
        %v1853 = vld [vmem:[%s174 + $0x1934] sm:$0xf]
        %v1854 = vld [vmem:[%s174 + $0x1938] sm:$0xf]
        %v1855 = vld [vmem:[%s174 + $0x193c] sm:$0xf]
        %v1856 = vld [vmem:[%s174 + $0x1940] sm:$0xf]
        %v1857 = vld [vmem:[%s174 + $0x1944] sm:$0xf]
        %v1858 = vld [vmem:[%s174 + $0x1948] sm:$0xf]
        %v1859 = vld [vmem:[%s174 + $0x194c] sm:$0xf]
        %v1860 = vld [vmem:[%s174 + $0x1950] sm:$0xf]
        %v1861 = vld [vmem:[%s174 + $0x1954] sm:$0xf]
        %v1862 = vld [vmem:[%s174 + $0x1958] sm:$0xf]
        %v1863 = vld [vmem:[%s174 + $0x195c] sm:$0xf]
        %v1864 = vld [vmem:[%s174 + $0x1960] sm:$0xf]
        %v1865 = vld [vmem:[%s174 + $0x1964] sm:$0xf]
        %v1866 = vld [vmem:[%s174 + $0x1968] sm:$0xf]
        %v1867 = vld [vmem:[%s174 + $0x196c] sm:$0xf]
        %v1868 = vld [vmem:[%s174 + $0x1970] sm:$0xf]
        %v1869 = vld [vmem:[%s174 + $0x1974] sm:$0xf]
        %v1870 = vld [vmem:[%s174 + $0x1978] sm:$0xf]
        %v1871 = vld [vmem:[%s174 + $0x197c] sm:$0xf]
        %v1872 = vld [vmem:[%s174 + $0x1980] sm:$0xf]
        %v1873 = vld [vmem:[%s174 + $0x1984] sm:$0xf]
        %v1874 = vld [vmem:[%s174 + $0x1988] sm:$0xf]
        %v1875 = vld [vmem:[%s174 + $0x198c] sm:$0xf]
        %v1876 = vld [vmem:[%s174 + $0x1990] sm:$0xf]
        %v1877 = vld [vmem:[%s174 + $0x1994] sm:$0xf]
        %v1878 = vld [vmem:[%s174 + $0x1998] sm:$0xf]
        %v1879 = vld [vmem:[%s174 + $0x199c] sm:$0xf]
        %v1880 = vld [vmem:[%s174 + $0x19a0] sm:$0xf]
        %v1881 = vld [vmem:[%s174 + $0x19a4] sm:$0xf]
        %v1882 = vld [vmem:[%s174 + $0x19a8] sm:$0xf]
        %v1883 = vld [vmem:[%s174 + $0x19ac] sm:$0xf]
        %v1884 = vld [vmem:[%s174 + $0x19b0] sm:$0xf]
        %v1885 = vld [vmem:[%s174 + $0x19b4] sm:$0xf]
        %v1886 = vld [vmem:[%s174 + $0x19b8] sm:$0xf]
        %v1887 = vld [vmem:[%s174 + $0x19bc] sm:$0xf]
        %v1888 = vld [vmem:[%s174 + $0x19c0] sm:$0xf]
        %v1889 = vld [vmem:[%s174 + $0x19c4] sm:$0xf]
        %v1890 = vld [vmem:[%s174 + $0x19c8] sm:$0xf]
        %v1891 = vld [vmem:[%s174 + $0x19cc] sm:$0xf]
        %v1892 = vld [vmem:[%s174 + $0x19d0] sm:$0xf]
        %v1893 = vld [vmem:[%s174 + $0x19d4] sm:$0xf]
        %v1894 = vld [vmem:[%s174 + $0x19d8] sm:$0xf]
        %v1895 = vld [vmem:[%s174 + $0x19dc] sm:$0xf]
        %v1896 = vld [vmem:[%s174 + $0x19e0] sm:$0xf]
        %v1897 = vld [vmem:[%s174 + $0x19e4] sm:$0xf]
        %v1898 = vld [vmem:[%s174 + $0x19e8] sm:$0xf]
        %v1899 = vld [vmem:[%s174 + $0x19ec] sm:$0xf]
        %v1900 = vld [vmem:[%s174 + $0x19f0] sm:$0xf]
        %v1901 = vld [vmem:[%s174 + $0x19f4] sm:$0xf]
        %v1902 = vld [vmem:[%s174 + $0x19f8] sm:$0xf]
        %v1903 = vld [vmem:[%s174 + $0x19fc] sm:$0xf]
        %v1904 = vld [vmem:[%s174 + $0x1a00] sm:$0xf]
        %v1905 = vld [vmem:[%s174 + $0x1a04] sm:$0xf]
        %v1906 = vld [vmem:[%s174 + $0x1a08] sm:$0xf]
        %v1907 = vld [vmem:[%s174 + $0x1a0c] sm:$0xf]
        %v1908 = vld [vmem:[%s174 + $0x1a10] sm:$0xf]
        %v1909 = vld [vmem:[%s174 + $0x1a14] sm:$0xf]
        %v1910 = vld [vmem:[%s174 + $0x1a18] sm:$0xf]
        %v1911 = vld [vmem:[%s174 + $0x1a1c] sm:$0xf]
        %v1912 = vld [vmem:[%s174 + $0x1a20] sm:$0xf]
        %v1913 = vld [vmem:[%s174 + $0x1a24] sm:$0xf]
        %v1914 = vld [vmem:[%s174 + $0x1a28] sm:$0xf]
        %v1915 = vld [vmem:[%s174 + $0x1a2c] sm:$0xf]
        %v1916 = vld [vmem:[%s174 + $0x1a30] sm:$0xf]
        %v1917 = vld [vmem:[%s174 + $0x1a34] sm:$0xf]
        %v1918 = vld [vmem:[%s174 + $0x1a38] sm:$0xf]
        %v1919 = vld [vmem:[%s174 + $0x1a3c] sm:$0xf]
        %v1920 = vld [vmem:[%s174 + $0x1a40] sm:$0xf]
        %v1921 = vld [vmem:[%s174 + $0x1a44] sm:$0xf]
        %v1922 = vld [vmem:[%s174 + $0x1a48] sm:$0xf]
        %v1923 = vld [vmem:[%s174 + $0x1a4c] sm:$0xf]
        %v1924 = vld [vmem:[%s174 + $0x1a50] sm:$0xf]
        %v1925 = vld [vmem:[%s174 + $0x1a54] sm:$0xf]
        %v1926 = vld [vmem:[%s174 + $0x1a58] sm:$0xf]
        %v1927 = vld [vmem:[%s174 + $0x1a5c] sm:$0xf]
        %v1928 = vld [vmem:[%s174 + $0x1a60] sm:$0xf]
        %v1929 = vld [vmem:[%s174 + $0x1a64] sm:$0xf]
        %v1930 = vld [vmem:[%s174 + $0x1a68] sm:$0xf]
        %v1931 = vld [vmem:[%s174 + $0x1a6c] sm:$0xf]
        %v1932 = vld [vmem:[%s174 + $0x1a70] sm:$0xf]
        %v1933 = vld [vmem:[%s174 + $0x1a74] sm:$0xf]
        %v1934 = vld [vmem:[%s174 + $0x1a78] sm:$0xf]
        %v1935 = vld [vmem:[%s174 + $0x1a7c] sm:$0xf]
        %v1936 = vld [vmem:[%s174 + $0x1a80] sm:$0xf]
        %v1937 = vld [vmem:[%s174 + $0x1a84] sm:$0xf]
        %v1938 = vld [vmem:[%s174 + $0x1a88] sm:$0xf]
        %v1939 = vld [vmem:[%s174 + $0x1a8c] sm:$0xf]
        %v1940 = vld [vmem:[%s174 + $0x1a90] sm:$0xf]
        %v1941 = vld [vmem:[%s174 + $0x1a94] sm:$0xf]
        %v1942 = vld [vmem:[%s174 + $0x1a98] sm:$0xf]
        %v1943 = vld [vmem:[%s174 + $0x1a9c] sm:$0xf]
        %v1944 = vld [vmem:[%s174 + $0x1aa0] sm:$0xf]
        %v1945 = vld [vmem:[%s174 + $0x1aa4] sm:$0xf]
        %v1946 = vld [vmem:[%s174 + $0x1aa8] sm:$0xf]
        %v1947 = vld [vmem:[%s174 + $0x1aac] sm:$0xf]
        %v1948 = vld [vmem:[%s174 + $0x1ab0] sm:$0xf]
        %v1949 = vld [vmem:[%s174 + $0x1ab4] sm:$0xf]
        %v1950 = vld [vmem:[%s174 + $0x1ab8] sm:$0xf]
        %v1951 = vld [vmem:[%s174 + $0x1abc] sm:$0xf]
        %v1952 = vld [vmem:[%s174 + $0x1ac0] sm:$0xf]
        %v1953 = vld [vmem:[%s174 + $0x1ac4] sm:$0xf]
        %v1954 = vld [vmem:[%s174 + $0x1ac8] sm:$0xf]
        %v1955 = vld [vmem:[%s174 + $0x1acc] sm:$0xf]
        %v1956 = vld [vmem:[%s174 + $0x1ad0] sm:$0xf]
        %v1957 = vld [vmem:[%s174 + $0x1ad4] sm:$0xf]
        %v1958 = vld [vmem:[%s174 + $0x1ad8] sm:$0xf]
        %v1959 = vld [vmem:[%s174 + $0x1adc] sm:$0xf]
        %v1960 = vld [vmem:[%s174 + $0x1ae0] sm:$0xf]
        %v1961 = vld [vmem:[%s174 + $0x1ae4] sm:$0xf]
        %v1962 = vld [vmem:[%s174 + $0x1ae8] sm:$0xf]
        %v1963 = vld [vmem:[%s174 + $0x1aec] sm:$0xf]
        %v1964 = vld [vmem:[%s174 + $0x1af0] sm:$0xf]
        %v1965 = vld [vmem:[%s174 + $0x1af4] sm:$0xf]
        %v1966 = vld [vmem:[%s174 + $0x1af8] sm:$0xf]
        %v1967 = vld [vmem:[%s174 + $0x1afc] sm:$0xf]
        %v1968 = vld [vmem:[%s174 + $0x1b00] sm:$0xf]
        %v1969 = vld [vmem:[%s174 + $0x1b04] sm:$0xf]
        %v1970 = vld [vmem:[%s174 + $0x1b08] sm:$0xf]
        %v1971 = vld [vmem:[%s174 + $0x1b0c] sm:$0xf]
        %v1972 = vld [vmem:[%s174 + $0x1b10] sm:$0xf]
        %v1973 = vld [vmem:[%s174 + $0x1b14] sm:$0xf]
        %v1974 = vld [vmem:[%s174 + $0x1b18] sm:$0xf]
        %v1975 = vld [vmem:[%s174 + $0x1b1c] sm:$0xf]
        %v1976 = vld [vmem:[%s174 + $0x1b20] sm:$0xf]
        %v1977 = vld [vmem:[%s174 + $0x1b24] sm:$0xf]
        %v1978 = vld [vmem:[%s174 + $0x1b28] sm:$0xf]
        %v1979 = vld [vmem:[%s174 + $0x1b2c] sm:$0xf]
        %v1980 = vld [vmem:[%s174 + $0x1b30] sm:$0xf]
        %v1981 = vld [vmem:[%s174 + $0x1b34] sm:$0xf]
        %v1982 = vld [vmem:[%s174 + $0x1b38] sm:$0xf]
        %v1983 = vld [vmem:[%s174 + $0x1b3c] sm:$0xf]
        %v1984 = vld [vmem:[%s174 + $0x1b40] sm:$0xf]
        %v1985 = vld [vmem:[%s174 + $0x1b44] sm:$0xf]
        %v1986 = vld [vmem:[%s174 + $0x1b48] sm:$0xf]
        %v1987 = vld [vmem:[%s174 + $0x1b4c] sm:$0xf]
        %v1988 = vld [vmem:[%s174 + $0x1b50] sm:$0xf]
        %v1989 = vld [vmem:[%s174 + $0x1b54] sm:$0xf]
        %v1990 = vld [vmem:[%s174 + $0x1b58] sm:$0xf]
        %v1991 = vld [vmem:[%s174 + $0x1b5c] sm:$0xf]
        %v1992 = vld [vmem:[%s174 + $0x1b60] sm:$0xf]
        %v1993 = vld [vmem:[%s174 + $0x1b64] sm:$0xf]
        %v1994 = vld [vmem:[%s174 + $0x1b68] sm:$0xf]
        %v1995 = vld [vmem:[%s174 + $0x1b6c] sm:$0xf]
        %v1996 = vld [vmem:[%s174 + $0x1b70] sm:$0xf]
        %v1997 = vld [vmem:[%s174 + $0x1b74] sm:$0xf]
        %v1998 = vld [vmem:[%s174 + $0x1b78] sm:$0xf]
        %v1999 = vld [vmem:[%s174 + $0x1b7c] sm:$0xf]
        %v2000 = vld [vmem:[%s174 + $0x1b80] sm:$0xf]
        %v2001 = vld [vmem:[%s174 + $0x1b84] sm:$0xf]
        %v2002 = vld [vmem:[%s174 + $0x1b88] sm:$0xf]
        %v2003 = vld [vmem:[%s174 + $0x1b8c] sm:$0xf]
        %v2004 = vld [vmem:[%s174 + $0x1b90] sm:$0xf]
        %v2005 = vld [vmem:[%s174 + $0x1b94] sm:$0xf]
        %v2006 = vld [vmem:[%s174 + $0x1b98] sm:$0xf]
        %v2007 = vld [vmem:[%s174 + $0x1b9c] sm:$0xf]
        %v2008 = vld [vmem:[%s174 + $0x1ba0] sm:$0xf]
        %v2009 = vld [vmem:[%s174 + $0x1ba4] sm:$0xf]
        %v2010 = vld [vmem:[%s174 + $0x1ba8] sm:$0xf]
        %v2011 = vld [vmem:[%s174 + $0x1bac] sm:$0xf]
        %v2012 = vld [vmem:[%s174 + $0x1bb0] sm:$0xf]
        %v2013 = vld [vmem:[%s174 + $0x1bb4] sm:$0xf]
        %v2014 = vld [vmem:[%s174 + $0x1bb8] sm:$0xf]
        %v2015 = vld [vmem:[%s174 + $0x1bbc] sm:$0xf]
        %v2016 = vld [vmem:[%s174 + $0x1bc0] sm:$0xf]
        %v2017 = vld [vmem:[%s174 + $0x1bc4] sm:$0xf]
        %v2018 = vld [vmem:[%s174 + $0x1bc8] sm:$0xf]
        %v2019 = vld [vmem:[%s174 + $0x1bcc] sm:$0xf]
        %v2020 = vld [vmem:[%s174 + $0x1bd0] sm:$0xf]
        %v2021 = vld [vmem:[%s174 + $0x1bd4] sm:$0xf]
        %v2022 = vld [vmem:[%s174 + $0x1bd8] sm:$0xf]
        %v2023 = vld [vmem:[%s174 + $0x1bdc] sm:$0xf]
        %v2024 = vld [vmem:[%s174 + $0x1be0] sm:$0xf]
        %v2025 = vld [vmem:[%s174 + $0x1be4] sm:$0xf]
        %v2026 = vld [vmem:[%s174 + $0x1be8] sm:$0xf]
        %v2027 = vld [vmem:[%s174 + $0x1bec] sm:$0xf]
        %v2028 = vld [vmem:[%s174 + $0x1bf0] sm:$0xf]
        %v2029 = vld [vmem:[%s174 + $0x1bf4] sm:$0xf]
        %v2030 = vld [vmem:[%s174 + $0x1bf8] sm:$0xf]
        %v2031 = vld [vmem:[%s174 + $0x1bfc] sm:$0xf]
        %v2032 = vld [vmem:[%s174 + $0x1c00] sm:$0xf]
        %v2033 = vld [vmem:[%s174 + $0x1c04] sm:$0xf]
        %v2034 = vld [vmem:[%s174 + $0x1c08] sm:$0xf]
        %v2035 = vld [vmem:[%s174 + $0x1c0c] sm:$0xf]
        %v2036 = vld [vmem:[%s174 + $0x1c10] sm:$0xf]
        %v2037 = vld [vmem:[%s174 + $0x1c14] sm:$0xf]
        %v2038 = vld [vmem:[%s174 + $0x1c18] sm:$0xf]
        %v2039 = vld [vmem:[%s174 + $0x1c1c] sm:$0xf]
        %v2040 = vld [vmem:[%s174 + $0x1c20] sm:$0xf]
        %v2041 = vld [vmem:[%s174 + $0x1c24] sm:$0xf]
        %v2042 = vld [vmem:[%s174 + $0x1c28] sm:$0xf]
        %v2043 = vld [vmem:[%s174 + $0x1c2c] sm:$0xf]
        %v2044 = vld [vmem:[%s174 + $0x1c30] sm:$0xf]
        %v2045 = vld [vmem:[%s174 + $0x1c34] sm:$0xf]
        %v2046 = vld [vmem:[%s174 + $0x1c38] sm:$0xf]
        %v2047 = vld [vmem:[%s174 + $0x1c3c] sm:$0xf]
        %v2048 = vld [vmem:[%s174 + $0x1c40] sm:$0xf]
        %v2049 = vld [vmem:[%s174 + $0x1c44] sm:$0xf]
        %v2050 = vld [vmem:[%s174 + $0x1c48] sm:$0xf]
        %v2051 = vld [vmem:[%s174 + $0x1c4c] sm:$0xf]
        %v2052 = vld [vmem:[%s174 + $0x1c50] sm:$0xf]
        %v2053 = vld [vmem:[%s174 + $0x1c54] sm:$0xf]
        %v2054 = vld [vmem:[%s174 + $0x1c58] sm:$0xf]
        %v2055 = vld [vmem:[%s174 + $0x1c5c] sm:$0xf]
        %v2056 = vld [vmem:[%s174 + $0x1c60] sm:$0xf]
        %v2057 = vld [vmem:[%s174 + $0x1c64] sm:$0xf]
        %v2058 = vld [vmem:[%s174 + $0x1c68] sm:$0xf]
        %v2059 = vld [vmem:[%s174 + $0x1c6c] sm:$0xf]
        %v2060 = vld [vmem:[%s174 + $0x1c70] sm:$0xf]
        %v2061 = vld [vmem:[%s174 + $0x1c74] sm:$0xf]
        %v2062 = vld [vmem:[%s174 + $0x1c78] sm:$0xf]
        %v2063 = vld [vmem:[%s174 + $0x1c7c] sm:$0xf]
        %v2064 = vld [vmem:[%s174 + $0x1c80] sm:$0xf]
        %v2065 = vld [vmem:[%s174 + $0x1c84] sm:$0xf]
        %v2066 = vld [vmem:[%s174 + $0x1c88] sm:$0xf]
        %v2067 = vld [vmem:[%s174 + $0x1c8c] sm:$0xf]
        %v2068 = vld [vmem:[%s174 + $0x1c90] sm:$0xf]
        %v2069 = vld [vmem:[%s174 + $0x1c94] sm:$0xf]
        %v2070 = vld [vmem:[%s174 + $0x1c98] sm:$0xf]
        %v2071 = vld [vmem:[%s174 + $0x1c9c] sm:$0xf]
        %v2072 = vld [vmem:[%s174 + $0x1ca0] sm:$0xf]
        %v2073 = vld [vmem:[%s174 + $0x1ca4] sm:$0xf]
        %v2074 = vld [vmem:[%s174 + $0x1ca8] sm:$0xf]
        %v2075 = vld [vmem:[%s174 + $0x1cac] sm:$0xf]
        %v2076 = vld [vmem:[%s174 + $0x1cb0] sm:$0xf]
        %v2077 = vld [vmem:[%s174 + $0x1cb4] sm:$0xf]
        %v2078 = vld [vmem:[%s174 + $0x1cb8] sm:$0xf]
        %v2079 = vld [vmem:[%s174 + $0x1cbc] sm:$0xf]
        %v2080 = vld [vmem:[%s174 + $0x1cc0] sm:$0xf]
        %v2081 = vld [vmem:[%s174 + $0x1cc4] sm:$0xf]
        %v2082 = vld [vmem:[%s174 + $0x1cc8] sm:$0xf]
        %v2083 = vld [vmem:[%s174 + $0x1ccc] sm:$0xf]
        %v2084 = vld [vmem:[%s174 + $0x1cd0] sm:$0xf]
        %v2085 = vld [vmem:[%s174 + $0x1cd4] sm:$0xf]
        %v2086 = vld [vmem:[%s174 + $0x1cd8] sm:$0xf]
        %v2087 = vld [vmem:[%s174 + $0x1cdc] sm:$0xf]
        %v2088 = vld [vmem:[%s174 + $0x1ce0] sm:$0xf]
        %v2089 = vld [vmem:[%s174 + $0x1ce4] sm:$0xf]
        %v2090 = vld [vmem:[%s174 + $0x1ce8] sm:$0xf]
        %v2091 = vld [vmem:[%s174 + $0x1cec] sm:$0xf]
        %v2092 = vld [vmem:[%s174 + $0x1cf0] sm:$0xf]
        %v2093 = vld [vmem:[%s174 + $0x1cf4] sm:$0xf]
        %v2094 = vld [vmem:[%s174 + $0x1cf8] sm:$0xf]
        %v2095 = vld [vmem:[%s174 + $0x1cfc] sm:$0xf]
        %v2096 = vld [vmem:[%s174 + $0x1d00] sm:$0xf]
        %v2097 = vld [vmem:[%s174 + $0x1d04] sm:$0xf]
        %v2098 = vld [vmem:[%s174 + $0x1d08] sm:$0xf]
        %v2099 = vld [vmem:[%s174 + $0x1d0c] sm:$0xf]
        %v2100 = vld [vmem:[%s174 + $0x1d10] sm:$0xf]
        %v2101 = vld [vmem:[%s174 + $0x1d14] sm:$0xf]
        %v2102 = vld [vmem:[%s174 + $0x1d18] sm:$0xf]
        %v2103 = vld [vmem:[%s174 + $0x1d1c] sm:$0xf]
        %v2104 = vld [vmem:[%s174 + $0x1d20] sm:$0xf]
        %v2105 = vld [vmem:[%s174 + $0x1d24] sm:$0xf]
        %v2106 = vld [vmem:[%s174 + $0x1d28] sm:$0xf]
        %v2107 = vld [vmem:[%s174 + $0x1d2c] sm:$0xf]
        %v2108 = vld [vmem:[%s174 + $0x1d30] sm:$0xf]
        %v2109 = vld [vmem:[%s174 + $0x1d34] sm:$0xf]
        %v2110 = vld [vmem:[%s174 + $0x1d38] sm:$0xf]
        %v2111 = vld [vmem:[%s174 + $0x1d3c] sm:$0xf]
        %v2112 = vld [vmem:[%s174 + $0x1d40] sm:$0xf]
        %v2113 = vld [vmem:[%s174 + $0x1d44] sm:$0xf]
        %v2114 = vld [vmem:[%s174 + $0x1d48] sm:$0xf]
        %v2115 = vld [vmem:[%s174 + $0x1d4c] sm:$0xf]
        %v2116 = vld [vmem:[%s174 + $0x1d50] sm:$0xf]
        %v2117 = vld [vmem:[%s174 + $0x1d54] sm:$0xf]
        %v2118 = vld [vmem:[%s174 + $0x1d58] sm:$0xf]
        %v2119 = vld [vmem:[%s174 + $0x1d5c] sm:$0xf]
        %v2120 = vld [vmem:[%s174 + $0x1d60] sm:$0xf]
        %v2121 = vld [vmem:[%s174 + $0x1d64] sm:$0xf]
        %v2122 = vld [vmem:[%s174 + $0x1d68] sm:$0xf]
        %v2123 = vld [vmem:[%s174 + $0x1d6c] sm:$0xf]
        %v2124 = vld [vmem:[%s174 + $0x1d70] sm:$0xf]
        %v2125 = vld [vmem:[%s174 + $0x1d74] sm:$0xf]
        %v2126 = vld [vmem:[%s174 + $0x1d78] sm:$0xf]
        %v2127 = vld [vmem:[%s174 + $0x1d7c] sm:$0xf]
        %v2128 = vld [vmem:[%s174 + $0x1d80] sm:$0xf]
        %v2129 = vld [vmem:[%s174 + $0x1d84] sm:$0xf]
        %v2130 = vld [vmem:[%s174 + $0x1d88] sm:$0xf]
        %v2131 = vld [vmem:[%s174 + $0x1d8c] sm:$0xf]
        %v2132 = vld [vmem:[%s174 + $0x1d90] sm:$0xf]
        %v2133 = vld [vmem:[%s174 + $0x1d94] sm:$0xf]
        %v2134 = vld [vmem:[%s174 + $0x1d98] sm:$0xf]
        %v2135 = vld [vmem:[%s174 + $0x1d9c] sm:$0xf]
        %v2136 = vld [vmem:[%s174 + $0x1da0] sm:$0xf]
        %v2137 = vld [vmem:[%s174 + $0x1da4] sm:$0xf]
        %v2138 = vld [vmem:[%s174 + $0x1da8] sm:$0xf]
        %v2139 = vld [vmem:[%s174 + $0x1dac] sm:$0xf]
        %v2140 = vld [vmem:[%s174 + $0x1db0] sm:$0xf]
        %v2141 = vld [vmem:[%s174 + $0x1db4] sm:$0xf]
        %v2142 = vld [vmem:[%s174 + $0x1db8] sm:$0xf]
        %v2143 = vld [vmem:[%s174 + $0x1dbc] sm:$0xf]
        %v2144 = vld [vmem:[%s174 + $0x1dc0] sm:$0xf]
        %v2145 = vld [vmem:[%s174 + $0x1dc4] sm:$0xf]
        %v2146 = vld [vmem:[%s174 + $0x1dc8] sm:$0xf]
        %v2147 = vld [vmem:[%s174 + $0x1dcc] sm:$0xf]
        %v2148 = vld [vmem:[%s174 + $0x1dd0] sm:$0xf]
        %v2149 = vld [vmem:[%s174 + $0x1dd4] sm:$0xf]
        %v2150 = vld [vmem:[%s174 + $0x1dd8] sm:$0xf]
        %v2151 = vld [vmem:[%s174 + $0x1ddc] sm:$0xf]
        %v2152 = vld [vmem:[%s174 + $0x1de0] sm:$0xf]
        %v2153 = vld [vmem:[%s174 + $0x1de4] sm:$0xf]
        %v2154 = vld [vmem:[%s174 + $0x1de8] sm:$0xf]
        %v2155 = vld [vmem:[%s174 + $0x1dec] sm:$0xf]
        %v2156 = vld [vmem:[%s174 + $0x1df0] sm:$0xf]
        %v2157 = vld [vmem:[%s174 + $0x1df4] sm:$0xf]
        %v2158 = vld [vmem:[%s174 + $0x1df8] sm:$0xf]
        %v2159 = vld [vmem:[%s174 + $0x1dfc] sm:$0xf]
        %v2160 = vld [vmem:[%s174 + $0x1e00] sm:$0xf]
        %v2161 = vld [vmem:[%s174 + $0x1e04] sm:$0xf]
        %v2162 = vld [vmem:[%s174 + $0x1e08] sm:$0xf]
        %v2163 = vld [vmem:[%s174 + $0x1e0c] sm:$0xf]
        %v2164 = vld [vmem:[%s174 + $0x1e10] sm:$0xf]
        %v2165 = vld [vmem:[%s174 + $0x1e14] sm:$0xf]
        %v2166 = vld [vmem:[%s174 + $0x1e18] sm:$0xf]
        %v2167 = vld [vmem:[%s174 + $0x1e1c] sm:$0xf]
        %v2168 = vld [vmem:[%s174 + $0x1e20] sm:$0xf]
        %v2169 = vld [vmem:[%s174 + $0x1e24] sm:$0xf]
        %v2170 = vld [vmem:[%s174 + $0x1e28] sm:$0xf]
        %v2171 = vld [vmem:[%s174 + $0x1e2c] sm:$0xf]
        %v2172 = vld [vmem:[%s174 + $0x1e30] sm:$0xf]
        %v2173 = vld [vmem:[%s174 + $0x1e34] sm:$0xf]
        %v2174 = vld [vmem:[%s174 + $0x1e38] sm:$0xf]
        %v2175 = vld [vmem:[%s174 + $0x1e3c] sm:$0xf]
        %v2176 = vld [vmem:[%s174 + $0x1e40] sm:$0xf]
        %v2177 = vld [vmem:[%s174 + $0x1e44] sm:$0xf]
        %v2178 = vld [vmem:[%s174 + $0x1e48] sm:$0xf]
        %v2179 = vld [vmem:[%s174 + $0x1e4c] sm:$0xf]
        %v2180 = vld [vmem:[%s174 + $0x1e50] sm:$0xf]
        %v2181 = vld [vmem:[%s174 + $0x1e54] sm:$0xf]
        %v2182 = vld [vmem:[%s174 + $0x1e58] sm:$0xf]
        %v2183 = vld [vmem:[%s174 + $0x1e5c] sm:$0xf]
        %v2184 = vld [vmem:[%s174 + $0x1e60] sm:$0xf]
        %v2185 = vld [vmem:[%s174 + $0x1e64] sm:$0xf]
        %v2186 = vld [vmem:[%s174 + $0x1e68] sm:$0xf]
        %v2187 = vld [vmem:[%s174 + $0x1e6c] sm:$0xf]
        %v2188 = vld [vmem:[%s174 + $0x1e70] sm:$0xf]
        %v2189 = vld [vmem:[%s174 + $0x1e74] sm:$0xf]
        %v2190 = vld [vmem:[%s174 + $0x1e78] sm:$0xf]
        %v2191 = vld [vmem:[%s174 + $0x1e7c] sm:$0xf]
        %v2192 = vld [vmem:[%s174 + $0x1e80] sm:$0xf]
        %v2193 = vld [vmem:[%s174 + $0x1e84] sm:$0xf]
        %v2194 = vld [vmem:[%s174 + $0x1e88] sm:$0xf]
        %v2195 = vld [vmem:[%s174 + $0x1e8c] sm:$0xf]
        %v2196 = vld [vmem:[%s174 + $0x1e90] sm:$0xf]
        %v2197 = vld [vmem:[%s174 + $0x1e94] sm:$0xf]
        %v2198 = vld [vmem:[%s174 + $0x1e98] sm:$0xf]
        %v2199 = vld [vmem:[%s174 + $0x1e9c] sm:$0xf]
        %v2200 = vld [vmem:[%s174 + $0x1ea0] sm:$0xf]
        %v2201 = vld [vmem:[%s174 + $0x1ea4] sm:$0xf]
        %v2202 = vld [vmem:[%s174 + $0x1ea8] sm:$0xf]
        %v2203 = vld [vmem:[%s174 + $0x1eac] sm:$0xf]
        %v2204 = vld [vmem:[%s174 + $0x1eb0] sm:$0xf]
        %v2205 = vld [vmem:[%s174 + $0x1eb4] sm:$0xf]
        %v2206 = vld [vmem:[%s174 + $0x1eb8] sm:$0xf]
        %v2207 = vld [vmem:[%s174 + $0x1ebc] sm:$0xf]
        %v2208 = vld [vmem:[%s174 + $0x1ec0] sm:$0xf]
        %v2209 = vld [vmem:[%s174 + $0x1ec4] sm:$0xf]
        %v2210 = vld [vmem:[%s174 + $0x1ec8] sm:$0xf]
        %v2211 = vld [vmem:[%s174 + $0x1ecc] sm:$0xf]
        %v2212 = vld [vmem:[%s174 + $0x1ed0] sm:$0xf]
        %v2213 = vld [vmem:[%s174 + $0x1ed4] sm:$0xf]
        %v2214 = vld [vmem:[%s174 + $0x1ed8] sm:$0xf]
        %v2215 = vld [vmem:[%s174 + $0x1edc] sm:$0xf]
        %v2216 = vld [vmem:[%s174 + $0x1ee0] sm:$0xf]
        %v2217 = vld [vmem:[%s174 + $0x1ee4] sm:$0xf]
        %v2218 = vld [vmem:[%s174 + $0x1ee8] sm:$0xf]
        %v2219 = vld [vmem:[%s174 + $0x1eec] sm:$0xf]
        %v2220 = vld [vmem:[%s174 + $0x1ef0] sm:$0xf]
        %v2221 = vld [vmem:[%s174 + $0x1ef4] sm:$0xf]
        %v2222 = vld [vmem:[%s174 + $0x1ef8] sm:$0xf]
        %v2223 = vld [vmem:[%s174 + $0x1efc] sm:$0xf]
        %v2224 = vld [vmem:[%s174 + $0x1f00] sm:$0xf]
        %v2225 = vld [vmem:[%s174 + $0x1f04] sm:$0xf]
        %v2226 = vld [vmem:[%s174 + $0x1f08] sm:$0xf]
        %v2227 = vld [vmem:[%s174 + $0x1f0c] sm:$0xf]
        %v2228 = vld [vmem:[%s174 + $0x1f10] sm:$0xf]
        %v2229 = vld [vmem:[%s174 + $0x1f14] sm:$0xf]
        %v2230 = vld [vmem:[%s174 + $0x1f18] sm:$0xf]
        %v2231 = vld [vmem:[%s174 + $0x1f1c] sm:$0xf]
        %v2232 = vld [vmem:[%s174 + $0x1f20] sm:$0xf]
        %v2233 = vld [vmem:[%s174 + $0x1f24] sm:$0xf]
        %v2234 = vld [vmem:[%s174 + $0x1f28] sm:$0xf]
        %v2235 = vld [vmem:[%s174 + $0x1f2c] sm:$0xf]
        %v2236 = vld [vmem:[%s174 + $0x1f30] sm:$0xf]
        %v2237 = vld [vmem:[%s174 + $0x1f34] sm:$0xf]
        %v2238 = vld [vmem:[%s174 + $0x1f38] sm:$0xf]
        %v2239 = vld [vmem:[%s174 + $0x1f3c] sm:$0xf]
        %v2240 = vld [vmem:[%s174 + $0x1f40] sm:$0xf]
        %v2241 = vld [vmem:[%s174 + $0x1f44] sm:$0xf]
        %v2242 = vld [vmem:[%s174 + $0x1f48] sm:$0xf]
        %v2243 = vld [vmem:[%s174 + $0x1f4c] sm:$0xf]
        %v2244 = vld [vmem:[%s174 + $0x1f50] sm:$0xf]
        %v2245 = vld [vmem:[%s174 + $0x1f54] sm:$0xf]
        %v2246 = vld [vmem:[%s174 + $0x1f58] sm:$0xf]
        %v2247 = vld [vmem:[%s174 + $0x1f5c] sm:$0xf]
        %v2248 = vld [vmem:[%s174 + $0x1f60] sm:$0xf]
        %v2249 = vld [vmem:[%s174 + $0x1f64] sm:$0xf]
        %v2250 = vld [vmem:[%s174 + $0x1f68] sm:$0xf]
        %v2251 = vld [vmem:[%s174 + $0x1f6c] sm:$0xf]
        %v2252 = vld [vmem:[%s174 + $0x1f70] sm:$0xf]
        %v2253 = vld [vmem:[%s174 + $0x1f74] sm:$0xf]
        %v2254 = vld [vmem:[%s174 + $0x1f78] sm:$0xf]
        %v2255 = vld [vmem:[%s174 + $0x1f7c] sm:$0xf]
        %v2256 = vld [vmem:[%s174 + $0x1f80] sm:$0xf]
        %v2257 = vld [vmem:[%s174 + $0x1f84] sm:$0xf]
        %v2258 = vld [vmem:[%s174 + $0x1f88] sm:$0xf]
        %v2259 = vld [vmem:[%s174 + $0x1f8c] sm:$0xf]
        %v2260 = vld [vmem:[%s174 + $0x1f90] sm:$0xf]
        %v2261 = vld [vmem:[%s174 + $0x1f94] sm:$0xf]
        %v2262 = vld [vmem:[%s174 + $0x1f98] sm:$0xf]
        %v2263 = vld [vmem:[%s174 + $0x1f9c] sm:$0xf]
        %v2264 = vld [vmem:[%s174 + $0x1fa0] sm:$0xf]
        %v2265 = vld [vmem:[%s174 + $0x1fa4] sm:$0xf]
        %v2266 = vld [vmem:[%s174 + $0x1fa8] sm:$0xf]
        %v2267 = vld [vmem:[%s174 + $0x1fac] sm:$0xf]
        %v2268 = vld [vmem:[%s174 + $0x1fb0] sm:$0xf]
        %v2269 = vld [vmem:[%s174 + $0x1fb4] sm:$0xf]
        %v2270 = vld [vmem:[%s174 + $0x1fb8] sm:$0xf]
        %v2271 = vld [vmem:[%s174 + $0x1fbc] sm:$0xf]
        %v2272 = vld [vmem:[%s174 + $0x1fc0] sm:$0xf]
        %v2273 = vld [vmem:[%s174 + $0x1fc4] sm:$0xf]
        %v2274 = vld [vmem:[%s174 + $0x1fc8] sm:$0xf]
        %v2275 = vld [vmem:[%s174 + $0x1fcc] sm:$0xf]
        %v2276 = vld [vmem:[%s174 + $0x1fd0] sm:$0xf]
        %v2277 = vld [vmem:[%s174 + $0x1fd4] sm:$0xf]
        %v2278 = vld [vmem:[%s174 + $0x1fd8] sm:$0xf]
        %v2279 = vld [vmem:[%s174 + $0x1fdc] sm:$0xf]
        %v2280 = vld [vmem:[%s174 + $0x1fe0] sm:$0xf]
        %v2281 = vld [vmem:[%s174 + $0x1fe4] sm:$0xf]
        %v2282 = vld [vmem:[%s174 + $0x1fe8] sm:$0xf]
        %v2283 = vld [vmem:[%s174 + $0x1fec] sm:$0xf]
        %v2284 = vld [vmem:[%s174 + $0x1ff0] sm:$0xf]
        %v2285 = vld [vmem:[%s174 + $0x1ff4] sm:$0xf]
        %v2286 = vld [vmem:[%s174 + $0x1ff8] sm:$0xf]
        %v2287 = vld [vmem:[%s174 + $0x1ffc] sm:$0xf]
        %v2304 = vcombine.high %v224, %v224
        %v2306 = vunpack.c.l.s4 1966171168
        %v2307 = vunpack.c.0.s8 %v2306
        %v2308 = vlaneseq
        %v2309 = vshrl.u32 %v2308, 7
        %v2310 = vsub.s32 %v2307, %v2309
        %v2311 = vrot.slane %v224, %v2310
        %v2313 = vunpack.c.l.s4 1966171168
        %v2314 = vunpack.c.0.s8 %v2313
        %v2315 = vlaneseq
        %v2316 = vshrl.u32 %v2315, 7
        %v2317 = vsub.s32 %v2314, %v2316
        %v2318 = vrot.slane %v2304, %v2317
        %v2319 = vcombine.high %v2311, %v2311
        %v2320 = vcombine.high %v2318, %v2318
        %v2322 = vunpack.c.l.s4 1966171168
        %v2323 = vunpack.c.0.s8 %v2322
        %v2324 = vlaneseq
        %v2325 = vshrl.u32 %v2324, 7
        %v2326 = vsub.s32 %v2323, %v2325
        %v2327 = vrot.slane %v2311, %v2326
        %v2329 = vunpack.c.l.s4 1966171168
        %v2330 = vunpack.c.0.s8 %v2329
        %v2331 = vlaneseq
        %v2332 = vshrl.u32 %v2331, 7
        %v2333 = vsub.s32 %v2330, %v2332
        %v2334 = vrot.slane %v2318, %v2333
        %v2336 = vunpack.c.l.s4 1966171168
        %v2337 = vunpack.c.0.s8 %v2336
        %v2338 = vlaneseq
        %v2339 = vshrl.u32 %v2338, 7
        %v2340 = vsub.s32 %v2337, %v2339
        %v2341 = vrot.slane %v2319, %v2340
        %v2343 = vunpack.c.l.s4 1966171168
        %v2344 = vunpack.c.0.s8 %v2343
        %v2345 = vlaneseq
        %v2346 = vshrl.u32 %v2345, 7
        %v2347 = vsub.s32 %v2344, %v2346
        %v2348 = vrot.slane %v2320, %v2347
        %v2349 = vcombine.high %v2327, %v2327
        %v2350 = vcombine.high %v2334, %v2334
        %v2351 = vcombine.high %v2341, %v2341
        %v2352 = vcombine.high %v2348, %v2348
        %v2353 = vcombine.high %v225, %v225
        %v2355 = vunpack.c.l.s4 1966171168
        %v2356 = vunpack.c.0.s8 %v2355
        %v2357 = vlaneseq
        %v2358 = vshrl.u32 %v2357, 7
        %v2359 = vsub.s32 %v2356, %v2358
        %v2360 = vrot.slane %v225, %v2359
        %v2362 = vunpack.c.l.s4 1966171168
        %v2363 = vunpack.c.0.s8 %v2362
        %v2364 = vlaneseq
        %v2365 = vshrl.u32 %v2364, 7
        %v2366 = vsub.s32 %v2363, %v2365
        %v2367 = vrot.slane %v2353, %v2366
        %v2368 = vcombine.high %v2360, %v2360
        %v2369 = vcombine.high %v2367, %v2367
        %v2371 = vunpack.c.l.s4 1966171168
        %v2372 = vunpack.c.0.s8 %v2371
        %v2373 = vlaneseq
        %v2374 = vshrl.u32 %v2373, 7
        %v2375 = vsub.s32 %v2372, %v2374
        %v2376 = vrot.slane %v2360, %v2375
        %v2378 = vunpack.c.l.s4 1966171168
        %v2379 = vunpack.c.0.s8 %v2378
        %v2380 = vlaneseq
        %v2381 = vshrl.u32 %v2380, 7
        %v2382 = vsub.s32 %v2379, %v2381
        %v2383 = vrot.slane %v2367, %v2382
        %v2385 = vunpack.c.l.s4 1966171168
        %v2386 = vunpack.c.0.s8 %v2385
        %v2387 = vlaneseq
        %v2388 = vshrl.u32 %v2387, 7
        %v2389 = vsub.s32 %v2386, %v2388
        %v2390 = vrot.slane %v2368, %v2389
        %v2392 = vunpack.c.l.s4 1966171168
        %v2393 = vunpack.c.0.s8 %v2392
        %v2394 = vlaneseq
        %v2395 = vshrl.u32 %v2394, 7
        %v2396 = vsub.s32 %v2393, %v2395
        %v2397 = vrot.slane %v2369, %v2396
        %v2398 = vcombine.high %v2376, %v2376
        %v2399 = vcombine.high %v2383, %v2383
        %v2400 = vcombine.high %v2390, %v2390
        %v2401 = vcombine.high %v2397, %v2397
        %v2402 = vcombine.high %v226, %v226
        %v2404 = vunpack.c.l.s4 1966171168
        %v2405 = vunpack.c.0.s8 %v2404
        %v2406 = vlaneseq
        %v2407 = vshrl.u32 %v2406, 7
        %v2408 = vsub.s32 %v2405, %v2407
        %v2409 = vrot.slane %v226, %v2408
        %v2411 = vunpack.c.l.s4 1966171168
        %v2412 = vunpack.c.0.s8 %v2411
        %v2413 = vlaneseq
        %v2414 = vshrl.u32 %v2413, 7
        %v2415 = vsub.s32 %v2412, %v2414
        %v2416 = vrot.slane %v2402, %v2415
        %v2417 = vcombine.high %v2409, %v2409
        %v2418 = vcombine.high %v2416, %v2416
        %v2420 = vunpack.c.l.s4 1966171168
        %v2421 = vunpack.c.0.s8 %v2420
        %v2422 = vlaneseq
        %v2423 = vshrl.u32 %v2422, 7
        %v2424 = vsub.s32 %v2421, %v2423
        %v2425 = vrot.slane %v2409, %v2424
        %v2427 = vunpack.c.l.s4 1966171168
        %v2428 = vunpack.c.0.s8 %v2427
        %v2429 = vlaneseq
        %v2430 = vshrl.u32 %v2429, 7
        %v2431 = vsub.s32 %v2428, %v2430
        %v2432 = vrot.slane %v2416, %v2431
        %v2434 = vunpack.c.l.s4 1966171168
        %v2435 = vunpack.c.0.s8 %v2434
        %v2436 = vlaneseq
        %v2437 = vshrl.u32 %v2436, 7
        %v2438 = vsub.s32 %v2435, %v2437
        %v2439 = vrot.slane %v2417, %v2438
        %v2441 = vunpack.c.l.s4 1966171168
        %v2442 = vunpack.c.0.s8 %v2441
        %v2443 = vlaneseq
        %v2444 = vshrl.u32 %v2443, 7
        %v2445 = vsub.s32 %v2442, %v2444
        %v2446 = vrot.slane %v2418, %v2445
        %v2447 = vcombine.high %v2425, %v2425
        %v2448 = vcombine.high %v2432, %v2432
        %v2449 = vcombine.high %v2439, %v2439
        %v2450 = vcombine.high %v2446, %v2446
        %v2451 = vcombine.high %v227, %v227
        %v2453 = vunpack.c.l.s4 1966171168
        %v2454 = vunpack.c.0.s8 %v2453
        %v2455 = vlaneseq
        %v2456 = vshrl.u32 %v2455, 7
        %v2457 = vsub.s32 %v2454, %v2456
        %v2458 = vrot.slane %v227, %v2457
        %v2460 = vunpack.c.l.s4 1966171168
        %v2461 = vunpack.c.0.s8 %v2460
        %v2462 = vlaneseq
        %v2463 = vshrl.u32 %v2462, 7
        %v2464 = vsub.s32 %v2461, %v2463
        %v2465 = vrot.slane %v2451, %v2464
        %v2466 = vcombine.high %v2458, %v2458
        %v2467 = vcombine.high %v2465, %v2465
        %v2469 = vunpack.c.l.s4 1966171168
        %v2470 = vunpack.c.0.s8 %v2469
        %v2471 = vlaneseq
        %v2472 = vshrl.u32 %v2471, 7
        %v2473 = vsub.s32 %v2470, %v2472
        %v2474 = vrot.slane %v2458, %v2473
        %v2476 = vunpack.c.l.s4 1966171168
        %v2477 = vunpack.c.0.s8 %v2476
        %v2478 = vlaneseq
        %v2479 = vshrl.u32 %v2478, 7
        %v2480 = vsub.s32 %v2477, %v2479
        %v2481 = vrot.slane %v2465, %v2480
        %v2483 = vunpack.c.l.s4 1966171168
        %v2484 = vunpack.c.0.s8 %v2483
        %v2485 = vlaneseq
        %v2486 = vshrl.u32 %v2485, 7
        %v2487 = vsub.s32 %v2484, %v2486
        %v2488 = vrot.slane %v2466, %v2487
        %v2490 = vunpack.c.l.s4 1966171168
        %v2491 = vunpack.c.0.s8 %v2490
        %v2492 = vlaneseq
        %v2493 = vshrl.u32 %v2492, 7
        %v2494 = vsub.s32 %v2491, %v2493
        %v2495 = vrot.slane %v2467, %v2494
        %v2496 = vcombine.high %v2474, %v2474
        %v2497 = vcombine.high %v2481, %v2481
        %v2498 = vcombine.high %v2488, %v2488
        %v2499 = vcombine.high %v2495, %v2495
        %v2500 = vcombine.high %v228, %v228
        %v2502 = vunpack.c.l.s4 1966171168
        %v2503 = vunpack.c.0.s8 %v2502
        %v2504 = vlaneseq
        %v2505 = vshrl.u32 %v2504, 7
        %v2506 = vsub.s32 %v2503, %v2505
        %v2507 = vrot.slane %v228, %v2506
        %v2509 = vunpack.c.l.s4 1966171168
        %v2510 = vunpack.c.0.s8 %v2509
        %v2511 = vlaneseq
        %v2512 = vshrl.u32 %v2511, 7
        %v2513 = vsub.s32 %v2510, %v2512
        %v2514 = vrot.slane %v2500, %v2513
        %v2515 = vcombine.high %v2507, %v2507
        %v2516 = vcombine.high %v2514, %v2514
        %v2518 = vunpack.c.l.s4 1966171168
        %v2519 = vunpack.c.0.s8 %v2518
        %v2520 = vlaneseq
        %v2521 = vshrl.u32 %v2520, 7
        %v2522 = vsub.s32 %v2519, %v2521
        %v2523 = vrot.slane %v2507, %v2522
        %v2525 = vunpack.c.l.s4 1966171168
        %v2526 = vunpack.c.0.s8 %v2525
        %v2527 = vlaneseq
        %v2528 = vshrl.u32 %v2527, 7
        %v2529 = vsub.s32 %v2526, %v2528
        %v2530 = vrot.slane %v2514, %v2529
        %v2532 = vunpack.c.l.s4 1966171168
        %v2533 = vunpack.c.0.s8 %v2532
        %v2534 = vlaneseq
        %v2535 = vshrl.u32 %v2534, 7
        %v2536 = vsub.s32 %v2533, %v2535
        %v2537 = vrot.slane %v2515, %v2536
        %v2539 = vunpack.c.l.s4 1966171168
        %v2540 = vunpack.c.0.s8 %v2539
        %v2541 = vlaneseq
        %v2542 = vshrl.u32 %v2541, 7
        %v2543 = vsub.s32 %v2540, %v2542
        %v2544 = vrot.slane %v2516, %v2543
        %v2545 = vcombine.high %v2523, %v2523
        %v2546 = vcombine.high %v2530, %v2530
        %v2547 = vcombine.high %v2537, %v2537
        %v2548 = vcombine.high %v2544, %v2544
        %v2549 = vcombine.high %v229, %v229
        %v2551 = vunpack.c.l.s4 1966171168
        %v2552 = vunpack.c.0.s8 %v2551
        %v2553 = vlaneseq
        %v2554 = vshrl.u32 %v2553, 7
        %v2555 = vsub.s32 %v2552, %v2554
        %v2556 = vrot.slane %v229, %v2555
        %v2558 = vunpack.c.l.s4 1966171168
        %v2559 = vunpack.c.0.s8 %v2558
        %v2560 = vlaneseq
        %v2561 = vshrl.u32 %v2560, 7
        %v2562 = vsub.s32 %v2559, %v2561
        %v2563 = vrot.slane %v2549, %v2562
        %v2564 = vcombine.high %v2556, %v2556
        %v2565 = vcombine.high %v2563, %v2563
        %v2567 = vunpack.c.l.s4 1966171168
        %v2568 = vunpack.c.0.s8 %v2567
        %v2569 = vlaneseq
        %v2570 = vshrl.u32 %v2569, 7
        %v2571 = vsub.s32 %v2568, %v2570
        %v2572 = vrot.slane %v2556, %v2571
        %v2574 = vunpack.c.l.s4 1966171168
        %v2575 = vunpack.c.0.s8 %v2574
        %v2576 = vlaneseq
        %v2577 = vshrl.u32 %v2576, 7
        %v2578 = vsub.s32 %v2575, %v2577
        %v2579 = vrot.slane %v2563, %v2578
        %v2581 = vunpack.c.l.s4 1966171168
        %v2582 = vunpack.c.0.s8 %v2581
        %v2583 = vlaneseq
        %v2584 = vshrl.u32 %v2583, 7
        %v2585 = vsub.s32 %v2582, %v2584
        %v2586 = vrot.slane %v2564, %v2585
        %v2588 = vunpack.c.l.s4 1966171168
        %v2589 = vunpack.c.0.s8 %v2588
        %v2590 = vlaneseq
        %v2591 = vshrl.u32 %v2590, 7
        %v2592 = vsub.s32 %v2589, %v2591
        %v2593 = vrot.slane %v2565, %v2592
        %v2594 = vcombine.high %v2572, %v2572
        %v2595 = vcombine.high %v2579, %v2579
        %v2596 = vcombine.high %v2586, %v2586
        %v2597 = vcombine.high %v2593, %v2593
        %v2598 = vcombine.high %v230, %v230
        %v2600 = vunpack.c.l.s4 1966171168
        %v2601 = vunpack.c.0.s8 %v2600
        %v2602 = vlaneseq
        %v2603 = vshrl.u32 %v2602, 7
        %v2604 = vsub.s32 %v2601, %v2603
        %v2605 = vrot.slane %v230, %v2604
        %v2607 = vunpack.c.l.s4 1966171168
        %v2608 = vunpack.c.0.s8 %v2607
        %v2609 = vlaneseq
        %v2610 = vshrl.u32 %v2609, 7
        %v2611 = vsub.s32 %v2608, %v2610
        %v2612 = vrot.slane %v2598, %v2611
        %v2613 = vcombine.high %v2605, %v2605
        %v2614 = vcombine.high %v2612, %v2612
        %v2616 = vunpack.c.l.s4 1966171168
        %v2617 = vunpack.c.0.s8 %v2616
        %v2618 = vlaneseq
        %v2619 = vshrl.u32 %v2618, 7
        %v2620 = vsub.s32 %v2617, %v2619
        %v2621 = vrot.slane %v2605, %v2620
        %v2623 = vunpack.c.l.s4 1966171168
        %v2624 = vunpack.c.0.s8 %v2623
        %v2625 = vlaneseq
        %v2626 = vshrl.u32 %v2625, 7
        %v2627 = vsub.s32 %v2624, %v2626
        %v2628 = vrot.slane %v2612, %v2627
        %v2630 = vunpack.c.l.s4 1966171168
        %v2631 = vunpack.c.0.s8 %v2630
        %v2632 = vlaneseq
        %v2633 = vshrl.u32 %v2632, 7
        %v2634 = vsub.s32 %v2631, %v2633
        %v2635 = vrot.slane %v2613, %v2634
        %v2637 = vunpack.c.l.s4 1966171168
        %v2638 = vunpack.c.0.s8 %v2637
        %v2639 = vlaneseq
        %v2640 = vshrl.u32 %v2639, 7
        %v2641 = vsub.s32 %v2638, %v2640
        %v2642 = vrot.slane %v2614, %v2641
        %v2643 = vcombine.high %v2621, %v2621
        %v2644 = vcombine.high %v2628, %v2628
        %v2645 = vcombine.high %v2635, %v2635
        %v2646 = vcombine.high %v2642, %v2642
        %v2647 = vcombine.high %v231, %v231
        %v2649 = vunpack.c.l.s4 1966171168
        %v2650 = vunpack.c.0.s8 %v2649
        %v2651 = vlaneseq
        %v2652 = vshrl.u32 %v2651, 7
        %v2653 = vsub.s32 %v2650, %v2652
        %v2654 = vrot.slane %v231, %v2653
        %v2656 = vunpack.c.l.s4 1966171168
        %v2657 = vunpack.c.0.s8 %v2656
        %v2658 = vlaneseq
        %v2659 = vshrl.u32 %v2658, 7
        %v2660 = vsub.s32 %v2657, %v2659
        %v2661 = vrot.slane %v2647, %v2660
        %v2662 = vcombine.high %v2654, %v2654
        %v2663 = vcombine.high %v2661, %v2661
        %v2665 = vunpack.c.l.s4 1966171168
        %v2666 = vunpack.c.0.s8 %v2665
        %v2667 = vlaneseq
        %v2668 = vshrl.u32 %v2667, 7
        %v2669 = vsub.s32 %v2666, %v2668
        %v2670 = vrot.slane %v2654, %v2669
        %v2672 = vunpack.c.l.s4 1966171168
        %v2673 = vunpack.c.0.s8 %v2672
        %v2674 = vlaneseq
        %v2675 = vshrl.u32 %v2674, 7
        %v2676 = vsub.s32 %v2673, %v2675
        %v2677 = vrot.slane %v2661, %v2676
        %v2679 = vunpack.c.l.s4 1966171168
        %v2680 = vunpack.c.0.s8 %v2679
        %v2681 = vlaneseq
        %v2682 = vshrl.u32 %v2681, 7
        %v2683 = vsub.s32 %v2680, %v2682
        %v2684 = vrot.slane %v2662, %v2683
        %v2686 = vunpack.c.l.s4 1966171168
        %v2687 = vunpack.c.0.s8 %v2686
        %v2688 = vlaneseq
        %v2689 = vshrl.u32 %v2688, 7
        %v2690 = vsub.s32 %v2687, %v2689
        %v2691 = vrot.slane %v2663, %v2690
        %v2692 = vcombine.high %v2670, %v2670
        %v2693 = vcombine.high %v2677, %v2677
        %v2694 = vcombine.high %v2684, %v2684
        %v2695 = vcombine.high %v2691, %v2691
        %v2696 = vcombine.high %v232, %v232
        %v2698 = vunpack.c.l.s4 1966171168
        %v2699 = vunpack.c.0.s8 %v2698
        %v2700 = vlaneseq
        %v2701 = vshrl.u32 %v2700, 7
        %v2702 = vsub.s32 %v2699, %v2701
        %v2703 = vrot.slane %v232, %v2702
        %v2705 = vunpack.c.l.s4 1966171168
        %v2706 = vunpack.c.0.s8 %v2705
        %v2707 = vlaneseq
        %v2708 = vshrl.u32 %v2707, 7
        %v2709 = vsub.s32 %v2706, %v2708
        %v2710 = vrot.slane %v2696, %v2709
        %v2711 = vcombine.high %v2703, %v2703
        %v2712 = vcombine.high %v2710, %v2710
        %v2714 = vunpack.c.l.s4 1966171168
        %v2715 = vunpack.c.0.s8 %v2714
        %v2716 = vlaneseq
        %v2717 = vshrl.u32 %v2716, 7
        %v2718 = vsub.s32 %v2715, %v2717
        %v2719 = vrot.slane %v2703, %v2718
        %v2721 = vunpack.c.l.s4 1966171168
        %v2722 = vunpack.c.0.s8 %v2721
        %v2723 = vlaneseq
        %v2724 = vshrl.u32 %v2723, 7
        %v2725 = vsub.s32 %v2722, %v2724
        %v2726 = vrot.slane %v2710, %v2725
        %v2728 = vunpack.c.l.s4 1966171168
        %v2729 = vunpack.c.0.s8 %v2728
        %v2730 = vlaneseq
        %v2731 = vshrl.u32 %v2730, 7
        %v2732 = vsub.s32 %v2729, %v2731
        %v2733 = vrot.slane %v2711, %v2732
        %v2735 = vunpack.c.l.s4 1966171168
        %v2736 = vunpack.c.0.s8 %v2735
        %v2737 = vlaneseq
        %v2738 = vshrl.u32 %v2737, 7
        %v2739 = vsub.s32 %v2736, %v2738
        %v2740 = vrot.slane %v2712, %v2739
        %v2741 = vcombine.high %v2719, %v2719
        %v2742 = vcombine.high %v2726, %v2726
        %v2743 = vcombine.high %v2733, %v2733
        %v2744 = vcombine.high %v2740, %v2740
        %v2745 = vcombine.high %v233, %v233
        %v2747 = vunpack.c.l.s4 1966171168
        %v2748 = vunpack.c.0.s8 %v2747
        %v2749 = vlaneseq
        %v2750 = vshrl.u32 %v2749, 7
        %v2751 = vsub.s32 %v2748, %v2750
        %v2752 = vrot.slane %v233, %v2751
        %v2754 = vunpack.c.l.s4 1966171168
        %v2755 = vunpack.c.0.s8 %v2754
        %v2756 = vlaneseq
        %v2757 = vshrl.u32 %v2756, 7
        %v2758 = vsub.s32 %v2755, %v2757
        %v2759 = vrot.slane %v2745, %v2758
        %v2760 = vcombine.high %v2752, %v2752
        %v2761 = vcombine.high %v2759, %v2759
        %v2763 = vunpack.c.l.s4 1966171168
        %v2764 = vunpack.c.0.s8 %v2763
        %v2765 = vlaneseq
        %v2766 = vshrl.u32 %v2765, 7
        %v2767 = vsub.s32 %v2764, %v2766
        %v2768 = vrot.slane %v2752, %v2767
        %v2770 = vunpack.c.l.s4 1966171168
        %v2771 = vunpack.c.0.s8 %v2770
        %v2772 = vlaneseq
        %v2773 = vshrl.u32 %v2772, 7
        %v2774 = vsub.s32 %v2771, %v2773
        %v2775 = vrot.slane %v2759, %v2774
        %v2777 = vunpack.c.l.s4 1966171168
        %v2778 = vunpack.c.0.s8 %v2777
        %v2779 = vlaneseq
        %v2780 = vshrl.u32 %v2779, 7
        %v2781 = vsub.s32 %v2778, %v2780
        %v2782 = vrot.slane %v2760, %v2781
        %v2784 = vunpack.c.l.s4 1966171168
        %v2785 = vunpack.c.0.s8 %v2784
        %v2786 = vlaneseq
        %v2787 = vshrl.u32 %v2786, 7
        %v2788 = vsub.s32 %v2785, %v2787
        %v2789 = vrot.slane %v2761, %v2788
        %v2790 = vcombine.high %v2768, %v2768
        %v2791 = vcombine.high %v2775, %v2775
        %v2792 = vcombine.high %v2782, %v2782
        %v2793 = vcombine.high %v2789, %v2789
        %v2794 = vcombine.high %v234, %v234
        %v2796 = vunpack.c.l.s4 1966171168
        %v2797 = vunpack.c.0.s8 %v2796
        %v2798 = vlaneseq
        %v2799 = vshrl.u32 %v2798, 7
        %v2800 = vsub.s32 %v2797, %v2799
        %v2801 = vrot.slane %v234, %v2800
        %v2803 = vunpack.c.l.s4 1966171168
        %v2804 = vunpack.c.0.s8 %v2803
        %v2805 = vlaneseq
        %v2806 = vshrl.u32 %v2805, 7
        %v2807 = vsub.s32 %v2804, %v2806
        %v2808 = vrot.slane %v2794, %v2807
        %v2809 = vcombine.high %v2801, %v2801
        %v2810 = vcombine.high %v2808, %v2808
        %v2812 = vunpack.c.l.s4 1966171168
        %v2813 = vunpack.c.0.s8 %v2812
        %v2814 = vlaneseq
        %v2815 = vshrl.u32 %v2814, 7
        %v2816 = vsub.s32 %v2813, %v2815
        %v2817 = vrot.slane %v2801, %v2816
        %v2819 = vunpack.c.l.s4 1966171168
        %v2820 = vunpack.c.0.s8 %v2819
        %v2821 = vlaneseq
        %v2822 = vshrl.u32 %v2821, 7
        %v2823 = vsub.s32 %v2820, %v2822
        %v2824 = vrot.slane %v2808, %v2823
        %v2826 = vunpack.c.l.s4 1966171168
        %v2827 = vunpack.c.0.s8 %v2826
        %v2828 = vlaneseq
        %v2829 = vshrl.u32 %v2828, 7
        %v2830 = vsub.s32 %v2827, %v2829
        %v2831 = vrot.slane %v2809, %v2830
        %v2833 = vunpack.c.l.s4 1966171168
        %v2834 = vunpack.c.0.s8 %v2833
        %v2835 = vlaneseq
        %v2836 = vshrl.u32 %v2835, 7
        %v2837 = vsub.s32 %v2834, %v2836
        %v2838 = vrot.slane %v2810, %v2837
        %v2839 = vcombine.high %v2817, %v2817
        %v2840 = vcombine.high %v2824, %v2824
        %v2841 = vcombine.high %v2831, %v2831
        %v2842 = vcombine.high %v2838, %v2838
        %v2843 = vcombine.high %v235, %v235
        %v2845 = vunpack.c.l.s4 1966171168
        %v2846 = vunpack.c.0.s8 %v2845
        %v2847 = vlaneseq
        %v2848 = vshrl.u32 %v2847, 7
        %v2849 = vsub.s32 %v2846, %v2848
        %v2850 = vrot.slane %v235, %v2849
        %v2852 = vunpack.c.l.s4 1966171168
        %v2853 = vunpack.c.0.s8 %v2852
        %v2854 = vlaneseq
        %v2855 = vshrl.u32 %v2854, 7
        %v2856 = vsub.s32 %v2853, %v2855
        %v2857 = vrot.slane %v2843, %v2856
        %v2858 = vcombine.high %v2850, %v2850
        %v2859 = vcombine.high %v2857, %v2857
        %v2861 = vunpack.c.l.s4 1966171168
        %v2862 = vunpack.c.0.s8 %v2861
        %v2863 = vlaneseq
        %v2864 = vshrl.u32 %v2863, 7
        %v2865 = vsub.s32 %v2862, %v2864
        %v2866 = vrot.slane %v2850, %v2865
        %v2868 = vunpack.c.l.s4 1966171168
        %v2869 = vunpack.c.0.s8 %v2868
        %v2870 = vlaneseq
        %v2871 = vshrl.u32 %v2870, 7
        %v2872 = vsub.s32 %v2869, %v2871
        %v2873 = vrot.slane %v2857, %v2872
        %v2875 = vunpack.c.l.s4 1966171168
        %v2876 = vunpack.c.0.s8 %v2875
        %v2877 = vlaneseq
        %v2878 = vshrl.u32 %v2877, 7
        %v2879 = vsub.s32 %v2876, %v2878
        %v2880 = vrot.slane %v2858, %v2879
        %v2882 = vunpack.c.l.s4 1966171168
        %v2883 = vunpack.c.0.s8 %v2882
        %v2884 = vlaneseq
        %v2885 = vshrl.u32 %v2884, 7
        %v2886 = vsub.s32 %v2883, %v2885
        %v2887 = vrot.slane %v2859, %v2886
        %v2888 = vcombine.high %v2866, %v2866
        %v2889 = vcombine.high %v2873, %v2873
        %v2890 = vcombine.high %v2880, %v2880
        %v2891 = vcombine.high %v2887, %v2887
        %v2892 = vcombine.high %v236, %v236
        %v2894 = vunpack.c.l.s4 1966171168
        %v2895 = vunpack.c.0.s8 %v2894
        %v2896 = vlaneseq
        %v2897 = vshrl.u32 %v2896, 7
        %v2898 = vsub.s32 %v2895, %v2897
        %v2899 = vrot.slane %v236, %v2898
        %v2901 = vunpack.c.l.s4 1966171168
        %v2902 = vunpack.c.0.s8 %v2901
        %v2903 = vlaneseq
        %v2904 = vshrl.u32 %v2903, 7
        %v2905 = vsub.s32 %v2902, %v2904
        %v2906 = vrot.slane %v2892, %v2905
        %v2907 = vcombine.high %v2899, %v2899
        %v2908 = vcombine.high %v2906, %v2906
        %v2910 = vunpack.c.l.s4 1966171168
        %v2911 = vunpack.c.0.s8 %v2910
        %v2912 = vlaneseq
        %v2913 = vshrl.u32 %v2912, 7
        %v2914 = vsub.s32 %v2911, %v2913
        %v2915 = vrot.slane %v2899, %v2914
        %v2917 = vunpack.c.l.s4 1966171168
        %v2918 = vunpack.c.0.s8 %v2917
        %v2919 = vlaneseq
        %v2920 = vshrl.u32 %v2919, 7
        %v2921 = vsub.s32 %v2918, %v2920
        %v2922 = vrot.slane %v2906, %v2921
        %v2924 = vunpack.c.l.s4 1966171168
        %v2925 = vunpack.c.0.s8 %v2924
        %v2926 = vlaneseq
        %v2927 = vshrl.u32 %v2926, 7
        %v2928 = vsub.s32 %v2925, %v2927
        %v2929 = vrot.slane %v2907, %v2928
        %v2931 = vunpack.c.l.s4 1966171168
        %v2932 = vunpack.c.0.s8 %v2931
        %v2933 = vlaneseq
        %v2934 = vshrl.u32 %v2933, 7
        %v2935 = vsub.s32 %v2932, %v2934
        %v2936 = vrot.slane %v2908, %v2935
        %v2937 = vcombine.high %v2915, %v2915
        %v2938 = vcombine.high %v2922, %v2922
        %v2939 = vcombine.high %v2929, %v2929
        %v2940 = vcombine.high %v2936, %v2936
        %v2941 = vcombine.high %v237, %v237
        %v2943 = vunpack.c.l.s4 1966171168
        %v2944 = vunpack.c.0.s8 %v2943
        %v2945 = vlaneseq
        %v2946 = vshrl.u32 %v2945, 7
        %v2947 = vsub.s32 %v2944, %v2946
        %v2948 = vrot.slane %v237, %v2947
        %v2950 = vunpack.c.l.s4 1966171168
        %v2951 = vunpack.c.0.s8 %v2950
        %v2952 = vlaneseq
        %v2953 = vshrl.u32 %v2952, 7
        %v2954 = vsub.s32 %v2951, %v2953
        %v2955 = vrot.slane %v2941, %v2954
        %v2956 = vcombine.high %v2948, %v2948
        %v2957 = vcombine.high %v2955, %v2955
        %v2959 = vunpack.c.l.s4 1966171168
        %v2960 = vunpack.c.0.s8 %v2959
        %v2961 = vlaneseq
        %v2962 = vshrl.u32 %v2961, 7
        %v2963 = vsub.s32 %v2960, %v2962
        %v2964 = vrot.slane %v2948, %v2963
        %v2966 = vunpack.c.l.s4 1966171168
        %v2967 = vunpack.c.0.s8 %v2966
        %v2968 = vlaneseq
        %v2969 = vshrl.u32 %v2968, 7
        %v2970 = vsub.s32 %v2967, %v2969
        %v2971 = vrot.slane %v2955, %v2970
        %v2973 = vunpack.c.l.s4 1966171168
        %v2974 = vunpack.c.0.s8 %v2973
        %v2975 = vlaneseq
        %v2976 = vshrl.u32 %v2975, 7
        %v2977 = vsub.s32 %v2974, %v2976
        %v2978 = vrot.slane %v2956, %v2977
        %v2980 = vunpack.c.l.s4 1966171168
        %v2981 = vunpack.c.0.s8 %v2980
        %v2982 = vlaneseq
        %v2983 = vshrl.u32 %v2982, 7
        %v2984 = vsub.s32 %v2981, %v2983
        %v2985 = vrot.slane %v2957, %v2984
        %v2986 = vcombine.high %v2964, %v2964
        %v2987 = vcombine.high %v2971, %v2971
        %v2988 = vcombine.high %v2978, %v2978
        %v2989 = vcombine.high %v2985, %v2985
        %v2990 = vcombine.high %v238, %v238
        %v2992 = vunpack.c.l.s4 1966171168
        %v2993 = vunpack.c.0.s8 %v2992
        %v2994 = vlaneseq
        %v2995 = vshrl.u32 %v2994, 7
        %v2996 = vsub.s32 %v2993, %v2995
        %v2997 = vrot.slane %v238, %v2996
        %v2999 = vunpack.c.l.s4 1966171168
        %v3000 = vunpack.c.0.s8 %v2999
        %v3001 = vlaneseq
        %v3002 = vshrl.u32 %v3001, 7
        %v3003 = vsub.s32 %v3000, %v3002
        %v3004 = vrot.slane %v2990, %v3003
        %v3005 = vcombine.high %v2997, %v2997
        %v3006 = vcombine.high %v3004, %v3004
        %v3008 = vunpack.c.l.s4 1966171168
        %v3009 = vunpack.c.0.s8 %v3008
        %v3010 = vlaneseq
        %v3011 = vshrl.u32 %v3010, 7
        %v3012 = vsub.s32 %v3009, %v3011
        %v3013 = vrot.slane %v2997, %v3012
        %v3015 = vunpack.c.l.s4 1966171168
        %v3016 = vunpack.c.0.s8 %v3015
        %v3017 = vlaneseq
        %v3018 = vshrl.u32 %v3017, 7
        %v3019 = vsub.s32 %v3016, %v3018
        %v3020 = vrot.slane %v3004, %v3019
        %v3022 = vunpack.c.l.s4 1966171168
        %v3023 = vunpack.c.0.s8 %v3022
        %v3024 = vlaneseq
        %v3025 = vshrl.u32 %v3024, 7
        %v3026 = vsub.s32 %v3023, %v3025
        %v3027 = vrot.slane %v3005, %v3026
        %v3029 = vunpack.c.l.s4 1966171168
        %v3030 = vunpack.c.0.s8 %v3029
        %v3031 = vlaneseq
        %v3032 = vshrl.u32 %v3031, 7
        %v3033 = vsub.s32 %v3030, %v3032
        %v3034 = vrot.slane %v3006, %v3033
        %v3035 = vcombine.high %v3013, %v3013
        %v3036 = vcombine.high %v3020, %v3020
        %v3037 = vcombine.high %v3027, %v3027
        %v3038 = vcombine.high %v3034, %v3034
        %v3039 = vcombine.high %v239, %v239
        %v3041 = vunpack.c.l.s4 1966171168
        %v3042 = vunpack.c.0.s8 %v3041
        %v3043 = vlaneseq
        %v3044 = vshrl.u32 %v3043, 7
        %v3045 = vsub.s32 %v3042, %v3044
        %v3046 = vrot.slane %v239, %v3045
        %v3048 = vunpack.c.l.s4 1966171168
        %v3049 = vunpack.c.0.s8 %v3048
        %v3050 = vlaneseq
        %v3051 = vshrl.u32 %v3050, 7
        %v3052 = vsub.s32 %v3049, %v3051
        %v3053 = vrot.slane %v3039, %v3052
        %v3054 = vcombine.high %v3046, %v3046
        %v3055 = vcombine.high %v3053, %v3053
        %v3057 = vunpack.c.l.s4 1966171168
        %v3058 = vunpack.c.0.s8 %v3057
        %v3059 = vlaneseq
        %v3060 = vshrl.u32 %v3059, 7
        %v3061 = vsub.s32 %v3058, %v3060
        %v3062 = vrot.slane %v3046, %v3061
        %v3064 = vunpack.c.l.s4 1966171168
        %v3065 = vunpack.c.0.s8 %v3064
        %v3066 = vlaneseq
        %v3067 = vshrl.u32 %v3066, 7
        %v3068 = vsub.s32 %v3065, %v3067
        %v3069 = vrot.slane %v3053, %v3068
        %v3071 = vunpack.c.l.s4 1966171168
        %v3072 = vunpack.c.0.s8 %v3071
        %v3073 = vlaneseq
        %v3074 = vshrl.u32 %v3073, 7
        %v3075 = vsub.s32 %v3072, %v3074
        %v3076 = vrot.slane %v3054, %v3075
        %v3078 = vunpack.c.l.s4 1966171168
        %v3079 = vunpack.c.0.s8 %v3078
        %v3080 = vlaneseq
        %v3081 = vshrl.u32 %v3080, 7
        %v3082 = vsub.s32 %v3079, %v3081
        %v3083 = vrot.slane %v3055, %v3082
        %v3084 = vcombine.high %v3062, %v3062
        %v3085 = vcombine.high %v3069, %v3069
        %v3086 = vcombine.high %v3076, %v3076
        %v3087 = vcombine.high %v3083, %v3083
        %v5264 = vunpack.c.l.b16 %v240
        %v5265 = vunpack.c.l.b16 %v241
        %v5266 = vunpack.c.l.b16 %v242
        %v5267 = vunpack.c.l.b16 %v243
        %v5268 = vunpack.c.l.b16 %v244
        %v5269 = vunpack.c.l.b16 %v245
        %v5270 = vunpack.c.l.b16 %v246
        %v5271 = vunpack.c.l.b16 %v247
        %v5272 = vunpack.c.l.b16 %v248
        %v5273 = vunpack.c.l.b16 %v249
        %v5274 = vunpack.c.l.b16 %v250
        %v5275 = vunpack.c.l.b16 %v251
        %v5276 = vunpack.c.l.b16 %v252
        %v5277 = vunpack.c.l.b16 %v253
        %v5278 = vunpack.c.l.b16 %v254
        %v5279 = vunpack.c.l.b16 %v255
        %v5280 = vunpack.c.l.b16 %v256
        %v5281 = vunpack.c.l.b16 %v257
        %v5282 = vunpack.c.l.b16 %v258
        %v5283 = vunpack.c.l.b16 %v259
        %v5284 = vunpack.c.l.b16 %v260
        %v5285 = vunpack.c.l.b16 %v261
        %v5286 = vunpack.c.l.b16 %v262
        %v5287 = vunpack.c.l.b16 %v263
        %v5288 = vunpack.c.l.b16 %v264
        %v5289 = vunpack.c.l.b16 %v265
        %v5290 = vunpack.c.l.b16 %v266
        %v5291 = vunpack.c.l.b16 %v267
        %v5292 = vunpack.c.l.b16 %v268
        %v5293 = vunpack.c.l.b16 %v269
        %v5294 = vunpack.c.l.b16 %v270
        %v5295 = vunpack.c.l.b16 %v271
        %v5296 = vunpack.c.l.b16 %v272
        %v5297 = vunpack.c.l.b16 %v273
        %v5298 = vunpack.c.l.b16 %v274
        %v5299 = vunpack.c.l.b16 %v275
        %v5300 = vunpack.c.l.b16 %v276
        %v5301 = vunpack.c.l.b16 %v277
        %v5302 = vunpack.c.l.b16 %v278
        %v5303 = vunpack.c.l.b16 %v279
        %v5304 = vunpack.c.l.b16 %v280
        %v5305 = vunpack.c.l.b16 %v281
        %v5306 = vunpack.c.l.b16 %v282
        %v5307 = vunpack.c.l.b16 %v283
        %v5308 = vunpack.c.l.b16 %v284
        %v5309 = vunpack.c.l.b16 %v285
        %v5310 = vunpack.c.l.b16 %v286
        %v5311 = vunpack.c.l.b16 %v287
        %v5312 = vunpack.c.l.b16 %v288
        %v5313 = vunpack.c.l.b16 %v289
        %v5314 = vunpack.c.l.b16 %v290
        %v5315 = vunpack.c.l.b16 %v291
        %v5316 = vunpack.c.l.b16 %v292
        %v5317 = vunpack.c.l.b16 %v293
        %v5318 = vunpack.c.l.b16 %v294
        %v5319 = vunpack.c.l.b16 %v295
        %v5320 = vunpack.c.l.b16 %v296
        %v5321 = vunpack.c.l.b16 %v297
        %v5322 = vunpack.c.l.b16 %v298
        %v5323 = vunpack.c.l.b16 %v299
        %v5324 = vunpack.c.l.b16 %v300
        %v5325 = vunpack.c.l.b16 %v301
        %v5326 = vunpack.c.l.b16 %v302
        %v5327 = vunpack.c.l.b16 %v303
        %v5328 = vunpack.c.l.b16 %v304
        %v5329 = vunpack.c.l.b16 %v305
        %v5330 = vunpack.c.l.b16 %v306
        %v5331 = vunpack.c.l.b16 %v307
        %v5332 = vunpack.c.l.b16 %v308
        %v5333 = vunpack.c.l.b16 %v309
        %v5334 = vunpack.c.l.b16 %v310
        %v5335 = vunpack.c.l.b16 %v311
        %v5336 = vunpack.c.l.b16 %v312
        %v5337 = vunpack.c.l.b16 %v313
        %v5338 = vunpack.c.l.b16 %v314
        %v5339 = vunpack.c.l.b16 %v315
        %v5340 = vunpack.c.l.b16 %v316
        %v5341 = vunpack.c.l.b16 %v317
        %v5342 = vunpack.c.l.b16 %v318
        %v5343 = vunpack.c.l.b16 %v319
        %v5344 = vunpack.c.l.b16 %v320
        %v5345 = vunpack.c.l.b16 %v321
        %v5346 = vunpack.c.l.b16 %v322
        %v5347 = vunpack.c.l.b16 %v323
        %v5348 = vunpack.c.l.b16 %v324
        %v5349 = vunpack.c.l.b16 %v325
        %v5350 = vunpack.c.l.b16 %v326
        %v5351 = vunpack.c.l.b16 %v327
        %v5352 = vunpack.c.l.b16 %v328
        %v5353 = vunpack.c.l.b16 %v329
        %v5354 = vunpack.c.l.b16 %v330
        %v5355 = vunpack.c.l.b16 %v331
        %v5356 = vunpack.c.l.b16 %v332
        %v5357 = vunpack.c.l.b16 %v333
        %v5358 = vunpack.c.l.b16 %v334
        %v5359 = vunpack.c.l.b16 %v335
        %v5360 = vunpack.c.l.b16 %v336
        %v5361 = vunpack.c.l.b16 %v337
        %v5362 = vunpack.c.l.b16 %v338
        %v5363 = vunpack.c.l.b16 %v339
        %v5364 = vunpack.c.l.b16 %v340
        %v5365 = vunpack.c.l.b16 %v341
        %v5366 = vunpack.c.l.b16 %v342
        %v5367 = vunpack.c.l.b16 %v343
        %v5368 = vunpack.c.l.b16 %v344
        %v5369 = vunpack.c.l.b16 %v345
        %v5370 = vunpack.c.l.b16 %v346
        %v5371 = vunpack.c.l.b16 %v347
        %v5372 = vunpack.c.l.b16 %v348
        %v5373 = vunpack.c.l.b16 %v349
        %v5374 = vunpack.c.l.b16 %v350
        %v5375 = vunpack.c.l.b16 %v351
        %v5376 = vunpack.c.l.b16 %v352
        %v5377 = vunpack.c.l.b16 %v353
        %v5378 = vunpack.c.l.b16 %v354
        %v5379 = vunpack.c.l.b16 %v355
        %v5380 = vunpack.c.l.b16 %v356
        %v5381 = vunpack.c.l.b16 %v357
        %v5382 = vunpack.c.l.b16 %v358
        %v5383 = vunpack.c.l.b16 %v359
        %v5384 = vunpack.c.l.b16 %v360
        %v5385 = vunpack.c.l.b16 %v361
        %v5386 = vunpack.c.l.b16 %v362
        %v5387 = vunpack.c.l.b16 %v363
        %v5388 = vunpack.c.l.b16 %v364
        %v5389 = vunpack.c.l.b16 %v365
        %v5390 = vunpack.c.l.b16 %v366
        %v5391 = vunpack.c.l.b16 %v367
        %v5392 = vunpack.c.l.b16 %v368
        %v5393 = vunpack.c.l.b16 %v369
        %v5394 = vunpack.c.l.b16 %v370
        %v5395 = vunpack.c.l.b16 %v371
        %v5396 = vunpack.c.l.b16 %v372
        %v5397 = vunpack.c.l.b16 %v373
        %v5398 = vunpack.c.l.b16 %v374
        %v5399 = vunpack.c.l.b16 %v375
        %v5400 = vunpack.c.l.b16 %v376
        %v5401 = vunpack.c.l.b16 %v377
        %v5402 = vunpack.c.l.b16 %v378
        %v5403 = vunpack.c.l.b16 %v379
        %v5404 = vunpack.c.l.b16 %v380
        %v5405 = vunpack.c.l.b16 %v381
        %v5406 = vunpack.c.l.b16 %v382
        %v5407 = vunpack.c.l.b16 %v383
        %v5408 = vunpack.c.l.b16 %v384
        %v5409 = vunpack.c.l.b16 %v385
        %v5410 = vunpack.c.l.b16 %v386
        %v5411 = vunpack.c.l.b16 %v387
        %v5412 = vunpack.c.l.b16 %v388
        %v5413 = vunpack.c.l.b16 %v389
        %v5414 = vunpack.c.l.b16 %v390
        %v5415 = vunpack.c.l.b16 %v391
        %v5416 = vunpack.c.l.b16 %v392
        %v5417 = vunpack.c.l.b16 %v393
        %v5418 = vunpack.c.l.b16 %v394
        %v5419 = vunpack.c.l.b16 %v395
        %v5420 = vunpack.c.l.b16 %v396
        %v5421 = vunpack.c.l.b16 %v397
        %v5422 = vunpack.c.l.b16 %v398
        %v5423 = vunpack.c.l.b16 %v399
        %v5424 = vunpack.c.l.b16 %v400
        %v5425 = vunpack.c.l.b16 %v401
        %v5426 = vunpack.c.l.b16 %v402
        %v5427 = vunpack.c.l.b16 %v403
        %v5428 = vunpack.c.l.b16 %v404
        %v5429 = vunpack.c.l.b16 %v405
        %v5430 = vunpack.c.l.b16 %v406
        %v5431 = vunpack.c.l.b16 %v407
        %v5432 = vunpack.c.l.b16 %v408
        %v5433 = vunpack.c.l.b16 %v409
        %v5434 = vunpack.c.l.b16 %v410
        %v5435 = vunpack.c.l.b16 %v411
        %v5436 = vunpack.c.l.b16 %v412
        %v5437 = vunpack.c.l.b16 %v413
        %v5438 = vunpack.c.l.b16 %v414
        %v5439 = vunpack.c.l.b16 %v415
        %v5440 = vunpack.c.l.b16 %v416
        %v5441 = vunpack.c.l.b16 %v417
        %v5442 = vunpack.c.l.b16 %v418
        %v5443 = vunpack.c.l.b16 %v419
        %v5444 = vunpack.c.l.b16 %v420
        %v5445 = vunpack.c.l.b16 %v421
        %v5446 = vunpack.c.l.b16 %v422
        %v5447 = vunpack.c.l.b16 %v423
        %v5448 = vunpack.c.l.b16 %v424
        %v5449 = vunpack.c.l.b16 %v425
        %v5450 = vunpack.c.l.b16 %v426
        %v5451 = vunpack.c.l.b16 %v427
        %v5452 = vunpack.c.l.b16 %v428
        %v5453 = vunpack.c.l.b16 %v429
        %v5454 = vunpack.c.l.b16 %v430
        %v5455 = vunpack.c.l.b16 %v431
        %v5456 = vunpack.c.l.b16 %v432
        %v5457 = vunpack.c.l.b16 %v433
        %v5458 = vunpack.c.l.b16 %v434
        %v5459 = vunpack.c.l.b16 %v435
        %v5460 = vunpack.c.l.b16 %v436
        %v5461 = vunpack.c.l.b16 %v437
        %v5462 = vunpack.c.l.b16 %v438
        %v5463 = vunpack.c.l.b16 %v439
        %v5464 = vunpack.c.l.b16 %v440
        %v5465 = vunpack.c.l.b16 %v441
        %v5466 = vunpack.c.l.b16 %v442
        %v5467 = vunpack.c.l.b16 %v443
        %v5468 = vunpack.c.l.b16 %v444
        %v5469 = vunpack.c.l.b16 %v445
        %v5470 = vunpack.c.l.b16 %v446
        %v5471 = vunpack.c.l.b16 %v447
        %v5472 = vunpack.c.l.b16 %v448
        %v5473 = vunpack.c.l.b16 %v449
        %v5474 = vunpack.c.l.b16 %v450
        %v5475 = vunpack.c.l.b16 %v451
        %v5476 = vunpack.c.l.b16 %v452
        %v5477 = vunpack.c.l.b16 %v453
        %v5478 = vunpack.c.l.b16 %v454
        %v5479 = vunpack.c.l.b16 %v455
        %v5480 = vunpack.c.l.b16 %v456
        %v5481 = vunpack.c.l.b16 %v457
        %v5482 = vunpack.c.l.b16 %v458
        %v5483 = vunpack.c.l.b16 %v459
        %v5484 = vunpack.c.l.b16 %v460
        %v5485 = vunpack.c.l.b16 %v461
        %v5486 = vunpack.c.l.b16 %v462
        %v5487 = vunpack.c.l.b16 %v463
        %v5488 = vunpack.c.l.b16 %v464
        %v5489 = vunpack.c.l.b16 %v465
        %v5490 = vunpack.c.l.b16 %v466
        %v5491 = vunpack.c.l.b16 %v467
        %v5492 = vunpack.c.l.b16 %v468
        %v5493 = vunpack.c.l.b16 %v469
        %v5494 = vunpack.c.l.b16 %v470
        %v5495 = vunpack.c.l.b16 %v471
        %v5496 = vunpack.c.l.b16 %v472
        %v5497 = vunpack.c.l.b16 %v473
        %v5498 = vunpack.c.l.b16 %v474
        %v5499 = vunpack.c.l.b16 %v475
        %v5500 = vunpack.c.l.b16 %v476
        %v5501 = vunpack.c.l.b16 %v477
        %v5502 = vunpack.c.l.b16 %v478
        %v5503 = vunpack.c.l.b16 %v479
        %v5504 = vunpack.c.l.b16 %v480
        %v5505 = vunpack.c.l.b16 %v481
        %v5506 = vunpack.c.l.b16 %v482
        %v5507 = vunpack.c.l.b16 %v483
        %v5508 = vunpack.c.l.b16 %v484
        %v5509 = vunpack.c.l.b16 %v485
        %v5510 = vunpack.c.l.b16 %v486
        %v5511 = vunpack.c.l.b16 %v487
        %v5512 = vunpack.c.l.b16 %v488
        %v5513 = vunpack.c.l.b16 %v489
        %v5514 = vunpack.c.l.b16 %v490
        %v5515 = vunpack.c.l.b16 %v491
        %v5516 = vunpack.c.l.b16 %v492
        %v5517 = vunpack.c.l.b16 %v493
        %v5518 = vunpack.c.l.b16 %v494
        %v5519 = vunpack.c.l.b16 %v495
        %v5520 = vunpack.c.l.b16 %v496
        %v5521 = vunpack.c.l.b16 %v497
        %v5522 = vunpack.c.l.b16 %v498
        %v5523 = vunpack.c.l.b16 %v499
        %v5524 = vunpack.c.l.b16 %v500
        %v5525 = vunpack.c.l.b16 %v501
        %v5526 = vunpack.c.l.b16 %v502
        %v5527 = vunpack.c.l.b16 %v503
        %v5528 = vunpack.c.l.b16 %v504
        %v5529 = vunpack.c.l.b16 %v505
        %v5530 = vunpack.c.l.b16 %v506
        %v5531 = vunpack.c.l.b16 %v507
        %v5532 = vunpack.c.l.b16 %v508
        %v5533 = vunpack.c.l.b16 %v509
        %v5534 = vunpack.c.l.b16 %v510
        %v5535 = vunpack.c.l.b16 %v511
        %v5536 = vunpack.c.l.b16 %v512
        %v5537 = vunpack.c.l.b16 %v513
        %v5538 = vunpack.c.l.b16 %v514
        %v5539 = vunpack.c.l.b16 %v515
        %v5540 = vunpack.c.l.b16 %v516
        %v5541 = vunpack.c.l.b16 %v517
        %v5542 = vunpack.c.l.b16 %v518
        %v5543 = vunpack.c.l.b16 %v519
        %v5544 = vunpack.c.l.b16 %v520
        %v5545 = vunpack.c.l.b16 %v521
        %v5546 = vunpack.c.l.b16 %v522
        %v5547 = vunpack.c.l.b16 %v523
        %v5548 = vunpack.c.l.b16 %v524
        %v5549 = vunpack.c.l.b16 %v525
        %v5550 = vunpack.c.l.b16 %v526
        %v5551 = vunpack.c.l.b16 %v527
        %v5552 = vunpack.c.l.b16 %v528
        %v5553 = vunpack.c.l.b16 %v529
        %v5554 = vunpack.c.l.b16 %v530
        %v5555 = vunpack.c.l.b16 %v531
        %v5556 = vunpack.c.l.b16 %v532
        %v5557 = vunpack.c.l.b16 %v533
        %v5558 = vunpack.c.l.b16 %v534
        %v5559 = vunpack.c.l.b16 %v535
        %v5560 = vunpack.c.l.b16 %v536
        %v5561 = vunpack.c.l.b16 %v537
        %v5562 = vunpack.c.l.b16 %v538
        %v5563 = vunpack.c.l.b16 %v539
        %v5564 = vunpack.c.l.b16 %v540
        %v5565 = vunpack.c.l.b16 %v541
        %v5566 = vunpack.c.l.b16 %v542
        %v5567 = vunpack.c.l.b16 %v543
        %v5568 = vunpack.c.l.b16 %v544
        %v5569 = vunpack.c.l.b16 %v545
        %v5570 = vunpack.c.l.b16 %v546
        %v5571 = vunpack.c.l.b16 %v547
        %v5572 = vunpack.c.l.b16 %v548
        %v5573 = vunpack.c.l.b16 %v549
        %v5574 = vunpack.c.l.b16 %v550
        %v5575 = vunpack.c.l.b16 %v551
        %v5576 = vunpack.c.l.b16 %v552
        %v5577 = vunpack.c.l.b16 %v553
        %v5578 = vunpack.c.l.b16 %v554
        %v5579 = vunpack.c.l.b16 %v555
        %v5580 = vunpack.c.l.b16 %v556
        %v5581 = vunpack.c.l.b16 %v557
        %v5582 = vunpack.c.l.b16 %v558
        %v5583 = vunpack.c.l.b16 %v559
        %v5584 = vunpack.c.l.b16 %v560
        %v5585 = vunpack.c.l.b16 %v561
        %v5586 = vunpack.c.l.b16 %v562
        %v5587 = vunpack.c.l.b16 %v563
        %v5588 = vunpack.c.l.b16 %v564
        %v5589 = vunpack.c.l.b16 %v565
        %v5590 = vunpack.c.l.b16 %v566
        %v5591 = vunpack.c.l.b16 %v567
        %v5592 = vunpack.c.l.b16 %v568
        %v5593 = vunpack.c.l.b16 %v569
        %v5594 = vunpack.c.l.b16 %v570
        %v5595 = vunpack.c.l.b16 %v571
        %v5596 = vunpack.c.l.b16 %v572
        %v5597 = vunpack.c.l.b16 %v573
        %v5598 = vunpack.c.l.b16 %v574
        %v5599 = vunpack.c.l.b16 %v575
        %v5600 = vunpack.c.l.b16 %v576
        %v5601 = vunpack.c.l.b16 %v577
        %v5602 = vunpack.c.l.b16 %v578
        %v5603 = vunpack.c.l.b16 %v579
        %v5604 = vunpack.c.l.b16 %v580
        %v5605 = vunpack.c.l.b16 %v581
        %v5606 = vunpack.c.l.b16 %v582
        %v5607 = vunpack.c.l.b16 %v583
        %v5608 = vunpack.c.l.b16 %v584
        %v5609 = vunpack.c.l.b16 %v585
        %v5610 = vunpack.c.l.b16 %v586
        %v5611 = vunpack.c.l.b16 %v587
        %v5612 = vunpack.c.l.b16 %v588
        %v5613 = vunpack.c.l.b16 %v589
        %v5614 = vunpack.c.l.b16 %v590
        %v5615 = vunpack.c.l.b16 %v591
        %v5616 = vunpack.c.l.b16 %v592
        %v5617 = vunpack.c.l.b16 %v593
        %v5618 = vunpack.c.l.b16 %v594
        %v5619 = vunpack.c.l.b16 %v595
        %v5620 = vunpack.c.l.b16 %v596
        %v5621 = vunpack.c.l.b16 %v597
        %v5622 = vunpack.c.l.b16 %v598
        %v5623 = vunpack.c.l.b16 %v599
        %v5624 = vunpack.c.l.b16 %v600
        %v5625 = vunpack.c.l.b16 %v601
        %v5626 = vunpack.c.l.b16 %v602
        %v5627 = vunpack.c.l.b16 %v603
        %v5628 = vunpack.c.l.b16 %v604
        %v5629 = vunpack.c.l.b16 %v605
        %v5630 = vunpack.c.l.b16 %v606
        %v5631 = vunpack.c.l.b16 %v607
        %v5632 = vunpack.c.l.b16 %v608
        %v5633 = vunpack.c.l.b16 %v609
        %v5634 = vunpack.c.l.b16 %v610
        %v5635 = vunpack.c.l.b16 %v611
        %v5636 = vunpack.c.l.b16 %v612
        %v5637 = vunpack.c.l.b16 %v613
        %v5638 = vunpack.c.l.b16 %v614
        %v5639 = vunpack.c.l.b16 %v615
        %v5640 = vunpack.c.l.b16 %v616
        %v5641 = vunpack.c.l.b16 %v617
        %v5642 = vunpack.c.l.b16 %v618
        %v5643 = vunpack.c.l.b16 %v619
        %v5644 = vunpack.c.l.b16 %v620
        %v5645 = vunpack.c.l.b16 %v621
        %v5646 = vunpack.c.l.b16 %v622
        %v5647 = vunpack.c.l.b16 %v623
        %v5648 = vunpack.c.l.b16 %v624
        %v5649 = vunpack.c.l.b16 %v625
        %v5650 = vunpack.c.l.b16 %v626
        %v5651 = vunpack.c.l.b16 %v627
        %v5652 = vunpack.c.l.b16 %v628
        %v5653 = vunpack.c.l.b16 %v629
        %v5654 = vunpack.c.l.b16 %v630
        %v5655 = vunpack.c.l.b16 %v631
        %v5656 = vunpack.c.l.b16 %v632
        %v5657 = vunpack.c.l.b16 %v633
        %v5658 = vunpack.c.l.b16 %v634
        %v5659 = vunpack.c.l.b16 %v635
        %v5660 = vunpack.c.l.b16 %v636
        %v5661 = vunpack.c.l.b16 %v637
        %v5662 = vunpack.c.l.b16 %v638
        %v5663 = vunpack.c.l.b16 %v639
        %v5664 = vunpack.c.l.b16 %v640
        %v5665 = vunpack.c.l.b16 %v641
        %v5666 = vunpack.c.l.b16 %v642
        %v5667 = vunpack.c.l.b16 %v643
        %v5668 = vunpack.c.l.b16 %v644
        %v5669 = vunpack.c.l.b16 %v645
        %v5670 = vunpack.c.l.b16 %v646
        %v5671 = vunpack.c.l.b16 %v647
        %v5672 = vunpack.c.l.b16 %v648
        %v5673 = vunpack.c.l.b16 %v649
        %v5674 = vunpack.c.l.b16 %v650
        %v5675 = vunpack.c.l.b16 %v651
        %v5676 = vunpack.c.l.b16 %v652
        %v5677 = vunpack.c.l.b16 %v653
        %v5678 = vunpack.c.l.b16 %v654
        %v5679 = vunpack.c.l.b16 %v655
        %v5680 = vunpack.c.l.b16 %v656
        %v5681 = vunpack.c.l.b16 %v657
        %v5682 = vunpack.c.l.b16 %v658
        %v5683 = vunpack.c.l.b16 %v659
        %v5684 = vunpack.c.l.b16 %v660
        %v5685 = vunpack.c.l.b16 %v661
        %v5686 = vunpack.c.l.b16 %v662
        %v5687 = vunpack.c.l.b16 %v663
        %v5688 = vunpack.c.l.b16 %v664
        %v5689 = vunpack.c.l.b16 %v665
        %v5690 = vunpack.c.l.b16 %v666
        %v5691 = vunpack.c.l.b16 %v667
        %v5692 = vunpack.c.l.b16 %v668
        %v5693 = vunpack.c.l.b16 %v669
        %v5694 = vunpack.c.l.b16 %v670
        %v5695 = vunpack.c.l.b16 %v671
        %v5696 = vunpack.c.l.b16 %v672
        %v5697 = vunpack.c.l.b16 %v673
        %v5698 = vunpack.c.l.b16 %v674
        %v5699 = vunpack.c.l.b16 %v675
        %v5700 = vunpack.c.l.b16 %v676
        %v5701 = vunpack.c.l.b16 %v677
        %v5702 = vunpack.c.l.b16 %v678
        %v5703 = vunpack.c.l.b16 %v679
        %v5704 = vunpack.c.l.b16 %v680
        %v5705 = vunpack.c.l.b16 %v681
        %v5706 = vunpack.c.l.b16 %v682
        %v5707 = vunpack.c.l.b16 %v683
        %v5708 = vunpack.c.l.b16 %v684
        %v5709 = vunpack.c.l.b16 %v685
        %v5710 = vunpack.c.l.b16 %v686
        %v5711 = vunpack.c.l.b16 %v687
        %v5712 = vunpack.c.l.b16 %v688
        %v5713 = vunpack.c.l.b16 %v689
        %v5714 = vunpack.c.l.b16 %v690
        %v5715 = vunpack.c.l.b16 %v691
        %v5716 = vunpack.c.l.b16 %v692
        %v5717 = vunpack.c.l.b16 %v693
        %v5718 = vunpack.c.l.b16 %v694
        %v5719 = vunpack.c.l.b16 %v695
        %v5720 = vunpack.c.l.b16 %v696
        %v5721 = vunpack.c.l.b16 %v697
        %v5722 = vunpack.c.l.b16 %v698
        %v5723 = vunpack.c.l.b16 %v699
        %v5724 = vunpack.c.l.b16 %v700
        %v5725 = vunpack.c.l.b16 %v701
        %v5726 = vunpack.c.l.b16 %v702
        %v5727 = vunpack.c.l.b16 %v703
        %v5728 = vunpack.c.l.b16 %v704
        %v5729 = vunpack.c.l.b16 %v705
        %v5730 = vunpack.c.l.b16 %v706
        %v5731 = vunpack.c.l.b16 %v707
        %v5732 = vunpack.c.l.b16 %v708
        %v5733 = vunpack.c.l.b16 %v709
        %v5734 = vunpack.c.l.b16 %v710
        %v5735 = vunpack.c.l.b16 %v711
        %v5736 = vunpack.c.l.b16 %v712
        %v5737 = vunpack.c.l.b16 %v713
        %v5738 = vunpack.c.l.b16 %v714
        %v5739 = vunpack.c.l.b16 %v715
        %v5740 = vunpack.c.l.b16 %v716
        %v5741 = vunpack.c.l.b16 %v717
        %v5742 = vunpack.c.l.b16 %v718
        %v5743 = vunpack.c.l.b16 %v719
        %v5744 = vunpack.c.l.b16 %v720
        %v5745 = vunpack.c.l.b16 %v721
        %v5746 = vunpack.c.l.b16 %v722
        %v5747 = vunpack.c.l.b16 %v723
        %v5748 = vunpack.c.l.b16 %v724
        %v5749 = vunpack.c.l.b16 %v725
        %v5750 = vunpack.c.l.b16 %v726
        %v5751 = vunpack.c.l.b16 %v727
        %v5752 = vunpack.c.l.b16 %v728
        %v5753 = vunpack.c.l.b16 %v729
        %v5754 = vunpack.c.l.b16 %v730
        %v5755 = vunpack.c.l.b16 %v731
        %v5756 = vunpack.c.l.b16 %v732
        %v5757 = vunpack.c.l.b16 %v733
        %v5758 = vunpack.c.l.b16 %v734
        %v5759 = vunpack.c.l.b16 %v735
        %v5760 = vunpack.c.l.b16 %v736
        %v5761 = vunpack.c.l.b16 %v737
        %v5762 = vunpack.c.l.b16 %v738
        %v5763 = vunpack.c.l.b16 %v739
        %v5764 = vunpack.c.l.b16 %v740
        %v5765 = vunpack.c.l.b16 %v741
        %v5766 = vunpack.c.l.b16 %v742
        %v5767 = vunpack.c.l.b16 %v743
        %v5768 = vunpack.c.l.b16 %v744
        %v5769 = vunpack.c.l.b16 %v745
        %v5770 = vunpack.c.l.b16 %v746
        %v5771 = vunpack.c.l.b16 %v747
        %v5772 = vunpack.c.l.b16 %v748
        %v5773 = vunpack.c.l.b16 %v749
        %v5774 = vunpack.c.l.b16 %v750
        %v5775 = vunpack.c.l.b16 %v751
        %v5776 = vunpack.c.l.b16 %v752
        %v5777 = vunpack.c.l.b16 %v753
        %v5778 = vunpack.c.l.b16 %v754
        %v5779 = vunpack.c.l.b16 %v755
        %v5780 = vunpack.c.l.b16 %v756
        %v5781 = vunpack.c.l.b16 %v757
        %v5782 = vunpack.c.l.b16 %v758
        %v5783 = vunpack.c.l.b16 %v759
        %v5784 = vunpack.c.l.b16 %v760
        %v5785 = vunpack.c.l.b16 %v761
        %v5786 = vunpack.c.l.b16 %v762
        %v5787 = vunpack.c.l.b16 %v763
        %v5788 = vunpack.c.l.b16 %v764
        %v5789 = vunpack.c.l.b16 %v765
        %v5790 = vunpack.c.l.b16 %v766
        %v5791 = vunpack.c.l.b16 %v767
        %v5792 = vunpack.c.l.b16 %v768
        %v5793 = vunpack.c.l.b16 %v769
        %v5794 = vunpack.c.l.b16 %v770
        %v5795 = vunpack.c.l.b16 %v771
        %v5796 = vunpack.c.l.b16 %v772
        %v5797 = vunpack.c.l.b16 %v773
        %v5798 = vunpack.c.l.b16 %v774
        %v5799 = vunpack.c.l.b16 %v775
        %v5800 = vunpack.c.l.b16 %v776
        %v5801 = vunpack.c.l.b16 %v777
        %v5802 = vunpack.c.l.b16 %v778
        %v5803 = vunpack.c.l.b16 %v779
        %v5804 = vunpack.c.l.b16 %v780
        %v5805 = vunpack.c.l.b16 %v781
        %v5806 = vunpack.c.l.b16 %v782
        %v5807 = vunpack.c.l.b16 %v783
        %v5808 = vunpack.c.l.b16 %v784
        %v5809 = vunpack.c.l.b16 %v785
        %v5810 = vunpack.c.l.b16 %v786
        %v5811 = vunpack.c.l.b16 %v787
        %v5812 = vunpack.c.l.b16 %v788
        %v5813 = vunpack.c.l.b16 %v789
        %v5814 = vunpack.c.l.b16 %v790
        %v5815 = vunpack.c.l.b16 %v791
        %v5816 = vunpack.c.l.b16 %v792
        %v5817 = vunpack.c.l.b16 %v793
        %v5818 = vunpack.c.l.b16 %v794
        %v5819 = vunpack.c.l.b16 %v795
        %v5820 = vunpack.c.l.b16 %v796
        %v5821 = vunpack.c.l.b16 %v797
        %v5822 = vunpack.c.l.b16 %v798
        %v5823 = vunpack.c.l.b16 %v799
        %v5824 = vunpack.c.l.b16 %v800
        %v5825 = vunpack.c.l.b16 %v801
        %v5826 = vunpack.c.l.b16 %v802
        %v5827 = vunpack.c.l.b16 %v803
        %v5828 = vunpack.c.l.b16 %v804
        %v5829 = vunpack.c.l.b16 %v805
        %v5830 = vunpack.c.l.b16 %v806
        %v5831 = vunpack.c.l.b16 %v807
        %v5832 = vunpack.c.l.b16 %v808
        %v5833 = vunpack.c.l.b16 %v809
        %v5834 = vunpack.c.l.b16 %v810
        %v5835 = vunpack.c.l.b16 %v811
        %v5836 = vunpack.c.l.b16 %v812
        %v5837 = vunpack.c.l.b16 %v813
        %v5838 = vunpack.c.l.b16 %v814
        %v5839 = vunpack.c.l.b16 %v815
        %v5840 = vunpack.c.l.b16 %v816
        %v5841 = vunpack.c.l.b16 %v817
        %v5842 = vunpack.c.l.b16 %v818
        %v5843 = vunpack.c.l.b16 %v819
        %v5844 = vunpack.c.l.b16 %v820
        %v5845 = vunpack.c.l.b16 %v821
        %v5846 = vunpack.c.l.b16 %v822
        %v5847 = vunpack.c.l.b16 %v823
        %v5848 = vunpack.c.l.b16 %v824
        %v5849 = vunpack.c.l.b16 %v825
        %v5850 = vunpack.c.l.b16 %v826
        %v5851 = vunpack.c.l.b16 %v827
        %v5852 = vunpack.c.l.b16 %v828
        %v5853 = vunpack.c.l.b16 %v829
        %v5854 = vunpack.c.l.b16 %v830
        %v5855 = vunpack.c.l.b16 %v831
        %v5856 = vunpack.c.l.b16 %v832
        %v5857 = vunpack.c.l.b16 %v833
        %v5858 = vunpack.c.l.b16 %v834
        %v5859 = vunpack.c.l.b16 %v835
        %v5860 = vunpack.c.l.b16 %v836
        %v5861 = vunpack.c.l.b16 %v837
        %v5862 = vunpack.c.l.b16 %v838
        %v5863 = vunpack.c.l.b16 %v839
        %v5864 = vunpack.c.l.b16 %v840
        %v5865 = vunpack.c.l.b16 %v841
        %v5866 = vunpack.c.l.b16 %v842
        %v5867 = vunpack.c.l.b16 %v843
        %v5868 = vunpack.c.l.b16 %v844
        %v5869 = vunpack.c.l.b16 %v845
        %v5870 = vunpack.c.l.b16 %v846
        %v5871 = vunpack.c.l.b16 %v847
        %v5872 = vunpack.c.l.b16 %v848
        %v5873 = vunpack.c.l.b16 %v849
        %v5874 = vunpack.c.l.b16 %v850
        %v5875 = vunpack.c.l.b16 %v851
        %v5876 = vunpack.c.l.b16 %v852
        %v5877 = vunpack.c.l.b16 %v853
        %v5878 = vunpack.c.l.b16 %v854
        %v5879 = vunpack.c.l.b16 %v855
        %v5880 = vunpack.c.l.b16 %v856
        %v5881 = vunpack.c.l.b16 %v857
        %v5882 = vunpack.c.l.b16 %v858
        %v5883 = vunpack.c.l.b16 %v859
        %v5884 = vunpack.c.l.b16 %v860
        %v5885 = vunpack.c.l.b16 %v861
        %v5886 = vunpack.c.l.b16 %v862
        %v5887 = vunpack.c.l.b16 %v863
        %v5888 = vunpack.c.l.b16 %v864
        %v5889 = vunpack.c.l.b16 %v865
        %v5890 = vunpack.c.l.b16 %v866
        %v5891 = vunpack.c.l.b16 %v867
        %v5892 = vunpack.c.l.b16 %v868
        %v5893 = vunpack.c.l.b16 %v869
        %v5894 = vunpack.c.l.b16 %v870
        %v5895 = vunpack.c.l.b16 %v871
        %v5896 = vunpack.c.l.b16 %v872
        %v5897 = vunpack.c.l.b16 %v873
        %v5898 = vunpack.c.l.b16 %v874
        %v5899 = vunpack.c.l.b16 %v875
        %v5900 = vunpack.c.l.b16 %v876
        %v5901 = vunpack.c.l.b16 %v877
        %v5902 = vunpack.c.l.b16 %v878
        %v5903 = vunpack.c.l.b16 %v879
        %v5904 = vunpack.c.l.b16 %v880
        %v5905 = vunpack.c.l.b16 %v881
        %v5906 = vunpack.c.l.b16 %v882
        %v5907 = vunpack.c.l.b16 %v883
        %v5908 = vunpack.c.l.b16 %v884
        %v5909 = vunpack.c.l.b16 %v885
        %v5910 = vunpack.c.l.b16 %v886
        %v5911 = vunpack.c.l.b16 %v887
        %v5912 = vunpack.c.l.b16 %v888
        %v5913 = vunpack.c.l.b16 %v889
        %v5914 = vunpack.c.l.b16 %v890
        %v5915 = vunpack.c.l.b16 %v891
        %v5916 = vunpack.c.l.b16 %v892
        %v5917 = vunpack.c.l.b16 %v893
        %v5918 = vunpack.c.l.b16 %v894
        %v5919 = vunpack.c.l.b16 %v895
        %v5920 = vunpack.c.l.b16 %v896
        %v5921 = vunpack.c.l.b16 %v897
        %v5922 = vunpack.c.l.b16 %v898
        %v5923 = vunpack.c.l.b16 %v899
        %v5924 = vunpack.c.l.b16 %v900
        %v5925 = vunpack.c.l.b16 %v901
        %v5926 = vunpack.c.l.b16 %v902
        %v5927 = vunpack.c.l.b16 %v903
        %v5928 = vunpack.c.l.b16 %v904
        %v5929 = vunpack.c.l.b16 %v905
        %v5930 = vunpack.c.l.b16 %v906
        %v5931 = vunpack.c.l.b16 %v907
        %v5932 = vunpack.c.l.b16 %v908
        %v5933 = vunpack.c.l.b16 %v909
        %v5934 = vunpack.c.l.b16 %v910
        %v5935 = vunpack.c.l.b16 %v911
        %v5936 = vunpack.c.l.b16 %v912
        %v5937 = vunpack.c.l.b16 %v913
        %v5938 = vunpack.c.l.b16 %v914
        %v5939 = vunpack.c.l.b16 %v915
        %v5940 = vunpack.c.l.b16 %v916
        %v5941 = vunpack.c.l.b16 %v917
        %v5942 = vunpack.c.l.b16 %v918
        %v5943 = vunpack.c.l.b16 %v919
        %v5944 = vunpack.c.l.b16 %v920
        %v5945 = vunpack.c.l.b16 %v921
        %v5946 = vunpack.c.l.b16 %v922
        %v5947 = vunpack.c.l.b16 %v923
        %v5948 = vunpack.c.l.b16 %v924
        %v5949 = vunpack.c.l.b16 %v925
        %v5950 = vunpack.c.l.b16 %v926
        %v5951 = vunpack.c.l.b16 %v927
        %v5952 = vunpack.c.l.b16 %v928
        %v5953 = vunpack.c.l.b16 %v929
        %v5954 = vunpack.c.l.b16 %v930
        %v5955 = vunpack.c.l.b16 %v931
        %v5956 = vunpack.c.l.b16 %v932
        %v5957 = vunpack.c.l.b16 %v933
        %v5958 = vunpack.c.l.b16 %v934
        %v5959 = vunpack.c.l.b16 %v935
        %v5960 = vunpack.c.l.b16 %v936
        %v5961 = vunpack.c.l.b16 %v937
        %v5962 = vunpack.c.l.b16 %v938
        %v5963 = vunpack.c.l.b16 %v939
        %v5964 = vunpack.c.l.b16 %v940
        %v5965 = vunpack.c.l.b16 %v941
        %v5966 = vunpack.c.l.b16 %v942
        %v5967 = vunpack.c.l.b16 %v943
        %v5968 = vunpack.c.l.b16 %v944
        %v5969 = vunpack.c.l.b16 %v945
        %v5970 = vunpack.c.l.b16 %v946
        %v5971 = vunpack.c.l.b16 %v947
        %v5972 = vunpack.c.l.b16 %v948
        %v5973 = vunpack.c.l.b16 %v949
        %v5974 = vunpack.c.l.b16 %v950
        %v5975 = vunpack.c.l.b16 %v951
        %v5976 = vunpack.c.l.b16 %v952
        %v5977 = vunpack.c.l.b16 %v953
        %v5978 = vunpack.c.l.b16 %v954
        %v5979 = vunpack.c.l.b16 %v955
        %v5980 = vunpack.c.l.b16 %v956
        %v5981 = vunpack.c.l.b16 %v957
        %v5982 = vunpack.c.l.b16 %v958
        %v5983 = vunpack.c.l.b16 %v959
        %v5984 = vunpack.c.l.b16 %v960
        %v5985 = vunpack.c.l.b16 %v961
        %v5986 = vunpack.c.l.b16 %v962
        %v5987 = vunpack.c.l.b16 %v963
        %v5988 = vunpack.c.l.b16 %v964
        %v5989 = vunpack.c.l.b16 %v965
        %v5990 = vunpack.c.l.b16 %v966
        %v5991 = vunpack.c.l.b16 %v967
        %v5992 = vunpack.c.l.b16 %v968
        %v5993 = vunpack.c.l.b16 %v969
        %v5994 = vunpack.c.l.b16 %v970
        %v5995 = vunpack.c.l.b16 %v971
        %v5996 = vunpack.c.l.b16 %v972
        %v5997 = vunpack.c.l.b16 %v973
        %v5998 = vunpack.c.l.b16 %v974
        %v5999 = vunpack.c.l.b16 %v975
        %v6000 = vunpack.c.l.b16 %v976
        %v6001 = vunpack.c.l.b16 %v977
        %v6002 = vunpack.c.l.b16 %v978
        %v6003 = vunpack.c.l.b16 %v979
        %v6004 = vunpack.c.l.b16 %v980
        %v6005 = vunpack.c.l.b16 %v981
        %v6006 = vunpack.c.l.b16 %v982
        %v6007 = vunpack.c.l.b16 %v983
        %v6008 = vunpack.c.l.b16 %v984
        %v6009 = vunpack.c.l.b16 %v985
        %v6010 = vunpack.c.l.b16 %v986
        %v6011 = vunpack.c.l.b16 %v987
        %v6012 = vunpack.c.l.b16 %v988
        %v6013 = vunpack.c.l.b16 %v989
        %v6014 = vunpack.c.l.b16 %v990
        %v6015 = vunpack.c.l.b16 %v991
        %v6016 = vunpack.c.l.b16 %v992
        %v6017 = vunpack.c.l.b16 %v993
        %v6018 = vunpack.c.l.b16 %v994
        %v6019 = vunpack.c.l.b16 %v995
        %v6020 = vunpack.c.l.b16 %v996
        %v6021 = vunpack.c.l.b16 %v997
        %v6022 = vunpack.c.l.b16 %v998
        %v6023 = vunpack.c.l.b16 %v999
        %v6024 = vunpack.c.l.b16 %v1000
        %v6025 = vunpack.c.l.b16 %v1001
        %v6026 = vunpack.c.l.b16 %v1002
        %v6027 = vunpack.c.l.b16 %v1003
        %v6028 = vunpack.c.l.b16 %v1004
        %v6029 = vunpack.c.l.b16 %v1005
        %v6030 = vunpack.c.l.b16 %v1006
        %v6031 = vunpack.c.l.b16 %v1007
        %v6032 = vunpack.c.l.b16 %v1008
        %v6033 = vunpack.c.l.b16 %v1009
        %v6034 = vunpack.c.l.b16 %v1010
        %v6035 = vunpack.c.l.b16 %v1011
        %v6036 = vunpack.c.l.b16 %v1012
        %v6037 = vunpack.c.l.b16 %v1013
        %v6038 = vunpack.c.l.b16 %v1014
        %v6039 = vunpack.c.l.b16 %v1015
        %v6040 = vunpack.c.l.b16 %v1016
        %v6041 = vunpack.c.l.b16 %v1017
        %v6042 = vunpack.c.l.b16 %v1018
        %v6043 = vunpack.c.l.b16 %v1019
        %v6044 = vunpack.c.l.b16 %v1020
        %v6045 = vunpack.c.l.b16 %v1021
        %v6046 = vunpack.c.l.b16 %v1022
        %v6047 = vunpack.c.l.b16 %v1023
        %v6048 = vunpack.c.l.b16 %v1024
        %v6049 = vunpack.c.l.b16 %v1025
        %v6050 = vunpack.c.l.b16 %v1026
        %v6051 = vunpack.c.l.b16 %v1027
        %v6052 = vunpack.c.l.b16 %v1028
        %v6053 = vunpack.c.l.b16 %v1029
        %v6054 = vunpack.c.l.b16 %v1030
        %v6055 = vunpack.c.l.b16 %v1031
        %v6056 = vunpack.c.l.b16 %v1032
        %v6057 = vunpack.c.l.b16 %v1033
        %v6058 = vunpack.c.l.b16 %v1034
        %v6059 = vunpack.c.l.b16 %v1035
        %v6060 = vunpack.c.l.b16 %v1036
        %v6061 = vunpack.c.l.b16 %v1037
        %v6062 = vunpack.c.l.b16 %v1038
        %v6063 = vunpack.c.l.b16 %v1039
        %v6064 = vunpack.c.l.b16 %v1040
        %v6065 = vunpack.c.l.b16 %v1041
        %v6066 = vunpack.c.l.b16 %v1042
        %v6067 = vunpack.c.l.b16 %v1043
        %v6068 = vunpack.c.l.b16 %v1044
        %v6069 = vunpack.c.l.b16 %v1045
        %v6070 = vunpack.c.l.b16 %v1046
        %v6071 = vunpack.c.l.b16 %v1047
        %v6072 = vunpack.c.l.b16 %v1048
        %v6073 = vunpack.c.l.b16 %v1049
        %v6074 = vunpack.c.l.b16 %v1050
        %v6075 = vunpack.c.l.b16 %v1051
        %v6076 = vunpack.c.l.b16 %v1052
        %v6077 = vunpack.c.l.b16 %v1053
        %v6078 = vunpack.c.l.b16 %v1054
        %v6079 = vunpack.c.l.b16 %v1055
        %v6080 = vunpack.c.l.b16 %v1056
        %v6081 = vunpack.c.l.b16 %v1057
        %v6082 = vunpack.c.l.b16 %v1058
        %v6083 = vunpack.c.l.b16 %v1059
        %v6084 = vunpack.c.l.b16 %v1060
        %v6085 = vunpack.c.l.b16 %v1061
        %v6086 = vunpack.c.l.b16 %v1062
        %v6087 = vunpack.c.l.b16 %v1063
        %v6088 = vunpack.c.l.b16 %v1064
        %v6089 = vunpack.c.l.b16 %v1065
        %v6090 = vunpack.c.l.b16 %v1066
        %v6091 = vunpack.c.l.b16 %v1067
        %v6092 = vunpack.c.l.b16 %v1068
        %v6093 = vunpack.c.l.b16 %v1069
        %v6094 = vunpack.c.l.b16 %v1070
        %v6095 = vunpack.c.l.b16 %v1071
        %v6096 = vunpack.c.l.b16 %v1072
        %v6097 = vunpack.c.l.b16 %v1073
        %v6098 = vunpack.c.l.b16 %v1074
        %v6099 = vunpack.c.l.b16 %v1075
        %v6100 = vunpack.c.l.b16 %v1076
        %v6101 = vunpack.c.l.b16 %v1077
        %v6102 = vunpack.c.l.b16 %v1078
        %v6103 = vunpack.c.l.b16 %v1079
        %v6104 = vunpack.c.l.b16 %v1080
        %v6105 = vunpack.c.l.b16 %v1081
        %v6106 = vunpack.c.l.b16 %v1082
        %v6107 = vunpack.c.l.b16 %v1083
        %v6108 = vunpack.c.l.b16 %v1084
        %v6109 = vunpack.c.l.b16 %v1085
        %v6110 = vunpack.c.l.b16 %v1086
        %v6111 = vunpack.c.l.b16 %v1087
        %v6112 = vunpack.c.l.b16 %v1088
        %v6113 = vunpack.c.l.b16 %v1089
        %v6114 = vunpack.c.l.b16 %v1090
        %v6115 = vunpack.c.l.b16 %v1091
        %v6116 = vunpack.c.l.b16 %v1092
        %v6117 = vunpack.c.l.b16 %v1093
        %v6118 = vunpack.c.l.b16 %v1094
        %v6119 = vunpack.c.l.b16 %v1095
        %v6120 = vunpack.c.l.b16 %v1096
        %v6121 = vunpack.c.l.b16 %v1097
        %v6122 = vunpack.c.l.b16 %v1098
        %v6123 = vunpack.c.l.b16 %v1099
        %v6124 = vunpack.c.l.b16 %v1100
        %v6125 = vunpack.c.l.b16 %v1101
        %v6126 = vunpack.c.l.b16 %v1102
        %v6127 = vunpack.c.l.b16 %v1103
        %v6128 = vunpack.c.l.b16 %v1104
        %v6129 = vunpack.c.l.b16 %v1105
        %v6130 = vunpack.c.l.b16 %v1106
        %v6131 = vunpack.c.l.b16 %v1107
        %v6132 = vunpack.c.l.b16 %v1108
        %v6133 = vunpack.c.l.b16 %v1109
        %v6134 = vunpack.c.l.b16 %v1110
        %v6135 = vunpack.c.l.b16 %v1111
        %v6136 = vunpack.c.l.b16 %v1112
        %v6137 = vunpack.c.l.b16 %v1113
        %v6138 = vunpack.c.l.b16 %v1114
        %v6139 = vunpack.c.l.b16 %v1115
        %v6140 = vunpack.c.l.b16 %v1116
        %v6141 = vunpack.c.l.b16 %v1117
        %v6142 = vunpack.c.l.b16 %v1118
        %v6143 = vunpack.c.l.b16 %v1119
        %v6144 = vunpack.c.l.b16 %v1120
        %v6145 = vunpack.c.l.b16 %v1121
        %v6146 = vunpack.c.l.b16 %v1122
        %v6147 = vunpack.c.l.b16 %v1123
        %v6148 = vunpack.c.l.b16 %v1124
        %v6149 = vunpack.c.l.b16 %v1125
        %v6150 = vunpack.c.l.b16 %v1126
        %v6151 = vunpack.c.l.b16 %v1127
        %v6152 = vunpack.c.l.b16 %v1128
        %v6153 = vunpack.c.l.b16 %v1129
        %v6154 = vunpack.c.l.b16 %v1130
        %v6155 = vunpack.c.l.b16 %v1131
        %v6156 = vunpack.c.l.b16 %v1132
        %v6157 = vunpack.c.l.b16 %v1133
        %v6158 = vunpack.c.l.b16 %v1134
        %v6159 = vunpack.c.l.b16 %v1135
        %v6160 = vunpack.c.l.b16 %v1136
        %v6161 = vunpack.c.l.b16 %v1137
        %v6162 = vunpack.c.l.b16 %v1138
        %v6163 = vunpack.c.l.b16 %v1139
        %v6164 = vunpack.c.l.b16 %v1140
        %v6165 = vunpack.c.l.b16 %v1141
        %v6166 = vunpack.c.l.b16 %v1142
        %v6167 = vunpack.c.l.b16 %v1143
        %v6168 = vunpack.c.l.b16 %v1144
        %v6169 = vunpack.c.l.b16 %v1145
        %v6170 = vunpack.c.l.b16 %v1146
        %v6171 = vunpack.c.l.b16 %v1147
        %v6172 = vunpack.c.l.b16 %v1148
        %v6173 = vunpack.c.l.b16 %v1149
        %v6174 = vunpack.c.l.b16 %v1150
        %v6175 = vunpack.c.l.b16 %v1151
        %v6176 = vunpack.c.l.b16 %v1152
        %v6177 = vunpack.c.l.b16 %v1153
        %v6178 = vunpack.c.l.b16 %v1154
        %v6179 = vunpack.c.l.b16 %v1155
        %v6180 = vunpack.c.l.b16 %v1156
        %v6181 = vunpack.c.l.b16 %v1157
        %v6182 = vunpack.c.l.b16 %v1158
        %v6183 = vunpack.c.l.b16 %v1159
        %v6184 = vunpack.c.l.b16 %v1160
        %v6185 = vunpack.c.l.b16 %v1161
        %v6186 = vunpack.c.l.b16 %v1162
        %v6187 = vunpack.c.l.b16 %v1163
        %v6188 = vunpack.c.l.b16 %v1164
        %v6189 = vunpack.c.l.b16 %v1165
        %v6190 = vunpack.c.l.b16 %v1166
        %v6191 = vunpack.c.l.b16 %v1167
        %v6192 = vunpack.c.l.b16 %v1168
        %v6193 = vunpack.c.l.b16 %v1169
        %v6194 = vunpack.c.l.b16 %v1170
        %v6195 = vunpack.c.l.b16 %v1171
        %v6196 = vunpack.c.l.b16 %v1172
        %v6197 = vunpack.c.l.b16 %v1173
        %v6198 = vunpack.c.l.b16 %v1174
        %v6199 = vunpack.c.l.b16 %v1175
        %v6200 = vunpack.c.l.b16 %v1176
        %v6201 = vunpack.c.l.b16 %v1177
        %v6202 = vunpack.c.l.b16 %v1178
        %v6203 = vunpack.c.l.b16 %v1179
        %v6204 = vunpack.c.l.b16 %v1180
        %v6205 = vunpack.c.l.b16 %v1181
        %v6206 = vunpack.c.l.b16 %v1182
        %v6207 = vunpack.c.l.b16 %v1183
        %v6208 = vunpack.c.l.b16 %v1184
        %v6209 = vunpack.c.l.b16 %v1185
        %v6210 = vunpack.c.l.b16 %v1186
        %v6211 = vunpack.c.l.b16 %v1187
        %v6212 = vunpack.c.l.b16 %v1188
        %v6213 = vunpack.c.l.b16 %v1189
        %v6214 = vunpack.c.l.b16 %v1190
        %v6215 = vunpack.c.l.b16 %v1191
        %v6216 = vunpack.c.l.b16 %v1192
        %v6217 = vunpack.c.l.b16 %v1193
        %v6218 = vunpack.c.l.b16 %v1194
        %v6219 = vunpack.c.l.b16 %v1195
        %v6220 = vunpack.c.l.b16 %v1196
        %v6221 = vunpack.c.l.b16 %v1197
        %v6222 = vunpack.c.l.b16 %v1198
        %v6223 = vunpack.c.l.b16 %v1199
        %v6224 = vunpack.c.l.b16 %v1200
        %v6225 = vunpack.c.l.b16 %v1201
        %v6226 = vunpack.c.l.b16 %v1202
        %v6227 = vunpack.c.l.b16 %v1203
        %v6228 = vunpack.c.l.b16 %v1204
        %v6229 = vunpack.c.l.b16 %v1205
        %v6230 = vunpack.c.l.b16 %v1206
        %v6231 = vunpack.c.l.b16 %v1207
        %v6232 = vunpack.c.l.b16 %v1208
        %v6233 = vunpack.c.l.b16 %v1209
        %v6234 = vunpack.c.l.b16 %v1210
        %v6235 = vunpack.c.l.b16 %v1211
        %v6236 = vunpack.c.l.b16 %v1212
        %v6237 = vunpack.c.l.b16 %v1213
        %v6238 = vunpack.c.l.b16 %v1214
        %v6239 = vunpack.c.l.b16 %v1215
        %v6240 = vunpack.c.l.b16 %v1216
        %v6241 = vunpack.c.l.b16 %v1217
        %v6242 = vunpack.c.l.b16 %v1218
        %v6243 = vunpack.c.l.b16 %v1219
        %v6244 = vunpack.c.l.b16 %v1220
        %v6245 = vunpack.c.l.b16 %v1221
        %v6246 = vunpack.c.l.b16 %v1222
        %v6247 = vunpack.c.l.b16 %v1223
        %v6248 = vunpack.c.l.b16 %v1224
        %v6249 = vunpack.c.l.b16 %v1225
        %v6250 = vunpack.c.l.b16 %v1226
        %v6251 = vunpack.c.l.b16 %v1227
        %v6252 = vunpack.c.l.b16 %v1228
        %v6253 = vunpack.c.l.b16 %v1229
        %v6254 = vunpack.c.l.b16 %v1230
        %v6255 = vunpack.c.l.b16 %v1231
        %v6256 = vunpack.c.l.b16 %v1232
        %v6257 = vunpack.c.l.b16 %v1233
        %v6258 = vunpack.c.l.b16 %v1234
        %v6259 = vunpack.c.l.b16 %v1235
        %v6260 = vunpack.c.l.b16 %v1236
        %v6261 = vunpack.c.l.b16 %v1237
        %v6262 = vunpack.c.l.b16 %v1238
        %v6263 = vunpack.c.l.b16 %v1239
        %v6264 = vunpack.c.l.b16 %v1240
        %v6265 = vunpack.c.l.b16 %v1241
        %v6266 = vunpack.c.l.b16 %v1242
        %v6267 = vunpack.c.l.b16 %v1243
        %v6268 = vunpack.c.l.b16 %v1244
        %v6269 = vunpack.c.l.b16 %v1245
        %v6270 = vunpack.c.l.b16 %v1246
        %v6271 = vunpack.c.l.b16 %v1247
        %v6272 = vunpack.c.l.b16 %v1248
        %v6273 = vunpack.c.l.b16 %v1249
        %v6274 = vunpack.c.l.b16 %v1250
        %v6275 = vunpack.c.l.b16 %v1251
        %v6276 = vunpack.c.l.b16 %v1252
        %v6277 = vunpack.c.l.b16 %v1253
        %v6278 = vunpack.c.l.b16 %v1254
        %v6279 = vunpack.c.l.b16 %v1255
        %v6280 = vunpack.c.l.b16 %v1256
        %v6281 = vunpack.c.l.b16 %v1257
        %v6282 = vunpack.c.l.b16 %v1258
        %v6283 = vunpack.c.l.b16 %v1259
        %v6284 = vunpack.c.l.b16 %v1260
        %v6285 = vunpack.c.l.b16 %v1261
        %v6286 = vunpack.c.l.b16 %v1262
        %v6287 = vunpack.c.l.b16 %v1263
        %v6288 = vunpack.c.l.b16 %v1264
        %v6289 = vunpack.c.l.b16 %v1265
        %v6290 = vunpack.c.l.b16 %v1266
        %v6291 = vunpack.c.l.b16 %v1267
        %v6292 = vunpack.c.l.b16 %v1268
        %v6293 = vunpack.c.l.b16 %v1269
        %v6294 = vunpack.c.l.b16 %v1270
        %v6295 = vunpack.c.l.b16 %v1271
        %v6296 = vunpack.c.l.b16 %v1272
        %v6297 = vunpack.c.l.b16 %v1273
        %v6298 = vunpack.c.l.b16 %v1274
        %v6299 = vunpack.c.l.b16 %v1275
        %v6300 = vunpack.c.l.b16 %v1276
        %v6301 = vunpack.c.l.b16 %v1277
        %v6302 = vunpack.c.l.b16 %v1278
        %v6303 = vunpack.c.l.b16 %v1279
        %v6304 = vunpack.c.l.b16 %v1280
        %v6305 = vunpack.c.l.b16 %v1281
        %v6306 = vunpack.c.l.b16 %v1282
        %v6307 = vunpack.c.l.b16 %v1283
        %v6308 = vunpack.c.l.b16 %v1284
        %v6309 = vunpack.c.l.b16 %v1285
        %v6310 = vunpack.c.l.b16 %v1286
        %v6311 = vunpack.c.l.b16 %v1287
        %v6312 = vunpack.c.l.b16 %v1288
        %v6313 = vunpack.c.l.b16 %v1289
        %v6314 = vunpack.c.l.b16 %v1290
        %v6315 = vunpack.c.l.b16 %v1291
        %v6316 = vunpack.c.l.b16 %v1292
        %v6317 = vunpack.c.l.b16 %v1293
        %v6318 = vunpack.c.l.b16 %v1294
        %v6319 = vunpack.c.l.b16 %v1295
        %v6320 = vunpack.c.l.b16 %v1296
        %v6321 = vunpack.c.l.b16 %v1297
        %v6322 = vunpack.c.l.b16 %v1298
        %v6323 = vunpack.c.l.b16 %v1299
        %v6324 = vunpack.c.l.b16 %v1300
        %v6325 = vunpack.c.l.b16 %v1301
        %v6326 = vunpack.c.l.b16 %v1302
        %v6327 = vunpack.c.l.b16 %v1303
        %v6328 = vunpack.c.l.b16 %v1304
        %v6329 = vunpack.c.l.b16 %v1305
        %v6330 = vunpack.c.l.b16 %v1306
        %v6331 = vunpack.c.l.b16 %v1307
        %v6332 = vunpack.c.l.b16 %v1308
        %v6333 = vunpack.c.l.b16 %v1309
        %v6334 = vunpack.c.l.b16 %v1310
        %v6335 = vunpack.c.l.b16 %v1311
        %v6336 = vunpack.c.l.b16 %v1312
        %v6337 = vunpack.c.l.b16 %v1313
        %v6338 = vunpack.c.l.b16 %v1314
        %v6339 = vunpack.c.l.b16 %v1315
        %v6340 = vunpack.c.l.b16 %v1316
        %v6341 = vunpack.c.l.b16 %v1317
        %v6342 = vunpack.c.l.b16 %v1318
        %v6343 = vunpack.c.l.b16 %v1319
        %v6344 = vunpack.c.l.b16 %v1320
        %v6345 = vunpack.c.l.b16 %v1321
        %v6346 = vunpack.c.l.b16 %v1322
        %v6347 = vunpack.c.l.b16 %v1323
        %v6348 = vunpack.c.l.b16 %v1324
        %v6349 = vunpack.c.l.b16 %v1325
        %v6350 = vunpack.c.l.b16 %v1326
        %v6351 = vunpack.c.l.b16 %v1327
        %v6352 = vunpack.c.l.b16 %v1328
        %v6353 = vunpack.c.l.b16 %v1329
        %v6354 = vunpack.c.l.b16 %v1330
        %v6355 = vunpack.c.l.b16 %v1331
        %v6356 = vunpack.c.l.b16 %v1332
        %v6357 = vunpack.c.l.b16 %v1333
        %v6358 = vunpack.c.l.b16 %v1334
        %v6359 = vunpack.c.l.b16 %v1335
        %v6360 = vunpack.c.l.b16 %v1336
        %v6361 = vunpack.c.l.b16 %v1337
        %v6362 = vunpack.c.l.b16 %v1338
        %v6363 = vunpack.c.l.b16 %v1339
        %v6364 = vunpack.c.l.b16 %v1340
        %v6365 = vunpack.c.l.b16 %v1341
        %v6366 = vunpack.c.l.b16 %v1342
        %v6367 = vunpack.c.l.b16 %v1343
        %v6368 = vunpack.c.l.b16 %v1344
        %v6369 = vunpack.c.l.b16 %v1345
        %v6370 = vunpack.c.l.b16 %v1346
        %v6371 = vunpack.c.l.b16 %v1347
        %v6372 = vunpack.c.l.b16 %v1348
        %v6373 = vunpack.c.l.b16 %v1349
        %v6374 = vunpack.c.l.b16 %v1350
        %v6375 = vunpack.c.l.b16 %v1351
        %v6376 = vunpack.c.l.b16 %v1352
        %v6377 = vunpack.c.l.b16 %v1353
        %v6378 = vunpack.c.l.b16 %v1354
        %v6379 = vunpack.c.l.b16 %v1355
        %v6380 = vunpack.c.l.b16 %v1356
        %v6381 = vunpack.c.l.b16 %v1357
        %v6382 = vunpack.c.l.b16 %v1358
        %v6383 = vunpack.c.l.b16 %v1359
        %v6384 = vunpack.c.l.b16 %v1360
        %v6385 = vunpack.c.l.b16 %v1361
        %v6386 = vunpack.c.l.b16 %v1362
        %v6387 = vunpack.c.l.b16 %v1363
        %v6388 = vunpack.c.l.b16 %v1364
        %v6389 = vunpack.c.l.b16 %v1365
        %v6390 = vunpack.c.l.b16 %v1366
        %v6391 = vunpack.c.l.b16 %v1367
        %v6392 = vunpack.c.l.b16 %v1368
        %v6393 = vunpack.c.l.b16 %v1369
        %v6394 = vunpack.c.l.b16 %v1370
        %v6395 = vunpack.c.l.b16 %v1371
        %v6396 = vunpack.c.l.b16 %v1372
        %v6397 = vunpack.c.l.b16 %v1373
        %v6398 = vunpack.c.l.b16 %v1374
        %v6399 = vunpack.c.l.b16 %v1375
        %v6400 = vunpack.c.l.b16 %v1376
        %v6401 = vunpack.c.l.b16 %v1377
        %v6402 = vunpack.c.l.b16 %v1378
        %v6403 = vunpack.c.l.b16 %v1379
        %v6404 = vunpack.c.l.b16 %v1380
        %v6405 = vunpack.c.l.b16 %v1381
        %v6406 = vunpack.c.l.b16 %v1382
        %v6407 = vunpack.c.l.b16 %v1383
        %v6408 = vunpack.c.l.b16 %v1384
        %v6409 = vunpack.c.l.b16 %v1385
        %v6410 = vunpack.c.l.b16 %v1386
        %v6411 = vunpack.c.l.b16 %v1387
        %v6412 = vunpack.c.l.b16 %v1388
        %v6413 = vunpack.c.l.b16 %v1389
        %v6414 = vunpack.c.l.b16 %v1390
        %v6415 = vunpack.c.l.b16 %v1391
        %v6416 = vunpack.c.l.b16 %v1392
        %v6417 = vunpack.c.l.b16 %v1393
        %v6418 = vunpack.c.l.b16 %v1394
        %v6419 = vunpack.c.l.b16 %v1395
        %v6420 = vunpack.c.l.b16 %v1396
        %v6421 = vunpack.c.l.b16 %v1397
        %v6422 = vunpack.c.l.b16 %v1398
        %v6423 = vunpack.c.l.b16 %v1399
        %v6424 = vunpack.c.l.b16 %v1400
        %v6425 = vunpack.c.l.b16 %v1401
        %v6426 = vunpack.c.l.b16 %v1402
        %v6427 = vunpack.c.l.b16 %v1403
        %v6428 = vunpack.c.l.b16 %v1404
        %v6429 = vunpack.c.l.b16 %v1405
        %v6430 = vunpack.c.l.b16 %v1406
        %v6431 = vunpack.c.l.b16 %v1407
        %v6432 = vunpack.c.l.b16 %v1408
        %v6433 = vunpack.c.l.b16 %v1409
        %v6434 = vunpack.c.l.b16 %v1410
        %v6435 = vunpack.c.l.b16 %v1411
        %v6436 = vunpack.c.l.b16 %v1412
        %v6437 = vunpack.c.l.b16 %v1413
        %v6438 = vunpack.c.l.b16 %v1414
        %v6439 = vunpack.c.l.b16 %v1415
        %v6440 = vunpack.c.l.b16 %v1416
        %v6441 = vunpack.c.l.b16 %v1417
        %v6442 = vunpack.c.l.b16 %v1418
        %v6443 = vunpack.c.l.b16 %v1419
        %v6444 = vunpack.c.l.b16 %v1420
        %v6445 = vunpack.c.l.b16 %v1421
        %v6446 = vunpack.c.l.b16 %v1422
        %v6447 = vunpack.c.l.b16 %v1423
        %v6448 = vunpack.c.l.b16 %v1424
        %v6449 = vunpack.c.l.b16 %v1425
        %v6450 = vunpack.c.l.b16 %v1426
        %v6451 = vunpack.c.l.b16 %v1427
        %v6452 = vunpack.c.l.b16 %v1428
        %v6453 = vunpack.c.l.b16 %v1429
        %v6454 = vunpack.c.l.b16 %v1430
        %v6455 = vunpack.c.l.b16 %v1431
        %v6456 = vunpack.c.l.b16 %v1432
        %v6457 = vunpack.c.l.b16 %v1433
        %v6458 = vunpack.c.l.b16 %v1434
        %v6459 = vunpack.c.l.b16 %v1435
        %v6460 = vunpack.c.l.b16 %v1436
        %v6461 = vunpack.c.l.b16 %v1437
        %v6462 = vunpack.c.l.b16 %v1438
        %v6463 = vunpack.c.l.b16 %v1439
        %v6464 = vunpack.c.l.b16 %v1440
        %v6465 = vunpack.c.l.b16 %v1441
        %v6466 = vunpack.c.l.b16 %v1442
        %v6467 = vunpack.c.l.b16 %v1443
        %v6468 = vunpack.c.l.b16 %v1444
        %v6469 = vunpack.c.l.b16 %v1445
        %v6470 = vunpack.c.l.b16 %v1446
        %v6471 = vunpack.c.l.b16 %v1447
        %v6472 = vunpack.c.l.b16 %v1448
        %v6473 = vunpack.c.l.b16 %v1449
        %v6474 = vunpack.c.l.b16 %v1450
        %v6475 = vunpack.c.l.b16 %v1451
        %v6476 = vunpack.c.l.b16 %v1452
        %v6477 = vunpack.c.l.b16 %v1453
        %v6478 = vunpack.c.l.b16 %v1454
        %v6479 = vunpack.c.l.b16 %v1455
        %v6480 = vunpack.c.l.b16 %v1456
        %v6481 = vunpack.c.l.b16 %v1457
        %v6482 = vunpack.c.l.b16 %v1458
        %v6483 = vunpack.c.l.b16 %v1459
        %v6484 = vunpack.c.l.b16 %v1460
        %v6485 = vunpack.c.l.b16 %v1461
        %v6486 = vunpack.c.l.b16 %v1462
        %v6487 = vunpack.c.l.b16 %v1463
        %v6488 = vunpack.c.l.b16 %v1464
        %v6489 = vunpack.c.l.b16 %v1465
        %v6490 = vunpack.c.l.b16 %v1466
        %v6491 = vunpack.c.l.b16 %v1467
        %v6492 = vunpack.c.l.b16 %v1468
        %v6493 = vunpack.c.l.b16 %v1469
        %v6494 = vunpack.c.l.b16 %v1470
        %v6495 = vunpack.c.l.b16 %v1471
        %v6496 = vunpack.c.l.b16 %v1472
        %v6497 = vunpack.c.l.b16 %v1473
        %v6498 = vunpack.c.l.b16 %v1474
        %v6499 = vunpack.c.l.b16 %v1475
        %v6500 = vunpack.c.l.b16 %v1476
        %v6501 = vunpack.c.l.b16 %v1477
        %v6502 = vunpack.c.l.b16 %v1478
        %v6503 = vunpack.c.l.b16 %v1479
        %v6504 = vunpack.c.l.b16 %v1480
        %v6505 = vunpack.c.l.b16 %v1481
        %v6506 = vunpack.c.l.b16 %v1482
        %v6507 = vunpack.c.l.b16 %v1483
        %v6508 = vunpack.c.l.b16 %v1484
        %v6509 = vunpack.c.l.b16 %v1485
        %v6510 = vunpack.c.l.b16 %v1486
        %v6511 = vunpack.c.l.b16 %v1487
        %v6512 = vunpack.c.l.b16 %v1488
        %v6513 = vunpack.c.l.b16 %v1489
        %v6514 = vunpack.c.l.b16 %v1490
        %v6515 = vunpack.c.l.b16 %v1491
        %v6516 = vunpack.c.l.b16 %v1492
        %v6517 = vunpack.c.l.b16 %v1493
        %v6518 = vunpack.c.l.b16 %v1494
        %v6519 = vunpack.c.l.b16 %v1495
        %v6520 = vunpack.c.l.b16 %v1496
        %v6521 = vunpack.c.l.b16 %v1497
        %v6522 = vunpack.c.l.b16 %v1498
        %v6523 = vunpack.c.l.b16 %v1499
        %v6524 = vunpack.c.l.b16 %v1500
        %v6525 = vunpack.c.l.b16 %v1501
        %v6526 = vunpack.c.l.b16 %v1502
        %v6527 = vunpack.c.l.b16 %v1503
        %v6528 = vunpack.c.l.b16 %v1504
        %v6529 = vunpack.c.l.b16 %v1505
        %v6530 = vunpack.c.l.b16 %v1506
        %v6531 = vunpack.c.l.b16 %v1507
        %v6532 = vunpack.c.l.b16 %v1508
        %v6533 = vunpack.c.l.b16 %v1509
        %v6534 = vunpack.c.l.b16 %v1510
        %v6535 = vunpack.c.l.b16 %v1511
        %v6536 = vunpack.c.l.b16 %v1512
        %v6537 = vunpack.c.l.b16 %v1513
        %v6538 = vunpack.c.l.b16 %v1514
        %v6539 = vunpack.c.l.b16 %v1515
        %v6540 = vunpack.c.l.b16 %v1516
        %v6541 = vunpack.c.l.b16 %v1517
        %v6542 = vunpack.c.l.b16 %v1518
        %v6543 = vunpack.c.l.b16 %v1519
        %v6544 = vunpack.c.l.b16 %v1520
        %v6545 = vunpack.c.l.b16 %v1521
        %v6546 = vunpack.c.l.b16 %v1522
        %v6547 = vunpack.c.l.b16 %v1523
        %v6548 = vunpack.c.l.b16 %v1524
        %v6549 = vunpack.c.l.b16 %v1525
        %v6550 = vunpack.c.l.b16 %v1526
        %v6551 = vunpack.c.l.b16 %v1527
        %v6552 = vunpack.c.l.b16 %v1528
        %v6553 = vunpack.c.l.b16 %v1529
        %v6554 = vunpack.c.l.b16 %v1530
        %v6555 = vunpack.c.l.b16 %v1531
        %v6556 = vunpack.c.l.b16 %v1532
        %v6557 = vunpack.c.l.b16 %v1533
        %v6558 = vunpack.c.l.b16 %v1534
        %v6559 = vunpack.c.l.b16 %v1535
        %v6560 = vunpack.c.l.b16 %v1536
        %v6561 = vunpack.c.l.b16 %v1537
        %v6562 = vunpack.c.l.b16 %v1538
        %v6563 = vunpack.c.l.b16 %v1539
        %v6564 = vunpack.c.l.b16 %v1540
        %v6565 = vunpack.c.l.b16 %v1541
        %v6566 = vunpack.c.l.b16 %v1542
        %v6567 = vunpack.c.l.b16 %v1543
        %v6568 = vunpack.c.l.b16 %v1544
        %v6569 = vunpack.c.l.b16 %v1545
        %v6570 = vunpack.c.l.b16 %v1546
        %v6571 = vunpack.c.l.b16 %v1547
        %v6572 = vunpack.c.l.b16 %v1548
        %v6573 = vunpack.c.l.b16 %v1549
        %v6574 = vunpack.c.l.b16 %v1550
        %v6575 = vunpack.c.l.b16 %v1551
        %v6576 = vunpack.c.l.b16 %v1552
        %v6577 = vunpack.c.l.b16 %v1553
        %v6578 = vunpack.c.l.b16 %v1554
        %v6579 = vunpack.c.l.b16 %v1555
        %v6580 = vunpack.c.l.b16 %v1556
        %v6581 = vunpack.c.l.b16 %v1557
        %v6582 = vunpack.c.l.b16 %v1558
        %v6583 = vunpack.c.l.b16 %v1559
        %v6584 = vunpack.c.l.b16 %v1560
        %v6585 = vunpack.c.l.b16 %v1561
        %v6586 = vunpack.c.l.b16 %v1562
        %v6587 = vunpack.c.l.b16 %v1563
        %v6588 = vunpack.c.l.b16 %v1564
        %v6589 = vunpack.c.l.b16 %v1565
        %v6590 = vunpack.c.l.b16 %v1566
        %v6591 = vunpack.c.l.b16 %v1567
        %v6592 = vunpack.c.l.b16 %v1568
        %v6593 = vunpack.c.l.b16 %v1569
        %v6594 = vunpack.c.l.b16 %v1570
        %v6595 = vunpack.c.l.b16 %v1571
        %v6596 = vunpack.c.l.b16 %v1572
        %v6597 = vunpack.c.l.b16 %v1573
        %v6598 = vunpack.c.l.b16 %v1574
        %v6599 = vunpack.c.l.b16 %v1575
        %v6600 = vunpack.c.l.b16 %v1576
        %v6601 = vunpack.c.l.b16 %v1577
        %v6602 = vunpack.c.l.b16 %v1578
        %v6603 = vunpack.c.l.b16 %v1579
        %v6604 = vunpack.c.l.b16 %v1580
        %v6605 = vunpack.c.l.b16 %v1581
        %v6606 = vunpack.c.l.b16 %v1582
        %v6607 = vunpack.c.l.b16 %v1583
        %v6608 = vunpack.c.l.b16 %v1584
        %v6609 = vunpack.c.l.b16 %v1585
        %v6610 = vunpack.c.l.b16 %v1586
        %v6611 = vunpack.c.l.b16 %v1587
        %v6612 = vunpack.c.l.b16 %v1588
        %v6613 = vunpack.c.l.b16 %v1589
        %v6614 = vunpack.c.l.b16 %v1590
        %v6615 = vunpack.c.l.b16 %v1591
        %v6616 = vunpack.c.l.b16 %v1592
        %v6617 = vunpack.c.l.b16 %v1593
        %v6618 = vunpack.c.l.b16 %v1594
        %v6619 = vunpack.c.l.b16 %v1595
        %v6620 = vunpack.c.l.b16 %v1596
        %v6621 = vunpack.c.l.b16 %v1597
        %v6622 = vunpack.c.l.b16 %v1598
        %v6623 = vunpack.c.l.b16 %v1599
        %v6624 = vunpack.c.l.b16 %v1600
        %v6625 = vunpack.c.l.b16 %v1601
        %v6626 = vunpack.c.l.b16 %v1602
        %v6627 = vunpack.c.l.b16 %v1603
        %v6628 = vunpack.c.l.b16 %v1604
        %v6629 = vunpack.c.l.b16 %v1605
        %v6630 = vunpack.c.l.b16 %v1606
        %v6631 = vunpack.c.l.b16 %v1607
        %v6632 = vunpack.c.l.b16 %v1608
        %v6633 = vunpack.c.l.b16 %v1609
        %v6634 = vunpack.c.l.b16 %v1610
        %v6635 = vunpack.c.l.b16 %v1611
        %v6636 = vunpack.c.l.b16 %v1612
        %v6637 = vunpack.c.l.b16 %v1613
        %v6638 = vunpack.c.l.b16 %v1614
        %v6639 = vunpack.c.l.b16 %v1615
        %v6640 = vunpack.c.l.b16 %v1616
        %v6641 = vunpack.c.l.b16 %v1617
        %v6642 = vunpack.c.l.b16 %v1618
        %v6643 = vunpack.c.l.b16 %v1619
        %v6644 = vunpack.c.l.b16 %v1620
        %v6645 = vunpack.c.l.b16 %v1621
        %v6646 = vunpack.c.l.b16 %v1622
        %v6647 = vunpack.c.l.b16 %v1623
        %v6648 = vunpack.c.l.b16 %v1624
        %v6649 = vunpack.c.l.b16 %v1625
        %v6650 = vunpack.c.l.b16 %v1626
        %v6651 = vunpack.c.l.b16 %v1627
        %v6652 = vunpack.c.l.b16 %v1628
        %v6653 = vunpack.c.l.b16 %v1629
        %v6654 = vunpack.c.l.b16 %v1630
        %v6655 = vunpack.c.l.b16 %v1631
        %v6656 = vunpack.c.l.b16 %v1632
        %v6657 = vunpack.c.l.b16 %v1633
        %v6658 = vunpack.c.l.b16 %v1634
        %v6659 = vunpack.c.l.b16 %v1635
        %v6660 = vunpack.c.l.b16 %v1636
        %v6661 = vunpack.c.l.b16 %v1637
        %v6662 = vunpack.c.l.b16 %v1638
        %v6663 = vunpack.c.l.b16 %v1639
        %v6664 = vunpack.c.l.b16 %v1640
        %v6665 = vunpack.c.l.b16 %v1641
        %v6666 = vunpack.c.l.b16 %v1642
        %v6667 = vunpack.c.l.b16 %v1643
        %v6668 = vunpack.c.l.b16 %v1644
        %v6669 = vunpack.c.l.b16 %v1645
        %v6670 = vunpack.c.l.b16 %v1646
        %v6671 = vunpack.c.l.b16 %v1647
        %v6672 = vunpack.c.l.b16 %v1648
        %v6673 = vunpack.c.l.b16 %v1649
        %v6674 = vunpack.c.l.b16 %v1650
        %v6675 = vunpack.c.l.b16 %v1651
        %v6676 = vunpack.c.l.b16 %v1652
        %v6677 = vunpack.c.l.b16 %v1653
        %v6678 = vunpack.c.l.b16 %v1654
        %v6679 = vunpack.c.l.b16 %v1655
        %v6680 = vunpack.c.l.b16 %v1656
        %v6681 = vunpack.c.l.b16 %v1657
        %v6682 = vunpack.c.l.b16 %v1658
        %v6683 = vunpack.c.l.b16 %v1659
        %v6684 = vunpack.c.l.b16 %v1660
        %v6685 = vunpack.c.l.b16 %v1661
        %v6686 = vunpack.c.l.b16 %v1662
        %v6687 = vunpack.c.l.b16 %v1663
        %v6688 = vunpack.c.l.b16 %v1664
        %v6689 = vunpack.c.l.b16 %v1665
        %v6690 = vunpack.c.l.b16 %v1666
        %v6691 = vunpack.c.l.b16 %v1667
        %v6692 = vunpack.c.l.b16 %v1668
        %v6693 = vunpack.c.l.b16 %v1669
        %v6694 = vunpack.c.l.b16 %v1670
        %v6695 = vunpack.c.l.b16 %v1671
        %v6696 = vunpack.c.l.b16 %v1672
        %v6697 = vunpack.c.l.b16 %v1673
        %v6698 = vunpack.c.l.b16 %v1674
        %v6699 = vunpack.c.l.b16 %v1675
        %v6700 = vunpack.c.l.b16 %v1676
        %v6701 = vunpack.c.l.b16 %v1677
        %v6702 = vunpack.c.l.b16 %v1678
        %v6703 = vunpack.c.l.b16 %v1679
        %v6704 = vunpack.c.l.b16 %v1680
        %v6705 = vunpack.c.l.b16 %v1681
        %v6706 = vunpack.c.l.b16 %v1682
        %v6707 = vunpack.c.l.b16 %v1683
        %v6708 = vunpack.c.l.b16 %v1684
        %v6709 = vunpack.c.l.b16 %v1685
        %v6710 = vunpack.c.l.b16 %v1686
        %v6711 = vunpack.c.l.b16 %v1687
        %v6712 = vunpack.c.l.b16 %v1688
        %v6713 = vunpack.c.l.b16 %v1689
        %v6714 = vunpack.c.l.b16 %v1690
        %v6715 = vunpack.c.l.b16 %v1691
        %v6716 = vunpack.c.l.b16 %v1692
        %v6717 = vunpack.c.l.b16 %v1693
        %v6718 = vunpack.c.l.b16 %v1694
        %v6719 = vunpack.c.l.b16 %v1695
        %v6720 = vunpack.c.l.b16 %v1696
        %v6721 = vunpack.c.l.b16 %v1697
        %v6722 = vunpack.c.l.b16 %v1698
        %v6723 = vunpack.c.l.b16 %v1699
        %v6724 = vunpack.c.l.b16 %v1700
        %v6725 = vunpack.c.l.b16 %v1701
        %v6726 = vunpack.c.l.b16 %v1702
        %v6727 = vunpack.c.l.b16 %v1703
        %v6728 = vunpack.c.l.b16 %v1704
        %v6729 = vunpack.c.l.b16 %v1705
        %v6730 = vunpack.c.l.b16 %v1706
        %v6731 = vunpack.c.l.b16 %v1707
        %v6732 = vunpack.c.l.b16 %v1708
        %v6733 = vunpack.c.l.b16 %v1709
        %v6734 = vunpack.c.l.b16 %v1710
        %v6735 = vunpack.c.l.b16 %v1711
        %v6736 = vunpack.c.l.b16 %v1712
        %v6737 = vunpack.c.l.b16 %v1713
        %v6738 = vunpack.c.l.b16 %v1714
        %v6739 = vunpack.c.l.b16 %v1715
        %v6740 = vunpack.c.l.b16 %v1716
        %v6741 = vunpack.c.l.b16 %v1717
        %v6742 = vunpack.c.l.b16 %v1718
        %v6743 = vunpack.c.l.b16 %v1719
        %v6744 = vunpack.c.l.b16 %v1720
        %v6745 = vunpack.c.l.b16 %v1721
        %v6746 = vunpack.c.l.b16 %v1722
        %v6747 = vunpack.c.l.b16 %v1723
        %v6748 = vunpack.c.l.b16 %v1724
        %v6749 = vunpack.c.l.b16 %v1725
        %v6750 = vunpack.c.l.b16 %v1726
        %v6751 = vunpack.c.l.b16 %v1727
        %v6752 = vunpack.c.l.b16 %v1728
        %v6753 = vunpack.c.l.b16 %v1729
        %v6754 = vunpack.c.l.b16 %v1730
        %v6755 = vunpack.c.l.b16 %v1731
        %v6756 = vunpack.c.l.b16 %v1732
        %v6757 = vunpack.c.l.b16 %v1733
        %v6758 = vunpack.c.l.b16 %v1734
        %v6759 = vunpack.c.l.b16 %v1735
        %v6760 = vunpack.c.l.b16 %v1736
        %v6761 = vunpack.c.l.b16 %v1737
        %v6762 = vunpack.c.l.b16 %v1738
        %v6763 = vunpack.c.l.b16 %v1739
        %v6764 = vunpack.c.l.b16 %v1740
        %v6765 = vunpack.c.l.b16 %v1741
        %v6766 = vunpack.c.l.b16 %v1742
        %v6767 = vunpack.c.l.b16 %v1743
        %v6768 = vunpack.c.l.b16 %v1744
        %v6769 = vunpack.c.l.b16 %v1745
        %v6770 = vunpack.c.l.b16 %v1746
        %v6771 = vunpack.c.l.b16 %v1747
        %v6772 = vunpack.c.l.b16 %v1748
        %v6773 = vunpack.c.l.b16 %v1749
        %v6774 = vunpack.c.l.b16 %v1750
        %v6775 = vunpack.c.l.b16 %v1751
        %v6776 = vunpack.c.l.b16 %v1752
        %v6777 = vunpack.c.l.b16 %v1753
        %v6778 = vunpack.c.l.b16 %v1754
        %v6779 = vunpack.c.l.b16 %v1755
        %v6780 = vunpack.c.l.b16 %v1756
        %v6781 = vunpack.c.l.b16 %v1757
        %v6782 = vunpack.c.l.b16 %v1758
        %v6783 = vunpack.c.l.b16 %v1759
        %v6784 = vunpack.c.l.b16 %v1760
        %v6785 = vunpack.c.l.b16 %v1761
        %v6786 = vunpack.c.l.b16 %v1762
        %v6787 = vunpack.c.l.b16 %v1763
        %v6788 = vunpack.c.l.b16 %v1764
        %v6789 = vunpack.c.l.b16 %v1765
        %v6790 = vunpack.c.l.b16 %v1766
        %v6791 = vunpack.c.l.b16 %v1767
        %v6792 = vunpack.c.l.b16 %v1768
        %v6793 = vunpack.c.l.b16 %v1769
        %v6794 = vunpack.c.l.b16 %v1770
        %v6795 = vunpack.c.l.b16 %v1771
        %v6796 = vunpack.c.l.b16 %v1772
        %v6797 = vunpack.c.l.b16 %v1773
        %v6798 = vunpack.c.l.b16 %v1774
        %v6799 = vunpack.c.l.b16 %v1775
        %v6800 = vunpack.c.l.b16 %v1776
        %v6801 = vunpack.c.l.b16 %v1777
        %v6802 = vunpack.c.l.b16 %v1778
        %v6803 = vunpack.c.l.b16 %v1779
        %v6804 = vunpack.c.l.b16 %v1780
        %v6805 = vunpack.c.l.b16 %v1781
        %v6806 = vunpack.c.l.b16 %v1782
        %v6807 = vunpack.c.l.b16 %v1783
        %v6808 = vunpack.c.l.b16 %v1784
        %v6809 = vunpack.c.l.b16 %v1785
        %v6810 = vunpack.c.l.b16 %v1786
        %v6811 = vunpack.c.l.b16 %v1787
        %v6812 = vunpack.c.l.b16 %v1788
        %v6813 = vunpack.c.l.b16 %v1789
        %v6814 = vunpack.c.l.b16 %v1790
        %v6815 = vunpack.c.l.b16 %v1791
        %v6816 = vunpack.c.l.b16 %v1792
        %v6817 = vunpack.c.l.b16 %v1793
        %v6818 = vunpack.c.l.b16 %v1794
        %v6819 = vunpack.c.l.b16 %v1795
        %v6820 = vunpack.c.l.b16 %v1796
        %v6821 = vunpack.c.l.b16 %v1797
        %v6822 = vunpack.c.l.b16 %v1798
        %v6823 = vunpack.c.l.b16 %v1799
        %v6824 = vunpack.c.l.b16 %v1800
        %v6825 = vunpack.c.l.b16 %v1801
        %v6826 = vunpack.c.l.b16 %v1802
        %v6827 = vunpack.c.l.b16 %v1803
        %v6828 = vunpack.c.l.b16 %v1804
        %v6829 = vunpack.c.l.b16 %v1805
        %v6830 = vunpack.c.l.b16 %v1806
        %v6831 = vunpack.c.l.b16 %v1807
        %v6832 = vunpack.c.l.b16 %v1808
        %v6833 = vunpack.c.l.b16 %v1809
        %v6834 = vunpack.c.l.b16 %v1810
        %v6835 = vunpack.c.l.b16 %v1811
        %v6836 = vunpack.c.l.b16 %v1812
        %v6837 = vunpack.c.l.b16 %v1813
        %v6838 = vunpack.c.l.b16 %v1814
        %v6839 = vunpack.c.l.b16 %v1815
        %v6840 = vunpack.c.l.b16 %v1816
        %v6841 = vunpack.c.l.b16 %v1817
        %v6842 = vunpack.c.l.b16 %v1818
        %v6843 = vunpack.c.l.b16 %v1819
        %v6844 = vunpack.c.l.b16 %v1820
        %v6845 = vunpack.c.l.b16 %v1821
        %v6846 = vunpack.c.l.b16 %v1822
        %v6847 = vunpack.c.l.b16 %v1823
        %v6848 = vunpack.c.l.b16 %v1824
        %v6849 = vunpack.c.l.b16 %v1825
        %v6850 = vunpack.c.l.b16 %v1826
        %v6851 = vunpack.c.l.b16 %v1827
        %v6852 = vunpack.c.l.b16 %v1828
        %v6853 = vunpack.c.l.b16 %v1829
        %v6854 = vunpack.c.l.b16 %v1830
        %v6855 = vunpack.c.l.b16 %v1831
        %v6856 = vunpack.c.l.b16 %v1832
        %v6857 = vunpack.c.l.b16 %v1833
        %v6858 = vunpack.c.l.b16 %v1834
        %v6859 = vunpack.c.l.b16 %v1835
        %v6860 = vunpack.c.l.b16 %v1836
        %v6861 = vunpack.c.l.b16 %v1837
        %v6862 = vunpack.c.l.b16 %v1838
        %v6863 = vunpack.c.l.b16 %v1839
        %v6864 = vunpack.c.l.b16 %v1840
        %v6865 = vunpack.c.l.b16 %v1841
        %v6866 = vunpack.c.l.b16 %v1842
        %v6867 = vunpack.c.l.b16 %v1843
        %v6868 = vunpack.c.l.b16 %v1844
        %v6869 = vunpack.c.l.b16 %v1845
        %v6870 = vunpack.c.l.b16 %v1846
        %v6871 = vunpack.c.l.b16 %v1847
        %v6872 = vunpack.c.l.b16 %v1848
        %v6873 = vunpack.c.l.b16 %v1849
        %v6874 = vunpack.c.l.b16 %v1850
        %v6875 = vunpack.c.l.b16 %v1851
        %v6876 = vunpack.c.l.b16 %v1852
        %v6877 = vunpack.c.l.b16 %v1853
        %v6878 = vunpack.c.l.b16 %v1854
        %v6879 = vunpack.c.l.b16 %v1855
        %v6880 = vunpack.c.l.b16 %v1856
        %v6881 = vunpack.c.l.b16 %v1857
        %v6882 = vunpack.c.l.b16 %v1858
        %v6883 = vunpack.c.l.b16 %v1859
        %v6884 = vunpack.c.l.b16 %v1860
        %v6885 = vunpack.c.l.b16 %v1861
        %v6886 = vunpack.c.l.b16 %v1862
        %v6887 = vunpack.c.l.b16 %v1863
        %v6888 = vunpack.c.l.b16 %v1864
        %v6889 = vunpack.c.l.b16 %v1865
        %v6890 = vunpack.c.l.b16 %v1866
        %v6891 = vunpack.c.l.b16 %v1867
        %v6892 = vunpack.c.l.b16 %v1868
        %v6893 = vunpack.c.l.b16 %v1869
        %v6894 = vunpack.c.l.b16 %v1870
        %v6895 = vunpack.c.l.b16 %v1871
        %v6896 = vunpack.c.l.b16 %v1872
        %v6897 = vunpack.c.l.b16 %v1873
        %v6898 = vunpack.c.l.b16 %v1874
        %v6899 = vunpack.c.l.b16 %v1875
        %v6900 = vunpack.c.l.b16 %v1876
        %v6901 = vunpack.c.l.b16 %v1877
        %v6902 = vunpack.c.l.b16 %v1878
        %v6903 = vunpack.c.l.b16 %v1879
        %v6904 = vunpack.c.l.b16 %v1880
        %v6905 = vunpack.c.l.b16 %v1881
        %v6906 = vunpack.c.l.b16 %v1882
        %v6907 = vunpack.c.l.b16 %v1883
        %v6908 = vunpack.c.l.b16 %v1884
        %v6909 = vunpack.c.l.b16 %v1885
        %v6910 = vunpack.c.l.b16 %v1886
        %v6911 = vunpack.c.l.b16 %v1887
        %v6912 = vunpack.c.l.b16 %v1888
        %v6913 = vunpack.c.l.b16 %v1889
        %v6914 = vunpack.c.l.b16 %v1890
        %v6915 = vunpack.c.l.b16 %v1891
        %v6916 = vunpack.c.l.b16 %v1892
        %v6917 = vunpack.c.l.b16 %v1893
        %v6918 = vunpack.c.l.b16 %v1894
        %v6919 = vunpack.c.l.b16 %v1895
        %v6920 = vunpack.c.l.b16 %v1896
        %v6921 = vunpack.c.l.b16 %v1897
        %v6922 = vunpack.c.l.b16 %v1898
        %v6923 = vunpack.c.l.b16 %v1899
        %v6924 = vunpack.c.l.b16 %v1900
        %v6925 = vunpack.c.l.b16 %v1901
        %v6926 = vunpack.c.l.b16 %v1902
        %v6927 = vunpack.c.l.b16 %v1903
        %v6928 = vunpack.c.l.b16 %v1904
        %v6929 = vunpack.c.l.b16 %v1905
        %v6930 = vunpack.c.l.b16 %v1906
        %v6931 = vunpack.c.l.b16 %v1907
        %v6932 = vunpack.c.l.b16 %v1908
        %v6933 = vunpack.c.l.b16 %v1909
        %v6934 = vunpack.c.l.b16 %v1910
        %v6935 = vunpack.c.l.b16 %v1911
        %v6936 = vunpack.c.l.b16 %v1912
        %v6937 = vunpack.c.l.b16 %v1913
        %v6938 = vunpack.c.l.b16 %v1914
        %v6939 = vunpack.c.l.b16 %v1915
        %v6940 = vunpack.c.l.b16 %v1916
        %v6941 = vunpack.c.l.b16 %v1917
        %v6942 = vunpack.c.l.b16 %v1918
        %v6943 = vunpack.c.l.b16 %v1919
        %v6944 = vunpack.c.l.b16 %v1920
        %v6945 = vunpack.c.l.b16 %v1921
        %v6946 = vunpack.c.l.b16 %v1922
        %v6947 = vunpack.c.l.b16 %v1923
        %v6948 = vunpack.c.l.b16 %v1924
        %v6949 = vunpack.c.l.b16 %v1925
        %v6950 = vunpack.c.l.b16 %v1926
        %v6951 = vunpack.c.l.b16 %v1927
        %v6952 = vunpack.c.l.b16 %v1928
        %v6953 = vunpack.c.l.b16 %v1929
        %v6954 = vunpack.c.l.b16 %v1930
        %v6955 = vunpack.c.l.b16 %v1931
        %v6956 = vunpack.c.l.b16 %v1932
        %v6957 = vunpack.c.l.b16 %v1933
        %v6958 = vunpack.c.l.b16 %v1934
        %v6959 = vunpack.c.l.b16 %v1935
        %v6960 = vunpack.c.l.b16 %v1936
        %v6961 = vunpack.c.l.b16 %v1937
        %v6962 = vunpack.c.l.b16 %v1938
        %v6963 = vunpack.c.l.b16 %v1939
        %v6964 = vunpack.c.l.b16 %v1940
        %v6965 = vunpack.c.l.b16 %v1941
        %v6966 = vunpack.c.l.b16 %v1942
        %v6967 = vunpack.c.l.b16 %v1943
        %v6968 = vunpack.c.l.b16 %v1944
        %v6969 = vunpack.c.l.b16 %v1945
        %v6970 = vunpack.c.l.b16 %v1946
        %v6971 = vunpack.c.l.b16 %v1947
        %v6972 = vunpack.c.l.b16 %v1948
        %v6973 = vunpack.c.l.b16 %v1949
        %v6974 = vunpack.c.l.b16 %v1950
        %v6975 = vunpack.c.l.b16 %v1951
        %v6976 = vunpack.c.l.b16 %v1952
        %v6977 = vunpack.c.l.b16 %v1953
        %v6978 = vunpack.c.l.b16 %v1954
        %v6979 = vunpack.c.l.b16 %v1955
        %v6980 = vunpack.c.l.b16 %v1956
        %v6981 = vunpack.c.l.b16 %v1957
        %v6982 = vunpack.c.l.b16 %v1958
        %v6983 = vunpack.c.l.b16 %v1959
        %v6984 = vunpack.c.l.b16 %v1960
        %v6985 = vunpack.c.l.b16 %v1961
        %v6986 = vunpack.c.l.b16 %v1962
        %v6987 = vunpack.c.l.b16 %v1963
        %v6988 = vunpack.c.l.b16 %v1964
        %v6989 = vunpack.c.l.b16 %v1965
        %v6990 = vunpack.c.l.b16 %v1966
        %v6991 = vunpack.c.l.b16 %v1967
        %v6992 = vunpack.c.l.b16 %v1968
        %v6993 = vunpack.c.l.b16 %v1969
        %v6994 = vunpack.c.l.b16 %v1970
        %v6995 = vunpack.c.l.b16 %v1971
        %v6996 = vunpack.c.l.b16 %v1972
        %v6997 = vunpack.c.l.b16 %v1973
        %v6998 = vunpack.c.l.b16 %v1974
        %v6999 = vunpack.c.l.b16 %v1975
        %v7000 = vunpack.c.l.b16 %v1976
        %v7001 = vunpack.c.l.b16 %v1977
        %v7002 = vunpack.c.l.b16 %v1978
        %v7003 = vunpack.c.l.b16 %v1979
        %v7004 = vunpack.c.l.b16 %v1980
        %v7005 = vunpack.c.l.b16 %v1981
        %v7006 = vunpack.c.l.b16 %v1982
        %v7007 = vunpack.c.l.b16 %v1983
        %v7008 = vunpack.c.l.b16 %v1984
        %v7009 = vunpack.c.l.b16 %v1985
        %v7010 = vunpack.c.l.b16 %v1986
        %v7011 = vunpack.c.l.b16 %v1987
        %v7012 = vunpack.c.l.b16 %v1988
        %v7013 = vunpack.c.l.b16 %v1989
        %v7014 = vunpack.c.l.b16 %v1990
        %v7015 = vunpack.c.l.b16 %v1991
        %v7016 = vunpack.c.l.b16 %v1992
        %v7017 = vunpack.c.l.b16 %v1993
        %v7018 = vunpack.c.l.b16 %v1994
        %v7019 = vunpack.c.l.b16 %v1995
        %v7020 = vunpack.c.l.b16 %v1996
        %v7021 = vunpack.c.l.b16 %v1997
        %v7022 = vunpack.c.l.b16 %v1998
        %v7023 = vunpack.c.l.b16 %v1999
        %v7024 = vunpack.c.l.b16 %v2000
        %v7025 = vunpack.c.l.b16 %v2001
        %v7026 = vunpack.c.l.b16 %v2002
        %v7027 = vunpack.c.l.b16 %v2003
        %v7028 = vunpack.c.l.b16 %v2004
        %v7029 = vunpack.c.l.b16 %v2005
        %v7030 = vunpack.c.l.b16 %v2006
        %v7031 = vunpack.c.l.b16 %v2007
        %v7032 = vunpack.c.l.b16 %v2008
        %v7033 = vunpack.c.l.b16 %v2009
        %v7034 = vunpack.c.l.b16 %v2010
        %v7035 = vunpack.c.l.b16 %v2011
        %v7036 = vunpack.c.l.b16 %v2012
        %v7037 = vunpack.c.l.b16 %v2013
        %v7038 = vunpack.c.l.b16 %v2014
        %v7039 = vunpack.c.l.b16 %v2015
        %v7040 = vunpack.c.l.b16 %v2016
        %v7041 = vunpack.c.l.b16 %v2017
        %v7042 = vunpack.c.l.b16 %v2018
        %v7043 = vunpack.c.l.b16 %v2019
        %v7044 = vunpack.c.l.b16 %v2020
        %v7045 = vunpack.c.l.b16 %v2021
        %v7046 = vunpack.c.l.b16 %v2022
        %v7047 = vunpack.c.l.b16 %v2023
        %v7048 = vunpack.c.l.b16 %v2024
        %v7049 = vunpack.c.l.b16 %v2025
        %v7050 = vunpack.c.l.b16 %v2026
        %v7051 = vunpack.c.l.b16 %v2027
        %v7052 = vunpack.c.l.b16 %v2028
        %v7053 = vunpack.c.l.b16 %v2029
        %v7054 = vunpack.c.l.b16 %v2030
        %v7055 = vunpack.c.l.b16 %v2031
        %v7056 = vunpack.c.l.b16 %v2032
        %v7057 = vunpack.c.l.b16 %v2033
        %v7058 = vunpack.c.l.b16 %v2034
        %v7059 = vunpack.c.l.b16 %v2035
        %v7060 = vunpack.c.l.b16 %v2036
        %v7061 = vunpack.c.l.b16 %v2037
        %v7062 = vunpack.c.l.b16 %v2038
        %v7063 = vunpack.c.l.b16 %v2039
        %v7064 = vunpack.c.l.b16 %v2040
        %v7065 = vunpack.c.l.b16 %v2041
        %v7066 = vunpack.c.l.b16 %v2042
        %v7067 = vunpack.c.l.b16 %v2043
        %v7068 = vunpack.c.l.b16 %v2044
        %v7069 = vunpack.c.l.b16 %v2045
        %v7070 = vunpack.c.l.b16 %v2046
        %v7071 = vunpack.c.l.b16 %v2047
        %v7072 = vunpack.c.l.b16 %v2048
        %v7073 = vunpack.c.l.b16 %v2049
        %v7074 = vunpack.c.l.b16 %v2050
        %v7075 = vunpack.c.l.b16 %v2051
        %v7076 = vunpack.c.l.b16 %v2052
        %v7077 = vunpack.c.l.b16 %v2053
        %v7078 = vunpack.c.l.b16 %v2054
        %v7079 = vunpack.c.l.b16 %v2055
        %v7080 = vunpack.c.l.b16 %v2056
        %v7081 = vunpack.c.l.b16 %v2057
        %v7082 = vunpack.c.l.b16 %v2058
        %v7083 = vunpack.c.l.b16 %v2059
        %v7084 = vunpack.c.l.b16 %v2060
        %v7085 = vunpack.c.l.b16 %v2061
        %v7086 = vunpack.c.l.b16 %v2062
        %v7087 = vunpack.c.l.b16 %v2063
        %v7088 = vunpack.c.l.b16 %v2064
        %v7089 = vunpack.c.l.b16 %v2065
        %v7090 = vunpack.c.l.b16 %v2066
        %v7091 = vunpack.c.l.b16 %v2067
        %v7092 = vunpack.c.l.b16 %v2068
        %v7093 = vunpack.c.l.b16 %v2069
        %v7094 = vunpack.c.l.b16 %v2070
        %v7095 = vunpack.c.l.b16 %v2071
        %v7096 = vunpack.c.l.b16 %v2072
        %v7097 = vunpack.c.l.b16 %v2073
        %v7098 = vunpack.c.l.b16 %v2074
        %v7099 = vunpack.c.l.b16 %v2075
        %v7100 = vunpack.c.l.b16 %v2076
        %v7101 = vunpack.c.l.b16 %v2077
        %v7102 = vunpack.c.l.b16 %v2078
        %v7103 = vunpack.c.l.b16 %v2079
        %v7104 = vunpack.c.l.b16 %v2080
        %v7105 = vunpack.c.l.b16 %v2081
        %v7106 = vunpack.c.l.b16 %v2082
        %v7107 = vunpack.c.l.b16 %v2083
        %v7108 = vunpack.c.l.b16 %v2084
        %v7109 = vunpack.c.l.b16 %v2085
        %v7110 = vunpack.c.l.b16 %v2086
        %v7111 = vunpack.c.l.b16 %v2087
        %v7112 = vunpack.c.l.b16 %v2088
        %v7113 = vunpack.c.l.b16 %v2089
        %v7114 = vunpack.c.l.b16 %v2090
        %v7115 = vunpack.c.l.b16 %v2091
        %v7116 = vunpack.c.l.b16 %v2092
        %v7117 = vunpack.c.l.b16 %v2093
        %v7118 = vunpack.c.l.b16 %v2094
        %v7119 = vunpack.c.l.b16 %v2095
        %v7120 = vunpack.c.l.b16 %v2096
        %v7121 = vunpack.c.l.b16 %v2097
        %v7122 = vunpack.c.l.b16 %v2098
        %v7123 = vunpack.c.l.b16 %v2099
        %v7124 = vunpack.c.l.b16 %v2100
        %v7125 = vunpack.c.l.b16 %v2101
        %v7126 = vunpack.c.l.b16 %v2102
        %v7127 = vunpack.c.l.b16 %v2103
        %v7128 = vunpack.c.l.b16 %v2104
        %v7129 = vunpack.c.l.b16 %v2105
        %v7130 = vunpack.c.l.b16 %v2106
        %v7131 = vunpack.c.l.b16 %v2107
        %v7132 = vunpack.c.l.b16 %v2108
        %v7133 = vunpack.c.l.b16 %v2109
        %v7134 = vunpack.c.l.b16 %v2110
        %v7135 = vunpack.c.l.b16 %v2111
        %v7136 = vunpack.c.l.b16 %v2112
        %v7137 = vunpack.c.l.b16 %v2113
        %v7138 = vunpack.c.l.b16 %v2114
        %v7139 = vunpack.c.l.b16 %v2115
        %v7140 = vunpack.c.l.b16 %v2116
        %v7141 = vunpack.c.l.b16 %v2117
        %v7142 = vunpack.c.l.b16 %v2118
        %v7143 = vunpack.c.l.b16 %v2119
        %v7144 = vunpack.c.l.b16 %v2120
        %v7145 = vunpack.c.l.b16 %v2121
        %v7146 = vunpack.c.l.b16 %v2122
        %v7147 = vunpack.c.l.b16 %v2123
        %v7148 = vunpack.c.l.b16 %v2124
        %v7149 = vunpack.c.l.b16 %v2125
        %v7150 = vunpack.c.l.b16 %v2126
        %v7151 = vunpack.c.l.b16 %v2127
        %v7152 = vunpack.c.l.b16 %v2128
        %v7153 = vunpack.c.l.b16 %v2129
        %v7154 = vunpack.c.l.b16 %v2130
        %v7155 = vunpack.c.l.b16 %v2131
        %v7156 = vunpack.c.l.b16 %v2132
        %v7157 = vunpack.c.l.b16 %v2133
        %v7158 = vunpack.c.l.b16 %v2134
        %v7159 = vunpack.c.l.b16 %v2135
        %v7160 = vunpack.c.l.b16 %v2136
        %v7161 = vunpack.c.l.b16 %v2137
        %v7162 = vunpack.c.l.b16 %v2138
        %v7163 = vunpack.c.l.b16 %v2139
        %v7164 = vunpack.c.l.b16 %v2140
        %v7165 = vunpack.c.l.b16 %v2141
        %v7166 = vunpack.c.l.b16 %v2142
        %v7167 = vunpack.c.l.b16 %v2143
        %v7168 = vunpack.c.l.b16 %v2144
        %v7169 = vunpack.c.l.b16 %v2145
        %v7170 = vunpack.c.l.b16 %v2146
        %v7171 = vunpack.c.l.b16 %v2147
        %v7172 = vunpack.c.l.b16 %v2148
        %v7173 = vunpack.c.l.b16 %v2149
        %v7174 = vunpack.c.l.b16 %v2150
        %v7175 = vunpack.c.l.b16 %v2151
        %v7176 = vunpack.c.l.b16 %v2152
        %v7177 = vunpack.c.l.b16 %v2153
        %v7178 = vunpack.c.l.b16 %v2154
        %v7179 = vunpack.c.l.b16 %v2155
        %v7180 = vunpack.c.l.b16 %v2156
        %v7181 = vunpack.c.l.b16 %v2157
        %v7182 = vunpack.c.l.b16 %v2158
        %v7183 = vunpack.c.l.b16 %v2159
        %v7184 = vunpack.c.l.b16 %v2160
        %v7185 = vunpack.c.l.b16 %v2161
        %v7186 = vunpack.c.l.b16 %v2162
        %v7187 = vunpack.c.l.b16 %v2163
        %v7188 = vunpack.c.l.b16 %v2164
        %v7189 = vunpack.c.l.b16 %v2165
        %v7190 = vunpack.c.l.b16 %v2166
        %v7191 = vunpack.c.l.b16 %v2167
        %v7192 = vunpack.c.l.b16 %v2168
        %v7193 = vunpack.c.l.b16 %v2169
        %v7194 = vunpack.c.l.b16 %v2170
        %v7195 = vunpack.c.l.b16 %v2171
        %v7196 = vunpack.c.l.b16 %v2172
        %v7197 = vunpack.c.l.b16 %v2173
        %v7198 = vunpack.c.l.b16 %v2174
        %v7199 = vunpack.c.l.b16 %v2175
        %v7200 = vunpack.c.l.b16 %v2176
        %v7201 = vunpack.c.l.b16 %v2177
        %v7202 = vunpack.c.l.b16 %v2178
        %v7203 = vunpack.c.l.b16 %v2179
        %v7204 = vunpack.c.l.b16 %v2180
        %v7205 = vunpack.c.l.b16 %v2181
        %v7206 = vunpack.c.l.b16 %v2182
        %v7207 = vunpack.c.l.b16 %v2183
        %v7208 = vunpack.c.l.b16 %v2184
        %v7209 = vunpack.c.l.b16 %v2185
        %v7210 = vunpack.c.l.b16 %v2186
        %v7211 = vunpack.c.l.b16 %v2187
        %v7212 = vunpack.c.l.b16 %v2188
        %v7213 = vunpack.c.l.b16 %v2189
        %v7214 = vunpack.c.l.b16 %v2190
        %v7215 = vunpack.c.l.b16 %v2191
        %v7216 = vunpack.c.l.b16 %v2192
        %v7217 = vunpack.c.l.b16 %v2193
        %v7218 = vunpack.c.l.b16 %v2194
        %v7219 = vunpack.c.l.b16 %v2195
        %v7220 = vunpack.c.l.b16 %v2196
        %v7221 = vunpack.c.l.b16 %v2197
        %v7222 = vunpack.c.l.b16 %v2198
        %v7223 = vunpack.c.l.b16 %v2199
        %v7224 = vunpack.c.l.b16 %v2200
        %v7225 = vunpack.c.l.b16 %v2201
        %v7226 = vunpack.c.l.b16 %v2202
        %v7227 = vunpack.c.l.b16 %v2203
        %v7228 = vunpack.c.l.b16 %v2204
        %v7229 = vunpack.c.l.b16 %v2205
        %v7230 = vunpack.c.l.b16 %v2206
        %v7231 = vunpack.c.l.b16 %v2207
        %v7232 = vunpack.c.l.b16 %v2208
        %v7233 = vunpack.c.l.b16 %v2209
        %v7234 = vunpack.c.l.b16 %v2210
        %v7235 = vunpack.c.l.b16 %v2211
        %v7236 = vunpack.c.l.b16 %v2212
        %v7237 = vunpack.c.l.b16 %v2213
        %v7238 = vunpack.c.l.b16 %v2214
        %v7239 = vunpack.c.l.b16 %v2215
        %v7240 = vunpack.c.l.b16 %v2216
        %v7241 = vunpack.c.l.b16 %v2217
        %v7242 = vunpack.c.l.b16 %v2218
        %v7243 = vunpack.c.l.b16 %v2219
        %v7244 = vunpack.c.l.b16 %v2220
        %v7245 = vunpack.c.l.b16 %v2221
        %v7246 = vunpack.c.l.b16 %v2222
        %v7247 = vunpack.c.l.b16 %v2223
        %v7248 = vunpack.c.l.b16 %v2224
        %v7249 = vunpack.c.l.b16 %v2225
        %v7250 = vunpack.c.l.b16 %v2226
        %v7251 = vunpack.c.l.b16 %v2227
        %v7252 = vunpack.c.l.b16 %v2228
        %v7253 = vunpack.c.l.b16 %v2229
        %v7254 = vunpack.c.l.b16 %v2230
        %v7255 = vunpack.c.l.b16 %v2231
        %v7256 = vunpack.c.l.b16 %v2232
        %v7257 = vunpack.c.l.b16 %v2233
        %v7258 = vunpack.c.l.b16 %v2234
        %v7259 = vunpack.c.l.b16 %v2235
        %v7260 = vunpack.c.l.b16 %v2236
        %v7261 = vunpack.c.l.b16 %v2237
        %v7262 = vunpack.c.l.b16 %v2238
        %v7263 = vunpack.c.l.b16 %v2239
        %v7264 = vunpack.c.l.b16 %v2240
        %v7265 = vunpack.c.l.b16 %v2241
        %v7266 = vunpack.c.l.b16 %v2242
        %v7267 = vunpack.c.l.b16 %v2243
        %v7268 = vunpack.c.l.b16 %v2244
        %v7269 = vunpack.c.l.b16 %v2245
        %v7270 = vunpack.c.l.b16 %v2246
        %v7271 = vunpack.c.l.b16 %v2247
        %v7272 = vunpack.c.l.b16 %v2248
        %v7273 = vunpack.c.l.b16 %v2249
        %v7274 = vunpack.c.l.b16 %v2250
        %v7275 = vunpack.c.l.b16 %v2251
        %v7276 = vunpack.c.l.b16 %v2252
        %v7277 = vunpack.c.l.b16 %v2253
        %v7278 = vunpack.c.l.b16 %v2254
        %v7279 = vunpack.c.l.b16 %v2255
        %v7280 = vunpack.c.l.b16 %v2256
        %v7281 = vunpack.c.l.b16 %v2257
        %v7282 = vunpack.c.l.b16 %v2258
        %v7283 = vunpack.c.l.b16 %v2259
        %v7284 = vunpack.c.l.b16 %v2260
        %v7285 = vunpack.c.l.b16 %v2261
        %v7286 = vunpack.c.l.b16 %v2262
        %v7287 = vunpack.c.l.b16 %v2263
        %v7288 = vunpack.c.l.b16 %v2264
        %v7289 = vunpack.c.l.b16 %v2265
        %v7290 = vunpack.c.l.b16 %v2266
        %v7291 = vunpack.c.l.b16 %v2267
        %v7292 = vunpack.c.l.b16 %v2268
        %v7293 = vunpack.c.l.b16 %v2269
        %v7294 = vunpack.c.l.b16 %v2270
        %v7295 = vunpack.c.l.b16 %v2271
        %v7296 = vunpack.c.l.b16 %v2272
        %v7297 = vunpack.c.l.b16 %v2273
        %v7298 = vunpack.c.l.b16 %v2274
        %v7299 = vunpack.c.l.b16 %v2275
        %v7300 = vunpack.c.l.b16 %v2276
        %v7301 = vunpack.c.l.b16 %v2277
        %v7302 = vunpack.c.l.b16 %v2278
        %v7303 = vunpack.c.l.b16 %v2279
        %v7304 = vunpack.c.l.b16 %v2280
        %v7305 = vunpack.c.l.b16 %v2281
        %v7306 = vunpack.c.l.b16 %v2282
        %v7307 = vunpack.c.l.b16 %v2283
        %v7308 = vunpack.c.l.b16 %v2284
        %v7309 = vunpack.c.l.b16 %v2285
        %v7310 = vunpack.c.l.b16 %v2286
        %v7311 = vunpack.c.l.b16 %v2287
        %v7312 = vpack.c.b16 %v5265, %v5264
        %v7313 = vpack.c.b16 %v5267, %v5266
        %v7314 = vpack.c.b16 %v5269, %v5268
        %v7315 = vpack.c.b16 %v5271, %v5270
        %v7316 = vpack.c.b16 %v5273, %v5272
        %v7317 = vpack.c.b16 %v5275, %v5274
        %v7318 = vpack.c.b16 %v5277, %v5276
        %v7319 = vpack.c.b16 %v5279, %v5278
        %v7320 = vpack.c.b16 %v5281, %v5280
        %v7321 = vpack.c.b16 %v5283, %v5282
        %v7322 = vpack.c.b16 %v5285, %v5284
        %v7323 = vpack.c.b16 %v5287, %v5286
        %v7324 = vpack.c.b16 %v5289, %v5288
        %v7325 = vpack.c.b16 %v5291, %v5290
        %v7326 = vpack.c.b16 %v5293, %v5292
        %v7327 = vpack.c.b16 %v5295, %v5294
        %v7328 = vpack.c.b16 %v5297, %v5296
        %v7329 = vpack.c.b16 %v5299, %v5298
        %v7330 = vpack.c.b16 %v5301, %v5300
        %v7331 = vpack.c.b16 %v5303, %v5302
        %v7332 = vpack.c.b16 %v5305, %v5304
        %v7333 = vpack.c.b16 %v5307, %v5306
        %v7334 = vpack.c.b16 %v5309, %v5308
        %v7335 = vpack.c.b16 %v5311, %v5310
        %v7336 = vpack.c.b16 %v5313, %v5312
        %v7337 = vpack.c.b16 %v5315, %v5314
        %v7338 = vpack.c.b16 %v5317, %v5316
        %v7339 = vpack.c.b16 %v5319, %v5318
        %v7340 = vpack.c.b16 %v5321, %v5320
        %v7341 = vpack.c.b16 %v5323, %v5322
        %v7342 = vpack.c.b16 %v5325, %v5324
        %v7343 = vpack.c.b16 %v5327, %v5326
        %v7344 = vpack.c.b16 %v5329, %v5328
        %v7345 = vpack.c.b16 %v5331, %v5330
        %v7346 = vpack.c.b16 %v5333, %v5332
        %v7347 = vpack.c.b16 %v5335, %v5334
        %v7348 = vpack.c.b16 %v5337, %v5336
        %v7349 = vpack.c.b16 %v5339, %v5338
        %v7350 = vpack.c.b16 %v5341, %v5340
        %v7351 = vpack.c.b16 %v5343, %v5342
        %v7352 = vpack.c.b16 %v5345, %v5344
        %v7353 = vpack.c.b16 %v5347, %v5346
        %v7354 = vpack.c.b16 %v5349, %v5348
        %v7355 = vpack.c.b16 %v5351, %v5350
        %v7356 = vpack.c.b16 %v5353, %v5352
        %v7357 = vpack.c.b16 %v5355, %v5354
        %v7358 = vpack.c.b16 %v5357, %v5356
        %v7359 = vpack.c.b16 %v5359, %v5358
        %v7360 = vpack.c.b16 %v5361, %v5360
        %v7361 = vpack.c.b16 %v5363, %v5362
        %v7362 = vpack.c.b16 %v5365, %v5364
        %v7363 = vpack.c.b16 %v5367, %v5366
        %v7364 = vpack.c.b16 %v5369, %v5368
        %v7365 = vpack.c.b16 %v5371, %v5370
        %v7366 = vpack.c.b16 %v5373, %v5372
        %v7367 = vpack.c.b16 %v5375, %v5374
        %v7368 = vpack.c.b16 %v5377, %v5376
        %v7369 = vpack.c.b16 %v5379, %v5378
        %v7370 = vpack.c.b16 %v5381, %v5380
        %v7371 = vpack.c.b16 %v5383, %v5382
        %v7372 = vpack.c.b16 %v5385, %v5384
        %v7373 = vpack.c.b16 %v5387, %v5386
        %v7374 = vpack.c.b16 %v5389, %v5388
        %v7375 = vpack.c.b16 %v5391, %v5390
        %v7376 = vpack.c.b16 %v5393, %v5392
        %v7377 = vpack.c.b16 %v5395, %v5394
        %v7378 = vpack.c.b16 %v5397, %v5396
        %v7379 = vpack.c.b16 %v5399, %v5398
        %v7380 = vpack.c.b16 %v5401, %v5400
        %v7381 = vpack.c.b16 %v5403, %v5402
        %v7382 = vpack.c.b16 %v5405, %v5404
        %v7383 = vpack.c.b16 %v5407, %v5406
        %v7384 = vpack.c.b16 %v5409, %v5408
        %v7385 = vpack.c.b16 %v5411, %v5410
        %v7386 = vpack.c.b16 %v5413, %v5412
        %v7387 = vpack.c.b16 %v5415, %v5414
        %v7388 = vpack.c.b16 %v5417, %v5416
        %v7389 = vpack.c.b16 %v5419, %v5418
        %v7390 = vpack.c.b16 %v5421, %v5420
        %v7391 = vpack.c.b16 %v5423, %v5422
        %v7392 = vpack.c.b16 %v5425, %v5424
        %v7393 = vpack.c.b16 %v5427, %v5426
        %v7394 = vpack.c.b16 %v5429, %v5428
        %v7395 = vpack.c.b16 %v5431, %v5430
        %v7396 = vpack.c.b16 %v5433, %v5432
        %v7397 = vpack.c.b16 %v5435, %v5434
        %v7398 = vpack.c.b16 %v5437, %v5436
        %v7399 = vpack.c.b16 %v5439, %v5438
        %v7400 = vpack.c.b16 %v5441, %v5440
        %v7401 = vpack.c.b16 %v5443, %v5442
        %v7402 = vpack.c.b16 %v5445, %v5444
        %v7403 = vpack.c.b16 %v5447, %v5446
        %v7404 = vpack.c.b16 %v5449, %v5448
        %v7405 = vpack.c.b16 %v5451, %v5450
        %v7406 = vpack.c.b16 %v5453, %v5452
        %v7407 = vpack.c.b16 %v5455, %v5454
        %v7408 = vpack.c.b16 %v5457, %v5456
        %v7409 = vpack.c.b16 %v5459, %v5458
        %v7410 = vpack.c.b16 %v5461, %v5460
        %v7411 = vpack.c.b16 %v5463, %v5462
        %v7412 = vpack.c.b16 %v5465, %v5464
        %v7413 = vpack.c.b16 %v5467, %v5466
        %v7414 = vpack.c.b16 %v5469, %v5468
        %v7415 = vpack.c.b16 %v5471, %v5470
        %v7416 = vpack.c.b16 %v5473, %v5472
        %v7417 = vpack.c.b16 %v5475, %v5474
        %v7418 = vpack.c.b16 %v5477, %v5476
        %v7419 = vpack.c.b16 %v5479, %v5478
        %v7420 = vpack.c.b16 %v5481, %v5480
        %v7421 = vpack.c.b16 %v5483, %v5482
        %v7422 = vpack.c.b16 %v5485, %v5484
        %v7423 = vpack.c.b16 %v5487, %v5486
        %v7424 = vpack.c.b16 %v5489, %v5488
        %v7425 = vpack.c.b16 %v5491, %v5490
        %v7426 = vpack.c.b16 %v5493, %v5492
        %v7427 = vpack.c.b16 %v5495, %v5494
        %v7428 = vpack.c.b16 %v5497, %v5496
        %v7429 = vpack.c.b16 %v5499, %v5498
        %v7430 = vpack.c.b16 %v5501, %v5500
        %v7431 = vpack.c.b16 %v5503, %v5502
        %v7432 = vpack.c.b16 %v5505, %v5504
        %v7433 = vpack.c.b16 %v5507, %v5506
        %v7434 = vpack.c.b16 %v5509, %v5508
        %v7435 = vpack.c.b16 %v5511, %v5510
        %v7436 = vpack.c.b16 %v5513, %v5512
        %v7437 = vpack.c.b16 %v5515, %v5514
        %v7438 = vpack.c.b16 %v5517, %v5516
        %v7439 = vpack.c.b16 %v5519, %v5518
        %v7440 = vpack.c.b16 %v5521, %v5520
        %v7441 = vpack.c.b16 %v5523, %v5522
        %v7442 = vpack.c.b16 %v5525, %v5524
        %v7443 = vpack.c.b16 %v5527, %v5526
        %v7444 = vpack.c.b16 %v5529, %v5528
        %v7445 = vpack.c.b16 %v5531, %v5530
        %v7446 = vpack.c.b16 %v5533, %v5532
        %v7447 = vpack.c.b16 %v5535, %v5534
        %v7448 = vpack.c.b16 %v5537, %v5536
        %v7449 = vpack.c.b16 %v5539, %v5538
        %v7450 = vpack.c.b16 %v5541, %v5540
        %v7451 = vpack.c.b16 %v5543, %v5542
        %v7452 = vpack.c.b16 %v5545, %v5544
        %v7453 = vpack.c.b16 %v5547, %v5546
        %v7454 = vpack.c.b16 %v5549, %v5548
        %v7455 = vpack.c.b16 %v5551, %v5550
        %v7456 = vpack.c.b16 %v5553, %v5552
        %v7457 = vpack.c.b16 %v5555, %v5554
        %v7458 = vpack.c.b16 %v5557, %v5556
        %v7459 = vpack.c.b16 %v5559, %v5558
        %v7460 = vpack.c.b16 %v5561, %v5560
        %v7461 = vpack.c.b16 %v5563, %v5562
        %v7462 = vpack.c.b16 %v5565, %v5564
        %v7463 = vpack.c.b16 %v5567, %v5566
        %v7464 = vpack.c.b16 %v5569, %v5568
        %v7465 = vpack.c.b16 %v5571, %v5570
        %v7466 = vpack.c.b16 %v5573, %v5572
        %v7467 = vpack.c.b16 %v5575, %v5574
        %v7468 = vpack.c.b16 %v5577, %v5576
        %v7469 = vpack.c.b16 %v5579, %v5578
        %v7470 = vpack.c.b16 %v5581, %v5580
        %v7471 = vpack.c.b16 %v5583, %v5582
        %v7472 = vpack.c.b16 %v5585, %v5584
        %v7473 = vpack.c.b16 %v5587, %v5586
        %v7474 = vpack.c.b16 %v5589, %v5588
        %v7475 = vpack.c.b16 %v5591, %v5590
        %v7476 = vpack.c.b16 %v5593, %v5592
        %v7477 = vpack.c.b16 %v5595, %v5594
        %v7478 = vpack.c.b16 %v5597, %v5596
        %v7479 = vpack.c.b16 %v5599, %v5598
        %v7480 = vpack.c.b16 %v5601, %v5600
        %v7481 = vpack.c.b16 %v5603, %v5602
        %v7482 = vpack.c.b16 %v5605, %v5604
        %v7483 = vpack.c.b16 %v5607, %v5606
        %v7484 = vpack.c.b16 %v5609, %v5608
        %v7485 = vpack.c.b16 %v5611, %v5610
        %v7486 = vpack.c.b16 %v5613, %v5612
        %v7487 = vpack.c.b16 %v5615, %v5614
        %v7488 = vpack.c.b16 %v5617, %v5616
        %v7489 = vpack.c.b16 %v5619, %v5618
        %v7490 = vpack.c.b16 %v5621, %v5620
        %v7491 = vpack.c.b16 %v5623, %v5622
        %v7492 = vpack.c.b16 %v5625, %v5624
        %v7493 = vpack.c.b16 %v5627, %v5626
        %v7494 = vpack.c.b16 %v5629, %v5628
        %v7495 = vpack.c.b16 %v5631, %v5630
        %v7496 = vpack.c.b16 %v5633, %v5632
        %v7497 = vpack.c.b16 %v5635, %v5634
        %v7498 = vpack.c.b16 %v5637, %v5636
        %v7499 = vpack.c.b16 %v5639, %v5638
        %v7500 = vpack.c.b16 %v5641, %v5640
        %v7501 = vpack.c.b16 %v5643, %v5642
        %v7502 = vpack.c.b16 %v5645, %v5644
        %v7503 = vpack.c.b16 %v5647, %v5646
        %v7504 = vpack.c.b16 %v5649, %v5648
        %v7505 = vpack.c.b16 %v5651, %v5650
        %v7506 = vpack.c.b16 %v5653, %v5652
        %v7507 = vpack.c.b16 %v5655, %v5654
        %v7508 = vpack.c.b16 %v5657, %v5656
        %v7509 = vpack.c.b16 %v5659, %v5658
        %v7510 = vpack.c.b16 %v5661, %v5660
        %v7511 = vpack.c.b16 %v5663, %v5662
        %v7512 = vpack.c.b16 %v5665, %v5664
        %v7513 = vpack.c.b16 %v5667, %v5666
        %v7514 = vpack.c.b16 %v5669, %v5668
        %v7515 = vpack.c.b16 %v5671, %v5670
        %v7516 = vpack.c.b16 %v5673, %v5672
        %v7517 = vpack.c.b16 %v5675, %v5674
        %v7518 = vpack.c.b16 %v5677, %v5676
        %v7519 = vpack.c.b16 %v5679, %v5678
        %v7520 = vpack.c.b16 %v5681, %v5680
        %v7521 = vpack.c.b16 %v5683, %v5682
        %v7522 = vpack.c.b16 %v5685, %v5684
        %v7523 = vpack.c.b16 %v5687, %v5686
        %v7524 = vpack.c.b16 %v5689, %v5688
        %v7525 = vpack.c.b16 %v5691, %v5690
        %v7526 = vpack.c.b16 %v5693, %v5692
        %v7527 = vpack.c.b16 %v5695, %v5694
        %v7528 = vpack.c.b16 %v5697, %v5696
        %v7529 = vpack.c.b16 %v5699, %v5698
        %v7530 = vpack.c.b16 %v5701, %v5700
        %v7531 = vpack.c.b16 %v5703, %v5702
        %v7532 = vpack.c.b16 %v5705, %v5704
        %v7533 = vpack.c.b16 %v5707, %v5706
        %v7534 = vpack.c.b16 %v5709, %v5708
        %v7535 = vpack.c.b16 %v5711, %v5710
        %v7536 = vpack.c.b16 %v5713, %v5712
        %v7537 = vpack.c.b16 %v5715, %v5714
        %v7538 = vpack.c.b16 %v5717, %v5716
        %v7539 = vpack.c.b16 %v5719, %v5718
        %v7540 = vpack.c.b16 %v5721, %v5720
        %v7541 = vpack.c.b16 %v5723, %v5722
        %v7542 = vpack.c.b16 %v5725, %v5724
        %v7543 = vpack.c.b16 %v5727, %v5726
        %v7544 = vpack.c.b16 %v5729, %v5728
        %v7545 = vpack.c.b16 %v5731, %v5730
        %v7546 = vpack.c.b16 %v5733, %v5732
        %v7547 = vpack.c.b16 %v5735, %v5734
        %v7548 = vpack.c.b16 %v5737, %v5736
        %v7549 = vpack.c.b16 %v5739, %v5738
        %v7550 = vpack.c.b16 %v5741, %v5740
        %v7551 = vpack.c.b16 %v5743, %v5742
        %v7552 = vpack.c.b16 %v5745, %v5744
        %v7553 = vpack.c.b16 %v5747, %v5746
        %v7554 = vpack.c.b16 %v5749, %v5748
        %v7555 = vpack.c.b16 %v5751, %v5750
        %v7556 = vpack.c.b16 %v5753, %v5752
        %v7557 = vpack.c.b16 %v5755, %v5754
        %v7558 = vpack.c.b16 %v5757, %v5756
        %v7559 = vpack.c.b16 %v5759, %v5758
        %v7560 = vpack.c.b16 %v5761, %v5760
        %v7561 = vpack.c.b16 %v5763, %v5762
        %v7562 = vpack.c.b16 %v5765, %v5764
        %v7563 = vpack.c.b16 %v5767, %v5766
        %v7564 = vpack.c.b16 %v5769, %v5768
        %v7565 = vpack.c.b16 %v5771, %v5770
        %v7566 = vpack.c.b16 %v5773, %v5772
        %v7567 = vpack.c.b16 %v5775, %v5774
        %v7568 = vpack.c.b16 %v5777, %v5776
        %v7569 = vpack.c.b16 %v5779, %v5778
        %v7570 = vpack.c.b16 %v5781, %v5780
        %v7571 = vpack.c.b16 %v5783, %v5782
        %v7572 = vpack.c.b16 %v5785, %v5784
        %v7573 = vpack.c.b16 %v5787, %v5786
        %v7574 = vpack.c.b16 %v5789, %v5788
        %v7575 = vpack.c.b16 %v5791, %v5790
        %v7576 = vpack.c.b16 %v5793, %v5792
        %v7577 = vpack.c.b16 %v5795, %v5794
        %v7578 = vpack.c.b16 %v5797, %v5796
        %v7579 = vpack.c.b16 %v5799, %v5798
        %v7580 = vpack.c.b16 %v5801, %v5800
        %v7581 = vpack.c.b16 %v5803, %v5802
        %v7582 = vpack.c.b16 %v5805, %v5804
        %v7583 = vpack.c.b16 %v5807, %v5806
        %v7584 = vpack.c.b16 %v5809, %v5808
        %v7585 = vpack.c.b16 %v5811, %v5810
        %v7586 = vpack.c.b16 %v5813, %v5812
        %v7587 = vpack.c.b16 %v5815, %v5814
        %v7588 = vpack.c.b16 %v5817, %v5816
        %v7589 = vpack.c.b16 %v5819, %v5818
        %v7590 = vpack.c.b16 %v5821, %v5820
        %v7591 = vpack.c.b16 %v5823, %v5822
        %v7592 = vpack.c.b16 %v5825, %v5824
        %v7593 = vpack.c.b16 %v5827, %v5826
        %v7594 = vpack.c.b16 %v5829, %v5828
        %v7595 = vpack.c.b16 %v5831, %v5830
        %v7596 = vpack.c.b16 %v5833, %v5832
        %v7597 = vpack.c.b16 %v5835, %v5834
        %v7598 = vpack.c.b16 %v5837, %v5836
        %v7599 = vpack.c.b16 %v5839, %v5838
        %v7600 = vpack.c.b16 %v5841, %v5840
        %v7601 = vpack.c.b16 %v5843, %v5842
        %v7602 = vpack.c.b16 %v5845, %v5844
        %v7603 = vpack.c.b16 %v5847, %v5846
        %v7604 = vpack.c.b16 %v5849, %v5848
        %v7605 = vpack.c.b16 %v5851, %v5850
        %v7606 = vpack.c.b16 %v5853, %v5852
        %v7607 = vpack.c.b16 %v5855, %v5854
        %v7608 = vpack.c.b16 %v5857, %v5856
        %v7609 = vpack.c.b16 %v5859, %v5858
        %v7610 = vpack.c.b16 %v5861, %v5860
        %v7611 = vpack.c.b16 %v5863, %v5862
        %v7612 = vpack.c.b16 %v5865, %v5864
        %v7613 = vpack.c.b16 %v5867, %v5866
        %v7614 = vpack.c.b16 %v5869, %v5868
        %v7615 = vpack.c.b16 %v5871, %v5870
        %v7616 = vpack.c.b16 %v5873, %v5872
        %v7617 = vpack.c.b16 %v5875, %v5874
        %v7618 = vpack.c.b16 %v5877, %v5876
        %v7619 = vpack.c.b16 %v5879, %v5878
        %v7620 = vpack.c.b16 %v5881, %v5880
        %v7621 = vpack.c.b16 %v5883, %v5882
        %v7622 = vpack.c.b16 %v5885, %v5884
        %v7623 = vpack.c.b16 %v5887, %v5886
        %v7624 = vpack.c.b16 %v5889, %v5888
        %v7625 = vpack.c.b16 %v5891, %v5890
        %v7626 = vpack.c.b16 %v5893, %v5892
        %v7627 = vpack.c.b16 %v5895, %v5894
        %v7628 = vpack.c.b16 %v5897, %v5896
        %v7629 = vpack.c.b16 %v5899, %v5898
        %v7630 = vpack.c.b16 %v5901, %v5900
        %v7631 = vpack.c.b16 %v5903, %v5902
        %v7632 = vpack.c.b16 %v5905, %v5904
        %v7633 = vpack.c.b16 %v5907, %v5906
        %v7634 = vpack.c.b16 %v5909, %v5908
        %v7635 = vpack.c.b16 %v5911, %v5910
        %v7636 = vpack.c.b16 %v5913, %v5912
        %v7637 = vpack.c.b16 %v5915, %v5914
        %v7638 = vpack.c.b16 %v5917, %v5916
        %v7639 = vpack.c.b16 %v5919, %v5918
        %v7640 = vpack.c.b16 %v5921, %v5920
        %v7641 = vpack.c.b16 %v5923, %v5922
        %v7642 = vpack.c.b16 %v5925, %v5924
        %v7643 = vpack.c.b16 %v5927, %v5926
        %v7644 = vpack.c.b16 %v5929, %v5928
        %v7645 = vpack.c.b16 %v5931, %v5930
        %v7646 = vpack.c.b16 %v5933, %v5932
        %v7647 = vpack.c.b16 %v5935, %v5934
        %v7648 = vpack.c.b16 %v5937, %v5936
        %v7649 = vpack.c.b16 %v5939, %v5938
        %v7650 = vpack.c.b16 %v5941, %v5940
        %v7651 = vpack.c.b16 %v5943, %v5942
        %v7652 = vpack.c.b16 %v5945, %v5944
        %v7653 = vpack.c.b16 %v5947, %v5946
        %v7654 = vpack.c.b16 %v5949, %v5948
        %v7655 = vpack.c.b16 %v5951, %v5950
        %v7656 = vpack.c.b16 %v5953, %v5952
        %v7657 = vpack.c.b16 %v5955, %v5954
        %v7658 = vpack.c.b16 %v5957, %v5956
        %v7659 = vpack.c.b16 %v5959, %v5958
        %v7660 = vpack.c.b16 %v5961, %v5960
        %v7661 = vpack.c.b16 %v5963, %v5962
        %v7662 = vpack.c.b16 %v5965, %v5964
        %v7663 = vpack.c.b16 %v5967, %v5966
        %v7664 = vpack.c.b16 %v5969, %v5968
        %v7665 = vpack.c.b16 %v5971, %v5970
        %v7666 = vpack.c.b16 %v5973, %v5972
        %v7667 = vpack.c.b16 %v5975, %v5974
        %v7668 = vpack.c.b16 %v5977, %v5976
        %v7669 = vpack.c.b16 %v5979, %v5978
        %v7670 = vpack.c.b16 %v5981, %v5980
        %v7671 = vpack.c.b16 %v5983, %v5982
        %v7672 = vpack.c.b16 %v5985, %v5984
        %v7673 = vpack.c.b16 %v5987, %v5986
        %v7674 = vpack.c.b16 %v5989, %v5988
        %v7675 = vpack.c.b16 %v5991, %v5990
        %v7676 = vpack.c.b16 %v5993, %v5992
        %v7677 = vpack.c.b16 %v5995, %v5994
        %v7678 = vpack.c.b16 %v5997, %v5996
        %v7679 = vpack.c.b16 %v5999, %v5998
        %v7680 = vpack.c.b16 %v6001, %v6000
        %v7681 = vpack.c.b16 %v6003, %v6002
        %v7682 = vpack.c.b16 %v6005, %v6004
        %v7683 = vpack.c.b16 %v6007, %v6006
        %v7684 = vpack.c.b16 %v6009, %v6008
        %v7685 = vpack.c.b16 %v6011, %v6010
        %v7686 = vpack.c.b16 %v6013, %v6012
        %v7687 = vpack.c.b16 %v6015, %v6014
        %v7688 = vpack.c.b16 %v6017, %v6016
        %v7689 = vpack.c.b16 %v6019, %v6018
        %v7690 = vpack.c.b16 %v6021, %v6020
        %v7691 = vpack.c.b16 %v6023, %v6022
        %v7692 = vpack.c.b16 %v6025, %v6024
        %v7693 = vpack.c.b16 %v6027, %v6026
        %v7694 = vpack.c.b16 %v6029, %v6028
        %v7695 = vpack.c.b16 %v6031, %v6030
        %v7696 = vpack.c.b16 %v6033, %v6032
        %v7697 = vpack.c.b16 %v6035, %v6034
        %v7698 = vpack.c.b16 %v6037, %v6036
        %v7699 = vpack.c.b16 %v6039, %v6038
        %v7700 = vpack.c.b16 %v6041, %v6040
        %v7701 = vpack.c.b16 %v6043, %v6042
        %v7702 = vpack.c.b16 %v6045, %v6044
        %v7703 = vpack.c.b16 %v6047, %v6046
        %v7704 = vpack.c.b16 %v6049, %v6048
        %v7705 = vpack.c.b16 %v6051, %v6050
        %v7706 = vpack.c.b16 %v6053, %v6052
        %v7707 = vpack.c.b16 %v6055, %v6054
        %v7708 = vpack.c.b16 %v6057, %v6056
        %v7709 = vpack.c.b16 %v6059, %v6058
        %v7710 = vpack.c.b16 %v6061, %v6060
        %v7711 = vpack.c.b16 %v6063, %v6062
        %v7712 = vpack.c.b16 %v6065, %v6064
        %v7713 = vpack.c.b16 %v6067, %v6066
        %v7714 = vpack.c.b16 %v6069, %v6068
        %v7715 = vpack.c.b16 %v6071, %v6070
        %v7716 = vpack.c.b16 %v6073, %v6072
        %v7717 = vpack.c.b16 %v6075, %v6074
        %v7718 = vpack.c.b16 %v6077, %v6076
        %v7719 = vpack.c.b16 %v6079, %v6078
        %v7720 = vpack.c.b16 %v6081, %v6080
        %v7721 = vpack.c.b16 %v6083, %v6082
        %v7722 = vpack.c.b16 %v6085, %v6084
        %v7723 = vpack.c.b16 %v6087, %v6086
        %v7724 = vpack.c.b16 %v6089, %v6088
        %v7725 = vpack.c.b16 %v6091, %v6090
        %v7726 = vpack.c.b16 %v6093, %v6092
        %v7727 = vpack.c.b16 %v6095, %v6094
        %v7728 = vpack.c.b16 %v6097, %v6096
        %v7729 = vpack.c.b16 %v6099, %v6098
        %v7730 = vpack.c.b16 %v6101, %v6100
        %v7731 = vpack.c.b16 %v6103, %v6102
        %v7732 = vpack.c.b16 %v6105, %v6104
        %v7733 = vpack.c.b16 %v6107, %v6106
        %v7734 = vpack.c.b16 %v6109, %v6108
        %v7735 = vpack.c.b16 %v6111, %v6110
        %v7736 = vpack.c.b16 %v6113, %v6112
        %v7737 = vpack.c.b16 %v6115, %v6114
        %v7738 = vpack.c.b16 %v6117, %v6116
        %v7739 = vpack.c.b16 %v6119, %v6118
        %v7740 = vpack.c.b16 %v6121, %v6120
        %v7741 = vpack.c.b16 %v6123, %v6122
        %v7742 = vpack.c.b16 %v6125, %v6124
        %v7743 = vpack.c.b16 %v6127, %v6126
        %v7744 = vpack.c.b16 %v6129, %v6128
        %v7745 = vpack.c.b16 %v6131, %v6130
        %v7746 = vpack.c.b16 %v6133, %v6132
        %v7747 = vpack.c.b16 %v6135, %v6134
        %v7748 = vpack.c.b16 %v6137, %v6136
        %v7749 = vpack.c.b16 %v6139, %v6138
        %v7750 = vpack.c.b16 %v6141, %v6140
        %v7751 = vpack.c.b16 %v6143, %v6142
        %v7752 = vpack.c.b16 %v6145, %v6144
        %v7753 = vpack.c.b16 %v6147, %v6146
        %v7754 = vpack.c.b16 %v6149, %v6148
        %v7755 = vpack.c.b16 %v6151, %v6150
        %v7756 = vpack.c.b16 %v6153, %v6152
        %v7757 = vpack.c.b16 %v6155, %v6154
        %v7758 = vpack.c.b16 %v6157, %v6156
        %v7759 = vpack.c.b16 %v6159, %v6158
        %v7760 = vpack.c.b16 %v6161, %v6160
        %v7761 = vpack.c.b16 %v6163, %v6162
        %v7762 = vpack.c.b16 %v6165, %v6164
        %v7763 = vpack.c.b16 %v6167, %v6166
        %v7764 = vpack.c.b16 %v6169, %v6168
        %v7765 = vpack.c.b16 %v6171, %v6170
        %v7766 = vpack.c.b16 %v6173, %v6172
        %v7767 = vpack.c.b16 %v6175, %v6174
        %v7768 = vpack.c.b16 %v6177, %v6176
        %v7769 = vpack.c.b16 %v6179, %v6178
        %v7770 = vpack.c.b16 %v6181, %v6180
        %v7771 = vpack.c.b16 %v6183, %v6182
        %v7772 = vpack.c.b16 %v6185, %v6184
        %v7773 = vpack.c.b16 %v6187, %v6186
        %v7774 = vpack.c.b16 %v6189, %v6188
        %v7775 = vpack.c.b16 %v6191, %v6190
        %v7776 = vpack.c.b16 %v6193, %v6192
        %v7777 = vpack.c.b16 %v6195, %v6194
        %v7778 = vpack.c.b16 %v6197, %v6196
        %v7779 = vpack.c.b16 %v6199, %v6198
        %v7780 = vpack.c.b16 %v6201, %v6200
        %v7781 = vpack.c.b16 %v6203, %v6202
        %v7782 = vpack.c.b16 %v6205, %v6204
        %v7783 = vpack.c.b16 %v6207, %v6206
        %v7784 = vpack.c.b16 %v6209, %v6208
        %v7785 = vpack.c.b16 %v6211, %v6210
        %v7786 = vpack.c.b16 %v6213, %v6212
        %v7787 = vpack.c.b16 %v6215, %v6214
        %v7788 = vpack.c.b16 %v6217, %v6216
        %v7789 = vpack.c.b16 %v6219, %v6218
        %v7790 = vpack.c.b16 %v6221, %v6220
        %v7791 = vpack.c.b16 %v6223, %v6222
        %v7792 = vpack.c.b16 %v6225, %v6224
        %v7793 = vpack.c.b16 %v6227, %v6226
        %v7794 = vpack.c.b16 %v6229, %v6228
        %v7795 = vpack.c.b16 %v6231, %v6230
        %v7796 = vpack.c.b16 %v6233, %v6232
        %v7797 = vpack.c.b16 %v6235, %v6234
        %v7798 = vpack.c.b16 %v6237, %v6236
        %v7799 = vpack.c.b16 %v6239, %v6238
        %v7800 = vpack.c.b16 %v6241, %v6240
        %v7801 = vpack.c.b16 %v6243, %v6242
        %v7802 = vpack.c.b16 %v6245, %v6244
        %v7803 = vpack.c.b16 %v6247, %v6246
        %v7804 = vpack.c.b16 %v6249, %v6248
        %v7805 = vpack.c.b16 %v6251, %v6250
        %v7806 = vpack.c.b16 %v6253, %v6252
        %v7807 = vpack.c.b16 %v6255, %v6254
        %v7808 = vpack.c.b16 %v6257, %v6256
        %v7809 = vpack.c.b16 %v6259, %v6258
        %v7810 = vpack.c.b16 %v6261, %v6260
        %v7811 = vpack.c.b16 %v6263, %v6262
        %v7812 = vpack.c.b16 %v6265, %v6264
        %v7813 = vpack.c.b16 %v6267, %v6266
        %v7814 = vpack.c.b16 %v6269, %v6268
        %v7815 = vpack.c.b16 %v6271, %v6270
        %v7816 = vpack.c.b16 %v6273, %v6272
        %v7817 = vpack.c.b16 %v6275, %v6274
        %v7818 = vpack.c.b16 %v6277, %v6276
        %v7819 = vpack.c.b16 %v6279, %v6278
        %v7820 = vpack.c.b16 %v6281, %v6280
        %v7821 = vpack.c.b16 %v6283, %v6282
        %v7822 = vpack.c.b16 %v6285, %v6284
        %v7823 = vpack.c.b16 %v6287, %v6286
        %v7824 = vpack.c.b16 %v6289, %v6288
        %v7825 = vpack.c.b16 %v6291, %v6290
        %v7826 = vpack.c.b16 %v6293, %v6292
        %v7827 = vpack.c.b16 %v6295, %v6294
        %v7828 = vpack.c.b16 %v6297, %v6296
        %v7829 = vpack.c.b16 %v6299, %v6298
        %v7830 = vpack.c.b16 %v6301, %v6300
        %v7831 = vpack.c.b16 %v6303, %v6302
        %v7832 = vpack.c.b16 %v6305, %v6304
        %v7833 = vpack.c.b16 %v6307, %v6306
        %v7834 = vpack.c.b16 %v6309, %v6308
        %v7835 = vpack.c.b16 %v6311, %v6310
        %v7836 = vpack.c.b16 %v6313, %v6312
        %v7837 = vpack.c.b16 %v6315, %v6314
        %v7838 = vpack.c.b16 %v6317, %v6316
        %v7839 = vpack.c.b16 %v6319, %v6318
        %v7840 = vpack.c.b16 %v6321, %v6320
        %v7841 = vpack.c.b16 %v6323, %v6322
        %v7842 = vpack.c.b16 %v6325, %v6324
        %v7843 = vpack.c.b16 %v6327, %v6326
        %v7844 = vpack.c.b16 %v6329, %v6328
        %v7845 = vpack.c.b16 %v6331, %v6330
        %v7846 = vpack.c.b16 %v6333, %v6332
        %v7847 = vpack.c.b16 %v6335, %v6334
        %v7848 = vpack.c.b16 %v6337, %v6336
        %v7849 = vpack.c.b16 %v6339, %v6338
        %v7850 = vpack.c.b16 %v6341, %v6340
        %v7851 = vpack.c.b16 %v6343, %v6342
        %v7852 = vpack.c.b16 %v6345, %v6344
        %v7853 = vpack.c.b16 %v6347, %v6346
        %v7854 = vpack.c.b16 %v6349, %v6348
        %v7855 = vpack.c.b16 %v6351, %v6350
        %v7856 = vpack.c.b16 %v6353, %v6352
        %v7857 = vpack.c.b16 %v6355, %v6354
        %v7858 = vpack.c.b16 %v6357, %v6356
        %v7859 = vpack.c.b16 %v6359, %v6358
        %v7860 = vpack.c.b16 %v6361, %v6360
        %v7861 = vpack.c.b16 %v6363, %v6362
        %v7862 = vpack.c.b16 %v6365, %v6364
        %v7863 = vpack.c.b16 %v6367, %v6366
        %v7864 = vpack.c.b16 %v6369, %v6368
        %v7865 = vpack.c.b16 %v6371, %v6370
        %v7866 = vpack.c.b16 %v6373, %v6372
        %v7867 = vpack.c.b16 %v6375, %v6374
        %v7868 = vpack.c.b16 %v6377, %v6376
        %v7869 = vpack.c.b16 %v6379, %v6378
        %v7870 = vpack.c.b16 %v6381, %v6380
        %v7871 = vpack.c.b16 %v6383, %v6382
        %v7872 = vpack.c.b16 %v6385, %v6384
        %v7873 = vpack.c.b16 %v6387, %v6386
        %v7874 = vpack.c.b16 %v6389, %v6388
        %v7875 = vpack.c.b16 %v6391, %v6390
        %v7876 = vpack.c.b16 %v6393, %v6392
        %v7877 = vpack.c.b16 %v6395, %v6394
        %v7878 = vpack.c.b16 %v6397, %v6396
        %v7879 = vpack.c.b16 %v6399, %v6398
        %v7880 = vpack.c.b16 %v6401, %v6400
        %v7881 = vpack.c.b16 %v6403, %v6402
        %v7882 = vpack.c.b16 %v6405, %v6404
        %v7883 = vpack.c.b16 %v6407, %v6406
        %v7884 = vpack.c.b16 %v6409, %v6408
        %v7885 = vpack.c.b16 %v6411, %v6410
        %v7886 = vpack.c.b16 %v6413, %v6412
        %v7887 = vpack.c.b16 %v6415, %v6414
        %v7888 = vpack.c.b16 %v6417, %v6416
        %v7889 = vpack.c.b16 %v6419, %v6418
        %v7890 = vpack.c.b16 %v6421, %v6420
        %v7891 = vpack.c.b16 %v6423, %v6422
        %v7892 = vpack.c.b16 %v6425, %v6424
        %v7893 = vpack.c.b16 %v6427, %v6426
        %v7894 = vpack.c.b16 %v6429, %v6428
        %v7895 = vpack.c.b16 %v6431, %v6430
        %v7896 = vpack.c.b16 %v6433, %v6432
        %v7897 = vpack.c.b16 %v6435, %v6434
        %v7898 = vpack.c.b16 %v6437, %v6436
        %v7899 = vpack.c.b16 %v6439, %v6438
        %v7900 = vpack.c.b16 %v6441, %v6440
        %v7901 = vpack.c.b16 %v6443, %v6442
        %v7902 = vpack.c.b16 %v6445, %v6444
        %v7903 = vpack.c.b16 %v6447, %v6446
        %v7904 = vpack.c.b16 %v6449, %v6448
        %v7905 = vpack.c.b16 %v6451, %v6450
        %v7906 = vpack.c.b16 %v6453, %v6452
        %v7907 = vpack.c.b16 %v6455, %v6454
        %v7908 = vpack.c.b16 %v6457, %v6456
        %v7909 = vpack.c.b16 %v6459, %v6458
        %v7910 = vpack.c.b16 %v6461, %v6460
        %v7911 = vpack.c.b16 %v6463, %v6462
        %v7912 = vpack.c.b16 %v6465, %v6464
        %v7913 = vpack.c.b16 %v6467, %v6466
        %v7914 = vpack.c.b16 %v6469, %v6468
        %v7915 = vpack.c.b16 %v6471, %v6470
        %v7916 = vpack.c.b16 %v6473, %v6472
        %v7917 = vpack.c.b16 %v6475, %v6474
        %v7918 = vpack.c.b16 %v6477, %v6476
        %v7919 = vpack.c.b16 %v6479, %v6478
        %v7920 = vpack.c.b16 %v6481, %v6480
        %v7921 = vpack.c.b16 %v6483, %v6482
        %v7922 = vpack.c.b16 %v6485, %v6484
        %v7923 = vpack.c.b16 %v6487, %v6486
        %v7924 = vpack.c.b16 %v6489, %v6488
        %v7925 = vpack.c.b16 %v6491, %v6490
        %v7926 = vpack.c.b16 %v6493, %v6492
        %v7927 = vpack.c.b16 %v6495, %v6494
        %v7928 = vpack.c.b16 %v6497, %v6496
        %v7929 = vpack.c.b16 %v6499, %v6498
        %v7930 = vpack.c.b16 %v6501, %v6500
        %v7931 = vpack.c.b16 %v6503, %v6502
        %v7932 = vpack.c.b16 %v6505, %v6504
        %v7933 = vpack.c.b16 %v6507, %v6506
        %v7934 = vpack.c.b16 %v6509, %v6508
        %v7935 = vpack.c.b16 %v6511, %v6510
        %v7936 = vpack.c.b16 %v6513, %v6512
        %v7937 = vpack.c.b16 %v6515, %v6514
        %v7938 = vpack.c.b16 %v6517, %v6516
        %v7939 = vpack.c.b16 %v6519, %v6518
        %v7940 = vpack.c.b16 %v6521, %v6520
        %v7941 = vpack.c.b16 %v6523, %v6522
        %v7942 = vpack.c.b16 %v6525, %v6524
        %v7943 = vpack.c.b16 %v6527, %v6526
        %v7944 = vpack.c.b16 %v6529, %v6528
        %v7945 = vpack.c.b16 %v6531, %v6530
        %v7946 = vpack.c.b16 %v6533, %v6532
        %v7947 = vpack.c.b16 %v6535, %v6534
        %v7948 = vpack.c.b16 %v6537, %v6536
        %v7949 = vpack.c.b16 %v6539, %v6538
        %v7950 = vpack.c.b16 %v6541, %v6540
        %v7951 = vpack.c.b16 %v6543, %v6542
        %v7952 = vpack.c.b16 %v6545, %v6544
        %v7953 = vpack.c.b16 %v6547, %v6546
        %v7954 = vpack.c.b16 %v6549, %v6548
        %v7955 = vpack.c.b16 %v6551, %v6550
        %v7956 = vpack.c.b16 %v6553, %v6552
        %v7957 = vpack.c.b16 %v6555, %v6554
        %v7958 = vpack.c.b16 %v6557, %v6556
        %v7959 = vpack.c.b16 %v6559, %v6558
        %v7960 = vpack.c.b16 %v6561, %v6560
        %v7961 = vpack.c.b16 %v6563, %v6562
        %v7962 = vpack.c.b16 %v6565, %v6564
        %v7963 = vpack.c.b16 %v6567, %v6566
        %v7964 = vpack.c.b16 %v6569, %v6568
        %v7965 = vpack.c.b16 %v6571, %v6570
        %v7966 = vpack.c.b16 %v6573, %v6572
        %v7967 = vpack.c.b16 %v6575, %v6574
        %v7968 = vpack.c.b16 %v6577, %v6576
        %v7969 = vpack.c.b16 %v6579, %v6578
        %v7970 = vpack.c.b16 %v6581, %v6580
        %v7971 = vpack.c.b16 %v6583, %v6582
        %v7972 = vpack.c.b16 %v6585, %v6584
        %v7973 = vpack.c.b16 %v6587, %v6586
        %v7974 = vpack.c.b16 %v6589, %v6588
        %v7975 = vpack.c.b16 %v6591, %v6590
        %v7976 = vpack.c.b16 %v6593, %v6592
        %v7977 = vpack.c.b16 %v6595, %v6594
        %v7978 = vpack.c.b16 %v6597, %v6596
        %v7979 = vpack.c.b16 %v6599, %v6598
        %v7980 = vpack.c.b16 %v6601, %v6600
        %v7981 = vpack.c.b16 %v6603, %v6602
        %v7982 = vpack.c.b16 %v6605, %v6604
        %v7983 = vpack.c.b16 %v6607, %v6606
        %v7984 = vpack.c.b16 %v6609, %v6608
        %v7985 = vpack.c.b16 %v6611, %v6610
        %v7986 = vpack.c.b16 %v6613, %v6612
        %v7987 = vpack.c.b16 %v6615, %v6614
        %v7988 = vpack.c.b16 %v6617, %v6616
        %v7989 = vpack.c.b16 %v6619, %v6618
        %v7990 = vpack.c.b16 %v6621, %v6620
        %v7991 = vpack.c.b16 %v6623, %v6622
        %v7992 = vpack.c.b16 %v6625, %v6624
        %v7993 = vpack.c.b16 %v6627, %v6626
        %v7994 = vpack.c.b16 %v6629, %v6628
        %v7995 = vpack.c.b16 %v6631, %v6630
        %v7996 = vpack.c.b16 %v6633, %v6632
        %v7997 = vpack.c.b16 %v6635, %v6634
        %v7998 = vpack.c.b16 %v6637, %v6636
        %v7999 = vpack.c.b16 %v6639, %v6638
        %v8000 = vpack.c.b16 %v6641, %v6640
        %v8001 = vpack.c.b16 %v6643, %v6642
        %v8002 = vpack.c.b16 %v6645, %v6644
        %v8003 = vpack.c.b16 %v6647, %v6646
        %v8004 = vpack.c.b16 %v6649, %v6648
        %v8005 = vpack.c.b16 %v6651, %v6650
        %v8006 = vpack.c.b16 %v6653, %v6652
        %v8007 = vpack.c.b16 %v6655, %v6654
        %v8008 = vpack.c.b16 %v6657, %v6656
        %v8009 = vpack.c.b16 %v6659, %v6658
        %v8010 = vpack.c.b16 %v6661, %v6660
        %v8011 = vpack.c.b16 %v6663, %v6662
        %v8012 = vpack.c.b16 %v6665, %v6664
        %v8013 = vpack.c.b16 %v6667, %v6666
        %v8014 = vpack.c.b16 %v6669, %v6668
        %v8015 = vpack.c.b16 %v6671, %v6670
        %v8016 = vpack.c.b16 %v6673, %v6672
        %v8017 = vpack.c.b16 %v6675, %v6674
        %v8018 = vpack.c.b16 %v6677, %v6676
        %v8019 = vpack.c.b16 %v6679, %v6678
        %v8020 = vpack.c.b16 %v6681, %v6680
        %v8021 = vpack.c.b16 %v6683, %v6682
        %v8022 = vpack.c.b16 %v6685, %v6684
        %v8023 = vpack.c.b16 %v6687, %v6686
        %v8024 = vpack.c.b16 %v6689, %v6688
        %v8025 = vpack.c.b16 %v6691, %v6690
        %v8026 = vpack.c.b16 %v6693, %v6692
        %v8027 = vpack.c.b16 %v6695, %v6694
        %v8028 = vpack.c.b16 %v6697, %v6696
        %v8029 = vpack.c.b16 %v6699, %v6698
        %v8030 = vpack.c.b16 %v6701, %v6700
        %v8031 = vpack.c.b16 %v6703, %v6702
        %v8032 = vpack.c.b16 %v6705, %v6704
        %v8033 = vpack.c.b16 %v6707, %v6706
        %v8034 = vpack.c.b16 %v6709, %v6708
        %v8035 = vpack.c.b16 %v6711, %v6710
        %v8036 = vpack.c.b16 %v6713, %v6712
        %v8037 = vpack.c.b16 %v6715, %v6714
        %v8038 = vpack.c.b16 %v6717, %v6716
        %v8039 = vpack.c.b16 %v6719, %v6718
        %v8040 = vpack.c.b16 %v6721, %v6720
        %v8041 = vpack.c.b16 %v6723, %v6722
        %v8042 = vpack.c.b16 %v6725, %v6724
        %v8043 = vpack.c.b16 %v6727, %v6726
        %v8044 = vpack.c.b16 %v6729, %v6728
        %v8045 = vpack.c.b16 %v6731, %v6730
        %v8046 = vpack.c.b16 %v6733, %v6732
        %v8047 = vpack.c.b16 %v6735, %v6734
        %v8048 = vpack.c.b16 %v6737, %v6736
        %v8049 = vpack.c.b16 %v6739, %v6738
        %v8050 = vpack.c.b16 %v6741, %v6740
        %v8051 = vpack.c.b16 %v6743, %v6742
        %v8052 = vpack.c.b16 %v6745, %v6744
        %v8053 = vpack.c.b16 %v6747, %v6746
        %v8054 = vpack.c.b16 %v6749, %v6748
        %v8055 = vpack.c.b16 %v6751, %v6750
        %v8056 = vpack.c.b16 %v6753, %v6752
        %v8057 = vpack.c.b16 %v6755, %v6754
        %v8058 = vpack.c.b16 %v6757, %v6756
        %v8059 = vpack.c.b16 %v6759, %v6758
        %v8060 = vpack.c.b16 %v6761, %v6760
        %v8061 = vpack.c.b16 %v6763, %v6762
        %v8062 = vpack.c.b16 %v6765, %v6764
        %v8063 = vpack.c.b16 %v6767, %v6766
        %v8064 = vpack.c.b16 %v6769, %v6768
        %v8065 = vpack.c.b16 %v6771, %v6770
        %v8066 = vpack.c.b16 %v6773, %v6772
        %v8067 = vpack.c.b16 %v6775, %v6774
        %v8068 = vpack.c.b16 %v6777, %v6776
        %v8069 = vpack.c.b16 %v6779, %v6778
        %v8070 = vpack.c.b16 %v6781, %v6780
        %v8071 = vpack.c.b16 %v6783, %v6782
        %v8072 = vpack.c.b16 %v6785, %v6784
        %v8073 = vpack.c.b16 %v6787, %v6786
        %v8074 = vpack.c.b16 %v6789, %v6788
        %v8075 = vpack.c.b16 %v6791, %v6790
        %v8076 = vpack.c.b16 %v6793, %v6792
        %v8077 = vpack.c.b16 %v6795, %v6794
        %v8078 = vpack.c.b16 %v6797, %v6796
        %v8079 = vpack.c.b16 %v6799, %v6798
        %v8080 = vpack.c.b16 %v6801, %v6800
        %v8081 = vpack.c.b16 %v6803, %v6802
        %v8082 = vpack.c.b16 %v6805, %v6804
        %v8083 = vpack.c.b16 %v6807, %v6806
        %v8084 = vpack.c.b16 %v6809, %v6808
        %v8085 = vpack.c.b16 %v6811, %v6810
        %v8086 = vpack.c.b16 %v6813, %v6812
        %v8087 = vpack.c.b16 %v6815, %v6814
        %v8088 = vpack.c.b16 %v6817, %v6816
        %v8089 = vpack.c.b16 %v6819, %v6818
        %v8090 = vpack.c.b16 %v6821, %v6820
        %v8091 = vpack.c.b16 %v6823, %v6822
        %v8092 = vpack.c.b16 %v6825, %v6824
        %v8093 = vpack.c.b16 %v6827, %v6826
        %v8094 = vpack.c.b16 %v6829, %v6828
        %v8095 = vpack.c.b16 %v6831, %v6830
        %v8096 = vpack.c.b16 %v6833, %v6832
        %v8097 = vpack.c.b16 %v6835, %v6834
        %v8098 = vpack.c.b16 %v6837, %v6836
        %v8099 = vpack.c.b16 %v6839, %v6838
        %v8100 = vpack.c.b16 %v6841, %v6840
        %v8101 = vpack.c.b16 %v6843, %v6842
        %v8102 = vpack.c.b16 %v6845, %v6844
        %v8103 = vpack.c.b16 %v6847, %v6846
        %v8104 = vpack.c.b16 %v6849, %v6848
        %v8105 = vpack.c.b16 %v6851, %v6850
        %v8106 = vpack.c.b16 %v6853, %v6852
        %v8107 = vpack.c.b16 %v6855, %v6854
        %v8108 = vpack.c.b16 %v6857, %v6856
        %v8109 = vpack.c.b16 %v6859, %v6858
        %v8110 = vpack.c.b16 %v6861, %v6860
        %v8111 = vpack.c.b16 %v6863, %v6862
        %v8112 = vpack.c.b16 %v6865, %v6864
        %v8113 = vpack.c.b16 %v6867, %v6866
        %v8114 = vpack.c.b16 %v6869, %v6868
        %v8115 = vpack.c.b16 %v6871, %v6870
        %v8116 = vpack.c.b16 %v6873, %v6872
        %v8117 = vpack.c.b16 %v6875, %v6874
        %v8118 = vpack.c.b16 %v6877, %v6876
        %v8119 = vpack.c.b16 %v6879, %v6878
        %v8120 = vpack.c.b16 %v6881, %v6880
        %v8121 = vpack.c.b16 %v6883, %v6882
        %v8122 = vpack.c.b16 %v6885, %v6884
        %v8123 = vpack.c.b16 %v6887, %v6886
        %v8124 = vpack.c.b16 %v6889, %v6888
        %v8125 = vpack.c.b16 %v6891, %v6890
        %v8126 = vpack.c.b16 %v6893, %v6892
        %v8127 = vpack.c.b16 %v6895, %v6894
        %v8128 = vpack.c.b16 %v6897, %v6896
        %v8129 = vpack.c.b16 %v6899, %v6898
        %v8130 = vpack.c.b16 %v6901, %v6900
        %v8131 = vpack.c.b16 %v6903, %v6902
        %v8132 = vpack.c.b16 %v6905, %v6904
        %v8133 = vpack.c.b16 %v6907, %v6906
        %v8134 = vpack.c.b16 %v6909, %v6908
        %v8135 = vpack.c.b16 %v6911, %v6910
        %v8136 = vpack.c.b16 %v6913, %v6912
        %v8137 = vpack.c.b16 %v6915, %v6914
        %v8138 = vpack.c.b16 %v6917, %v6916
        %v8139 = vpack.c.b16 %v6919, %v6918
        %v8140 = vpack.c.b16 %v6921, %v6920
        %v8141 = vpack.c.b16 %v6923, %v6922
        %v8142 = vpack.c.b16 %v6925, %v6924
        %v8143 = vpack.c.b16 %v6927, %v6926
        %v8144 = vpack.c.b16 %v6929, %v6928
        %v8145 = vpack.c.b16 %v6931, %v6930
        %v8146 = vpack.c.b16 %v6933, %v6932
        %v8147 = vpack.c.b16 %v6935, %v6934
        %v8148 = vpack.c.b16 %v6937, %v6936
        %v8149 = vpack.c.b16 %v6939, %v6938
        %v8150 = vpack.c.b16 %v6941, %v6940
        %v8151 = vpack.c.b16 %v6943, %v6942
        %v8152 = vpack.c.b16 %v6945, %v6944
        %v8153 = vpack.c.b16 %v6947, %v6946
        %v8154 = vpack.c.b16 %v6949, %v6948
        %v8155 = vpack.c.b16 %v6951, %v6950
        %v8156 = vpack.c.b16 %v6953, %v6952
        %v8157 = vpack.c.b16 %v6955, %v6954
        %v8158 = vpack.c.b16 %v6957, %v6956
        %v8159 = vpack.c.b16 %v6959, %v6958
        %v8160 = vpack.c.b16 %v6961, %v6960
        %v8161 = vpack.c.b16 %v6963, %v6962
        %v8162 = vpack.c.b16 %v6965, %v6964
        %v8163 = vpack.c.b16 %v6967, %v6966
        %v8164 = vpack.c.b16 %v6969, %v6968
        %v8165 = vpack.c.b16 %v6971, %v6970
        %v8166 = vpack.c.b16 %v6973, %v6972
        %v8167 = vpack.c.b16 %v6975, %v6974
        %v8168 = vpack.c.b16 %v6977, %v6976
        %v8169 = vpack.c.b16 %v6979, %v6978
        %v8170 = vpack.c.b16 %v6981, %v6980
        %v8171 = vpack.c.b16 %v6983, %v6982
        %v8172 = vpack.c.b16 %v6985, %v6984
        %v8173 = vpack.c.b16 %v6987, %v6986
        %v8174 = vpack.c.b16 %v6989, %v6988
        %v8175 = vpack.c.b16 %v6991, %v6990
        %v8176 = vpack.c.b16 %v6993, %v6992
        %v8177 = vpack.c.b16 %v6995, %v6994
        %v8178 = vpack.c.b16 %v6997, %v6996
        %v8179 = vpack.c.b16 %v6999, %v6998
        %v8180 = vpack.c.b16 %v7001, %v7000
        %v8181 = vpack.c.b16 %v7003, %v7002
        %v8182 = vpack.c.b16 %v7005, %v7004
        %v8183 = vpack.c.b16 %v7007, %v7006
        %v8184 = vpack.c.b16 %v7009, %v7008
        %v8185 = vpack.c.b16 %v7011, %v7010
        %v8186 = vpack.c.b16 %v7013, %v7012
        %v8187 = vpack.c.b16 %v7015, %v7014
        %v8188 = vpack.c.b16 %v7017, %v7016
        %v8189 = vpack.c.b16 %v7019, %v7018
        %v8190 = vpack.c.b16 %v7021, %v7020
        %v8191 = vpack.c.b16 %v7023, %v7022
        %v8192 = vpack.c.b16 %v7025, %v7024
        %v8193 = vpack.c.b16 %v7027, %v7026
        %v8194 = vpack.c.b16 %v7029, %v7028
        %v8195 = vpack.c.b16 %v7031, %v7030
        %v8196 = vpack.c.b16 %v7033, %v7032
        %v8197 = vpack.c.b16 %v7035, %v7034
        %v8198 = vpack.c.b16 %v7037, %v7036
        %v8199 = vpack.c.b16 %v7039, %v7038
        %v8200 = vpack.c.b16 %v7041, %v7040
        %v8201 = vpack.c.b16 %v7043, %v7042
        %v8202 = vpack.c.b16 %v7045, %v7044
        %v8203 = vpack.c.b16 %v7047, %v7046
        %v8204 = vpack.c.b16 %v7049, %v7048
        %v8205 = vpack.c.b16 %v7051, %v7050
        %v8206 = vpack.c.b16 %v7053, %v7052
        %v8207 = vpack.c.b16 %v7055, %v7054
        %v8208 = vpack.c.b16 %v7057, %v7056
        %v8209 = vpack.c.b16 %v7059, %v7058
        %v8210 = vpack.c.b16 %v7061, %v7060
        %v8211 = vpack.c.b16 %v7063, %v7062
        %v8212 = vpack.c.b16 %v7065, %v7064
        %v8213 = vpack.c.b16 %v7067, %v7066
        %v8214 = vpack.c.b16 %v7069, %v7068
        %v8215 = vpack.c.b16 %v7071, %v7070
        %v8216 = vpack.c.b16 %v7073, %v7072
        %v8217 = vpack.c.b16 %v7075, %v7074
        %v8218 = vpack.c.b16 %v7077, %v7076
        %v8219 = vpack.c.b16 %v7079, %v7078
        %v8220 = vpack.c.b16 %v7081, %v7080
        %v8221 = vpack.c.b16 %v7083, %v7082
        %v8222 = vpack.c.b16 %v7085, %v7084
        %v8223 = vpack.c.b16 %v7087, %v7086
        %v8224 = vpack.c.b16 %v7089, %v7088
        %v8225 = vpack.c.b16 %v7091, %v7090
        %v8226 = vpack.c.b16 %v7093, %v7092
        %v8227 = vpack.c.b16 %v7095, %v7094
        %v8228 = vpack.c.b16 %v7097, %v7096
        %v8229 = vpack.c.b16 %v7099, %v7098
        %v8230 = vpack.c.b16 %v7101, %v7100
        %v8231 = vpack.c.b16 %v7103, %v7102
        %v8232 = vpack.c.b16 %v7105, %v7104
        %v8233 = vpack.c.b16 %v7107, %v7106
        %v8234 = vpack.c.b16 %v7109, %v7108
        %v8235 = vpack.c.b16 %v7111, %v7110
        %v8236 = vpack.c.b16 %v7113, %v7112
        %v8237 = vpack.c.b16 %v7115, %v7114
        %v8238 = vpack.c.b16 %v7117, %v7116
        %v8239 = vpack.c.b16 %v7119, %v7118
        %v8240 = vpack.c.b16 %v7121, %v7120
        %v8241 = vpack.c.b16 %v7123, %v7122
        %v8242 = vpack.c.b16 %v7125, %v7124
        %v8243 = vpack.c.b16 %v7127, %v7126
        %v8244 = vpack.c.b16 %v7129, %v7128
        %v8245 = vpack.c.b16 %v7131, %v7130
        %v8246 = vpack.c.b16 %v7133, %v7132
        %v8247 = vpack.c.b16 %v7135, %v7134
        %v8248 = vpack.c.b16 %v7137, %v7136
        %v8249 = vpack.c.b16 %v7139, %v7138
        %v8250 = vpack.c.b16 %v7141, %v7140
        %v8251 = vpack.c.b16 %v7143, %v7142
        %v8252 = vpack.c.b16 %v7145, %v7144
        %v8253 = vpack.c.b16 %v7147, %v7146
        %v8254 = vpack.c.b16 %v7149, %v7148
        %v8255 = vpack.c.b16 %v7151, %v7150
        %v8256 = vpack.c.b16 %v7153, %v7152
        %v8257 = vpack.c.b16 %v7155, %v7154
        %v8258 = vpack.c.b16 %v7157, %v7156
        %v8259 = vpack.c.b16 %v7159, %v7158
        %v8260 = vpack.c.b16 %v7161, %v7160
        %v8261 = vpack.c.b16 %v7163, %v7162
        %v8262 = vpack.c.b16 %v7165, %v7164
        %v8263 = vpack.c.b16 %v7167, %v7166
        %v8264 = vpack.c.b16 %v7169, %v7168
        %v8265 = vpack.c.b16 %v7171, %v7170
        %v8266 = vpack.c.b16 %v7173, %v7172
        %v8267 = vpack.c.b16 %v7175, %v7174
        %v8268 = vpack.c.b16 %v7177, %v7176
        %v8269 = vpack.c.b16 %v7179, %v7178
        %v8270 = vpack.c.b16 %v7181, %v7180
        %v8271 = vpack.c.b16 %v7183, %v7182
        %v8272 = vpack.c.b16 %v7185, %v7184
        %v8273 = vpack.c.b16 %v7187, %v7186
        %v8274 = vpack.c.b16 %v7189, %v7188
        %v8275 = vpack.c.b16 %v7191, %v7190
        %v8276 = vpack.c.b16 %v7193, %v7192
        %v8277 = vpack.c.b16 %v7195, %v7194
        %v8278 = vpack.c.b16 %v7197, %v7196
        %v8279 = vpack.c.b16 %v7199, %v7198
        %v8280 = vpack.c.b16 %v7201, %v7200
        %v8281 = vpack.c.b16 %v7203, %v7202
        %v8282 = vpack.c.b16 %v7205, %v7204
        %v8283 = vpack.c.b16 %v7207, %v7206
        %v8284 = vpack.c.b16 %v7209, %v7208
        %v8285 = vpack.c.b16 %v7211, %v7210
        %v8286 = vpack.c.b16 %v7213, %v7212
        %v8287 = vpack.c.b16 %v7215, %v7214
        %v8288 = vpack.c.b16 %v7217, %v7216
        %v8289 = vpack.c.b16 %v7219, %v7218
        %v8290 = vpack.c.b16 %v7221, %v7220
        %v8291 = vpack.c.b16 %v7223, %v7222
        %v8292 = vpack.c.b16 %v7225, %v7224
        %v8293 = vpack.c.b16 %v7227, %v7226
        %v8294 = vpack.c.b16 %v7229, %v7228
        %v8295 = vpack.c.b16 %v7231, %v7230
        %v8296 = vpack.c.b16 %v7233, %v7232
        %v8297 = vpack.c.b16 %v7235, %v7234
        %v8298 = vpack.c.b16 %v7237, %v7236
        %v8299 = vpack.c.b16 %v7239, %v7238
        %v8300 = vpack.c.b16 %v7241, %v7240
        %v8301 = vpack.c.b16 %v7243, %v7242
        %v8302 = vpack.c.b16 %v7245, %v7244
        %v8303 = vpack.c.b16 %v7247, %v7246
        %v8304 = vpack.c.b16 %v7249, %v7248
        %v8305 = vpack.c.b16 %v7251, %v7250
        %v8306 = vpack.c.b16 %v7253, %v7252
        %v8307 = vpack.c.b16 %v7255, %v7254
        %v8308 = vpack.c.b16 %v7257, %v7256
        %v8309 = vpack.c.b16 %v7259, %v7258
        %v8310 = vpack.c.b16 %v7261, %v7260
        %v8311 = vpack.c.b16 %v7263, %v7262
        %v8312 = vpack.c.b16 %v7265, %v7264
        %v8313 = vpack.c.b16 %v7267, %v7266
        %v8314 = vpack.c.b16 %v7269, %v7268
        %v8315 = vpack.c.b16 %v7271, %v7270
        %v8316 = vpack.c.b16 %v7273, %v7272
        %v8317 = vpack.c.b16 %v7275, %v7274
        %v8318 = vpack.c.b16 %v7277, %v7276
        %v8319 = vpack.c.b16 %v7279, %v7278
        %v8320 = vpack.c.b16 %v7281, %v7280
        %v8321 = vpack.c.b16 %v7283, %v7282
        %v8322 = vpack.c.b16 %v7285, %v7284
        %v8323 = vpack.c.b16 %v7287, %v7286
        %v8324 = vpack.c.b16 %v7289, %v7288
        %v8325 = vpack.c.b16 %v7291, %v7290
        %v8326 = vpack.c.b16 %v7293, %v7292
        %v8327 = vpack.c.b16 %v7295, %v7294
        %v8328 = vpack.c.b16 %v7297, %v7296
        %v8329 = vpack.c.b16 %v7299, %v7298
        %v8330 = vpack.c.b16 %v7301, %v7300
        %v8331 = vpack.c.b16 %v7303, %v7302
        %v8332 = vpack.c.b16 %v7305, %v7304
        %v8333 = vpack.c.b16 %v7307, %v7306
        %v8334 = vpack.c.b16 %v7309, %v7308
        %v8335 = vpack.c.b16 %v7311, %v7310
        %9360 = vmatprep.subr.bf16.mxu0 0
        %9361 = vmatpush1.bf16.msra.mxu0 %v7312
        %9362 = vmatprep.subr.bf16.mxu0 0
        %9363 = vmatpush1.bf16.msra.mxu0 %v7313
        %9364 = vmatprep.subr.bf16.mxu0 0
        %9365 = vmatpush1.bf16.msra.mxu0 %v7314
        %9366 = vmatprep.subr.bf16.mxu0 0
        %9367 = vmatpush1.bf16.msra.mxu0 %v7315
        %9368 = vmatprep.subr.bf16.mxu0 0
        %9369 = vmatpush1.bf16.msra.mxu0 %v7316
        %9370 = vmatprep.subr.bf16.mxu0 0
        %9371 = vmatpush1.bf16.msra.mxu0 %v7317
        %9372 = vmatprep.subr.bf16.mxu0 0
        %9373 = vmatpush1.bf16.msra.mxu0 %v7318
        %9374 = vmatprep.subr.bf16.mxu0 0
        %9375 = vmatpush1.bf16.msra.mxu0 %v7319
        %9376 = vmatprep.subr.bf16.mxu0 0
        %9377 = vmatpush1.bf16.msra.mxu0 %v7320
        %9378 = vmatprep.subr.bf16.mxu0 0
        %9379 = vmatpush1.bf16.msra.mxu0 %v7321
        %9380 = vmatprep.subr.bf16.mxu0 0
        %9381 = vmatpush1.bf16.msra.mxu0 %v7322
        %9382 = vmatprep.subr.bf16.mxu0 0
        %9383 = vmatpush1.bf16.msra.mxu0 %v7323
        %9384 = vmatprep.subr.bf16.mxu0 0
        %9385 = vmatpush1.bf16.msra.mxu0 %v7324
        %9386 = vmatprep.subr.bf16.mxu0 0
        %9387 = vmatpush1.bf16.msra.mxu0 %v7325
        %9388 = vmatprep.subr.bf16.mxu0 0
        %9389 = vmatpush1.bf16.msra.mxu0 %v7326
        %9390 = vmatprep.subr.bf16.mxu0 0
        %9391 = vmatpush1.bf16.msra.mxu0 %v7327
        %9392 = vmatprep.mubr.bf16.mxu0 %v2341
        %9393 = vmatmul.mubr.bf16.gmra.mrb[0].mxu0 %v2327
        %v9394 = vpop.f32.mrb[0].mxu0
        %v9395 = vadd.f32 0.0, %v9394
        %v9396 = vpop.f32.mrb[0].mxu0
        %v9397 = vpop.f32.mrb[0].mxu0
        %v9398 = vpop.f32.mrb[0].mxu0
        %9399 = vdwg.mxu0
        %9400 = vmatprep.subr.bf16.mxu0 0
        %9401 = vmatpush1.bf16.msra.mxu0 %v7328
        %9402 = vmatprep.subr.bf16.mxu0 0
        %9403 = vmatpush1.bf16.msra.mxu0 %v7329
        %9404 = vmatprep.subr.bf16.mxu0 0
        %9405 = vmatpush1.bf16.msra.mxu0 %v7330
        %9406 = vmatprep.subr.bf16.mxu0 0
        %9407 = vmatpush1.bf16.msra.mxu0 %v7331
        %9408 = vmatprep.subr.bf16.mxu0 0
        %9409 = vmatpush1.bf16.msra.mxu0 %v7332
        %9410 = vmatprep.subr.bf16.mxu0 0
        %9411 = vmatpush1.bf16.msra.mxu0 %v7333
        %9412 = vmatprep.subr.bf16.mxu0 0
        %9413 = vmatpush1.bf16.msra.mxu0 %v7334
        %9414 = vmatprep.subr.bf16.mxu0 0
        %9415 = vmatpush1.bf16.msra.mxu0 %v7335
        %9416 = vmatprep.subr.bf16.mxu0 0
        %9417 = vmatpush1.bf16.msra.mxu0 %v7336
        %9418 = vmatprep.subr.bf16.mxu0 0
        %9419 = vmatpush1.bf16.msra.mxu0 %v7337
        %9420 = vmatprep.subr.bf16.mxu0 0
        %9421 = vmatpush1.bf16.msra.mxu0 %v7338
        %9422 = vmatprep.subr.bf16.mxu0 0
        %9423 = vmatpush1.bf16.msra.mxu0 %v7339
        %9424 = vmatprep.subr.bf16.mxu0 0
        %9425 = vmatpush1.bf16.msra.mxu0 %v7340
        %9426 = vmatprep.subr.bf16.mxu0 0
        %9427 = vmatpush1.bf16.msra.mxu0 %v7341
        %9428 = vmatprep.subr.bf16.mxu0 0
        %9429 = vmatpush1.bf16.msra.mxu0 %v7342
        %9430 = vmatprep.subr.bf16.mxu0 0
        %9431 = vmatpush1.bf16.msra.mxu0 %v7343
        %9432 = vmatprep.mubr.bf16.mxu0 %v2351
        %9433 = vmatmul.mubr.bf16.gmra.mrb[0].mxu0 %v2349
        %v9434 = vpop.f32.mrb[0].mxu0
        %v9435 = vadd.f32 %v9395, %v9434
        %v9436 = vpop.f32.mrb[0].mxu0
        %v9437 = vpop.f32.mrb[0].mxu0
        %v9438 = vpop.f32.mrb[0].mxu0
        %9439 = vdwg.mxu0
        %9440 = vmatprep.subr.bf16.mxu0 0
        %9441 = vmatpush1.bf16.msra.mxu0 %v7344
        %9442 = vmatprep.subr.bf16.mxu0 0
        %9443 = vmatpush1.bf16.msra.mxu0 %v7345
        %9444 = vmatprep.subr.bf16.mxu0 0
        %9445 = vmatpush1.bf16.msra.mxu0 %v7346
        %9446 = vmatprep.subr.bf16.mxu0 0
        %9447 = vmatpush1.bf16.msra.mxu0 %v7347
        %9448 = vmatprep.subr.bf16.mxu0 0
        %9449 = vmatpush1.bf16.msra.mxu0 %v7348
        %9450 = vmatprep.subr.bf16.mxu0 0
        %9451 = vmatpush1.bf16.msra.mxu0 %v7349
        %9452 = vmatprep.subr.bf16.mxu0 0
        %9453 = vmatpush1.bf16.msra.mxu0 %v7350
        %9454 = vmatprep.subr.bf16.mxu0 0
        %9455 = vmatpush1.bf16.msra.mxu0 %v7351
        %9456 = vmatprep.subr.bf16.mxu0 0
        %9457 = vmatpush1.bf16.msra.mxu0 %v7352
        %9458 = vmatprep.subr.bf16.mxu0 0
        %9459 = vmatpush1.bf16.msra.mxu0 %v7353
        %9460 = vmatprep.subr.bf16.mxu0 0
        %9461 = vmatpush1.bf16.msra.mxu0 %v7354
        %9462 = vmatprep.subr.bf16.mxu0 0
        %9463 = vmatpush1.bf16.msra.mxu0 %v7355
        %9464 = vmatprep.subr.bf16.mxu0 0
        %9465 = vmatpush1.bf16.msra.mxu0 %v7356
        %9466 = vmatprep.subr.bf16.mxu0 0
        %9467 = vmatpush1.bf16.msra.mxu0 %v7357
        %9468 = vmatprep.subr.bf16.mxu0 0
        %9469 = vmatpush1.bf16.msra.mxu0 %v7358
        %9470 = vmatprep.subr.bf16.mxu0 0
        %9471 = vmatpush1.bf16.msra.mxu0 %v7359
        %9472 = vmatprep.mubr.bf16.mxu0 %v2348
        %9473 = vmatmul.mubr.bf16.gmra.mrb[0].mxu0 %v2334
        %v9474 = vpop.f32.mrb[0].mxu0
        %v9475 = vadd.f32 %v9435, %v9474
        %v9476 = vpop.f32.mrb[0].mxu0
        %v9477 = vpop.f32.mrb[0].mxu0
        %v9478 = vpop.f32.mrb[0].mxu0
        %9479 = vdwg.mxu0
        %9480 = vmatprep.subr.bf16.mxu0 0
        %9481 = vmatpush1.bf16.msra.mxu0 %v7360
        %9482 = vmatprep.subr.bf16.mxu0 0
        %9483 = vmatpush1.bf16.msra.mxu0 %v7361
        %9484 = vmatprep.subr.bf16.mxu0 0
        %9485 = vmatpush1.bf16.msra.mxu0 %v7362
        %9486 = vmatprep.subr.bf16.mxu0 0
        %9487 = vmatpush1.bf16.msra.mxu0 %v7363
        %9488 = vmatprep.subr.bf16.mxu0 0
        %9489 = vmatpush1.bf16.msra.mxu0 %v7364
        %9490 = vmatprep.subr.bf16.mxu0 0
        %9491 = vmatpush1.bf16.msra.mxu0 %v7365
        %9492 = vmatprep.subr.bf16.mxu0 0
        %9493 = vmatpush1.bf16.msra.mxu0 %v7366
        %9494 = vmatprep.subr.bf16.mxu0 0
        %9495 = vmatpush1.bf16.msra.mxu0 %v7367
        %9496 = vmatprep.subr.bf16.mxu0 0
        %9497 = vmatpush1.bf16.msra.mxu0 %v7368
        %9498 = vmatprep.subr.bf16.mxu0 0
        %9499 = vmatpush1.bf16.msra.mxu0 %v7369
        %9500 = vmatprep.subr.bf16.mxu0 0
        %9501 = vmatpush1.bf16.msra.mxu0 %v7370
        %9502 = vmatprep.subr.bf16.mxu0 0
        %9503 = vmatpush1.bf16.msra.mxu0 %v7371
        %9504 = vmatprep.subr.bf16.mxu0 0
        %9505 = vmatpush1.bf16.msra.mxu0 %v7372
        %9506 = vmatprep.subr.bf16.mxu0 0
        %9507 = vmatpush1.bf16.msra.mxu0 %v7373
        %9508 = vmatprep.subr.bf16.mxu0 0
        %9509 = vmatpush1.bf16.msra.mxu0 %v7374
        %9510 = vmatprep.subr.bf16.mxu0 0
        %9511 = vmatpush1.bf16.msra.mxu0 %v7375
        %9512 = vmatprep.mubr.bf16.mxu0 %v2352
        %9513 = vmatmul.mubr.bf16.gmra.mrb[0].mxu0 %v2350
        %v9514 = vpop.f32.mrb[0].mxu0
        %v9515 = vadd.f32 %v9475, %v9514
        %v9516 = vpop.f32.mrb[0].mxu0
        %v9517 = vpop.f32.mrb[0].mxu0
        %v9518 = vpop.f32.mrb[0].mxu0
        %9519 = vdwg.mxu0
        %9520 = vmatprep.subr.bf16.mxu0 0
        %9521 = vmatpush1.bf16.msra.mxu0 %v7376
        %9522 = vmatprep.subr.bf16.mxu0 0
        %9523 = vmatpush1.bf16.msra.mxu0 %v7377
        %9524 = vmatprep.subr.bf16.mxu0 0
        %9525 = vmatpush1.bf16.msra.mxu0 %v7378
        %9526 = vmatprep.subr.bf16.mxu0 0
        %9527 = vmatpush1.bf16.msra.mxu0 %v7379
        %9528 = vmatprep.subr.bf16.mxu0 0
        %9529 = vmatpush1.bf16.msra.mxu0 %v7380
        %9530 = vmatprep.subr.bf16.mxu0 0
        %9531 = vmatpush1.bf16.msra.mxu0 %v7381
        %9532 = vmatprep.subr.bf16.mxu0 0
        %9533 = vmatpush1.bf16.msra.mxu0 %v7382
        %9534 = vmatprep.subr.bf16.mxu0 0
        %9535 = vmatpush1.bf16.msra.mxu0 %v7383
        %9536 = vmatprep.subr.bf16.mxu0 0
        %9537 = vmatpush1.bf16.msra.mxu0 %v7384
        %9538 = vmatprep.subr.bf16.mxu0 0
        %9539 = vmatpush1.bf16.msra.mxu0 %v7385
        %9540 = vmatprep.subr.bf16.mxu0 0
        %9541 = vmatpush1.bf16.msra.mxu0 %v7386
        %9542 = vmatprep.subr.bf16.mxu0 0
        %9543 = vmatpush1.bf16.msra.mxu0 %v7387
        %9544 = vmatprep.subr.bf16.mxu0 0
        %9545 = vmatpush1.bf16.msra.mxu0 %v7388
        %9546 = vmatprep.subr.bf16.mxu0 0
        %9547 = vmatpush1.bf16.msra.mxu0 %v7389
        %9548 = vmatprep.subr.bf16.mxu0 0
        %9549 = vmatpush1.bf16.msra.mxu0 %v7390
        %9550 = vmatprep.subr.bf16.mxu0 0
        %9551 = vmatpush1.bf16.msra.mxu0 %v7391
        %9552 = vmatprep.mubr.bf16.mxu0 %v2390
        %9553 = vmatmul.mubr.bf16.gmra.mrb[0].mxu0 %v2376
        %v9554 = vpop.f32.mrb[0].mxu0
        %v9555 = vadd.f32 %v9515, %v9554
        %v9556 = vpop.f32.mrb[0].mxu0
        %v9557 = vpop.f32.mrb[0].mxu0
        %v9558 = vpop.f32.mrb[0].mxu0
        %9559 = vdwg.mxu0
        %9560 = vmatprep.subr.bf16.mxu0 0
        %9561 = vmatpush1.bf16.msra.mxu0 %v7392
        %9562 = vmatprep.subr.bf16.mxu0 0
        %9563 = vmatpush1.bf16.msra.mxu0 %v7393
        %9564 = vmatprep.subr.bf16.mxu0 0
        %9565 = vmatpush1.bf16.msra.mxu0 %v7394
        %9566 = vmatprep.subr.bf16.mxu0 0
        %9567 = vmatpush1.bf16.msra.mxu0 %v7395
        %9568 = vmatprep.subr.bf16.mxu0 0
        %9569 = vmatpush1.bf16.msra.mxu0 %v7396
        %9570 = vmatprep.subr.bf16.mxu0 0
        %9571 = vmatpush1.bf16.msra.mxu0 %v7397
        %9572 = vmatprep.subr.bf16.mxu0 0
        %9573 = vmatpush1.bf16.msra.mxu0 %v7398
        %9574 = vmatprep.subr.bf16.mxu0 0
        %9575 = vmatpush1.bf16.msra.mxu0 %v7399
        %9576 = vmatprep.subr.bf16.mxu0 0
        %9577 = vmatpush1.bf16.msra.mxu0 %v7400
        %9578 = vmatprep.subr.bf16.mxu0 0
        %9579 = vmatpush1.bf16.msra.mxu0 %v7401
        %9580 = vmatprep.subr.bf16.mxu0 0
        %9581 = vmatpush1.bf16.msra.mxu0 %v7402
        %9582 = vmatprep.subr.bf16.mxu0 0
        %9583 = vmatpush1.bf16.msra.mxu0 %v7403
        %9584 = vmatprep.subr.bf16.mxu0 0
        %9585 = vmatpush1.bf16.msra.mxu0 %v7404
        %9586 = vmatprep.subr.bf16.mxu0 0
        %9587 = vmatpush1.bf16.msra.mxu0 %v7405
        %9588 = vmatprep.subr.bf16.mxu0 0
        %9589 = vmatpush1.bf16.msra.mxu0 %v7406
        %9590 = vmatprep.subr.bf16.mxu0 0
        %9591 = vmatpush1.bf16.msra.mxu0 %v7407
        %9592 = vmatprep.mubr.bf16.mxu0 %v2400
        %9593 = vmatmul.mubr.bf16.gmra.mrb[0].mxu0 %v2398
        %v9594 = vpop.f32.mrb[0].mxu0
        %v9595 = vadd.f32 %v9555, %v9594
        %v9596 = vpop.f32.mrb[0].mxu0
        %v9597 = vpop.f32.mrb[0].mxu0
        %v9598 = vpop.f32.mrb[0].mxu0
        %9599 = vdwg.mxu0
        %9600 = vmatprep.subr.bf16.mxu0 0
        %9601 = vmatpush1.bf16.msra.mxu0 %v7408
        %9602 = vmatprep.subr.bf16.mxu0 0
        %9603 = vmatpush1.bf16.msra.mxu0 %v7409
        %9604 = vmatprep.subr.bf16.mxu0 0
        %9605 = vmatpush1.bf16.msra.mxu0 %v7410
        %9606 = vmatprep.subr.bf16.mxu0 0
        %9607 = vmatpush1.bf16.msra.mxu0 %v7411
        %9608 = vmatprep.subr.bf16.mxu0 0
        %9609 = vmatpush1.bf16.msra.mxu0 %v7412
        %9610 = vmatprep.subr.bf16.mxu0 0
        %9611 = vmatpush1.bf16.msra.mxu0 %v7413
        %9612 = vmatprep.subr.bf16.mxu0 0
        %9613 = vmatpush1.bf16.msra.mxu0 %v7414
        %9614 = vmatprep.subr.bf16.mxu0 0
        %9615 = vmatpush1.bf16.msra.mxu0 %v7415
        %9616 = vmatprep.subr.bf16.mxu0 0
        %9617 = vmatpush1.bf16.msra.mxu0 %v7416
        %9618 = vmatprep.subr.bf16.mxu0 0
        %9619 = vmatpush1.bf16.msra.mxu0 %v7417
        %9620 = vmatprep.subr.bf16.mxu0 0
        %9621 = vmatpush1.bf16.msra.mxu0 %v7418
        %9622 = vmatprep.subr.bf16.mxu0 0
        %9623 = vmatpush1.bf16.msra.mxu0 %v7419
        %9624 = vmatprep.subr.bf16.mxu0 0
        %9625 = vmatpush1.bf16.msra.mxu0 %v7420
        %9626 = vmatprep.subr.bf16.mxu0 0
        %9627 = vmatpush1.bf16.msra.mxu0 %v7421
        %9628 = vmatprep.subr.bf16.mxu0 0
        %9629 = vmatpush1.bf16.msra.mxu0 %v7422
        %9630 = vmatprep.subr.bf16.mxu0 0
        %9631 = vmatpush1.bf16.msra.mxu0 %v7423
        %9632 = vmatprep.mubr.bf16.mxu0 %v2397
        %9633 = vmatmul.mubr.bf16.gmra.mrb[0].mxu0 %v2383
        %v9634 = vpop.f32.mrb[0].mxu0
        %v9635 = vadd.f32 %v9595, %v9634
        %v9636 = vpop.f32.mrb[0].mxu0
        %v9637 = vpop.f32.mrb[0].mxu0
        %v9638 = vpop.f32.mrb[0].mxu0
        %9639 = vdwg.mxu0
        %9640 = vmatprep.subr.bf16.mxu0 0
        %9641 = vmatpush1.bf16.msra.mxu0 %v7424
        %9642 = vmatprep.subr.bf16.mxu0 0
        %9643 = vmatpush1.bf16.msra.mxu0 %v7425
        %9644 = vmatprep.subr.bf16.mxu0 0
        %9645 = vmatpush1.bf16.msra.mxu0 %v7426
        %9646 = vmatprep.subr.bf16.mxu0 0
        %9647 = vmatpush1.bf16.msra.mxu0 %v7427
        %9648 = vmatprep.subr.bf16.mxu0 0
        %9649 = vmatpush1.bf16.msra.mxu0 %v7428
        %9650 = vmatprep.subr.bf16.mxu0 0
        %9651 = vmatpush1.bf16.msra.mxu0 %v7429
        %9652 = vmatprep.subr.bf16.mxu0 0
        %9653 = vmatpush1.bf16.msra.mxu0 %v7430
        %9654 = vmatprep.subr.bf16.mxu0 0
        %9655 = vmatpush1.bf16.msra.mxu0 %v7431
        %9656 = vmatprep.subr.bf16.mxu0 0
        %9657 = vmatpush1.bf16.msra.mxu0 %v7432
        %9658 = vmatprep.subr.bf16.mxu0 0
        %9659 = vmatpush1.bf16.msra.mxu0 %v7433
        %9660 = vmatprep.subr.bf16.mxu0 0
        %9661 = vmatpush1.bf16.msra.mxu0 %v7434
        %9662 = vmatprep.subr.bf16.mxu0 0
        %9663 = vmatpush1.bf16.msra.mxu0 %v7435
        %9664 = vmatprep.subr.bf16.mxu0 0
        %9665 = vmatpush1.bf16.msra.mxu0 %v7436
        %9666 = vmatprep.subr.bf16.mxu0 0
        %9667 = vmatpush1.bf16.msra.mxu0 %v7437
        %9668 = vmatprep.subr.bf16.mxu0 0
        %9669 = vmatpush1.bf16.msra.mxu0 %v7438
        %9670 = vmatprep.subr.bf16.mxu0 0
        %9671 = vmatpush1.bf16.msra.mxu0 %v7439
        %9672 = vmatprep.mubr.bf16.mxu0 %v2401
        %9673 = vmatmul.mubr.bf16.gmra.mrb[0].mxu0 %v2399
        %v9674 = vpop.f32.mrb[0].mxu0
        %v9675 = vadd.f32 %v9635, %v9674
        %v9676 = vpop.f32.mrb[0].mxu0
        %v9677 = vpop.f32.mrb[0].mxu0
        %v9678 = vpop.f32.mrb[0].mxu0
        %9679 = vdwg.mxu0
        %9680 = vmatprep.subr.bf16.mxu0 0
        %9681 = vmatpush1.bf16.msra.mxu0 %v7440
        %9682 = vmatprep.subr.bf16.mxu0 0
        %9683 = vmatpush1.bf16.msra.mxu0 %v7441
        %9684 = vmatprep.subr.bf16.mxu0 0
        %9685 = vmatpush1.bf16.msra.mxu0 %v7442
        %9686 = vmatprep.subr.bf16.mxu0 0
        %9687 = vmatpush1.bf16.msra.mxu0 %v7443
        %9688 = vmatprep.subr.bf16.mxu0 0
        %9689 = vmatpush1.bf16.msra.mxu0 %v7444
        %9690 = vmatprep.subr.bf16.mxu0 0
        %9691 = vmatpush1.bf16.msra.mxu0 %v7445
        %9692 = vmatprep.subr.bf16.mxu0 0
        %9693 = vmatpush1.bf16.msra.mxu0 %v7446
        %9694 = vmatprep.subr.bf16.mxu0 0
        %9695 = vmatpush1.bf16.msra.mxu0 %v7447
        %9696 = vmatprep.subr.bf16.mxu0 0
        %9697 = vmatpush1.bf16.msra.mxu0 %v7448
        %9698 = vmatprep.subr.bf16.mxu0 0
        %9699 = vmatpush1.bf16.msra.mxu0 %v7449
        %9700 = vmatprep.subr.bf16.mxu0 0
        %9701 = vmatpush1.bf16.msra.mxu0 %v7450
        %9702 = vmatprep.subr.bf16.mxu0 0
        %9703 = vmatpush1.bf16.msra.mxu0 %v7451
        %9704 = vmatprep.subr.bf16.mxu0 0
        %9705 = vmatpush1.bf16.msra.mxu0 %v7452
        %9706 = vmatprep.subr.bf16.mxu0 0
        %9707 = vmatpush1.bf16.msra.mxu0 %v7453
        %9708 = vmatprep.subr.bf16.mxu0 0
        %9709 = vmatpush1.bf16.msra.mxu0 %v7454
        %9710 = vmatprep.subr.bf16.mxu0 0
        %9711 = vmatpush1.bf16.msra.mxu0 %v7455
        %9712 = vmatprep.mubr.bf16.mxu0 %v2439
        %9713 = vmatmul.mubr.bf16.gmra.mrb[0].mxu0 %v2425
        %v9714 = vpop.f32.mrb[0].mxu0
        %v9715 = vadd.f32 %v9675, %v9714
        %v9716 = vpop.f32.mrb[0].mxu0
        %v9717 = vpop.f32.mrb[0].mxu0
        %v9718 = vpop.f32.mrb[0].mxu0
        %9719 = vdwg.mxu0
        %9720 = vmatprep.subr.bf16.mxu0 0
        %9721 = vmatpush1.bf16.msra.mxu0 %v7456
        %9722 = vmatprep.subr.bf16.mxu0 0
        %9723 = vmatpush1.bf16.msra.mxu0 %v7457
        %9724 = vmatprep.subr.bf16.mxu0 0
        %9725 = vmatpush1.bf16.msra.mxu0 %v7458
        %9726 = vmatprep.subr.bf16.mxu0 0
        %9727 = vmatpush1.bf16.msra.mxu0 %v7459
        %9728 = vmatprep.subr.bf16.mxu0 0
        %9729 = vmatpush1.bf16.msra.mxu0 %v7460
        %9730 = vmatprep.subr.bf16.mxu0 0
        %9731 = vmatpush1.bf16.msra.mxu0 %v7461
        %9732 = vmatprep.subr.bf16.mxu0 0
        %9733 = vmatpush1.bf16.msra.mxu0 %v7462
        %9734 = vmatprep.subr.bf16.mxu0 0
        %9735 = vmatpush1.bf16.msra.mxu0 %v7463
        %9736 = vmatprep.subr.bf16.mxu0 0
        %9737 = vmatpush1.bf16.msra.mxu0 %v7464
        %9738 = vmatprep.subr.bf16.mxu0 0
        %9739 = vmatpush1.bf16.msra.mxu0 %v7465
        %9740 = vmatprep.subr.bf16.mxu0 0
        %9741 = vmatpush1.bf16.msra.mxu0 %v7466
        %9742 = vmatprep.subr.bf16.mxu0 0
        %9743 = vmatpush1.bf16.msra.mxu0 %v7467
        %9744 = vmatprep.subr.bf16.mxu0 0
        %9745 = vmatpush1.bf16.msra.mxu0 %v7468
        %9746 = vmatprep.subr.bf16.mxu0 0
        %9747 = vmatpush1.bf16.msra.mxu0 %v7469
        %9748 = vmatprep.subr.bf16.mxu0 0
        %9749 = vmatpush1.bf16.msra.mxu0 %v7470
        %9750 = vmatprep.subr.bf16.mxu0 0
        %9751 = vmatpush1.bf16.msra.mxu0 %v7471
        %9752 = vmatprep.mubr.bf16.mxu0 %v2449
        %9753 = vmatmul.mubr.bf16.gmra.mrb[0].mxu0 %v2447
        %v9754 = vpop.f32.mrb[0].mxu0
        %v9755 = vadd.f32 %v9715, %v9754
        %v9756 = vpop.f32.mrb[0].mxu0
        %v9757 = vpop.f32.mrb[0].mxu0
        %v9758 = vpop.f32.mrb[0].mxu0
        %9759 = vdwg.mxu0
        %9760 = vmatprep.subr.bf16.mxu0 0
        %9761 = vmatpush1.bf16.msra.mxu0 %v7472
        %9762 = vmatprep.subr.bf16.mxu0 0
        %9763 = vmatpush1.bf16.msra.mxu0 %v7473
        %9764 = vmatprep.subr.bf16.mxu0 0
        %9765 = vmatpush1.bf16.msra.mxu0 %v7474
        %9766 = vmatprep.subr.bf16.mxu0 0
        %9767 = vmatpush1.bf16.msra.mxu0 %v7475
        %9768 = vmatprep.subr.bf16.mxu0 0
        %9769 = vmatpush1.bf16.msra.mxu0 %v7476
        %9770 = vmatprep.subr.bf16.mxu0 0
        %9771 = vmatpush1.bf16.msra.mxu0 %v7477
        %9772 = vmatprep.subr.bf16.mxu0 0
        %9773 = vmatpush1.bf16.msra.mxu0 %v7478
        %9774 = vmatprep.subr.bf16.mxu0 0
        %9775 = vmatpush1.bf16.msra.mxu0 %v7479
        %9776 = vmatprep.subr.bf16.mxu0 0
        %9777 = vmatpush1.bf16.msra.mxu0 %v7480
        %9778 = vmatprep.subr.bf16.mxu0 0
        %9779 = vmatpush1.bf16.msra.mxu0 %v7481
        %9780 = vmatprep.subr.bf16.mxu0 0
        %9781 = vmatpush1.bf16.msra.mxu0 %v7482
        %9782 = vmatprep.subr.bf16.mxu0 0
        %9783 = vmatpush1.bf16.msra.mxu0 %v7483
        %9784 = vmatprep.subr.bf16.mxu0 0
        %9785 = vmatpush1.bf16.msra.mxu0 %v7484
        %9786 = vmatprep.subr.bf16.mxu0 0
        %9787 = vmatpush1.bf16.msra.mxu0 %v7485
        %9788 = vmatprep.subr.bf16.mxu0 0
        %9789 = vmatpush1.bf16.msra.mxu0 %v7486
        %9790 = vmatprep.subr.bf16.mxu0 0
        %9791 = vmatpush1.bf16.msra.mxu0 %v7487
        %9792 = vmatprep.mubr.bf16.mxu0 %v2446
        %9793 = vmatmul.mubr.bf16.gmra.mrb[0].mxu0 %v2432
        %v9794 = vpop.f32.mrb[0].mxu0
        %v9795 = vadd.f32 %v9755, %v9794
        %v9796 = vpop.f32.mrb[0].mxu0
        %v9797 = vpop.f32.mrb[0].mxu0
        %v9798 = vpop.f32.mrb[0].mxu0
        %9799 = vdwg.mxu0
        %9800 = vmatprep.subr.bf16.mxu0 0
        %9801 = vmatpush1.bf16.msra.mxu0 %v7488
        %9802 = vmatprep.subr.bf16.mxu0 0
        %9803 = vmatpush1.bf16.msra.mxu0 %v7489
        %9804 = vmatprep.subr.bf16.mxu0 0
        %9805 = vmatpush1.bf16.msra.mxu0 %v7490
        %9806 = vmatprep.subr.bf16.mxu0 0
        %9807 = vmatpush1.bf16.msra.mxu0 %v7491
        %9808 = vmatprep.subr.bf16.mxu0 0
        %9809 = vmatpush1.bf16.msra.mxu0 %v7492
        %9810 = vmatprep.subr.bf16.mxu0 0
        %9811 = vmatpush1.bf16.msra.mxu0 %v7493
        %9812 = vmatprep.subr.bf16.mxu0 0
        %9813 = vmatpush1.bf16.msra.mxu0 %v7494
        %9814 = vmatprep.subr.bf16.mxu0 0
        %9815 = vmatpush1.bf16.msra.mxu0 %v7495
        %9816 = vmatprep.subr.bf16.mxu0 0
        %9817 = vmatpush1.bf16.msra.mxu0 %v7496
        %9818 = vmatprep.subr.bf16.mxu0 0
        %9819 = vmatpush1.bf16.msra.mxu0 %v7497
        %9820 = vmatprep.subr.bf16.mxu0 0
        %9821 = vmatpush1.bf16.msra.mxu0 %v7498
        %9822 = vmatprep.subr.bf16.mxu0 0
        %9823 = vmatpush1.bf16.msra.mxu0 %v7499
        %9824 = vmatprep.subr.bf16.mxu0 0
        %9825 = vmatpush1.bf16.msra.mxu0 %v7500
        %9826 = vmatprep.subr.bf16.mxu0 0
        %9827 = vmatpush1.bf16.msra.mxu0 %v7501
        %9828 = vmatprep.subr.bf16.mxu0 0
        %9829 = vmatpush1.bf16.msra.mxu0 %v7502
        %9830 = vmatprep.subr.bf16.mxu0 0
        %9831 = vmatpush1.bf16.msra.mxu0 %v7503
        %9832 = vmatprep.mubr.bf16.mxu0 %v2450
        %9833 = vmatmul.mubr.bf16.gmra.mrb[0].mxu0 %v2448
        %v9834 = vpop.f32.mrb[0].mxu0
        %v9835 = vadd.f32 %v9795, %v9834
        %v9836 = vpop.f32.mrb[0].mxu0
        %v9837 = vpop.f32.mrb[0].mxu0
        %v9838 = vpop.f32.mrb[0].mxu0
        %9839 = vdwg.mxu0
        %9840 = vmatprep.subr.bf16.mxu0 0
        %9841 = vmatpush1.bf16.msra.mxu0 %v7504
        %9842 = vmatprep.subr.bf16.mxu0 0
        %9843 = vmatpush1.bf16.msra.mxu0 %v7505
        %9844 = vmatprep.subr.bf16.mxu0 0
        %9845 = vmatpush1.bf16.msra.mxu0 %v7506
        %9846 = vmatprep.subr.bf16.mxu0 0
        %9847 = vmatpush1.bf16.msra.mxu0 %v7507
        %9848 = vmatprep.subr.bf16.mxu0 0
        %9849 = vmatpush1.bf16.msra.mxu0 %v7508
        %9850 = vmatprep.subr.bf16.mxu0 0
        %9851 = vmatpush1.bf16.msra.mxu0 %v7509
        %9852 = vmatprep.subr.bf16.mxu0 0
        %9853 = vmatpush1.bf16.msra.mxu0 %v7510
        %9854 = vmatprep.subr.bf16.mxu0 0
        %9855 = vmatpush1.bf16.msra.mxu0 %v7511
        %9856 = vmatprep.subr.bf16.mxu0 0
        %9857 = vmatpush1.bf16.msra.mxu0 %v7512
        %9858 = vmatprep.subr.bf16.mxu0 0
        %9859 = vmatpush1.bf16.msra.mxu0 %v7513
        %9860 = vmatprep.subr.bf16.mxu0 0
        %9861 = vmatpush1.bf16.msra.mxu0 %v7514
        %9862 = vmatprep.subr.bf16.mxu0 0
        %9863 = vmatpush1.bf16.msra.mxu0 %v7515
        %9864 = vmatprep.subr.bf16.mxu0 0
        %9865 = vmatpush1.bf16.msra.mxu0 %v7516
        %9866 = vmatprep.subr.bf16.mxu0 0
        %9867 = vmatpush1.bf16.msra.mxu0 %v7517
        %9868 = vmatprep.subr.bf16.mxu0 0
        %9869 = vmatpush1.bf16.msra.mxu0 %v7518
        %9870 = vmatprep.subr.bf16.mxu0 0
        %9871 = vmatpush1.bf16.msra.mxu0 %v7519
        %9872 = vmatprep.mubr.bf16.mxu0 %v2488
        %9873 = vmatmul.mubr.bf16.gmra.mrb[0].mxu0 %v2474
        %v9874 = vpop.f32.mrb[0].mxu0
        %v9875 = vadd.f32 %v9835, %v9874
        %v9876 = vpop.f32.mrb[0].mxu0
        %v9877 = vpop.f32.mrb[0].mxu0
        %v9878 = vpop.f32.mrb[0].mxu0
        %9879 = vdwg.mxu0
        %9880 = vmatprep.subr.bf16.mxu0 0
        %9881 = vmatpush1.bf16.msra.mxu0 %v7520
        %9882 = vmatprep.subr.bf16.mxu0 0
        %9883 = vmatpush1.bf16.msra.mxu0 %v7521
        %9884 = vmatprep.subr.bf16.mxu0 0
        %9885 = vmatpush1.bf16.msra.mxu0 %v7522
        %9886 = vmatprep.subr.bf16.mxu0 0
        %9887 = vmatpush1.bf16.msra.mxu0 %v7523
        %9888 = vmatprep.subr.bf16.mxu0 0
        %9889 = vmatpush1.bf16.msra.mxu0 %v7524
        %9890 = vmatprep.subr.bf16.mxu0 0
        %9891 = vmatpush1.bf16.msra.mxu0 %v7525
        %9892 = vmatprep.subr.bf16.mxu0 0
        %9893 = vmatpush1.bf16.msra.mxu0 %v7526
        %9894 = vmatprep.subr.bf16.mxu0 0
        %9895 = vmatpush1.bf16.msra.mxu0 %v7527
        %9896 = vmatprep.subr.bf16.mxu0 0
        %9897 = vmatpush1.bf16.msra.mxu0 %v7528
        %9898 = vmatprep.subr.bf16.mxu0 0
        %9899 = vmatpush1.bf16.msra.mxu0 %v7529
        %9900 = vmatprep.subr.bf16.mxu0 0
        %9901 = vmatpush1.bf16.msra.mxu0 %v7530
        %9902 = vmatprep.subr.bf16.mxu0 0
        %9903 = vmatpush1.bf16.msra.mxu0 %v7531
        %9904 = vmatprep.subr.bf16.mxu0 0
        %9905 = vmatpush1.bf16.msra.mxu0 %v7532
        %9906 = vmatprep.subr.bf16.mxu0 0
        %9907 = vmatpush1.bf16.msra.mxu0 %v7533
        %9908 = vmatprep.subr.bf16.mxu0 0
        %9909 = vmatpush1.bf16.msra.mxu0 %v7534
        %9910 = vmatprep.subr.bf16.mxu0 0
        %9911 = vmatpush1.bf16.msra.mxu0 %v7535
        %9912 = vmatprep.mubr.bf16.mxu0 %v2498
        %9913 = vmatmul.mubr.bf16.gmra.mrb[0].mxu0 %v2496
        %v9914 = vpop.f32.mrb[0].mxu0
        %v9915 = vadd.f32 %v9875, %v9914
        %v9916 = vpop.f32.mrb[0].mxu0
        %v9917 = vpop.f32.mrb[0].mxu0
        %v9918 = vpop.f32.mrb[0].mxu0
        %9919 = vdwg.mxu0
        %9920 = vmatprep.subr.bf16.mxu0 0
        %9921 = vmatpush1.bf16.msra.mxu0 %v7536
        %9922 = vmatprep.subr.bf16.mxu0 0
        %9923 = vmatpush1.bf16.msra.mxu0 %v7537
        %9924 = vmatprep.subr.bf16.mxu0 0
        %9925 = vmatpush1.bf16.msra.mxu0 %v7538
        %9926 = vmatprep.subr.bf16.mxu0 0
        %9927 = vmatpush1.bf16.msra.mxu0 %v7539
        %9928 = vmatprep.subr.bf16.mxu0 0
        %9929 = vmatpush1.bf16.msra.mxu0 %v7540
        %9930 = vmatprep.subr.bf16.mxu0 0
        %9931 = vmatpush1.bf16.msra.mxu0 %v7541
        %9932 = vmatprep.subr.bf16.mxu0 0
        %9933 = vmatpush1.bf16.msra.mxu0 %v7542
        %9934 = vmatprep.subr.bf16.mxu0 0
        %9935 = vmatpush1.bf16.msra.mxu0 %v7543
        %9936 = vmatprep.subr.bf16.mxu0 0
        %9937 = vmatpush1.bf16.msra.mxu0 %v7544
        %9938 = vmatprep.subr.bf16.mxu0 0
        %9939 = vmatpush1.bf16.msra.mxu0 %v7545
        %9940 = vmatprep.subr.bf16.mxu0 0
        %9941 = vmatpush1.bf16.msra.mxu0 %v7546
        %9942 = vmatprep.subr.bf16.mxu0 0
        %9943 = vmatpush1.bf16.msra.mxu0 %v7547
        %9944 = vmatprep.subr.bf16.mxu0 0
        %9945 = vmatpush1.bf16.msra.mxu0 %v7548
        %9946 = vmatprep.subr.bf16.mxu0 0
        %9947 = vmatpush1.bf16.msra.mxu0 %v7549
        %9948 = vmatprep.subr.bf16.mxu0 0
        %9949 = vmatpush1.bf16.msra.mxu0 %v7550
        %9950 = vmatprep.subr.bf16.mxu0 0
        %9951 = vmatpush1.bf16.msra.mxu0 %v7551
        %9952 = vmatprep.mubr.bf16.mxu0 %v2495
        %9953 = vmatmul.mubr.bf16.gmra.mrb[0].mxu0 %v2481
        %v9954 = vpop.f32.mrb[0].mxu0
        %v9955 = vadd.f32 %v9915, %v9954
        %v9956 = vpop.f32.mrb[0].mxu0
        %v9957 = vpop.f32.mrb[0].mxu0
        %v9958 = vpop.f32.mrb[0].mxu0
        %9959 = vdwg.mxu0
        %9960 = vmatprep.subr.bf16.mxu0 0
        %9961 = vmatpush1.bf16.msra.mxu0 %v7552
        %9962 = vmatprep.subr.bf16.mxu0 0
        %9963 = vmatpush1.bf16.msra.mxu0 %v7553
        %9964 = vmatprep.subr.bf16.mxu0 0
        %9965 = vmatpush1.bf16.msra.mxu0 %v7554
        %9966 = vmatprep.subr.bf16.mxu0 0
        %9967 = vmatpush1.bf16.msra.mxu0 %v7555
        %9968 = vmatprep.subr.bf16.mxu0 0
        %9969 = vmatpush1.bf16.msra.mxu0 %v7556
        %9970 = vmatprep.subr.bf16.mxu0 0
        %9971 = vmatpush1.bf16.msra.mxu0 %v7557
        %9972 = vmatprep.subr.bf16.mxu0 0
        %9973 = vmatpush1.bf16.msra.mxu0 %v7558
        %9974 = vmatprep.subr.bf16.mxu0 0
        %9975 = vmatpush1.bf16.msra.mxu0 %v7559
        %9976 = vmatprep.subr.bf16.mxu0 0
        %9977 = vmatpush1.bf16.msra.mxu0 %v7560
        %9978 = vmatprep.subr.bf16.mxu0 0
        %9979 = vmatpush1.bf16.msra.mxu0 %v7561
        %9980 = vmatprep.subr.bf16.mxu0 0
        %9981 = vmatpush1.bf16.msra.mxu0 %v7562
        %9982 = vmatprep.subr.bf16.mxu0 0
        %9983 = vmatpush1.bf16.msra.mxu0 %v7563
        %9984 = vmatprep.subr.bf16.mxu0 0
        %9985 = vmatpush1.bf16.msra.mxu0 %v7564
        %9986 = vmatprep.subr.bf16.mxu0 0
        %9987 = vmatpush1.bf16.msra.mxu0 %v7565
        %9988 = vmatprep.subr.bf16.mxu0 0
        %9989 = vmatpush1.bf16.msra.mxu0 %v7566
        %9990 = vmatprep.subr.bf16.mxu0 0
        %9991 = vmatpush1.bf16.msra.mxu0 %v7567
        %9992 = vmatprep.mubr.bf16.mxu0 %v2499
        %9993 = vmatmul.mubr.bf16.gmra.mrb[0].mxu0 %v2497
        %v9994 = vpop.f32.mrb[0].mxu0
        %v9995 = vadd.f32 %v9955, %v9994
        %v9996 = vpop.f32.mrb[0].mxu0
        %v9997 = vpop.f32.mrb[0].mxu0
        %v9998 = vpop.f32.mrb[0].mxu0
        %9999 = vdwg.mxu0
        %10000 = vmatprep.subr.bf16.mxu0 0
        %10001 = vmatpush1.bf16.msra.mxu0 %v7568
        %10002 = vmatprep.subr.bf16.mxu0 0
        %10003 = vmatpush1.bf16.msra.mxu0 %v7569
        %10004 = vmatprep.subr.bf16.mxu0 0
        %10005 = vmatpush1.bf16.msra.mxu0 %v7570
        %10006 = vmatprep.subr.bf16.mxu0 0
        %10007 = vmatpush1.bf16.msra.mxu0 %v7571
        %10008 = vmatprep.subr.bf16.mxu0 0
        %10009 = vmatpush1.bf16.msra.mxu0 %v7572
        %10010 = vmatprep.subr.bf16.mxu0 0
        %10011 = vmatpush1.bf16.msra.mxu0 %v7573
        %10012 = vmatprep.subr.bf16.mxu0 0
        %10013 = vmatpush1.bf16.msra.mxu0 %v7574
        %10014 = vmatprep.subr.bf16.mxu0 0
        %10015 = vmatpush1.bf16.msra.mxu0 %v7575
        %10016 = vmatprep.subr.bf16.mxu0 0
        %10017 = vmatpush1.bf16.msra.mxu0 %v7576
        %10018 = vmatprep.subr.bf16.mxu0 0
        %10019 = vmatpush1.bf16.msra.mxu0 %v7577
        %10020 = vmatprep.subr.bf16.mxu0 0
        %10021 = vmatpush1.bf16.msra.mxu0 %v7578
        %10022 = vmatprep.subr.bf16.mxu0 0
        %10023 = vmatpush1.bf16.msra.mxu0 %v7579
        %10024 = vmatprep.subr.bf16.mxu0 0
        %10025 = vmatpush1.bf16.msra.mxu0 %v7580
        %10026 = vmatprep.subr.bf16.mxu0 0
        %10027 = vmatpush1.bf16.msra.mxu0 %v7581
        %10028 = vmatprep.subr.bf16.mxu0 0
        %10029 = vmatpush1.bf16.msra.mxu0 %v7582
        %10030 = vmatprep.subr.bf16.mxu0 0
        %10031 = vmatpush1.bf16.msra.mxu0 %v7583
        %10032 = vmatprep.mubr.bf16.mxu0 %v2537
        %10033 = vmatmul.mubr.bf16.gmra.mrb[0].mxu0 %v2523
        %v10034 = vpop.f32.mrb[0].mxu0
        %v10035 = vadd.f32 %v9995, %v10034
        %v10036 = vpop.f32.mrb[0].mxu0
        %v10037 = vpop.f32.mrb[0].mxu0
        %v10038 = vpop.f32.mrb[0].mxu0
        %10039 = vdwg.mxu0
        %10040 = vmatprep.subr.bf16.mxu0 0
        %10041 = vmatpush1.bf16.msra.mxu0 %v7584
        %10042 = vmatprep.subr.bf16.mxu0 0
        %10043 = vmatpush1.bf16.msra.mxu0 %v7585
        %10044 = vmatprep.subr.bf16.mxu0 0
        %10045 = vmatpush1.bf16.msra.mxu0 %v7586
        %10046 = vmatprep.subr.bf16.mxu0 0
        %10047 = vmatpush1.bf16.msra.mxu0 %v7587
        %10048 = vmatprep.subr.bf16.mxu0 0
        %10049 = vmatpush1.bf16.msra.mxu0 %v7588
        %10050 = vmatprep.subr.bf16.mxu0 0
        %10051 = vmatpush1.bf16.msra.mxu0 %v7589
        %10052 = vmatprep.subr.bf16.mxu0 0
        %10053 = vmatpush1.bf16.msra.mxu0 %v7590
        %10054 = vmatprep.subr.bf16.mxu0 0
        %10055 = vmatpush1.bf16.msra.mxu0 %v7591
        %10056 = vmatprep.subr.bf16.mxu0 0
        %10057 = vmatpush1.bf16.msra.mxu0 %v7592
        %10058 = vmatprep.subr.bf16.mxu0 0
        %10059 = vmatpush1.bf16.msra.mxu0 %v7593
        %10060 = vmatprep.subr.bf16.mxu0 0
        %10061 = vmatpush1.bf16.msra.mxu0 %v7594
        %10062 = vmatprep.subr.bf16.mxu0 0
        %10063 = vmatpush1.bf16.msra.mxu0 %v7595
        %10064 = vmatprep.subr.bf16.mxu0 0
        %10065 = vmatpush1.bf16.msra.mxu0 %v7596
        %10066 = vmatprep.subr.bf16.mxu0 0
        %10067 = vmatpush1.bf16.msra.mxu0 %v7597
        %10068 = vmatprep.subr.bf16.mxu0 0
        %10069 = vmatpush1.bf16.msra.mxu0 %v7598
        %10070 = vmatprep.subr.bf16.mxu0 0
        %10071 = vmatpush1.bf16.msra.mxu0 %v7599
        %10072 = vmatprep.mubr.bf16.mxu0 %v2547
        %10073 = vmatmul.mubr.bf16.gmra.mrb[0].mxu0 %v2545
        %v10074 = vpop.f32.mrb[0].mxu0
        %v10075 = vadd.f32 %v10035, %v10074
        %v10076 = vpop.f32.mrb[0].mxu0
        %v10077 = vpop.f32.mrb[0].mxu0
        %v10078 = vpop.f32.mrb[0].mxu0
        %10079 = vdwg.mxu0
        %10080 = vmatprep.subr.bf16.mxu0 0
        %10081 = vmatpush1.bf16.msra.mxu0 %v7600
        %10082 = vmatprep.subr.bf16.mxu0 0
        %10083 = vmatpush1.bf16.msra.mxu0 %v7601
        %10084 = vmatprep.subr.bf16.mxu0 0
        %10085 = vmatpush1.bf16.msra.mxu0 %v7602
        %10086 = vmatprep.subr.bf16.mxu0 0
        %10087 = vmatpush1.bf16.msra.mxu0 %v7603
        %10088 = vmatprep.subr.bf16.mxu0 0
        %10089 = vmatpush1.bf16.msra.mxu0 %v7604
        %10090 = vmatprep.subr.bf16.mxu0 0
        %10091 = vmatpush1.bf16.msra.mxu0 %v7605
        %10092 = vmatprep.subr.bf16.mxu0 0
        %10093 = vmatpush1.bf16.msra.mxu0 %v7606
        %10094 = vmatprep.subr.bf16.mxu0 0
        %10095 = vmatpush1.bf16.msra.mxu0 %v7607
        %10096 = vmatprep.subr.bf16.mxu0 0
        %10097 = vmatpush1.bf16.msra.mxu0 %v7608
        %10098 = vmatprep.subr.bf16.mxu0 0
        %10099 = vmatpush1.bf16.msra.mxu0 %v7609
        %10100 = vmatprep.subr.bf16.mxu0 0
        %10101 = vmatpush1.bf16.msra.mxu0 %v7610
        %10102 = vmatprep.subr.bf16.mxu0 0
        %10103 = vmatpush1.bf16.msra.mxu0 %v7611
        %10104 = vmatprep.subr.bf16.mxu0 0
        %10105 = vmatpush1.bf16.msra.mxu0 %v7612
        %10106 = vmatprep.subr.bf16.mxu0 0
        %10107 = vmatpush1.bf16.msra.mxu0 %v7613
        %10108 = vmatprep.subr.bf16.mxu0 0
        %10109 = vmatpush1.bf16.msra.mxu0 %v7614
        %10110 = vmatprep.subr.bf16.mxu0 0
        %10111 = vmatpush1.bf16.msra.mxu0 %v7615
        %10112 = vmatprep.mubr.bf16.mxu0 %v2544
        %10113 = vmatmul.mubr.bf16.gmra.mrb[0].mxu0 %v2530
        %v10114 = vpop.f32.mrb[0].mxu0
        %v10115 = vadd.f32 %v10075, %v10114
        %v10116 = vpop.f32.mrb[0].mxu0
        %v10117 = vpop.f32.mrb[0].mxu0
        %v10118 = vpop.f32.mrb[0].mxu0
        %10119 = vdwg.mxu0
        %10120 = vmatprep.subr.bf16.mxu0 0
        %10121 = vmatpush1.bf16.msra.mxu0 %v7616
        %10122 = vmatprep.subr.bf16.mxu0 0
        %10123 = vmatpush1.bf16.msra.mxu0 %v7617
        %10124 = vmatprep.subr.bf16.mxu0 0
        %10125 = vmatpush1.bf16.msra.mxu0 %v7618
        %10126 = vmatprep.subr.bf16.mxu0 0
        %10127 = vmatpush1.bf16.msra.mxu0 %v7619
        %10128 = vmatprep.subr.bf16.mxu0 0
        %10129 = vmatpush1.bf16.msra.mxu0 %v7620
        %10130 = vmatprep.subr.bf16.mxu0 0
        %10131 = vmatpush1.bf16.msra.mxu0 %v7621
        %10132 = vmatprep.subr.bf16.mxu0 0
        %10133 = vmatpush1.bf16.msra.mxu0 %v7622
        %10134 = vmatprep.subr.bf16.mxu0 0
        %10135 = vmatpush1.bf16.msra.mxu0 %v7623
        %10136 = vmatprep.subr.bf16.mxu0 0
        %10137 = vmatpush1.bf16.msra.mxu0 %v7624
        %10138 = vmatprep.subr.bf16.mxu0 0
        %10139 = vmatpush1.bf16.msra.mxu0 %v7625
        %10140 = vmatprep.subr.bf16.mxu0 0
        %10141 = vmatpush1.bf16.msra.mxu0 %v7626
        %10142 = vmatprep.subr.bf16.mxu0 0
        %10143 = vmatpush1.bf16.msra.mxu0 %v7627
        %10144 = vmatprep.subr.bf16.mxu0 0
        %10145 = vmatpush1.bf16.msra.mxu0 %v7628
        %10146 = vmatprep.subr.bf16.mxu0 0
        %10147 = vmatpush1.bf16.msra.mxu0 %v7629
        %10148 = vmatprep.subr.bf16.mxu0 0
        %10149 = vmatpush1.bf16.msra.mxu0 %v7630
        %10150 = vmatprep.subr.bf16.mxu0 0
        %10151 = vmatpush1.bf16.msra.mxu0 %v7631
        %10152 = vmatprep.mubr.bf16.mxu0 %v2548
        %10153 = vmatmul.mubr.bf16.gmra.mrb[0].mxu0 %v2546
        %v10154 = vpop.f32.mrb[0].mxu0
        %v10155 = vadd.f32 %v10115, %v10154
        %v10156 = vpop.f32.mrb[0].mxu0
        %v10157 = vpop.f32.mrb[0].mxu0
        %v10158 = vpop.f32.mrb[0].mxu0
        %10159 = vdwg.mxu0
        %10160 = vmatprep.subr.bf16.mxu0 0
        %10161 = vmatpush1.bf16.msra.mxu0 %v7632
        %10162 = vmatprep.subr.bf16.mxu0 0
        %10163 = vmatpush1.bf16.msra.mxu0 %v7633
        %10164 = vmatprep.subr.bf16.mxu0 0
        %10165 = vmatpush1.bf16.msra.mxu0 %v7634
        %10166 = vmatprep.subr.bf16.mxu0 0
        %10167 = vmatpush1.bf16.msra.mxu0 %v7635
        %10168 = vmatprep.subr.bf16.mxu0 0
        %10169 = vmatpush1.bf16.msra.mxu0 %v7636
        %10170 = vmatprep.subr.bf16.mxu0 0
        %10171 = vmatpush1.bf16.msra.mxu0 %v7637
        %10172 = vmatprep.subr.bf16.mxu0 0
        %10173 = vmatpush1.bf16.msra.mxu0 %v7638
        %10174 = vmatprep.subr.bf16.mxu0 0
        %10175 = vmatpush1.bf16.msra.mxu0 %v7639
        %10176 = vmatprep.subr.bf16.mxu0 0
        %10177 = vmatpush1.bf16.msra.mxu0 %v7640
        %10178 = vmatprep.subr.bf16.mxu0 0
        %10179 = vmatpush1.bf16.msra.mxu0 %v7641
        %10180 = vmatprep.subr.bf16.mxu0 0
        %10181 = vmatpush1.bf16.msra.mxu0 %v7642
        %10182 = vmatprep.subr.bf16.mxu0 0
        %10183 = vmatpush1.bf16.msra.mxu0 %v7643
        %10184 = vmatprep.subr.bf16.mxu0 0
        %10185 = vmatpush1.bf16.msra.mxu0 %v7644
        %10186 = vmatprep.subr.bf16.mxu0 0
        %10187 = vmatpush1.bf16.msra.mxu0 %v7645
        %10188 = vmatprep.subr.bf16.mxu0 0
        %10189 = vmatpush1.bf16.msra.mxu0 %v7646
        %10190 = vmatprep.subr.bf16.mxu0 0
        %10191 = vmatpush1.bf16.msra.mxu0 %v7647
        %10192 = vmatprep.mubr.bf16.mxu0 %v2586
        %10193 = vmatmul.mubr.bf16.gmra.mrb[0].mxu0 %v2572
        %v10194 = vpop.f32.mrb[0].mxu0
        %v10195 = vadd.f32 %v10155, %v10194
        %v10196 = vpop.f32.mrb[0].mxu0
        %v10197 = vpop.f32.mrb[0].mxu0
        %v10198 = vpop.f32.mrb[0].mxu0
        %10199 = vdwg.mxu0
        %10200 = vmatprep.subr.bf16.mxu0 0
        %10201 = vmatpush1.bf16.msra.mxu0 %v7648
        %10202 = vmatprep.subr.bf16.mxu0 0
        %10203 = vmatpush1.bf16.msra.mxu0 %v7649
        %10204 = vmatprep.subr.bf16.mxu0 0
        %10205 = vmatpush1.bf16.msra.mxu0 %v7650
        %10206 = vmatprep.subr.bf16.mxu0 0
        %10207 = vmatpush1.bf16.msra.mxu0 %v7651
        %10208 = vmatprep.subr.bf16.mxu0 0
        %10209 = vmatpush1.bf16.msra.mxu0 %v7652
        %10210 = vmatprep.subr.bf16.mxu0 0
        %10211 = vmatpush1.bf16.msra.mxu0 %v7653
        %10212 = vmatprep.subr.bf16.mxu0 0
        %10213 = vmatpush1.bf16.msra.mxu0 %v7654
        %10214 = vmatprep.subr.bf16.mxu0 0
        %10215 = vmatpush1.bf16.msra.mxu0 %v7655
        %10216 = vmatprep.subr.bf16.mxu0 0
        %10217 = vmatpush1.bf16.msra.mxu0 %v7656
        %10218 = vmatprep.subr.bf16.mxu0 0
        %10219 = vmatpush1.bf16.msra.mxu0 %v7657
        %10220 = vmatprep.subr.bf16.mxu0 0
        %10221 = vmatpush1.bf16.msra.mxu0 %v7658
        %10222 = vmatprep.subr.bf16.mxu0 0
        %10223 = vmatpush1.bf16.msra.mxu0 %v7659
        %10224 = vmatprep.subr.bf16.mxu0 0
        %10225 = vmatpush1.bf16.msra.mxu0 %v7660
        %10226 = vmatprep.subr.bf16.mxu0 0
        %10227 = vmatpush1.bf16.msra.mxu0 %v7661
        %10228 = vmatprep.subr.bf16.mxu0 0
        %10229 = vmatpush1.bf16.msra.mxu0 %v7662
        %10230 = vmatprep.subr.bf16.mxu0 0
        %10231 = vmatpush1.bf16.msra.mxu0 %v7663
        %10232 = vmatprep.mubr.bf16.mxu0 %v2596
        %10233 = vmatmul.mubr.bf16.gmra.mrb[0].mxu0 %v2594
        %v10234 = vpop.f32.mrb[0].mxu0
        %v10235 = vadd.f32 %v10195, %v10234
        %v10236 = vpop.f32.mrb[0].mxu0
        %v10237 = vpop.f32.mrb[0].mxu0
        %v10238 = vpop.f32.mrb[0].mxu0
        %10239 = vdwg.mxu0
        %10240 = vmatprep.subr.bf16.mxu0 0
        %10241 = vmatpush1.bf16.msra.mxu0 %v7664
        %10242 = vmatprep.subr.bf16.mxu0 0
        %10243 = vmatpush1.bf16.msra.mxu0 %v7665
        %10244 = vmatprep.subr.bf16.mxu0 0
        %10245 = vmatpush1.bf16.msra.mxu0 %v7666
        %10246 = vmatprep.subr.bf16.mxu0 0
        %10247 = vmatpush1.bf16.msra.mxu0 %v7667
        %10248 = vmatprep.subr.bf16.mxu0 0
        %10249 = vmatpush1.bf16.msra.mxu0 %v7668
        %10250 = vmatprep.subr.bf16.mxu0 0
        %10251 = vmatpush1.bf16.msra.mxu0 %v7669
        %10252 = vmatprep.subr.bf16.mxu0 0
        %10253 = vmatpush1.bf16.msra.mxu0 %v7670
        %10254 = vmatprep.subr.bf16.mxu0 0
        %10255 = vmatpush1.bf16.msra.mxu0 %v7671
        %10256 = vmatprep.subr.bf16.mxu0 0
        %10257 = vmatpush1.bf16.msra.mxu0 %v7672
        %10258 = vmatprep.subr.bf16.mxu0 0
        %10259 = vmatpush1.bf16.msra.mxu0 %v7673
        %10260 = vmatprep.subr.bf16.mxu0 0
        %10261 = vmatpush1.bf16.msra.mxu0 %v7674
        %10262 = vmatprep.subr.bf16.mxu0 0
        %10263 = vmatpush1.bf16.msra.mxu0 %v7675
        %10264 = vmatprep.subr.bf16.mxu0 0
        %10265 = vmatpush1.bf16.msra.mxu0 %v7676
        %10266 = vmatprep.subr.bf16.mxu0 0
        %10267 = vmatpush1.bf16.msra.mxu0 %v7677
        %10268 = vmatprep.subr.bf16.mxu0 0
        %10269 = vmatpush1.bf16.msra.mxu0 %v7678
        %10270 = vmatprep.subr.bf16.mxu0 0
        %10271 = vmatpush1.bf16.msra.mxu0 %v7679
        %10272 = vmatprep.mubr.bf16.mxu0 %v2593
        %10273 = vmatmul.mubr.bf16.gmra.mrb[0].mxu0 %v2579
        %v10274 = vpop.f32.mrb[0].mxu0
        %v10275 = vadd.f32 %v10235, %v10274
        %v10276 = vpop.f32.mrb[0].mxu0
        %v10277 = vpop.f32.mrb[0].mxu0
        %v10278 = vpop.f32.mrb[0].mxu0
        %10279 = vdwg.mxu0
        %10280 = vmatprep.subr.bf16.mxu0 0
        %10281 = vmatpush1.bf16.msra.mxu0 %v7680
        %10282 = vmatprep.subr.bf16.mxu0 0
        %10283 = vmatpush1.bf16.msra.mxu0 %v7681
        %10284 = vmatprep.subr.bf16.mxu0 0
        %10285 = vmatpush1.bf16.msra.mxu0 %v7682
        %10286 = vmatprep.subr.bf16.mxu0 0
        %10287 = vmatpush1.bf16.msra.mxu0 %v7683
        %10288 = vmatprep.subr.bf16.mxu0 0
        %10289 = vmatpush1.bf16.msra.mxu0 %v7684
        %10290 = vmatprep.subr.bf16.mxu0 0
        %10291 = vmatpush1.bf16.msra.mxu0 %v7685
        %10292 = vmatprep.subr.bf16.mxu0 0
        %10293 = vmatpush1.bf16.msra.mxu0 %v7686
        %10294 = vmatprep.subr.bf16.mxu0 0
        %10295 = vmatpush1.bf16.msra.mxu0 %v7687
        %10296 = vmatprep.subr.bf16.mxu0 0
        %10297 = vmatpush1.bf16.msra.mxu0 %v7688
        %10298 = vmatprep.subr.bf16.mxu0 0
        %10299 = vmatpush1.bf16.msra.mxu0 %v7689
        %10300 = vmatprep.subr.bf16.mxu0 0
        %10301 = vmatpush1.bf16.msra.mxu0 %v7690
        %10302 = vmatprep.subr.bf16.mxu0 0
        %10303 = vmatpush1.bf16.msra.mxu0 %v7691
        %10304 = vmatprep.subr.bf16.mxu0 0
        %10305 = vmatpush1.bf16.msra.mxu0 %v7692
        %10306 = vmatprep.subr.bf16.mxu0 0
        %10307 = vmatpush1.bf16.msra.mxu0 %v7693
        %10308 = vmatprep.subr.bf16.mxu0 0
        %10309 = vmatpush1.bf16.msra.mxu0 %v7694
        %10310 = vmatprep.subr.bf16.mxu0 0
        %10311 = vmatpush1.bf16.msra.mxu0 %v7695
        %10312 = vmatprep.mubr.bf16.mxu0 %v2597
        %10313 = vmatmul.mubr.bf16.gmra.mrb[0].mxu0 %v2595
        %v10314 = vpop.f32.mrb[0].mxu0
        %v10315 = vadd.f32 %v10275, %v10314
        %v10316 = vpop.f32.mrb[0].mxu0
        %v10317 = vpop.f32.mrb[0].mxu0
        %v10318 = vpop.f32.mrb[0].mxu0
        %10319 = vdwg.mxu0
        %10320 = vmatprep.subr.bf16.mxu0 0
        %10321 = vmatpush1.bf16.msra.mxu0 %v7696
        %10322 = vmatprep.subr.bf16.mxu0 0
        %10323 = vmatpush1.bf16.msra.mxu0 %v7697
        %10324 = vmatprep.subr.bf16.mxu0 0
        %10325 = vmatpush1.bf16.msra.mxu0 %v7698
        %10326 = vmatprep.subr.bf16.mxu0 0
        %10327 = vmatpush1.bf16.msra.mxu0 %v7699
        %10328 = vmatprep.subr.bf16.mxu0 0
        %10329 = vmatpush1.bf16.msra.mxu0 %v7700
        %10330 = vmatprep.subr.bf16.mxu0 0
        %10331 = vmatpush1.bf16.msra.mxu0 %v7701
        %10332 = vmatprep.subr.bf16.mxu0 0
        %10333 = vmatpush1.bf16.msra.mxu0 %v7702
        %10334 = vmatprep.subr.bf16.mxu0 0
        %10335 = vmatpush1.bf16.msra.mxu0 %v7703
        %10336 = vmatprep.subr.bf16.mxu0 0
        %10337 = vmatpush1.bf16.msra.mxu0 %v7704
        %10338 = vmatprep.subr.bf16.mxu0 0
        %10339 = vmatpush1.bf16.msra.mxu0 %v7705
        %10340 = vmatprep.subr.bf16.mxu0 0
        %10341 = vmatpush1.bf16.msra.mxu0 %v7706
        %10342 = vmatprep.subr.bf16.mxu0 0
        %10343 = vmatpush1.bf16.msra.mxu0 %v7707
        %10344 = vmatprep.subr.bf16.mxu0 0
        %10345 = vmatpush1.bf16.msra.mxu0 %v7708
        %10346 = vmatprep.subr.bf16.mxu0 0
        %10347 = vmatpush1.bf16.msra.mxu0 %v7709
        %10348 = vmatprep.subr.bf16.mxu0 0
        %10349 = vmatpush1.bf16.msra.mxu0 %v7710
        %10350 = vmatprep.subr.bf16.mxu0 0
        %10351 = vmatpush1.bf16.msra.mxu0 %v7711
        %10352 = vmatprep.mubr.bf16.mxu0 %v2635
        %10353 = vmatmul.mubr.bf16.gmra.mrb[0].mxu0 %v2621
        %v10354 = vpop.f32.mrb[0].mxu0
        %v10355 = vadd.f32 %v10315, %v10354
        %v10356 = vpop.f32.mrb[0].mxu0
        %v10357 = vpop.f32.mrb[0].mxu0
        %v10358 = vpop.f32.mrb[0].mxu0
        %10359 = vdwg.mxu0
        %10360 = vmatprep.subr.bf16.mxu0 0
        %10361 = vmatpush1.bf16.msra.mxu0 %v7712
        %10362 = vmatprep.subr.bf16.mxu0 0
        %10363 = vmatpush1.bf16.msra.mxu0 %v7713
        %10364 = vmatprep.subr.bf16.mxu0 0
        %10365 = vmatpush1.bf16.msra.mxu0 %v7714
        %10366 = vmatprep.subr.bf16.mxu0 0
        %10367 = vmatpush1.bf16.msra.mxu0 %v7715
        %10368 = vmatprep.subr.bf16.mxu0 0
        %10369 = vmatpush1.bf16.msra.mxu0 %v7716
        %10370 = vmatprep.subr.bf16.mxu0 0
        %10371 = vmatpush1.bf16.msra.mxu0 %v7717
        %10372 = vmatprep.subr.bf16.mxu0 0
        %10373 = vmatpush1.bf16.msra.mxu0 %v7718
        %10374 = vmatprep.subr.bf16.mxu0 0
        %10375 = vmatpush1.bf16.msra.mxu0 %v7719
        %10376 = vmatprep.subr.bf16.mxu0 0
        %10377 = vmatpush1.bf16.msra.mxu0 %v7720
        %10378 = vmatprep.subr.bf16.mxu0 0
        %10379 = vmatpush1.bf16.msra.mxu0 %v7721
        %10380 = vmatprep.subr.bf16.mxu0 0
        %10381 = vmatpush1.bf16.msra.mxu0 %v7722
        %10382 = vmatprep.subr.bf16.mxu0 0
        %10383 = vmatpush1.bf16.msra.mxu0 %v7723
        %10384 = vmatprep.subr.bf16.mxu0 0
        %10385 = vmatpush1.bf16.msra.mxu0 %v7724
        %10386 = vmatprep.subr.bf16.mxu0 0
        %10387 = vmatpush1.bf16.msra.mxu0 %v7725
        %10388 = vmatprep.subr.bf16.mxu0 0
        %10389 = vmatpush1.bf16.msra.mxu0 %v7726
        %10390 = vmatprep.subr.bf16.mxu0 0
        %10391 = vmatpush1.bf16.msra.mxu0 %v7727
        %10392 = vmatprep.mubr.bf16.mxu0 %v2645
        %10393 = vmatmul.mubr.bf16.gmra.mrb[0].mxu0 %v2643
        %v10394 = vpop.f32.mrb[0].mxu0
        %v10395 = vadd.f32 %v10355, %v10394
        %v10396 = vpop.f32.mrb[0].mxu0
        %v10397 = vpop.f32.mrb[0].mxu0
        %v10398 = vpop.f32.mrb[0].mxu0
        %10399 = vdwg.mxu0
        %10400 = vmatprep.subr.bf16.mxu0 0
        %10401 = vmatpush1.bf16.msra.mxu0 %v7728
        %10402 = vmatprep.subr.bf16.mxu0 0
        %10403 = vmatpush1.bf16.msra.mxu0 %v7729
        %10404 = vmatprep.subr.bf16.mxu0 0
        %10405 = vmatpush1.bf16.msra.mxu0 %v7730
        %10406 = vmatprep.subr.bf16.mxu0 0
        %10407 = vmatpush1.bf16.msra.mxu0 %v7731
        %10408 = vmatprep.subr.bf16.mxu0 0
        %10409 = vmatpush1.bf16.msra.mxu0 %v7732
        %10410 = vmatprep.subr.bf16.mxu0 0
        %10411 = vmatpush1.bf16.msra.mxu0 %v7733
        %10412 = vmatprep.subr.bf16.mxu0 0
        %10413 = vmatpush1.bf16.msra.mxu0 %v7734
        %10414 = vmatprep.subr.bf16.mxu0 0
        %10415 = vmatpush1.bf16.msra.mxu0 %v7735
        %10416 = vmatprep.subr.bf16.mxu0 0
        %10417 = vmatpush1.bf16.msra.mxu0 %v7736
        %10418 = vmatprep.subr.bf16.mxu0 0
        %10419 = vmatpush1.bf16.msra.mxu0 %v7737
        %10420 = vmatprep.subr.bf16.mxu0 0
        %10421 = vmatpush1.bf16.msra.mxu0 %v7738
        %10422 = vmatprep.subr.bf16.mxu0 0
        %10423 = vmatpush1.bf16.msra.mxu0 %v7739
        %10424 = vmatprep.subr.bf16.mxu0 0
        %10425 = vmatpush1.bf16.msra.mxu0 %v7740
        %10426 = vmatprep.subr.bf16.mxu0 0
        %10427 = vmatpush1.bf16.msra.mxu0 %v7741
        %10428 = vmatprep.subr.bf16.mxu0 0
        %10429 = vmatpush1.bf16.msra.mxu0 %v7742
        %10430 = vmatprep.subr.bf16.mxu0 0
        %10431 = vmatpush1.bf16.msra.mxu0 %v7743
        %10432 = vmatprep.mubr.bf16.mxu0 %v2642
        %10433 = vmatmul.mubr.bf16.gmra.mrb[0].mxu0 %v2628
        %v10434 = vpop.f32.mrb[0].mxu0
        %v10435 = vadd.f32 %v10395, %v10434
        %v10436 = vpop.f32.mrb[0].mxu0
        %v10437 = vpop.f32.mrb[0].mxu0
        %v10438 = vpop.f32.mrb[0].mxu0
        %10439 = vdwg.mxu0
        %10440 = vmatprep.subr.bf16.mxu0 0
        %10441 = vmatpush1.bf16.msra.mxu0 %v7744
        %10442 = vmatprep.subr.bf16.mxu0 0
        %10443 = vmatpush1.bf16.msra.mxu0 %v7745
        %10444 = vmatprep.subr.bf16.mxu0 0
        %10445 = vmatpush1.bf16.msra.mxu0 %v7746
        %10446 = vmatprep.subr.bf16.mxu0 0
        %10447 = vmatpush1.bf16.msra.mxu0 %v7747
        %10448 = vmatprep.subr.bf16.mxu0 0
        %10449 = vmatpush1.bf16.msra.mxu0 %v7748
        %10450 = vmatprep.subr.bf16.mxu0 0
        %10451 = vmatpush1.bf16.msra.mxu0 %v7749
        %10452 = vmatprep.subr.bf16.mxu0 0
        %10453 = vmatpush1.bf16.msra.mxu0 %v7750
        %10454 = vmatprep.subr.bf16.mxu0 0
        %10455 = vmatpush1.bf16.msra.mxu0 %v7751
        %10456 = vmatprep.subr.bf16.mxu0 0
        %10457 = vmatpush1.bf16.msra.mxu0 %v7752
        %10458 = vmatprep.subr.bf16.mxu0 0
        %10459 = vmatpush1.bf16.msra.mxu0 %v7753
        %10460 = vmatprep.subr.bf16.mxu0 0
        %10461 = vmatpush1.bf16.msra.mxu0 %v7754
        %10462 = vmatprep.subr.bf16.mxu0 0
        %10463 = vmatpush1.bf16.msra.mxu0 %v7755
        %10464 = vmatprep.subr.bf16.mxu0 0
        %10465 = vmatpush1.bf16.msra.mxu0 %v7756
        %10466 = vmatprep.subr.bf16.mxu0 0
        %10467 = vmatpush1.bf16.msra.mxu0 %v7757
        %10468 = vmatprep.subr.bf16.mxu0 0
        %10469 = vmatpush1.bf16.msra.mxu0 %v7758
        %10470 = vmatprep.subr.bf16.mxu0 0
        %10471 = vmatpush1.bf16.msra.mxu0 %v7759
        %10472 = vmatprep.mubr.bf16.mxu0 %v2646
        %10473 = vmatmul.mubr.bf16.gmra.mrb[0].mxu0 %v2644
        %v10474 = vpop.f32.mrb[0].mxu0
        %v10475 = vadd.f32 %v10435, %v10474
        %v10476 = vpop.f32.mrb[0].mxu0
        %v10477 = vpop.f32.mrb[0].mxu0
        %v10478 = vpop.f32.mrb[0].mxu0
        %10479 = vdwg.mxu0
        %10480 = vmatprep.subr.bf16.mxu0 0
        %10481 = vmatpush1.bf16.msra.mxu0 %v7760
        %10482 = vmatprep.subr.bf16.mxu0 0
        %10483 = vmatpush1.bf16.msra.mxu0 %v7761
        %10484 = vmatprep.subr.bf16.mxu0 0
        %10485 = vmatpush1.bf16.msra.mxu0 %v7762
        %10486 = vmatprep.subr.bf16.mxu0 0
        %10487 = vmatpush1.bf16.msra.mxu0 %v7763
        %10488 = vmatprep.subr.bf16.mxu0 0
        %10489 = vmatpush1.bf16.msra.mxu0 %v7764
        %10490 = vmatprep.subr.bf16.mxu0 0
        %10491 = vmatpush1.bf16.msra.mxu0 %v7765
        %10492 = vmatprep.subr.bf16.mxu0 0
        %10493 = vmatpush1.bf16.msra.mxu0 %v7766
        %10494 = vmatprep.subr.bf16.mxu0 0
        %10495 = vmatpush1.bf16.msra.mxu0 %v7767
        %10496 = vmatprep.subr.bf16.mxu0 0
        %10497 = vmatpush1.bf16.msra.mxu0 %v7768
        %10498 = vmatprep.subr.bf16.mxu0 0
        %10499 = vmatpush1.bf16.msra.mxu0 %v7769
        %10500 = vmatprep.subr.bf16.mxu0 0
        %10501 = vmatpush1.bf16.msra.mxu0 %v7770
        %10502 = vmatprep.subr.bf16.mxu0 0
        %10503 = vmatpush1.bf16.msra.mxu0 %v7771
        %10504 = vmatprep.subr.bf16.mxu0 0
        %10505 = vmatpush1.bf16.msra.mxu0 %v7772
        %10506 = vmatprep.subr.bf16.mxu0 0
        %10507 = vmatpush1.bf16.msra.mxu0 %v7773
        %10508 = vmatprep.subr.bf16.mxu0 0
        %10509 = vmatpush1.bf16.msra.mxu0 %v7774
        %10510 = vmatprep.subr.bf16.mxu0 0
        %10511 = vmatpush1.bf16.msra.mxu0 %v7775
        %10512 = vmatprep.mubr.bf16.mxu0 %v2684
        %10513 = vmatmul.mubr.bf16.gmra.mrb[0].mxu0 %v2670
        %v10514 = vpop.f32.mrb[0].mxu0
        %v10515 = vadd.f32 %v10475, %v10514
        %v10516 = vpop.f32.mrb[0].mxu0
        %v10517 = vpop.f32.mrb[0].mxu0
        %v10518 = vpop.f32.mrb[0].mxu0
        %10519 = vdwg.mxu0
        %10520 = vmatprep.subr.bf16.mxu0 0
        %10521 = vmatpush1.bf16.msra.mxu0 %v7776
        %10522 = vmatprep.subr.bf16.mxu0 0
        %10523 = vmatpush1.bf16.msra.mxu0 %v7777
        %10524 = vmatprep.subr.bf16.mxu0 0
        %10525 = vmatpush1.bf16.msra.mxu0 %v7778
        %10526 = vmatprep.subr.bf16.mxu0 0
        %10527 = vmatpush1.bf16.msra.mxu0 %v7779
        %10528 = vmatprep.subr.bf16.mxu0 0
        %10529 = vmatpush1.bf16.msra.mxu0 %v7780
        %10530 = vmatprep.subr.bf16.mxu0 0
        %10531 = vmatpush1.bf16.msra.mxu0 %v7781
        %10532 = vmatprep.subr.bf16.mxu0 0
        %10533 = vmatpush1.bf16.msra.mxu0 %v7782
        %10534 = vmatprep.subr.bf16.mxu0 0
        %10535 = vmatpush1.bf16.msra.mxu0 %v7783
        %10536 = vmatprep.subr.bf16.mxu0 0
        %10537 = vmatpush1.bf16.msra.mxu0 %v7784
        %10538 = vmatprep.subr.bf16.mxu0 0
        %10539 = vmatpush1.bf16.msra.mxu0 %v7785
        %10540 = vmatprep.subr.bf16.mxu0 0
        %10541 = vmatpush1.bf16.msra.mxu0 %v7786
        %10542 = vmatprep.subr.bf16.mxu0 0
        %10543 = vmatpush1.bf16.msra.mxu0 %v7787
        %10544 = vmatprep.subr.bf16.mxu0 0
        %10545 = vmatpush1.bf16.msra.mxu0 %v7788
        %10546 = vmatprep.subr.bf16.mxu0 0
        %10547 = vmatpush1.bf16.msra.mxu0 %v7789
        %10548 = vmatprep.subr.bf16.mxu0 0
        %10549 = vmatpush1.bf16.msra.mxu0 %v7790
        %10550 = vmatprep.subr.bf16.mxu0 0
        %10551 = vmatpush1.bf16.msra.mxu0 %v7791
        %10552 = vmatprep.mubr.bf16.mxu0 %v2694
        %10553 = vmatmul.mubr.bf16.gmra.mrb[0].mxu0 %v2692
        %v10554 = vpop.f32.mrb[0].mxu0
        %v10555 = vadd.f32 %v10515, %v10554
        %v10556 = vpop.f32.mrb[0].mxu0
        %v10557 = vpop.f32.mrb[0].mxu0
        %v10558 = vpop.f32.mrb[0].mxu0
        %10559 = vdwg.mxu0
        %10560 = vmatprep.subr.bf16.mxu0 0
        %10561 = vmatpush1.bf16.msra.mxu0 %v7792
        %10562 = vmatprep.subr.bf16.mxu0 0
        %10563 = vmatpush1.bf16.msra.mxu0 %v7793
        %10564 = vmatprep.subr.bf16.mxu0 0
        %10565 = vmatpush1.bf16.msra.mxu0 %v7794
        %10566 = vmatprep.subr.bf16.mxu0 0
        %10567 = vmatpush1.bf16.msra.mxu0 %v7795
        %10568 = vmatprep.subr.bf16.mxu0 0
        %10569 = vmatpush1.bf16.msra.mxu0 %v7796
        %10570 = vmatprep.subr.bf16.mxu0 0
        %10571 = vmatpush1.bf16.msra.mxu0 %v7797
        %10572 = vmatprep.subr.bf16.mxu0 0
        %10573 = vmatpush1.bf16.msra.mxu0 %v7798
        %10574 = vmatprep.subr.bf16.mxu0 0
        %10575 = vmatpush1.bf16.msra.mxu0 %v7799
        %10576 = vmatprep.subr.bf16.mxu0 0
        %10577 = vmatpush1.bf16.msra.mxu0 %v7800
        %10578 = vmatprep.subr.bf16.mxu0 0
        %10579 = vmatpush1.bf16.msra.mxu0 %v7801
        %10580 = vmatprep.subr.bf16.mxu0 0
        %10581 = vmatpush1.bf16.msra.mxu0 %v7802
        %10582 = vmatprep.subr.bf16.mxu0 0
        %10583 = vmatpush1.bf16.msra.mxu0 %v7803
        %10584 = vmatprep.subr.bf16.mxu0 0
        %10585 = vmatpush1.bf16.msra.mxu0 %v7804
        %10586 = vmatprep.subr.bf16.mxu0 0
        %10587 = vmatpush1.bf16.msra.mxu0 %v7805
        %10588 = vmatprep.subr.bf16.mxu0 0
        %10589 = vmatpush1.bf16.msra.mxu0 %v7806
        %10590 = vmatprep.subr.bf16.mxu0 0
        %10591 = vmatpush1.bf16.msra.mxu0 %v7807
        %10592 = vmatprep.mubr.bf16.mxu0 %v2691
        %10593 = vmatmul.mubr.bf16.gmra.mrb[0].mxu0 %v2677
        %v10594 = vpop.f32.mrb[0].mxu0
        %v10595 = vadd.f32 %v10555, %v10594
        %v10596 = vpop.f32.mrb[0].mxu0
        %v10597 = vpop.f32.mrb[0].mxu0
        %v10598 = vpop.f32.mrb[0].mxu0
        %10599 = vdwg.mxu0
        %10600 = vmatprep.subr.bf16.mxu0 0
        %10601 = vmatpush1.bf16.msra.mxu0 %v7808
        %10602 = vmatprep.subr.bf16.mxu0 0
        %10603 = vmatpush1.bf16.msra.mxu0 %v7809
        %10604 = vmatprep.subr.bf16.mxu0 0
        %10605 = vmatpush1.bf16.msra.mxu0 %v7810
        %10606 = vmatprep.subr.bf16.mxu0 0
        %10607 = vmatpush1.bf16.msra.mxu0 %v7811
        %10608 = vmatprep.subr.bf16.mxu0 0
        %10609 = vmatpush1.bf16.msra.mxu0 %v7812
        %10610 = vmatprep.subr.bf16.mxu0 0
        %10611 = vmatpush1.bf16.msra.mxu0 %v7813
        %10612 = vmatprep.subr.bf16.mxu0 0
        %10613 = vmatpush1.bf16.msra.mxu0 %v7814
        %10614 = vmatprep.subr.bf16.mxu0 0
        %10615 = vmatpush1.bf16.msra.mxu0 %v7815
        %10616 = vmatprep.subr.bf16.mxu0 0
        %10617 = vmatpush1.bf16.msra.mxu0 %v7816
        %10618 = vmatprep.subr.bf16.mxu0 0
        %10619 = vmatpush1.bf16.msra.mxu0 %v7817
        %10620 = vmatprep.subr.bf16.mxu0 0
        %10621 = vmatpush1.bf16.msra.mxu0 %v7818
        %10622 = vmatprep.subr.bf16.mxu0 0
        %10623 = vmatpush1.bf16.msra.mxu0 %v7819
        %10624 = vmatprep.subr.bf16.mxu0 0
        %10625 = vmatpush1.bf16.msra.mxu0 %v7820
        %10626 = vmatprep.subr.bf16.mxu0 0
        %10627 = vmatpush1.bf16.msra.mxu0 %v7821
        %10628 = vmatprep.subr.bf16.mxu0 0
        %10629 = vmatpush1.bf16.msra.mxu0 %v7822
        %10630 = vmatprep.subr.bf16.mxu0 0
        %10631 = vmatpush1.bf16.msra.mxu0 %v7823
        %10632 = vmatprep.mubr.bf16.mxu0 %v2695
        %10633 = vmatmul.mubr.bf16.gmra.mrb[0].mxu0 %v2693
        %v10634 = vpop.f32.mrb[0].mxu0
        %v10635 = vadd.f32 %v10595, %v10634
        %v10636 = vpop.f32.mrb[0].mxu0
        %v10637 = vpop.f32.mrb[0].mxu0
        %v10638 = vpop.f32.mrb[0].mxu0
        %10639 = vdwg.mxu0
        %10640 = vmatprep.subr.bf16.mxu0 0
        %10641 = vmatpush1.bf16.msra.mxu0 %v7824
        %10642 = vmatprep.subr.bf16.mxu0 0
        %10643 = vmatpush1.bf16.msra.mxu0 %v7825
        %10644 = vmatprep.subr.bf16.mxu0 0
        %10645 = vmatpush1.bf16.msra.mxu0 %v7826
        %10646 = vmatprep.subr.bf16.mxu0 0
        %10647 = vmatpush1.bf16.msra.mxu0 %v7827
        %10648 = vmatprep.subr.bf16.mxu0 0
        %10649 = vmatpush1.bf16.msra.mxu0 %v7828
        %10650 = vmatprep.subr.bf16.mxu0 0
        %10651 = vmatpush1.bf16.msra.mxu0 %v7829
        %10652 = vmatprep.subr.bf16.mxu0 0
        %10653 = vmatpush1.bf16.msra.mxu0 %v7830
        %10654 = vmatprep.subr.bf16.mxu0 0
        %10655 = vmatpush1.bf16.msra.mxu0 %v7831
        %10656 = vmatprep.subr.bf16.mxu0 0
        %10657 = vmatpush1.bf16.msra.mxu0 %v7832
        %10658 = vmatprep.subr.bf16.mxu0 0
        %10659 = vmatpush1.bf16.msra.mxu0 %v7833
        %10660 = vmatprep.subr.bf16.mxu0 0
        %10661 = vmatpush1.bf16.msra.mxu0 %v7834
        %10662 = vmatprep.subr.bf16.mxu0 0
        %10663 = vmatpush1.bf16.msra.mxu0 %v7835
        %10664 = vmatprep.subr.bf16.mxu0 0
        %10665 = vmatpush1.bf16.msra.mxu0 %v7836
        %10666 = vmatprep.subr.bf16.mxu0 0
        %10667 = vmatpush1.bf16.msra.mxu0 %v7837
        %10668 = vmatprep.subr.bf16.mxu0 0
        %10669 = vmatpush1.bf16.msra.mxu0 %v7838
        %10670 = vmatprep.subr.bf16.mxu0 0
        %10671 = vmatpush1.bf16.msra.mxu0 %v7839
        %10672 = vmatprep.mubr.bf16.mxu0 %v2733
        %10673 = vmatmul.mubr.bf16.gmra.mrb[0].mxu0 %v2719
        %v10674 = vpop.f32.mrb[0].mxu0
        %v10675 = vadd.f32 %v10635, %v10674
        %v10676 = vpop.f32.mrb[0].mxu0
        %v10677 = vpop.f32.mrb[0].mxu0
        %v10678 = vpop.f32.mrb[0].mxu0
        %10679 = vdwg.mxu0
        %10680 = vmatprep.subr.bf16.mxu0 0
        %10681 = vmatpush1.bf16.msra.mxu0 %v7840
        %10682 = vmatprep.subr.bf16.mxu0 0
        %10683 = vmatpush1.bf16.msra.mxu0 %v7841
        %10684 = vmatprep.subr.bf16.mxu0 0
        %10685 = vmatpush1.bf16.msra.mxu0 %v7842
        %10686 = vmatprep.subr.bf16.mxu0 0
        %10687 = vmatpush1.bf16.msra.mxu0 %v7843
        %10688 = vmatprep.subr.bf16.mxu0 0
        %10689 = vmatpush1.bf16.msra.mxu0 %v7844
        %10690 = vmatprep.subr.bf16.mxu0 0
        %10691 = vmatpush1.bf16.msra.mxu0 %v7845
        %10692 = vmatprep.subr.bf16.mxu0 0
        %10693 = vmatpush1.bf16.msra.mxu0 %v7846
        %10694 = vmatprep.subr.bf16.mxu0 0
        %10695 = vmatpush1.bf16.msra.mxu0 %v7847
        %10696 = vmatprep.subr.bf16.mxu0 0
        %10697 = vmatpush1.bf16.msra.mxu0 %v7848
        %10698 = vmatprep.subr.bf16.mxu0 0
        %10699 = vmatpush1.bf16.msra.mxu0 %v7849
        %10700 = vmatprep.subr.bf16.mxu0 0
        %10701 = vmatpush1.bf16.msra.mxu0 %v7850
        %10702 = vmatprep.subr.bf16.mxu0 0
        %10703 = vmatpush1.bf16.msra.mxu0 %v7851
        %10704 = vmatprep.subr.bf16.mxu0 0
        %10705 = vmatpush1.bf16.msra.mxu0 %v7852
        %10706 = vmatprep.subr.bf16.mxu0 0
        %10707 = vmatpush1.bf16.msra.mxu0 %v7853
        %10708 = vmatprep.subr.bf16.mxu0 0
        %10709 = vmatpush1.bf16.msra.mxu0 %v7854
        %10710 = vmatprep.subr.bf16.mxu0 0
        %10711 = vmatpush1.bf16.msra.mxu0 %v7855
        %10712 = vmatprep.mubr.bf16.mxu0 %v2743
        %10713 = vmatmul.mubr.bf16.gmra.mrb[0].mxu0 %v2741
        %v10714 = vpop.f32.mrb[0].mxu0
        %v10715 = vadd.f32 %v10675, %v10714
        %v10716 = vpop.f32.mrb[0].mxu0
        %v10717 = vpop.f32.mrb[0].mxu0
        %v10718 = vpop.f32.mrb[0].mxu0
        %10719 = vdwg.mxu0
        %10720 = vmatprep.subr.bf16.mxu0 0
        %10721 = vmatpush1.bf16.msra.mxu0 %v7856
        %10722 = vmatprep.subr.bf16.mxu0 0
        %10723 = vmatpush1.bf16.msra.mxu0 %v7857
        %10724 = vmatprep.subr.bf16.mxu0 0
        %10725 = vmatpush1.bf16.msra.mxu0 %v7858
        %10726 = vmatprep.subr.bf16.mxu0 0
        %10727 = vmatpush1.bf16.msra.mxu0 %v7859
        %10728 = vmatprep.subr.bf16.mxu0 0
        %10729 = vmatpush1.bf16.msra.mxu0 %v7860
        %10730 = vmatprep.subr.bf16.mxu0 0
        %10731 = vmatpush1.bf16.msra.mxu0 %v7861
        %10732 = vmatprep.subr.bf16.mxu0 0
        %10733 = vmatpush1.bf16.msra.mxu0 %v7862
        %10734 = vmatprep.subr.bf16.mxu0 0
        %10735 = vmatpush1.bf16.msra.mxu0 %v7863
        %10736 = vmatprep.subr.bf16.mxu0 0
        %10737 = vmatpush1.bf16.msra.mxu0 %v7864
        %10738 = vmatprep.subr.bf16.mxu0 0
        %10739 = vmatpush1.bf16.msra.mxu0 %v7865
        %10740 = vmatprep.subr.bf16.mxu0 0
        %10741 = vmatpush1.bf16.msra.mxu0 %v7866
        %10742 = vmatprep.subr.bf16.mxu0 0
        %10743 = vmatpush1.bf16.msra.mxu0 %v7867
        %10744 = vmatprep.subr.bf16.mxu0 0
        %10745 = vmatpush1.bf16.msra.mxu0 %v7868
        %10746 = vmatprep.subr.bf16.mxu0 0
        %10747 = vmatpush1.bf16.msra.mxu0 %v7869
        %10748 = vmatprep.subr.bf16.mxu0 0
        %10749 = vmatpush1.bf16.msra.mxu0 %v7870
        %10750 = vmatprep.subr.bf16.mxu0 0
        %10751 = vmatpush1.bf16.msra.mxu0 %v7871
        %10752 = vmatprep.mubr.bf16.mxu0 %v2740
        %10753 = vmatmul.mubr.bf16.gmra.mrb[0].mxu0 %v2726
        %v10754 = vpop.f32.mrb[0].mxu0
        %v10755 = vadd.f32 %v10715, %v10754
        %v10756 = vpop.f32.mrb[0].mxu0
        %v10757 = vpop.f32.mrb[0].mxu0
        %v10758 = vpop.f32.mrb[0].mxu0
        %10759 = vdwg.mxu0
        %10760 = vmatprep.subr.bf16.mxu0 0
        %10761 = vmatpush1.bf16.msra.mxu0 %v7872
        %10762 = vmatprep.subr.bf16.mxu0 0
        %10763 = vmatpush1.bf16.msra.mxu0 %v7873
        %10764 = vmatprep.subr.bf16.mxu0 0
        %10765 = vmatpush1.bf16.msra.mxu0 %v7874
        %10766 = vmatprep.subr.bf16.mxu0 0
        %10767 = vmatpush1.bf16.msra.mxu0 %v7875
        %10768 = vmatprep.subr.bf16.mxu0 0
        %10769 = vmatpush1.bf16.msra.mxu0 %v7876
        %10770 = vmatprep.subr.bf16.mxu0 0
        %10771 = vmatpush1.bf16.msra.mxu0 %v7877
        %10772 = vmatprep.subr.bf16.mxu0 0
        %10773 = vmatpush1.bf16.msra.mxu0 %v7878
        %10774 = vmatprep.subr.bf16.mxu0 0
        %10775 = vmatpush1.bf16.msra.mxu0 %v7879
        %10776 = vmatprep.subr.bf16.mxu0 0
        %10777 = vmatpush1.bf16.msra.mxu0 %v7880
        %10778 = vmatprep.subr.bf16.mxu0 0
        %10779 = vmatpush1.bf16.msra.mxu0 %v7881
        %10780 = vmatprep.subr.bf16.mxu0 0
        %10781 = vmatpush1.bf16.msra.mxu0 %v7882
        %10782 = vmatprep.subr.bf16.mxu0 0
        %10783 = vmatpush1.bf16.msra.mxu0 %v7883
        %10784 = vmatprep.subr.bf16.mxu0 0
        %10785 = vmatpush1.bf16.msra.mxu0 %v7884
        %10786 = vmatprep.subr.bf16.mxu0 0
        %10787 = vmatpush1.bf16.msra.mxu0 %v7885
        %10788 = vmatprep.subr.bf16.mxu0 0
        %10789 = vmatpush1.bf16.msra.mxu0 %v7886
        %10790 = vmatprep.subr.bf16.mxu0 0
        %10791 = vmatpush1.bf16.msra.mxu0 %v7887
        %10792 = vmatprep.mubr.bf16.mxu0 %v2744
        %10793 = vmatmul.mubr.bf16.gmra.mrb[0].mxu0 %v2742
        %v10794 = vpop.f32.mrb[0].mxu0
        %v10795 = vadd.f32 %v10755, %v10794
        %v10796 = vpop.f32.mrb[0].mxu0
        %v10797 = vpop.f32.mrb[0].mxu0
        %v10798 = vpop.f32.mrb[0].mxu0
        %10799 = vdwg.mxu0
        %10800 = vmatprep.subr.bf16.mxu0 0
        %10801 = vmatpush1.bf16.msra.mxu0 %v7888
        %10802 = vmatprep.subr.bf16.mxu0 0
        %10803 = vmatpush1.bf16.msra.mxu0 %v7889
        %10804 = vmatprep.subr.bf16.mxu0 0
        %10805 = vmatpush1.bf16.msra.mxu0 %v7890
        %10806 = vmatprep.subr.bf16.mxu0 0
        %10807 = vmatpush1.bf16.msra.mxu0 %v7891
        %10808 = vmatprep.subr.bf16.mxu0 0
        %10809 = vmatpush1.bf16.msra.mxu0 %v7892
        %10810 = vmatprep.subr.bf16.mxu0 0
        %10811 = vmatpush1.bf16.msra.mxu0 %v7893
        %10812 = vmatprep.subr.bf16.mxu0 0
        %10813 = vmatpush1.bf16.msra.mxu0 %v7894
        %10814 = vmatprep.subr.bf16.mxu0 0
        %10815 = vmatpush1.bf16.msra.mxu0 %v7895
        %10816 = vmatprep.subr.bf16.mxu0 0
        %10817 = vmatpush1.bf16.msra.mxu0 %v7896
        %10818 = vmatprep.subr.bf16.mxu0 0
        %10819 = vmatpush1.bf16.msra.mxu0 %v7897
        %10820 = vmatprep.subr.bf16.mxu0 0
        %10821 = vmatpush1.bf16.msra.mxu0 %v7898
        %10822 = vmatprep.subr.bf16.mxu0 0
        %10823 = vmatpush1.bf16.msra.mxu0 %v7899
        %10824 = vmatprep.subr.bf16.mxu0 0
        %10825 = vmatpush1.bf16.msra.mxu0 %v7900
        %10826 = vmatprep.subr.bf16.mxu0 0
        %10827 = vmatpush1.bf16.msra.mxu0 %v7901
        %10828 = vmatprep.subr.bf16.mxu0 0
        %10829 = vmatpush1.bf16.msra.mxu0 %v7902
        %10830 = vmatprep.subr.bf16.mxu0 0
        %10831 = vmatpush1.bf16.msra.mxu0 %v7903
        %10832 = vmatprep.mubr.bf16.mxu0 %v2782
        %10833 = vmatmul.mubr.bf16.gmra.mrb[0].mxu0 %v2768
        %v10834 = vpop.f32.mrb[0].mxu0
        %v10835 = vadd.f32 %v10795, %v10834
        %v10836 = vpop.f32.mrb[0].mxu0
        %v10837 = vpop.f32.mrb[0].mxu0
        %v10838 = vpop.f32.mrb[0].mxu0
        %10839 = vdwg.mxu0
        %10840 = vmatprep.subr.bf16.mxu0 0
        %10841 = vmatpush1.bf16.msra.mxu0 %v7904
        %10842 = vmatprep.subr.bf16.mxu0 0
        %10843 = vmatpush1.bf16.msra.mxu0 %v7905
        %10844 = vmatprep.subr.bf16.mxu0 0
        %10845 = vmatpush1.bf16.msra.mxu0 %v7906
        %10846 = vmatprep.subr.bf16.mxu0 0
        %10847 = vmatpush1.bf16.msra.mxu0 %v7907
        %10848 = vmatprep.subr.bf16.mxu0 0
        %10849 = vmatpush1.bf16.msra.mxu0 %v7908
        %10850 = vmatprep.subr.bf16.mxu0 0
        %10851 = vmatpush1.bf16.msra.mxu0 %v7909
        %10852 = vmatprep.subr.bf16.mxu0 0
        %10853 = vmatpush1.bf16.msra.mxu0 %v7910
        %10854 = vmatprep.subr.bf16.mxu0 0
        %10855 = vmatpush1.bf16.msra.mxu0 %v7911
        %10856 = vmatprep.subr.bf16.mxu0 0
        %10857 = vmatpush1.bf16.msra.mxu0 %v7912
        %10858 = vmatprep.subr.bf16.mxu0 0
        %10859 = vmatpush1.bf16.msra.mxu0 %v7913
        %10860 = vmatprep.subr.bf16.mxu0 0
        %10861 = vmatpush1.bf16.msra.mxu0 %v7914
        %10862 = vmatprep.subr.bf16.mxu0 0
        %10863 = vmatpush1.bf16.msra.mxu0 %v7915
        %10864 = vmatprep.subr.bf16.mxu0 0
        %10865 = vmatpush1.bf16.msra.mxu0 %v7916
        %10866 = vmatprep.subr.bf16.mxu0 0
        %10867 = vmatpush1.bf16.msra.mxu0 %v7917
        %10868 = vmatprep.subr.bf16.mxu0 0
        %10869 = vmatpush1.bf16.msra.mxu0 %v7918
        %10870 = vmatprep.subr.bf16.mxu0 0
        %10871 = vmatpush1.bf16.msra.mxu0 %v7919
        %10872 = vmatprep.mubr.bf16.mxu0 %v2792
        %10873 = vmatmul.mubr.bf16.gmra.mrb[0].mxu0 %v2790
        %v10874 = vpop.f32.mrb[0].mxu0
        %v10875 = vadd.f32 %v10835, %v10874
        %v10876 = vpop.f32.mrb[0].mxu0
        %v10877 = vpop.f32.mrb[0].mxu0
        %v10878 = vpop.f32.mrb[0].mxu0
        %10879 = vdwg.mxu0
        %10880 = vmatprep.subr.bf16.mxu0 0
        %10881 = vmatpush1.bf16.msra.mxu0 %v7920
        %10882 = vmatprep.subr.bf16.mxu0 0
        %10883 = vmatpush1.bf16.msra.mxu0 %v7921
        %10884 = vmatprep.subr.bf16.mxu0 0
        %10885 = vmatpush1.bf16.msra.mxu0 %v7922
        %10886 = vmatprep.subr.bf16.mxu0 0
        %10887 = vmatpush1.bf16.msra.mxu0 %v7923
        %10888 = vmatprep.subr.bf16.mxu0 0
        %10889 = vmatpush1.bf16.msra.mxu0 %v7924
        %10890 = vmatprep.subr.bf16.mxu0 0
        %10891 = vmatpush1.bf16.msra.mxu0 %v7925
        %10892 = vmatprep.subr.bf16.mxu0 0
        %10893 = vmatpush1.bf16.msra.mxu0 %v7926
        %10894 = vmatprep.subr.bf16.mxu0 0
        %10895 = vmatpush1.bf16.msra.mxu0 %v7927
        %10896 = vmatprep.subr.bf16.mxu0 0
        %10897 = vmatpush1.bf16.msra.mxu0 %v7928
        %10898 = vmatprep.subr.bf16.mxu0 0
        %10899 = vmatpush1.bf16.msra.mxu0 %v7929
        %10900 = vmatprep.subr.bf16.mxu0 0
        %10901 = vmatpush1.bf16.msra.mxu0 %v7930
        %10902 = vmatprep.subr.bf16.mxu0 0
        %10903 = vmatpush1.bf16.msra.mxu0 %v7931
        %10904 = vmatprep.subr.bf16.mxu0 0
        %10905 = vmatpush1.bf16.msra.mxu0 %v7932
        %10906 = vmatprep.subr.bf16.mxu0 0
        %10907 = vmatpush1.bf16.msra.mxu0 %v7933
        %10908 = vmatprep.subr.bf16.mxu0 0
        %10909 = vmatpush1.bf16.msra.mxu0 %v7934
        %10910 = vmatprep.subr.bf16.mxu0 0
        %10911 = vmatpush1.bf16.msra.mxu0 %v7935
        %10912 = vmatprep.mubr.bf16.mxu0 %v2789
        %10913 = vmatmul.mubr.bf16.gmra.mrb[0].mxu0 %v2775
        %v10914 = vpop.f32.mrb[0].mxu0
        %v10915 = vadd.f32 %v10875, %v10914
        %v10916 = vpop.f32.mrb[0].mxu0
        %v10917 = vpop.f32.mrb[0].mxu0
        %v10918 = vpop.f32.mrb[0].mxu0
        %10919 = vdwg.mxu0
        %10920 = vmatprep.subr.bf16.mxu0 0
        %10921 = vmatpush1.bf16.msra.mxu0 %v7936
        %10922 = vmatprep.subr.bf16.mxu0 0
        %10923 = vmatpush1.bf16.msra.mxu0 %v7937
        %10924 = vmatprep.subr.bf16.mxu0 0
        %10925 = vmatpush1.bf16.msra.mxu0 %v7938
        %10926 = vmatprep.subr.bf16.mxu0 0
        %10927 = vmatpush1.bf16.msra.mxu0 %v7939
        %10928 = vmatprep.subr.bf16.mxu0 0
        %10929 = vmatpush1.bf16.msra.mxu0 %v7940
        %10930 = vmatprep.subr.bf16.mxu0 0
        %10931 = vmatpush1.bf16.msra.mxu0 %v7941
        %10932 = vmatprep.subr.bf16.mxu0 0
        %10933 = vmatpush1.bf16.msra.mxu0 %v7942
        %10934 = vmatprep.subr.bf16.mxu0 0
        %10935 = vmatpush1.bf16.msra.mxu0 %v7943
        %10936 = vmatprep.subr.bf16.mxu0 0
        %10937 = vmatpush1.bf16.msra.mxu0 %v7944
        %10938 = vmatprep.subr.bf16.mxu0 0
        %10939 = vmatpush1.bf16.msra.mxu0 %v7945
        %10940 = vmatprep.subr.bf16.mxu0 0
        %10941 = vmatpush1.bf16.msra.mxu0 %v7946
        %10942 = vmatprep.subr.bf16.mxu0 0
        %10943 = vmatpush1.bf16.msra.mxu0 %v7947
        %10944 = vmatprep.subr.bf16.mxu0 0
        %10945 = vmatpush1.bf16.msra.mxu0 %v7948
        %10946 = vmatprep.subr.bf16.mxu0 0
        %10947 = vmatpush1.bf16.msra.mxu0 %v7949
        %10948 = vmatprep.subr.bf16.mxu0 0
        %10949 = vmatpush1.bf16.msra.mxu0 %v7950
        %10950 = vmatprep.subr.bf16.mxu0 0
        %10951 = vmatpush1.bf16.msra.mxu0 %v7951
        %10952 = vmatprep.mubr.bf16.mxu0 %v2793
        %10953 = vmatmul.mubr.bf16.gmra.mrb[0].mxu0 %v2791
        %v10954 = vpop.f32.mrb[0].mxu0
        %v10955 = vadd.f32 %v10915, %v10954
        %v10956 = vpop.f32.mrb[0].mxu0
        %v10957 = vpop.f32.mrb[0].mxu0
        %v10958 = vpop.f32.mrb[0].mxu0
        %10959 = vdwg.mxu0
        %10960 = vmatprep.subr.bf16.mxu0 0
        %10961 = vmatpush1.bf16.msra.mxu0 %v7952
        %10962 = vmatprep.subr.bf16.mxu0 0
        %10963 = vmatpush1.bf16.msra.mxu0 %v7953
        %10964 = vmatprep.subr.bf16.mxu0 0
        %10965 = vmatpush1.bf16.msra.mxu0 %v7954
        %10966 = vmatprep.subr.bf16.mxu0 0
        %10967 = vmatpush1.bf16.msra.mxu0 %v7955
        %10968 = vmatprep.subr.bf16.mxu0 0
        %10969 = vmatpush1.bf16.msra.mxu0 %v7956
        %10970 = vmatprep.subr.bf16.mxu0 0
        %10971 = vmatpush1.bf16.msra.mxu0 %v7957
        %10972 = vmatprep.subr.bf16.mxu0 0
        %10973 = vmatpush1.bf16.msra.mxu0 %v7958
        %10974 = vmatprep.subr.bf16.mxu0 0
        %10975 = vmatpush1.bf16.msra.mxu0 %v7959
        %10976 = vmatprep.subr.bf16.mxu0 0
        %10977 = vmatpush1.bf16.msra.mxu0 %v7960
        %10978 = vmatprep.subr.bf16.mxu0 0
        %10979 = vmatpush1.bf16.msra.mxu0 %v7961
        %10980 = vmatprep.subr.bf16.mxu0 0
        %10981 = vmatpush1.bf16.msra.mxu0 %v7962
        %10982 = vmatprep.subr.bf16.mxu0 0
        %10983 = vmatpush1.bf16.msra.mxu0 %v7963
        %10984 = vmatprep.subr.bf16.mxu0 0
        %10985 = vmatpush1.bf16.msra.mxu0 %v7964
        %10986 = vmatprep.subr.bf16.mxu0 0
        %10987 = vmatpush1.bf16.msra.mxu0 %v7965
        %10988 = vmatprep.subr.bf16.mxu0 0
        %10989 = vmatpush1.bf16.msra.mxu0 %v7966
        %10990 = vmatprep.subr.bf16.mxu0 0
        %10991 = vmatpush1.bf16.msra.mxu0 %v7967
        %10992 = vmatprep.mubr.bf16.mxu0 %v2831
        %10993 = vmatmul.mubr.bf16.gmra.mrb[0].mxu0 %v2817
        %v10994 = vpop.f32.mrb[0].mxu0
        %v10995 = vadd.f32 %v10955, %v10994
        %v10996 = vpop.f32.mrb[0].mxu0
        %v10997 = vpop.f32.mrb[0].mxu0
        %v10998 = vpop.f32.mrb[0].mxu0
        %10999 = vdwg.mxu0
        %11000 = vmatprep.subr.bf16.mxu0 0
        %11001 = vmatpush1.bf16.msra.mxu0 %v7968
        %11002 = vmatprep.subr.bf16.mxu0 0
        %11003 = vmatpush1.bf16.msra.mxu0 %v7969
        %11004 = vmatprep.subr.bf16.mxu0 0
        %11005 = vmatpush1.bf16.msra.mxu0 %v7970
        %11006 = vmatprep.subr.bf16.mxu0 0
        %11007 = vmatpush1.bf16.msra.mxu0 %v7971
        %11008 = vmatprep.subr.bf16.mxu0 0
        %11009 = vmatpush1.bf16.msra.mxu0 %v7972
        %11010 = vmatprep.subr.bf16.mxu0 0
        %11011 = vmatpush1.bf16.msra.mxu0 %v7973
        %11012 = vmatprep.subr.bf16.mxu0 0
        %11013 = vmatpush1.bf16.msra.mxu0 %v7974
        %11014 = vmatprep.subr.bf16.mxu0 0
        %11015 = vmatpush1.bf16.msra.mxu0 %v7975
        %11016 = vmatprep.subr.bf16.mxu0 0
        %11017 = vmatpush1.bf16.msra.mxu0 %v7976
        %11018 = vmatprep.subr.bf16.mxu0 0
        %11019 = vmatpush1.bf16.msra.mxu0 %v7977
        %11020 = vmatprep.subr.bf16.mxu0 0
        %11021 = vmatpush1.bf16.msra.mxu0 %v7978
        %11022 = vmatprep.subr.bf16.mxu0 0
        %11023 = vmatpush1.bf16.msra.mxu0 %v7979
        %11024 = vmatprep.subr.bf16.mxu0 0
        %11025 = vmatpush1.bf16.msra.mxu0 %v7980
        %11026 = vmatprep.subr.bf16.mxu0 0
        %11027 = vmatpush1.bf16.msra.mxu0 %v7981
        %11028 = vmatprep.subr.bf16.mxu0 0
        %11029 = vmatpush1.bf16.msra.mxu0 %v7982
        %11030 = vmatprep.subr.bf16.mxu0 0
        %11031 = vmatpush1.bf16.msra.mxu0 %v7983
        %11032 = vmatprep.mubr.bf16.mxu0 %v2841
        %11033 = vmatmul.mubr.bf16.gmra.mrb[0].mxu0 %v2839
        %v11034 = vpop.f32.mrb[0].mxu0
        %v11035 = vadd.f32 %v10995, %v11034
        %v11036 = vpop.f32.mrb[0].mxu0
        %v11037 = vpop.f32.mrb[0].mxu0
        %v11038 = vpop.f32.mrb[0].mxu0
        %11039 = vdwg.mxu0
        %11040 = vmatprep.subr.bf16.mxu0 0
        %11041 = vmatpush1.bf16.msra.mxu0 %v7984
        %11042 = vmatprep.subr.bf16.mxu0 0
        %11043 = vmatpush1.bf16.msra.mxu0 %v7985
        %11044 = vmatprep.subr.bf16.mxu0 0
        %11045 = vmatpush1.bf16.msra.mxu0 %v7986
        %11046 = vmatprep.subr.bf16.mxu0 0
        %11047 = vmatpush1.bf16.msra.mxu0 %v7987
        %11048 = vmatprep.subr.bf16.mxu0 0
        %11049 = vmatpush1.bf16.msra.mxu0 %v7988
        %11050 = vmatprep.subr.bf16.mxu0 0
        %11051 = vmatpush1.bf16.msra.mxu0 %v7989
        %11052 = vmatprep.subr.bf16.mxu0 0
        %11053 = vmatpush1.bf16.msra.mxu0 %v7990
        %11054 = vmatprep.subr.bf16.mxu0 0
        %11055 = vmatpush1.bf16.msra.mxu0 %v7991
        %11056 = vmatprep.subr.bf16.mxu0 0
        %11057 = vmatpush1.bf16.msra.mxu0 %v7992
        %11058 = vmatprep.subr.bf16.mxu0 0
        %11059 = vmatpush1.bf16.msra.mxu0 %v7993
        %11060 = vmatprep.subr.bf16.mxu0 0
        %11061 = vmatpush1.bf16.msra.mxu0 %v7994
        %11062 = vmatprep.subr.bf16.mxu0 0
        %11063 = vmatpush1.bf16.msra.mxu0 %v7995
        %11064 = vmatprep.subr.bf16.mxu0 0
        %11065 = vmatpush1.bf16.msra.mxu0 %v7996
        %11066 = vmatprep.subr.bf16.mxu0 0
        %11067 = vmatpush1.bf16.msra.mxu0 %v7997
        %11068 = vmatprep.subr.bf16.mxu0 0
        %11069 = vmatpush1.bf16.msra.mxu0 %v7998
        %11070 = vmatprep.subr.bf16.mxu0 0
        %11071 = vmatpush1.bf16.msra.mxu0 %v7999
        %11072 = vmatprep.mubr.bf16.mxu0 %v2838
        %11073 = vmatmul.mubr.bf16.gmra.mrb[0].mxu0 %v2824
        %v11074 = vpop.f32.mrb[0].mxu0
        %v11075 = vadd.f32 %v11035, %v11074
        %v11076 = vpop.f32.mrb[0].mxu0
        %v11077 = vpop.f32.mrb[0].mxu0
        %v11078 = vpop.f32.mrb[0].mxu0
        %11079 = vdwg.mxu0
        %11080 = vmatprep.subr.bf16.mxu0 0
        %11081 = vmatpush1.bf16.msra.mxu0 %v8000
        %11082 = vmatprep.subr.bf16.mxu0 0
        %11083 = vmatpush1.bf16.msra.mxu0 %v8001
        %11084 = vmatprep.subr.bf16.mxu0 0
        %11085 = vmatpush1.bf16.msra.mxu0 %v8002
        %11086 = vmatprep.subr.bf16.mxu0 0
        %11087 = vmatpush1.bf16.msra.mxu0 %v8003
        %11088 = vmatprep.subr.bf16.mxu0 0
        %11089 = vmatpush1.bf16.msra.mxu0 %v8004
        %11090 = vmatprep.subr.bf16.mxu0 0
        %11091 = vmatpush1.bf16.msra.mxu0 %v8005
        %11092 = vmatprep.subr.bf16.mxu0 0
        %11093 = vmatpush1.bf16.msra.mxu0 %v8006
        %11094 = vmatprep.subr.bf16.mxu0 0
        %11095 = vmatpush1.bf16.msra.mxu0 %v8007
        %11096 = vmatprep.subr.bf16.mxu0 0
        %11097 = vmatpush1.bf16.msra.mxu0 %v8008
        %11098 = vmatprep.subr.bf16.mxu0 0
        %11099 = vmatpush1.bf16.msra.mxu0 %v8009
        %11100 = vmatprep.subr.bf16.mxu0 0
        %11101 = vmatpush1.bf16.msra.mxu0 %v8010
        %11102 = vmatprep.subr.bf16.mxu0 0
        %11103 = vmatpush1.bf16.msra.mxu0 %v8011
        %11104 = vmatprep.subr.bf16.mxu0 0
        %11105 = vmatpush1.bf16.msra.mxu0 %v8012
        %11106 = vmatprep.subr.bf16.mxu0 0
        %11107 = vmatpush1.bf16.msra.mxu0 %v8013
        %11108 = vmatprep.subr.bf16.mxu0 0
        %11109 = vmatpush1.bf16.msra.mxu0 %v8014
        %11110 = vmatprep.subr.bf16.mxu0 0
        %11111 = vmatpush1.bf16.msra.mxu0 %v8015
        %11112 = vmatprep.mubr.bf16.mxu0 %v2842
        %11113 = vmatmul.mubr.bf16.gmra.mrb[0].mxu0 %v2840
        %v11114 = vpop.f32.mrb[0].mxu0
        %v11115 = vadd.f32 %v11075, %v11114
        %v11116 = vpop.f32.mrb[0].mxu0
        %v11117 = vpop.f32.mrb[0].mxu0
        %v11118 = vpop.f32.mrb[0].mxu0
        %11119 = vdwg.mxu0
        %11120 = vmatprep.subr.bf16.mxu0 0
        %11121 = vmatpush1.bf16.msra.mxu0 %v8016
        %11122 = vmatprep.subr.bf16.mxu0 0
        %11123 = vmatpush1.bf16.msra.mxu0 %v8017
        %11124 = vmatprep.subr.bf16.mxu0 0
        %11125 = vmatpush1.bf16.msra.mxu0 %v8018
        %11126 = vmatprep.subr.bf16.mxu0 0
        %11127 = vmatpush1.bf16.msra.mxu0 %v8019
        %11128 = vmatprep.subr.bf16.mxu0 0
        %11129 = vmatpush1.bf16.msra.mxu0 %v8020
        %11130 = vmatprep.subr.bf16.mxu0 0
        %11131 = vmatpush1.bf16.msra.mxu0 %v8021
        %11132 = vmatprep.subr.bf16.mxu0 0
        %11133 = vmatpush1.bf16.msra.mxu0 %v8022
        %11134 = vmatprep.subr.bf16.mxu0 0
        %11135 = vmatpush1.bf16.msra.mxu0 %v8023
        %11136 = vmatprep.subr.bf16.mxu0 0
        %11137 = vmatpush1.bf16.msra.mxu0 %v8024
        %11138 = vmatprep.subr.bf16.mxu0 0
        %11139 = vmatpush1.bf16.msra.mxu0 %v8025
        %11140 = vmatprep.subr.bf16.mxu0 0
        %11141 = vmatpush1.bf16.msra.mxu0 %v8026
        %11142 = vmatprep.subr.bf16.mxu0 0
        %11143 = vmatpush1.bf16.msra.mxu0 %v8027
        %11144 = vmatprep.subr.bf16.mxu0 0
        %11145 = vmatpush1.bf16.msra.mxu0 %v8028
        %11146 = vmatprep.subr.bf16.mxu0 0
        %11147 = vmatpush1.bf16.msra.mxu0 %v8029
        %11148 = vmatprep.subr.bf16.mxu0 0
        %11149 = vmatpush1.bf16.msra.mxu0 %v8030
        %11150 = vmatprep.subr.bf16.mxu0 0
        %11151 = vmatpush1.bf16.msra.mxu0 %v8031
        %11152 = vmatprep.mubr.bf16.mxu0 %v2880
        %11153 = vmatmul.mubr.bf16.gmra.mrb[0].mxu0 %v2866
        %v11154 = vpop.f32.mrb[0].mxu0
        %v11155 = vadd.f32 %v11115, %v11154
        %v11156 = vpop.f32.mrb[0].mxu0
        %v11157 = vpop.f32.mrb[0].mxu0
        %v11158 = vpop.f32.mrb[0].mxu0
        %11159 = vdwg.mxu0
        %11160 = vmatprep.subr.bf16.mxu0 0
        %11161 = vmatpush1.bf16.msra.mxu0 %v8032
        %11162 = vmatprep.subr.bf16.mxu0 0
        %11163 = vmatpush1.bf16.msra.mxu0 %v8033
        %11164 = vmatprep.subr.bf16.mxu0 0
        %11165 = vmatpush1.bf16.msra.mxu0 %v8034
        %11166 = vmatprep.subr.bf16.mxu0 0
        %11167 = vmatpush1.bf16.msra.mxu0 %v8035
        %11168 = vmatprep.subr.bf16.mxu0 0
        %11169 = vmatpush1.bf16.msra.mxu0 %v8036
        %11170 = vmatprep.subr.bf16.mxu0 0
        %11171 = vmatpush1.bf16.msra.mxu0 %v8037
        %11172 = vmatprep.subr.bf16.mxu0 0
        %11173 = vmatpush1.bf16.msra.mxu0 %v8038
        %11174 = vmatprep.subr.bf16.mxu0 0
        %11175 = vmatpush1.bf16.msra.mxu0 %v8039
        %11176 = vmatprep.subr.bf16.mxu0 0
        %11177 = vmatpush1.bf16.msra.mxu0 %v8040
        %11178 = vmatprep.subr.bf16.mxu0 0
        %11179 = vmatpush1.bf16.msra.mxu0 %v8041
        %11180 = vmatprep.subr.bf16.mxu0 0
        %11181 = vmatpush1.bf16.msra.mxu0 %v8042
        %11182 = vmatprep.subr.bf16.mxu0 0
        %11183 = vmatpush1.bf16.msra.mxu0 %v8043
        %11184 = vmatprep.subr.bf16.mxu0 0
        %11185 = vmatpush1.bf16.msra.mxu0 %v8044
        %11186 = vmatprep.subr.bf16.mxu0 0
        %11187 = vmatpush1.bf16.msra.mxu0 %v8045
        %11188 = vmatprep.subr.bf16.mxu0 0
        %11189 = vmatpush1.bf16.msra.mxu0 %v8046
        %11190 = vmatprep.subr.bf16.mxu0 0
        %11191 = vmatpush1.bf16.msra.mxu0 %v8047
        %11192 = vmatprep.mubr.bf16.mxu0 %v2890
        %11193 = vmatmul.mubr.bf16.gmra.mrb[0].mxu0 %v2888
        %v11194 = vpop.f32.mrb[0].mxu0
        %v11195 = vadd.f32 %v11155, %v11194
        %v11196 = vpop.f32.mrb[0].mxu0
        %v11197 = vpop.f32.mrb[0].mxu0
        %v11198 = vpop.f32.mrb[0].mxu0
        %11199 = vdwg.mxu0
        %11200 = vmatprep.subr.bf16.mxu0 0
        %11201 = vmatpush1.bf16.msra.mxu0 %v8048
        %11202 = vmatprep.subr.bf16.mxu0 0
        %11203 = vmatpush1.bf16.msra.mxu0 %v8049
        %11204 = vmatprep.subr.bf16.mxu0 0
        %11205 = vmatpush1.bf16.msra.mxu0 %v8050
        %11206 = vmatprep.subr.bf16.mxu0 0
        %11207 = vmatpush1.bf16.msra.mxu0 %v8051
        %11208 = vmatprep.subr.bf16.mxu0 0
        %11209 = vmatpush1.bf16.msra.mxu0 %v8052
        %11210 = vmatprep.subr.bf16.mxu0 0
        %11211 = vmatpush1.bf16.msra.mxu0 %v8053
        %11212 = vmatprep.subr.bf16.mxu0 0
        %11213 = vmatpush1.bf16.msra.mxu0 %v8054
        %11214 = vmatprep.subr.bf16.mxu0 0
        %11215 = vmatpush1.bf16.msra.mxu0 %v8055
        %11216 = vmatprep.subr.bf16.mxu0 0
        %11217 = vmatpush1.bf16.msra.mxu0 %v8056
        %11218 = vmatprep.subr.bf16.mxu0 0
        %11219 = vmatpush1.bf16.msra.mxu0 %v8057
        %11220 = vmatprep.subr.bf16.mxu0 0
        %11221 = vmatpush1.bf16.msra.mxu0 %v8058
        %11222 = vmatprep.subr.bf16.mxu0 0
        %11223 = vmatpush1.bf16.msra.mxu0 %v8059
        %11224 = vmatprep.subr.bf16.mxu0 0
        %11225 = vmatpush1.bf16.msra.mxu0 %v8060
        %11226 = vmatprep.subr.bf16.mxu0 0
        %11227 = vmatpush1.bf16.msra.mxu0 %v8061
        %11228 = vmatprep.subr.bf16.mxu0 0
        %11229 = vmatpush1.bf16.msra.mxu0 %v8062
        %11230 = vmatprep.subr.bf16.mxu0 0
        %11231 = vmatpush1.bf16.msra.mxu0 %v8063
        %11232 = vmatprep.mubr.bf16.mxu0 %v2887
        %11233 = vmatmul.mubr.bf16.gmra.mrb[0].mxu0 %v2873
        %v11234 = vpop.f32.mrb[0].mxu0
        %v11235 = vadd.f32 %v11195, %v11234
        %v11236 = vpop.f32.mrb[0].mxu0
        %v11237 = vpop.f32.mrb[0].mxu0
        %v11238 = vpop.f32.mrb[0].mxu0
        %11239 = vdwg.mxu0
        %11240 = vmatprep.subr.bf16.mxu0 0
        %11241 = vmatpush1.bf16.msra.mxu0 %v8064
        %11242 = vmatprep.subr.bf16.mxu0 0
        %11243 = vmatpush1.bf16.msra.mxu0 %v8065
        %11244 = vmatprep.subr.bf16.mxu0 0
        %11245 = vmatpush1.bf16.msra.mxu0 %v8066
        %11246 = vmatprep.subr.bf16.mxu0 0
        %11247 = vmatpush1.bf16.msra.mxu0 %v8067
        %11248 = vmatprep.subr.bf16.mxu0 0
        %11249 = vmatpush1.bf16.msra.mxu0 %v8068
        %11250 = vmatprep.subr.bf16.mxu0 0
        %11251 = vmatpush1.bf16.msra.mxu0 %v8069
        %11252 = vmatprep.subr.bf16.mxu0 0
        %11253 = vmatpush1.bf16.msra.mxu0 %v8070
        %11254 = vmatprep.subr.bf16.mxu0 0
        %11255 = vmatpush1.bf16.msra.mxu0 %v8071
        %11256 = vmatprep.subr.bf16.mxu0 0
        %11257 = vmatpush1.bf16.msra.mxu0 %v8072
        %11258 = vmatprep.subr.bf16.mxu0 0
        %11259 = vmatpush1.bf16.msra.mxu0 %v8073
        %11260 = vmatprep.subr.bf16.mxu0 0
        %11261 = vmatpush1.bf16.msra.mxu0 %v8074
        %11262 = vmatprep.subr.bf16.mxu0 0
        %11263 = vmatpush1.bf16.msra.mxu0 %v8075
        %11264 = vmatprep.subr.bf16.mxu0 0
        %11265 = vmatpush1.bf16.msra.mxu0 %v8076
        %11266 = vmatprep.subr.bf16.mxu0 0
        %11267 = vmatpush1.bf16.msra.mxu0 %v8077
        %11268 = vmatprep.subr.bf16.mxu0 0
        %11269 = vmatpush1.bf16.msra.mxu0 %v8078
        %11270 = vmatprep.subr.bf16.mxu0 0
        %11271 = vmatpush1.bf16.msra.mxu0 %v8079
        %11272 = vmatprep.mubr.bf16.mxu0 %v2891
        %11273 = vmatmul.mubr.bf16.gmra.mrb[0].mxu0 %v2889
        %v11274 = vpop.f32.mrb[0].mxu0
        %v11275 = vadd.f32 %v11235, %v11274
        %v11276 = vpop.f32.mrb[0].mxu0
        %v11277 = vpop.f32.mrb[0].mxu0
        %v11278 = vpop.f32.mrb[0].mxu0
        %11279 = vdwg.mxu0
        %11280 = vmatprep.subr.bf16.mxu0 0
        %11281 = vmatpush1.bf16.msra.mxu0 %v8080
        %11282 = vmatprep.subr.bf16.mxu0 0
        %11283 = vmatpush1.bf16.msra.mxu0 %v8081
        %11284 = vmatprep.subr.bf16.mxu0 0
        %11285 = vmatpush1.bf16.msra.mxu0 %v8082
        %11286 = vmatprep.subr.bf16.mxu0 0
        %11287 = vmatpush1.bf16.msra.mxu0 %v8083
        %11288 = vmatprep.subr.bf16.mxu0 0
        %11289 = vmatpush1.bf16.msra.mxu0 %v8084
        %11290 = vmatprep.subr.bf16.mxu0 0
        %11291 = vmatpush1.bf16.msra.mxu0 %v8085
        %11292 = vmatprep.subr.bf16.mxu0 0
        %11293 = vmatpush1.bf16.msra.mxu0 %v8086
        %11294 = vmatprep.subr.bf16.mxu0 0
        %11295 = vmatpush1.bf16.msra.mxu0 %v8087
        %11296 = vmatprep.subr.bf16.mxu0 0
        %11297 = vmatpush1.bf16.msra.mxu0 %v8088
        %11298 = vmatprep.subr.bf16.mxu0 0
        %11299 = vmatpush1.bf16.msra.mxu0 %v8089
        %11300 = vmatprep.subr.bf16.mxu0 0
        %11301 = vmatpush1.bf16.msra.mxu0 %v8090
        %11302 = vmatprep.subr.bf16.mxu0 0
        %11303 = vmatpush1.bf16.msra.mxu0 %v8091
        %11304 = vmatprep.subr.bf16.mxu0 0
        %11305 = vmatpush1.bf16.msra.mxu0 %v8092
        %11306 = vmatprep.subr.bf16.mxu0 0
        %11307 = vmatpush1.bf16.msra.mxu0 %v8093
        %11308 = vmatprep.subr.bf16.mxu0 0
        %11309 = vmatpush1.bf16.msra.mxu0 %v8094
        %11310 = vmatprep.subr.bf16.mxu0 0
        %11311 = vmatpush1.bf16.msra.mxu0 %v8095
        %11312 = vmatprep.mubr.bf16.mxu0 %v2929
        %11313 = vmatmul.mubr.bf16.gmra.mrb[0].mxu0 %v2915
        %v11314 = vpop.f32.mrb[0].mxu0
        %v11315 = vadd.f32 %v11275, %v11314
        %v11316 = vpop.f32.mrb[0].mxu0
        %v11317 = vpop.f32.mrb[0].mxu0
        %v11318 = vpop.f32.mrb[0].mxu0
        %11319 = vdwg.mxu0
        %11320 = vmatprep.subr.bf16.mxu0 0
        %11321 = vmatpush1.bf16.msra.mxu0 %v8096
        %11322 = vmatprep.subr.bf16.mxu0 0
        %11323 = vmatpush1.bf16.msra.mxu0 %v8097
        %11324 = vmatprep.subr.bf16.mxu0 0
        %11325 = vmatpush1.bf16.msra.mxu0 %v8098
        %11326 = vmatprep.subr.bf16.mxu0 0
        %11327 = vmatpush1.bf16.msra.mxu0 %v8099
        %11328 = vmatprep.subr.bf16.mxu0 0
        %11329 = vmatpush1.bf16.msra.mxu0 %v8100
        %11330 = vmatprep.subr.bf16.mxu0 0
        %11331 = vmatpush1.bf16.msra.mxu0 %v8101
        %11332 = vmatprep.subr.bf16.mxu0 0
        %11333 = vmatpush1.bf16.msra.mxu0 %v8102
        %11334 = vmatprep.subr.bf16.mxu0 0
        %11335 = vmatpush1.bf16.msra.mxu0 %v8103
        %11336 = vmatprep.subr.bf16.mxu0 0
        %11337 = vmatpush1.bf16.msra.mxu0 %v8104
        %11338 = vmatprep.subr.bf16.mxu0 0
        %11339 = vmatpush1.bf16.msra.mxu0 %v8105
        %11340 = vmatprep.subr.bf16.mxu0 0
        %11341 = vmatpush1.bf16.msra.mxu0 %v8106
        %11342 = vmatprep.subr.bf16.mxu0 0
        %11343 = vmatpush1.bf16.msra.mxu0 %v8107
        %11344 = vmatprep.subr.bf16.mxu0 0
        %11345 = vmatpush1.bf16.msra.mxu0 %v8108
        %11346 = vmatprep.subr.bf16.mxu0 0
        %11347 = vmatpush1.bf16.msra.mxu0 %v8109
        %11348 = vmatprep.subr.bf16.mxu0 0
        %11349 = vmatpush1.bf16.msra.mxu0 %v8110
        %11350 = vmatprep.subr.bf16.mxu0 0
        %11351 = vmatpush1.bf16.msra.mxu0 %v8111
        %11352 = vmatprep.mubr.bf16.mxu0 %v2939
        %11353 = vmatmul.mubr.bf16.gmra.mrb[0].mxu0 %v2937
        %v11354 = vpop.f32.mrb[0].mxu0
        %v11355 = vadd.f32 %v11315, %v11354
        %v11356 = vpop.f32.mrb[0].mxu0
        %v11357 = vpop.f32.mrb[0].mxu0
        %v11358 = vpop.f32.mrb[0].mxu0
        %11359 = vdwg.mxu0
        %11360 = vmatprep.subr.bf16.mxu0 0
        %11361 = vmatpush1.bf16.msra.mxu0 %v8112
        %11362 = vmatprep.subr.bf16.mxu0 0
        %11363 = vmatpush1.bf16.msra.mxu0 %v8113
        %11364 = vmatprep.subr.bf16.mxu0 0
        %11365 = vmatpush1.bf16.msra.mxu0 %v8114
        %11366 = vmatprep.subr.bf16.mxu0 0
        %11367 = vmatpush1.bf16.msra.mxu0 %v8115
        %11368 = vmatprep.subr.bf16.mxu0 0
        %11369 = vmatpush1.bf16.msra.mxu0 %v8116
        %11370 = vmatprep.subr.bf16.mxu0 0
        %11371 = vmatpush1.bf16.msra.mxu0 %v8117
        %11372 = vmatprep.subr.bf16.mxu0 0
        %11373 = vmatpush1.bf16.msra.mxu0 %v8118
        %11374 = vmatprep.subr.bf16.mxu0 0
        %11375 = vmatpush1.bf16.msra.mxu0 %v8119
        %11376 = vmatprep.subr.bf16.mxu0 0
        %11377 = vmatpush1.bf16.msra.mxu0 %v8120
        %11378 = vmatprep.subr.bf16.mxu0 0
        %11379 = vmatpush1.bf16.msra.mxu0 %v8121
        %11380 = vmatprep.subr.bf16.mxu0 0
        %11381 = vmatpush1.bf16.msra.mxu0 %v8122
        %11382 = vmatprep.subr.bf16.mxu0 0
        %11383 = vmatpush1.bf16.msra.mxu0 %v8123
        %11384 = vmatprep.subr.bf16.mxu0 0
        %11385 = vmatpush1.bf16.msra.mxu0 %v8124
        %11386 = vmatprep.subr.bf16.mxu0 0
        %11387 = vmatpush1.bf16.msra.mxu0 %v8125
        %11388 = vmatprep.subr.bf16.mxu0 0
        %11389 = vmatpush1.bf16.msra.mxu0 %v8126
        %11390 = vmatprep.subr.bf16.mxu0 0
        %11391 = vmatpush1.bf16.msra.mxu0 %v8127
        %11392 = vmatprep.mubr.bf16.mxu0 %v2936
        %11393 = vmatmul.mubr.bf16.gmra.mrb[0].mxu0 %v2922
        %v11394 = vpop.f32.mrb[0].mxu0
        %v11395 = vadd.f32 %v11355, %v11394
        %v11396 = vpop.f32.mrb[0].mxu0
        %v11397 = vpop.f32.mrb[0].mxu0
        %v11398 = vpop.f32.mrb[0].mxu0
        %11399 = vdwg.mxu0
        %11400 = vmatprep.subr.bf16.mxu0 0
        %11401 = vmatpush1.bf16.msra.mxu0 %v8128
        %11402 = vmatprep.subr.bf16.mxu0 0
        %11403 = vmatpush1.bf16.msra.mxu0 %v8129
        %11404 = vmatprep.subr.bf16.mxu0 0
        %11405 = vmatpush1.bf16.msra.mxu0 %v8130
        %11406 = vmatprep.subr.bf16.mxu0 0
        %11407 = vmatpush1.bf16.msra.mxu0 %v8131
        %11408 = vmatprep.subr.bf16.mxu0 0
        %11409 = vmatpush1.bf16.msra.mxu0 %v8132
        %11410 = vmatprep.subr.bf16.mxu0 0
        %11411 = vmatpush1.bf16.msra.mxu0 %v8133
        %11412 = vmatprep.subr.bf16.mxu0 0
        %11413 = vmatpush1.bf16.msra.mxu0 %v8134
        %11414 = vmatprep.subr.bf16.mxu0 0
        %11415 = vmatpush1.bf16.msra.mxu0 %v8135
        %11416 = vmatprep.subr.bf16.mxu0 0
        %11417 = vmatpush1.bf16.msra.mxu0 %v8136
        %11418 = vmatprep.subr.bf16.mxu0 0
        %11419 = vmatpush1.bf16.msra.mxu0 %v8137
        %11420 = vmatprep.subr.bf16.mxu0 0
        %11421 = vmatpush1.bf16.msra.mxu0 %v8138
        %11422 = vmatprep.subr.bf16.mxu0 0
        %11423 = vmatpush1.bf16.msra.mxu0 %v8139
        %11424 = vmatprep.subr.bf16.mxu0 0
        %11425 = vmatpush1.bf16.msra.mxu0 %v8140
        %11426 = vmatprep.subr.bf16.mxu0 0
        %11427 = vmatpush1.bf16.msra.mxu0 %v8141
        %11428 = vmatprep.subr.bf16.mxu0 0
        %11429 = vmatpush1.bf16.msra.mxu0 %v8142
        %11430 = vmatprep.subr.bf16.mxu0 0
        %11431 = vmatpush1.bf16.msra.mxu0 %v8143
        %11432 = vmatprep.mubr.bf16.mxu0 %v2940
        %11433 = vmatmul.mubr.bf16.gmra.mrb[0].mxu0 %v2938
        %v11434 = vpop.f32.mrb[0].mxu0
        %v11435 = vadd.f32 %v11395, %v11434
        %v11436 = vpop.f32.mrb[0].mxu0
        %v11437 = vpop.f32.mrb[0].mxu0
        %v11438 = vpop.f32.mrb[0].mxu0
        %11439 = vdwg.mxu0
        %11440 = vmatprep.subr.bf16.mxu0 0
        %11441 = vmatpush1.bf16.msra.mxu0 %v8144
        %11442 = vmatprep.subr.bf16.mxu0 0
        %11443 = vmatpush1.bf16.msra.mxu0 %v8145
        %11444 = vmatprep.subr.bf16.mxu0 0
        %11445 = vmatpush1.bf16.msra.mxu0 %v8146
        %11446 = vmatprep.subr.bf16.mxu0 0
        %11447 = vmatpush1.bf16.msra.mxu0 %v8147
        %11448 = vmatprep.subr.bf16.mxu0 0
        %11449 = vmatpush1.bf16.msra.mxu0 %v8148
        %11450 = vmatprep.subr.bf16.mxu0 0
        %11451 = vmatpush1.bf16.msra.mxu0 %v8149
        %11452 = vmatprep.subr.bf16.mxu0 0
        %11453 = vmatpush1.bf16.msra.mxu0 %v8150
        %11454 = vmatprep.subr.bf16.mxu0 0
        %11455 = vmatpush1.bf16.msra.mxu0 %v8151
        %11456 = vmatprep.subr.bf16.mxu0 0
        %11457 = vmatpush1.bf16.msra.mxu0 %v8152
        %11458 = vmatprep.subr.bf16.mxu0 0
        %11459 = vmatpush1.bf16.msra.mxu0 %v8153
        %11460 = vmatprep.subr.bf16.mxu0 0
        %11461 = vmatpush1.bf16.msra.mxu0 %v8154
        %11462 = vmatprep.subr.bf16.mxu0 0
        %11463 = vmatpush1.bf16.msra.mxu0 %v8155
        %11464 = vmatprep.subr.bf16.mxu0 0
        %11465 = vmatpush1.bf16.msra.mxu0 %v8156
        %11466 = vmatprep.subr.bf16.mxu0 0
        %11467 = vmatpush1.bf16.msra.mxu0 %v8157
        %11468 = vmatprep.subr.bf16.mxu0 0
        %11469 = vmatpush1.bf16.msra.mxu0 %v8158
        %11470 = vmatprep.subr.bf16.mxu0 0
        %11471 = vmatpush1.bf16.msra.mxu0 %v8159
        %11472 = vmatprep.mubr.bf16.mxu0 %v2978
        %11473 = vmatmul.mubr.bf16.gmra.mrb[0].mxu0 %v2964
        %v11474 = vpop.f32.mrb[0].mxu0
        %v11475 = vadd.f32 %v11435, %v11474
        %v11476 = vpop.f32.mrb[0].mxu0
        %v11477 = vpop.f32.mrb[0].mxu0
        %v11478 = vpop.f32.mrb[0].mxu0
        %11479 = vdwg.mxu0
        %11480 = vmatprep.subr.bf16.mxu0 0
        %11481 = vmatpush1.bf16.msra.mxu0 %v8160
        %11482 = vmatprep.subr.bf16.mxu0 0
        %11483 = vmatpush1.bf16.msra.mxu0 %v8161
        %11484 = vmatprep.subr.bf16.mxu0 0
        %11485 = vmatpush1.bf16.msra.mxu0 %v8162
        %11486 = vmatprep.subr.bf16.mxu0 0
        %11487 = vmatpush1.bf16.msra.mxu0 %v8163
        %11488 = vmatprep.subr.bf16.mxu0 0
        %11489 = vmatpush1.bf16.msra.mxu0 %v8164
        %11490 = vmatprep.subr.bf16.mxu0 0
        %11491 = vmatpush1.bf16.msra.mxu0 %v8165
        %11492 = vmatprep.subr.bf16.mxu0 0
        %11493 = vmatpush1.bf16.msra.mxu0 %v8166
        %11494 = vmatprep.subr.bf16.mxu0 0
        %11495 = vmatpush1.bf16.msra.mxu0 %v8167
        %11496 = vmatprep.subr.bf16.mxu0 0
        %11497 = vmatpush1.bf16.msra.mxu0 %v8168
        %11498 = vmatprep.subr.bf16.mxu0 0
        %11499 = vmatpush1.bf16.msra.mxu0 %v8169
        %11500 = vmatprep.subr.bf16.mxu0 0
        %11501 = vmatpush1.bf16.msra.mxu0 %v8170
        %11502 = vmatprep.subr.bf16.mxu0 0
        %11503 = vmatpush1.bf16.msra.mxu0 %v8171
        %11504 = vmatprep.subr.bf16.mxu0 0
        %11505 = vmatpush1.bf16.msra.mxu0 %v8172
        %11506 = vmatprep.subr.bf16.mxu0 0
        %11507 = vmatpush1.bf16.msra.mxu0 %v8173
        %11508 = vmatprep.subr.bf16.mxu0 0
        %11509 = vmatpush1.bf16.msra.mxu0 %v8174
        %11510 = vmatprep.subr.bf16.mxu0 0
        %11511 = vmatpush1.bf16.msra.mxu0 %v8175
        %11512 = vmatprep.mubr.bf16.mxu0 %v2988
        %11513 = vmatmul.mubr.bf16.gmra.mrb[0].mxu0 %v2986
        %v11514 = vpop.f32.mrb[0].mxu0
        %v11515 = vadd.f32 %v11475, %v11514
        %v11516 = vpop.f32.mrb[0].mxu0
        %v11517 = vpop.f32.mrb[0].mxu0
        %v11518 = vpop.f32.mrb[0].mxu0
        %11519 = vdwg.mxu0
        %11520 = vmatprep.subr.bf16.mxu0 0
        %11521 = vmatpush1.bf16.msra.mxu0 %v8176
        %11522 = vmatprep.subr.bf16.mxu0 0
        %11523 = vmatpush1.bf16.msra.mxu0 %v8177
        %11524 = vmatprep.subr.bf16.mxu0 0
        %11525 = vmatpush1.bf16.msra.mxu0 %v8178
        %11526 = vmatprep.subr.bf16.mxu0 0
        %11527 = vmatpush1.bf16.msra.mxu0 %v8179
        %11528 = vmatprep.subr.bf16.mxu0 0
        %11529 = vmatpush1.bf16.msra.mxu0 %v8180
        %11530 = vmatprep.subr.bf16.mxu0 0
        %11531 = vmatpush1.bf16.msra.mxu0 %v8181
        %11532 = vmatprep.subr.bf16.mxu0 0
        %11533 = vmatpush1.bf16.msra.mxu0 %v8182
        %11534 = vmatprep.subr.bf16.mxu0 0
        %11535 = vmatpush1.bf16.msra.mxu0 %v8183
        %11536 = vmatprep.subr.bf16.mxu0 0
        %11537 = vmatpush1.bf16.msra.mxu0 %v8184
        %11538 = vmatprep.subr.bf16.mxu0 0
        %11539 = vmatpush1.bf16.msra.mxu0 %v8185
        %11540 = vmatprep.subr.bf16.mxu0 0
        %11541 = vmatpush1.bf16.msra.mxu0 %v8186
        %11542 = vmatprep.subr.bf16.mxu0 0
        %11543 = vmatpush1.bf16.msra.mxu0 %v8187
        %11544 = vmatprep.subr.bf16.mxu0 0
        %11545 = vmatpush1.bf16.msra.mxu0 %v8188
        %11546 = vmatprep.subr.bf16.mxu0 0
        %11547 = vmatpush1.bf16.msra.mxu0 %v8189
        %11548 = vmatprep.subr.bf16.mxu0 0
        %11549 = vmatpush1.bf16.msra.mxu0 %v8190
        %11550 = vmatprep.subr.bf16.mxu0 0
        %11551 = vmatpush1.bf16.msra.mxu0 %v8191
        %11552 = vmatprep.mubr.bf16.mxu0 %v2985
        %11553 = vmatmul.mubr.bf16.gmra.mrb[0].mxu0 %v2971
        %v11554 = vpop.f32.mrb[0].mxu0
        %v11555 = vadd.f32 %v11515, %v11554
        %v11556 = vpop.f32.mrb[0].mxu0
        %v11557 = vpop.f32.mrb[0].mxu0
        %v11558 = vpop.f32.mrb[0].mxu0
        %11559 = vdwg.mxu0
        %11560 = vmatprep.subr.bf16.mxu0 0
        %11561 = vmatpush1.bf16.msra.mxu0 %v8192
        %11562 = vmatprep.subr.bf16.mxu0 0
        %11563 = vmatpush1.bf16.msra.mxu0 %v8193
        %11564 = vmatprep.subr.bf16.mxu0 0
        %11565 = vmatpush1.bf16.msra.mxu0 %v8194
        %11566 = vmatprep.subr.bf16.mxu0 0
        %11567 = vmatpush1.bf16.msra.mxu0 %v8195
        %11568 = vmatprep.subr.bf16.mxu0 0
        %11569 = vmatpush1.bf16.msra.mxu0 %v8196
        %11570 = vmatprep.subr.bf16.mxu0 0
        %11571 = vmatpush1.bf16.msra.mxu0 %v8197
        %11572 = vmatprep.subr.bf16.mxu0 0
        %11573 = vmatpush1.bf16.msra.mxu0 %v8198
        %11574 = vmatprep.subr.bf16.mxu0 0
        %11575 = vmatpush1.bf16.msra.mxu0 %v8199
        %11576 = vmatprep.subr.bf16.mxu0 0
        %11577 = vmatpush1.bf16.msra.mxu0 %v8200
        %11578 = vmatprep.subr.bf16.mxu0 0
        %11579 = vmatpush1.bf16.msra.mxu0 %v8201
        %11580 = vmatprep.subr.bf16.mxu0 0
        %11581 = vmatpush1.bf16.msra.mxu0 %v8202
        %11582 = vmatprep.subr.bf16.mxu0 0
        %11583 = vmatpush1.bf16.msra.mxu0 %v8203
        %11584 = vmatprep.subr.bf16.mxu0 0
        %11585 = vmatpush1.bf16.msra.mxu0 %v8204
        %11586 = vmatprep.subr.bf16.mxu0 0
        %11587 = vmatpush1.bf16.msra.mxu0 %v8205
        %11588 = vmatprep.subr.bf16.mxu0 0
        %11589 = vmatpush1.bf16.msra.mxu0 %v8206
        %11590 = vmatprep.subr.bf16.mxu0 0
        %11591 = vmatpush1.bf16.msra.mxu0 %v8207
        %11592 = vmatprep.mubr.bf16.mxu0 %v2989
        %11593 = vmatmul.mubr.bf16.gmra.mrb[0].mxu0 %v2987
        %v11594 = vpop.f32.mrb[0].mxu0
        %v11595 = vadd.f32 %v11555, %v11594
        %v11596 = vpop.f32.mrb[0].mxu0
        %v11597 = vpop.f32.mrb[0].mxu0
        %v11598 = vpop.f32.mrb[0].mxu0
        %11599 = vdwg.mxu0
        %11600 = vmatprep.subr.bf16.mxu0 0
        %11601 = vmatpush1.bf16.msra.mxu0 %v8208
        %11602 = vmatprep.subr.bf16.mxu0 0
        %11603 = vmatpush1.bf16.msra.mxu0 %v8209
        %11604 = vmatprep.subr.bf16.mxu0 0
        %11605 = vmatpush1.bf16.msra.mxu0 %v8210
        %11606 = vmatprep.subr.bf16.mxu0 0
        %11607 = vmatpush1.bf16.msra.mxu0 %v8211
        %11608 = vmatprep.subr.bf16.mxu0 0
        %11609 = vmatpush1.bf16.msra.mxu0 %v8212
        %11610 = vmatprep.subr.bf16.mxu0 0
        %11611 = vmatpush1.bf16.msra.mxu0 %v8213
        %11612 = vmatprep.subr.bf16.mxu0 0
        %11613 = vmatpush1.bf16.msra.mxu0 %v8214
        %11614 = vmatprep.subr.bf16.mxu0 0
        %11615 = vmatpush1.bf16.msra.mxu0 %v8215
        %11616 = vmatprep.subr.bf16.mxu0 0
        %11617 = vmatpush1.bf16.msra.mxu0 %v8216
        %11618 = vmatprep.subr.bf16.mxu0 0
        %11619 = vmatpush1.bf16.msra.mxu0 %v8217
        %11620 = vmatprep.subr.bf16.mxu0 0
        %11621 = vmatpush1.bf16.msra.mxu0 %v8218
        %11622 = vmatprep.subr.bf16.mxu0 0
        %11623 = vmatpush1.bf16.msra.mxu0 %v8219
        %11624 = vmatprep.subr.bf16.mxu0 0
        %11625 = vmatpush1.bf16.msra.mxu0 %v8220
        %11626 = vmatprep.subr.bf16.mxu0 0
        %11627 = vmatpush1.bf16.msra.mxu0 %v8221
        %11628 = vmatprep.subr.bf16.mxu0 0
        %11629 = vmatpush1.bf16.msra.mxu0 %v8222
        %11630 = vmatprep.subr.bf16.mxu0 0
        %11631 = vmatpush1.bf16.msra.mxu0 %v8223
        %11632 = vmatprep.mubr.bf16.mxu0 %v3027
        %11633 = vmatmul.mubr.bf16.gmra.mrb[0].mxu0 %v3013
        %v11634 = vpop.f32.mrb[0].mxu0
        %v11635 = vadd.f32 %v11595, %v11634
        %v11636 = vpop.f32.mrb[0].mxu0
        %v11637 = vpop.f32.mrb[0].mxu0
        %v11638 = vpop.f32.mrb[0].mxu0
        %11639 = vdwg.mxu0
        %11640 = vmatprep.subr.bf16.mxu0 0
        %11641 = vmatpush1.bf16.msra.mxu0 %v8224
        %11642 = vmatprep.subr.bf16.mxu0 0
        %11643 = vmatpush1.bf16.msra.mxu0 %v8225
        %11644 = vmatprep.subr.bf16.mxu0 0
        %11645 = vmatpush1.bf16.msra.mxu0 %v8226
        %11646 = vmatprep.subr.bf16.mxu0 0
        %11647 = vmatpush1.bf16.msra.mxu0 %v8227
        %11648 = vmatprep.subr.bf16.mxu0 0
        %11649 = vmatpush1.bf16.msra.mxu0 %v8228
        %11650 = vmatprep.subr.bf16.mxu0 0
        %11651 = vmatpush1.bf16.msra.mxu0 %v8229
        %11652 = vmatprep.subr.bf16.mxu0 0
        %11653 = vmatpush1.bf16.msra.mxu0 %v8230
        %11654 = vmatprep.subr.bf16.mxu0 0
        %11655 = vmatpush1.bf16.msra.mxu0 %v8231
        %11656 = vmatprep.subr.bf16.mxu0 0
        %11657 = vmatpush1.bf16.msra.mxu0 %v8232
        %11658 = vmatprep.subr.bf16.mxu0 0
        %11659 = vmatpush1.bf16.msra.mxu0 %v8233
        %11660 = vmatprep.subr.bf16.mxu0 0
        %11661 = vmatpush1.bf16.msra.mxu0 %v8234
        %11662 = vmatprep.subr.bf16.mxu0 0
        %11663 = vmatpush1.bf16.msra.mxu0 %v8235
        %11664 = vmatprep.subr.bf16.mxu0 0
        %11665 = vmatpush1.bf16.msra.mxu0 %v8236
        %11666 = vmatprep.subr.bf16.mxu0 0
        %11667 = vmatpush1.bf16.msra.mxu0 %v8237
        %11668 = vmatprep.subr.bf16.mxu0 0
        %11669 = vmatpush1.bf16.msra.mxu0 %v8238
        %11670 = vmatprep.subr.bf16.mxu0 0
        %11671 = vmatpush1.bf16.msra.mxu0 %v8239
        %11672 = vmatprep.mubr.bf16.mxu0 %v3037
        %11673 = vmatmul.mubr.bf16.gmra.mrb[0].mxu0 %v3035
        %v11674 = vpop.f32.mrb[0].mxu0
        %v11675 = vadd.f32 %v11635, %v11674
        %v11676 = vpop.f32.mrb[0].mxu0
        %v11677 = vpop.f32.mrb[0].mxu0
        %v11678 = vpop.f32.mrb[0].mxu0
        %11679 = vdwg.mxu0
        %11680 = vmatprep.subr.bf16.mxu0 0
        %11681 = vmatpush1.bf16.msra.mxu0 %v8240
        %11682 = vmatprep.subr.bf16.mxu0 0
        %11683 = vmatpush1.bf16.msra.mxu0 %v8241
        %11684 = vmatprep.subr.bf16.mxu0 0
        %11685 = vmatpush1.bf16.msra.mxu0 %v8242
        %11686 = vmatprep.subr.bf16.mxu0 0
        %11687 = vmatpush1.bf16.msra.mxu0 %v8243
        %11688 = vmatprep.subr.bf16.mxu0 0
        %11689 = vmatpush1.bf16.msra.mxu0 %v8244
        %11690 = vmatprep.subr.bf16.mxu0 0
        %11691 = vmatpush1.bf16.msra.mxu0 %v8245
        %11692 = vmatprep.subr.bf16.mxu0 0
        %11693 = vmatpush1.bf16.msra.mxu0 %v8246
        %11694 = vmatprep.subr.bf16.mxu0 0
        %11695 = vmatpush1.bf16.msra.mxu0 %v8247
        %11696 = vmatprep.subr.bf16.mxu0 0
        %11697 = vmatpush1.bf16.msra.mxu0 %v8248
        %11698 = vmatprep.subr.bf16.mxu0 0
        %11699 = vmatpush1.bf16.msra.mxu0 %v8249
        %11700 = vmatprep.subr.bf16.mxu0 0
        %11701 = vmatpush1.bf16.msra.mxu0 %v8250
        %11702 = vmatprep.subr.bf16.mxu0 0
        %11703 = vmatpush1.bf16.msra.mxu0 %v8251
        %11704 = vmatprep.subr.bf16.mxu0 0
        %11705 = vmatpush1.bf16.msra.mxu0 %v8252
        %11706 = vmatprep.subr.bf16.mxu0 0
        %11707 = vmatpush1.bf16.msra.mxu0 %v8253
        %11708 = vmatprep.subr.bf16.mxu0 0
        %11709 = vmatpush1.bf16.msra.mxu0 %v8254
        %11710 = vmatprep.subr.bf16.mxu0 0
        %11711 = vmatpush1.bf16.msra.mxu0 %v8255
        %11712 = vmatprep.mubr.bf16.mxu0 %v3034
        %11713 = vmatmul.mubr.bf16.gmra.mrb[0].mxu0 %v3020
        %v11714 = vpop.f32.mrb[0].mxu0
        %v11715 = vadd.f32 %v11675, %v11714
        %v11716 = vpop.f32.mrb[0].mxu0
        %v11717 = vpop.f32.mrb[0].mxu0
        %v11718 = vpop.f32.mrb[0].mxu0
        %11719 = vdwg.mxu0
        %11720 = vmatprep.subr.bf16.mxu0 0
        %11721 = vmatpush1.bf16.msra.mxu0 %v8256
        %11722 = vmatprep.subr.bf16.mxu0 0
        %11723 = vmatpush1.bf16.msra.mxu0 %v8257
        %11724 = vmatprep.subr.bf16.mxu0 0
        %11725 = vmatpush1.bf16.msra.mxu0 %v8258
        %11726 = vmatprep.subr.bf16.mxu0 0
        %11727 = vmatpush1.bf16.msra.mxu0 %v8259
        %11728 = vmatprep.subr.bf16.mxu0 0
        %11729 = vmatpush1.bf16.msra.mxu0 %v8260
        %11730 = vmatprep.subr.bf16.mxu0 0
        %11731 = vmatpush1.bf16.msra.mxu0 %v8261
        %11732 = vmatprep.subr.bf16.mxu0 0
        %11733 = vmatpush1.bf16.msra.mxu0 %v8262
        %11734 = vmatprep.subr.bf16.mxu0 0
        %11735 = vmatpush1.bf16.msra.mxu0 %v8263
        %11736 = vmatprep.subr.bf16.mxu0 0
        %11737 = vmatpush1.bf16.msra.mxu0 %v8264
        %11738 = vmatprep.subr.bf16.mxu0 0
        %11739 = vmatpush1.bf16.msra.mxu0 %v8265
        %11740 = vmatprep.subr.bf16.mxu0 0
        %11741 = vmatpush1.bf16.msra.mxu0 %v8266
        %11742 = vmatprep.subr.bf16.mxu0 0
        %11743 = vmatpush1.bf16.msra.mxu0 %v8267
        %11744 = vmatprep.subr.bf16.mxu0 0
        %11745 = vmatpush1.bf16.msra.mxu0 %v8268
        %11746 = vmatprep.subr.bf16.mxu0 0
        %11747 = vmatpush1.bf16.msra.mxu0 %v8269
        %11748 = vmatprep.subr.bf16.mxu0 0
        %11749 = vmatpush1.bf16.msra.mxu0 %v8270
        %11750 = vmatprep.subr.bf16.mxu0 0
        %11751 = vmatpush1.bf16.msra.mxu0 %v8271
        %11752 = vmatprep.mubr.bf16.mxu0 %v3038
        %11753 = vmatmul.mubr.bf16.gmra.mrb[0].mxu0 %v3036
        %v11754 = vpop.f32.mrb[0].mxu0
        %v11755 = vadd.f32 %v11715, %v11754
        %v11756 = vpop.f32.mrb[0].mxu0
        %v11757 = vpop.f32.mrb[0].mxu0
        %v11758 = vpop.f32.mrb[0].mxu0
        %11759 = vdwg.mxu0
        %11760 = vmatprep.subr.bf16.mxu0 0
        %11761 = vmatpush1.bf16.msra.mxu0 %v8272
        %11762 = vmatprep.subr.bf16.mxu0 0
        %11763 = vmatpush1.bf16.msra.mxu0 %v8273
        %11764 = vmatprep.subr.bf16.mxu0 0
        %11765 = vmatpush1.bf16.msra.mxu0 %v8274
        %11766 = vmatprep.subr.bf16.mxu0 0
        %11767 = vmatpush1.bf16.msra.mxu0 %v8275
        %11768 = vmatprep.subr.bf16.mxu0 0
        %11769 = vmatpush1.bf16.msra.mxu0 %v8276
        %11770 = vmatprep.subr.bf16.mxu0 0
        %11771 = vmatpush1.bf16.msra.mxu0 %v8277
        %11772 = vmatprep.subr.bf16.mxu0 0
        %11773 = vmatpush1.bf16.msra.mxu0 %v8278
        %11774 = vmatprep.subr.bf16.mxu0 0
        %11775 = vmatpush1.bf16.msra.mxu0 %v8279
        %11776 = vmatprep.subr.bf16.mxu0 0
        %11777 = vmatpush1.bf16.msra.mxu0 %v8280
        %11778 = vmatprep.subr.bf16.mxu0 0
        %11779 = vmatpush1.bf16.msra.mxu0 %v8281
        %11780 = vmatprep.subr.bf16.mxu0 0
        %11781 = vmatpush1.bf16.msra.mxu0 %v8282
        %11782 = vmatprep.subr.bf16.mxu0 0
        %11783 = vmatpush1.bf16.msra.mxu0 %v8283
        %11784 = vmatprep.subr.bf16.mxu0 0
        %11785 = vmatpush1.bf16.msra.mxu0 %v8284
        %11786 = vmatprep.subr.bf16.mxu0 0
        %11787 = vmatpush1.bf16.msra.mxu0 %v8285
        %11788 = vmatprep.subr.bf16.mxu0 0
        %11789 = vmatpush1.bf16.msra.mxu0 %v8286
        %11790 = vmatprep.subr.bf16.mxu0 0
        %11791 = vmatpush1.bf16.msra.mxu0 %v8287
        %11792 = vmatprep.mubr.bf16.mxu0 %v3076
        %11793 = vmatmul.mubr.bf16.gmra.mrb[0].mxu0 %v3062
        %v11794 = vpop.f32.mrb[0].mxu0
        %v11795 = vadd.f32 %v11755, %v11794
        %v11796 = vpop.f32.mrb[0].mxu0
        %v11797 = vpop.f32.mrb[0].mxu0
        %v11798 = vpop.f32.mrb[0].mxu0
        %11799 = vdwg.mxu0
        %11800 = vmatprep.subr.bf16.mxu0 0
        %11801 = vmatpush1.bf16.msra.mxu0 %v8288
        %11802 = vmatprep.subr.bf16.mxu0 0
        %11803 = vmatpush1.bf16.msra.mxu0 %v8289
        %11804 = vmatprep.subr.bf16.mxu0 0
        %11805 = vmatpush1.bf16.msra.mxu0 %v8290
        %11806 = vmatprep.subr.bf16.mxu0 0
        %11807 = vmatpush1.bf16.msra.mxu0 %v8291
        %11808 = vmatprep.subr.bf16.mxu0 0
        %11809 = vmatpush1.bf16.msra.mxu0 %v8292
        %11810 = vmatprep.subr.bf16.mxu0 0
        %11811 = vmatpush1.bf16.msra.mxu0 %v8293
        %11812 = vmatprep.subr.bf16.mxu0 0
        %11813 = vmatpush1.bf16.msra.mxu0 %v8294
        %11814 = vmatprep.subr.bf16.mxu0 0
        %11815 = vmatpush1.bf16.msra.mxu0 %v8295
        %11816 = vmatprep.subr.bf16.mxu0 0
        %11817 = vmatpush1.bf16.msra.mxu0 %v8296
        %11818 = vmatprep.subr.bf16.mxu0 0
        %11819 = vmatpush1.bf16.msra.mxu0 %v8297
        %11820 = vmatprep.subr.bf16.mxu0 0
        %11821 = vmatpush1.bf16.msra.mxu0 %v8298
        %11822 = vmatprep.subr.bf16.mxu0 0
        %11823 = vmatpush1.bf16.msra.mxu0 %v8299
        %11824 = vmatprep.subr.bf16.mxu0 0
        %11825 = vmatpush1.bf16.msra.mxu0 %v8300
        %11826 = vmatprep.subr.bf16.mxu0 0
        %11827 = vmatpush1.bf16.msra.mxu0 %v8301
        %11828 = vmatprep.subr.bf16.mxu0 0
        %11829 = vmatpush1.bf16.msra.mxu0 %v8302
        %11830 = vmatprep.subr.bf16.mxu0 0
        %11831 = vmatpush1.bf16.msra.mxu0 %v8303
        %11832 = vmatprep.mubr.bf16.mxu0 %v3086
        %11833 = vmatmul.mubr.bf16.gmra.mrb[0].mxu0 %v3084
        %v11834 = vpop.f32.mrb[0].mxu0
        %v11835 = vadd.f32 %v11795, %v11834
        %v11836 = vpop.f32.mrb[0].mxu0
        %v11837 = vpop.f32.mrb[0].mxu0
        %v11838 = vpop.f32.mrb[0].mxu0
        %11839 = vdwg.mxu0
        %11840 = vmatprep.subr.bf16.mxu0 0
        %11841 = vmatpush1.bf16.msra.mxu0 %v8304
        %11842 = vmatprep.subr.bf16.mxu0 0
        %11843 = vmatpush1.bf16.msra.mxu0 %v8305
        %11844 = vmatprep.subr.bf16.mxu0 0
        %11845 = vmatpush1.bf16.msra.mxu0 %v8306
        %11846 = vmatprep.subr.bf16.mxu0 0
        %11847 = vmatpush1.bf16.msra.mxu0 %v8307
        %11848 = vmatprep.subr.bf16.mxu0 0
        %11849 = vmatpush1.bf16.msra.mxu0 %v8308
        %11850 = vmatprep.subr.bf16.mxu0 0
        %11851 = vmatpush1.bf16.msra.mxu0 %v8309
        %11852 = vmatprep.subr.bf16.mxu0 0
        %11853 = vmatpush1.bf16.msra.mxu0 %v8310
        %11854 = vmatprep.subr.bf16.mxu0 0
        %11855 = vmatpush1.bf16.msra.mxu0 %v8311
        %11856 = vmatprep.subr.bf16.mxu0 0
        %11857 = vmatpush1.bf16.msra.mxu0 %v8312
        %11858 = vmatprep.subr.bf16.mxu0 0
        %11859 = vmatpush1.bf16.msra.mxu0 %v8313
        %11860 = vmatprep.subr.bf16.mxu0 0
        %11861 = vmatpush1.bf16.msra.mxu0 %v8314
        %11862 = vmatprep.subr.bf16.mxu0 0
        %11863 = vmatpush1.bf16.msra.mxu0 %v8315
        %11864 = vmatprep.subr.bf16.mxu0 0
        %11865 = vmatpush1.bf16.msra.mxu0 %v8316
        %11866 = vmatprep.subr.bf16.mxu0 0
        %11867 = vmatpush1.bf16.msra.mxu0 %v8317
        %11868 = vmatprep.subr.bf16.mxu0 0
        %11869 = vmatpush1.bf16.msra.mxu0 %v8318
        %11870 = vmatprep.subr.bf16.mxu0 0
        %11871 = vmatpush1.bf16.msra.mxu0 %v8319
        %11872 = vmatprep.mubr.bf16.mxu0 %v3083
        %11873 = vmatmul.mubr.bf16.gmra.mrb[0].mxu0 %v3069
        %v11874 = vpop.f32.mrb[0].mxu0
        %v11875 = vadd.f32 %v11835, %v11874
        %v11876 = vpop.f32.mrb[0].mxu0
        %v11877 = vpop.f32.mrb[0].mxu0
        %v11878 = vpop.f32.mrb[0].mxu0
        %11879 = vdwg.mxu0
        %11880 = vmatprep.subr.bf16.mxu0 0
        %11881 = vmatpush1.bf16.msra.mxu0 %v8320
        %11882 = vmatprep.subr.bf16.mxu0 0
        %11883 = vmatpush1.bf16.msra.mxu0 %v8321
        %11884 = vmatprep.subr.bf16.mxu0 0
        %11885 = vmatpush1.bf16.msra.mxu0 %v8322
        %11886 = vmatprep.subr.bf16.mxu0 0
        %11887 = vmatpush1.bf16.msra.mxu0 %v8323
        %11888 = vmatprep.subr.bf16.mxu0 0
        %11889 = vmatpush1.bf16.msra.mxu0 %v8324
        %11890 = vmatprep.subr.bf16.mxu0 0
        %11891 = vmatpush1.bf16.msra.mxu0 %v8325
        %11892 = vmatprep.subr.bf16.mxu0 0
        %11893 = vmatpush1.bf16.msra.mxu0 %v8326
        %11894 = vmatprep.subr.bf16.mxu0 0
        %11895 = vmatpush1.bf16.msra.mxu0 %v8327
        %11896 = vmatprep.subr.bf16.mxu0 0
        %11897 = vmatpush1.bf16.msra.mxu0 %v8328
        %11898 = vmatprep.subr.bf16.mxu0 0
        %11899 = vmatpush1.bf16.msra.mxu0 %v8329
        %11900 = vmatprep.subr.bf16.mxu0 0
        %11901 = vmatpush1.bf16.msra.mxu0 %v8330
        %11902 = vmatprep.subr.bf16.mxu0 0
        %11903 = vmatpush1.bf16.msra.mxu0 %v8331
        %11904 = vmatprep.subr.bf16.mxu0 0
        %11905 = vmatpush1.bf16.msra.mxu0 %v8332
        %11906 = vmatprep.subr.bf16.mxu0 0
        %11907 = vmatpush1.bf16.msra.mxu0 %v8333
        %11908 = vmatprep.subr.bf16.mxu0 0
        %11909 = vmatpush1.bf16.msra.mxu0 %v8334
        %11910 = vmatprep.subr.bf16.mxu0 0
        %11911 = vmatpush1.bf16.msra.mxu0 %v8335
        %11912 = vmatprep.mubr.bf16.mxu0 %v3087
        %11913 = vmatmul.mubr.bf16.gmra.mrb[0].mxu0 %v3085
        %v11914 = vpop.f32.mrb[0].mxu0
        %v11915 = vadd.f32 %v11875, %v11914
        %v11916 = vpop.f32.mrb[0].mxu0
        %v11917 = vpop.f32.mrb[0].mxu0
        %v11918 = vpop.f32.mrb[0].mxu0
        %11919 = vdwg.mxu0
        %v11920 = vadd.f32 %v223, %v11915
        %vm11921 = vcmask 975872
        %11922 = vst.msk [vmem:[#allocation2] sm:$0x3] %vm11921, %v11920
        %p11923 = scmp.eq.s32.totalorder %s21, 7
        // Predicated region
        $region37: #{model_forward.6} parent=27 // pred_check
          %p11924 = pneg %p11923
        $region38: #{model_forward.6} parent=27 // pred_check_branch
          %11926 = sbr.rel (%p11924) target = $region40
        $region39: #{model_forward.6} parent=27 // pred_region
          %v11927 = vld [vmem:[#allocation2] sm:$0x3]
          %11928 = vst.msk [vmem:[%s215] sm:$0x3] %vm11921, %v11927
        $region40: #{model_forward.6} parent=27 // pred_fallthru
          _
        %p11929 = scmp.lt.s32.totalorder %s20, 1
        %s11930 = scalar_select %p11929, %s20, 1
        %s11931 = smul.addr %s11930, 2
        %s11932 = scalar_lea.vmem %s2, %s11931
        // Predicated region
        $region41: #{model_forward.6} parent=27 // pred_check
          %p11933 = pneg %p106
        $region42: #{model_forward.6} parent=27 // pred_check_branch
          %11935 = sbr.rel (%p11933) target = $region44
        $region43: #{model_forward.6} parent=27 // pred_region
          _
        $region44: #{model_forward.6} parent=27 // pred_fallthru
          _
      $region28: #{model_forward.6} parent=5 // pred_fallthru
        _
      %p11936 = scmp.le.s32.totalorder 2, %s11
      // Predicated region
      $region45: #{model_forward.6} parent=5 // pred_check
        %p11937 = pneg %p11936
      $region46: #{model_forward.6} parent=5 // pred_check_branch
        %11939 = sbr.rel (%p11937) target = $region48
      $region47: #{model_forward.6} parent=5 // pred_region
        %s11940 = ssub.s32 %s11, 2
        // Predicated region
        $region49: #{model_forward.6} parent=47 // pred_check
          %p11941 = pneg %p112
        $region50: #{model_forward.6} parent=47 // pred_check_branch
          %11943 = sbr.rel (%p11941) target = $region52
        $region51: #{model_forward.6} parent=47 // pred_region
          %p11944 = scmp.lt.s32.totalorder %s22, 1
          %s11945 = scalar_select %p11944, %s22, 1
          %s11946 = smul.addr %s11945, 2
          %s11947 = scalar_lea.vmem %s2, %s11946
        $region52: #{model_forward.6} parent=47 // pred_fallthru
          _
      $region48: #{model_forward.6} parent=5 // pred_fallthru
        _
    $region6: #{model_forward.6} parent=1 // loop_footer
      %s15 = sadd.s32 1, %s11
    $region7: #{model_forward.6} parent=1 // loop_footer_branch
      %10 = sbr.rel target = $region3
    $region8: #{model_forward.6} parent=1 // loop_exit
      _
    %11948 = vsyncpa [#allocation4], 1
    %s11949 = scalar_lea.sflag [#allocation4], 1
    %11950 = vsyncpa %s11949, 1

</llo_original>
